<compile_context>
chip_gen: v5e
topology: v5e:2x2
jax: 0.10.0
libtpu: 0.0.40
codegen_flags: <defaults>
</compile_context>

<pallas_src>
import math

import jax
import jax.numpy as jnp
from jax.experimental import pallas as pl
from jax.experimental.pallas import tpu as pltpu

D_MODEL = 128
NHEAD = 4
HEAD_DIM = D_MODEL // NHEAD
DIM_FF = 512
NUM_LAYERS = 2
SRC_VOCAB = 13
TGT_VOCAB = 17
EPS = 1e-5
NEG_INF = -1e9  # finite large-negative mask (safer than -inf)


# ------------------------- in-kernel helpers -------------------------

def _ln(x, g, b):
    mu = jnp.mean(x, axis=-1, keepdims=True)
    xc = x - mu
    var = jnp.mean(xc * xc, axis=-1, keepdims=True)
    return xc * jax.lax.rsqrt(var + EPS) * g + b


def _mha_core(q_all, k_all, v_all, mask):
    # q_all: (Sq, D), k_all/v_all: (Sk, D); heads packed along the lane axis.
    # Per-head matmuls are statically unrolled (NHEAD=4) so the compiler can
    # interleave MXU pushes across heads.  Scale already folded into Q.
    outs = []
    for h in range(NHEAD):
        sl = slice(h * HEAD_DIM, (h + 1) * HEAD_DIM)
        q = q_all[:, sl]
        k = k_all[:, sl]
        v = v_all[:, sl]
        s = jnp.dot(q, k.T, preferred_element_type=jnp.float32)
        if mask is not None:
            s = s + mask
        s = s - jnp.max(s, axis=-1, keepdims=True)
        p = jnp.exp(s)
        p = p * pl.reciprocal(jnp.sum(p, axis=-1, keepdims=True), approx=True)
        outs.append(jnp.dot(p, v, preferred_element_type=jnp.float32))
    return jnp.concatenate(outs, axis=-1)  # (Sq, D) lane-dense


# ------------------------- fused layer kernels -------------------------

def _enc_layer_kernel(x_ref, wqkv_ref, bqkv_ref, wo_ref, bo_ref,
                      ln1g_ref, ln1b_ref, w1_ref, b1_ref, w2_ref, b2_ref,
                      ln2g_ref, ln2b_ref, o_ref):
    x = x_ref[...]                                            # (S, D)
    qkv = jnp.dot(x, wqkv_ref[...],
                  preferred_element_type=jnp.float32) + bqkv_ref[...]
    attn = _mha_core(qkv[:, :D_MODEL], qkv[:, D_MODEL:2 * D_MODEL],
                     qkv[:, 2 * D_MODEL:], None)
    sa = jnp.dot(attn, wo_ref[...],
                 preferred_element_type=jnp.float32) + bo_ref[...]
    h1 = _ln(x + sa, ln1g_ref[...], ln1b_ref[...])
    hf = jnp.maximum(
        jnp.dot(h1, w1_ref[...], preferred_element_type=jnp.float32)
        + b1_ref[...], 0.0)
    f = jnp.dot(hf, w2_ref[...],
                preferred_element_type=jnp.float32) + b2_ref[...]
    o_ref[...] = _ln(h1 + f, ln2g_ref[...], ln2b_ref[...])


def _dec_layer_kernel(x_ref, mem_ref,
                      wqkv_ref, bqkv_ref, wos_ref, bos_ref, ln1g_ref, ln1b_ref,
                      wqc_ref, bqc_ref, wkvc_ref, bkvc_ref, woc_ref, boc_ref,
                      ln2g_ref, ln2b_ref, w1_ref, b1_ref, w2_ref, b2_ref,
                      ln3g_ref, ln3b_ref, o_ref):
    x = x_ref[...]                                            # (St, D)
    mem = mem_ref[...]                                        # (Ss, D)
    st = x.shape[0]

    # causal self-attention (mask built in-kernel)
    qkv = jnp.dot(x, wqkv_ref[...],
                  preferred_element_type=jnp.float32) + bqkv_ref[...]
    row = jax.lax.broadcasted_iota(jnp.int32, (st, st), 0)
    col = jax.lax.broadcasted_iota(jnp.int32, (st, st), 1)
    causal = jnp.where(col > row, jnp.float32(NEG_INF), jnp.float32(0.0))
    attn = _mha_core(qkv[:, :D_MODEL], qkv[:, D_MODEL:2 * D_MODEL],
                     qkv[:, 2 * D_MODEL:], causal)
    sa = jnp.dot(attn, wos_ref[...],
                 preferred_element_type=jnp.float32) + bos_ref[...]
    h1 = _ln(x + sa, ln1g_ref[...], ln1b_ref[...])

    # cross-attention over encoder memory (no mask)
    qc = jnp.dot(h1, wqc_ref[...],
                 preferred_element_type=jnp.float32) + bqc_ref[...]
    kvc = jnp.dot(mem, wkvc_ref[...],
                  preferred_element_type=jnp.float32) + bkvc_ref[...]
    ca = _mha_core(qc, kvc[:, :D_MODEL], kvc[:, D_MODEL:], None)
    co = jnp.dot(ca, woc_ref[...],
                 preferred_element_type=jnp.float32) + boc_ref[...]
    h2 = _ln(h1 + co, ln2g_ref[...], ln2b_ref[...])

    # FFN
    hf = jnp.maximum(
        jnp.dot(h2, w1_ref[...], preferred_element_type=jnp.float32)
        + b1_ref[...], 0.0)
    f = jnp.dot(hf, w2_ref[...],
                preferred_element_type=jnp.float32) + b2_ref[...]
    o_ref[...] = _ln(h2 + f, ln3g_ref[...], ln3b_ref[...])


def _layernorm_kernel(x_ref, g_ref, b_ref, o_ref):
    o_ref[...] = _ln(x_ref[...], g_ref[...], b_ref[...])


def _final_norm_fc_kernel(x_ref, g_ref, b_ref, w_ref, fcb_ref, o_ref):
    y = _ln(x_ref[...], g_ref[...], b_ref[...])
    o_ref[...] = jnp.dot(y, w_ref[...],
                         preferred_element_type=jnp.float32) + fcb_ref[...]


# ------------------------- kernel wrappers -------------------------

def _vmem():
    return pl.BlockSpec(memory_space=pltpu.MemorySpace.VMEM)


def _rep_spec(arr):
    # full-array block replicated across the batch grid axis
    nd = arr.ndim
    return pl.BlockSpec(arr.shape, lambda b, _nd=nd: (0,) * _nd)


def encoder_layer(x2d, wts, B, S):
    return pl.pallas_call(
        _enc_layer_kernel,
        out_shape=jax.ShapeDtypeStruct((B * S, D_MODEL), jnp.float32),
        grid=(B,),
        in_specs=[pl.BlockSpec((S, D_MODEL), lambda b: (b, 0))]
                 + [_rep_spec(w) for w in wts],
        out_specs=pl.BlockSpec((S, D_MODEL), lambda b: (b, 0)),
        compiler_params=pltpu.CompilerParams(
            dimension_semantics=("parallel",)),
    )(x2d, *wts)


def decoder_layer(x2d, mem2d, wts, B, St, Ss):
    return pl.pallas_call(
        _dec_layer_kernel,
        out_shape=jax.ShapeDtypeStruct((B * St, D_MODEL), jnp.float32),
        grid=(B,),
        in_specs=[pl.BlockSpec((St, D_MODEL), lambda b: (b, 0)),
                  pl.BlockSpec((Ss, D_MODEL), lambda b: (b, 0))]
                 + [_rep_spec(w) for w in wts],
        out_specs=pl.BlockSpec((St, D_MODEL), lambda b: (b, 0)),
        compiler_params=pltpu.CompilerParams(
            dimension_semantics=("parallel",)),
    )(x2d, mem2d, *wts)


def layer_norm(x2d, g, b):
    M = x2d.shape[0]
    return pl.pallas_call(
        _layernorm_kernel,
        out_shape=jax.ShapeDtypeStruct((M, D_MODEL), jnp.float32),
        in_specs=[_vmem()] * 3,
        out_specs=_vmem(),
    )(x2d, g.reshape(1, D_MODEL), b.reshape(1, D_MODEL))


def final_norm_fc(x2d, g, b, fc_w_pad, fc_b_pad):
    M = x2d.shape[0]
    N = fc_w_pad.shape[1]
    return pl.pallas_call(
        _final_norm_fc_kernel,
        out_shape=jax.ShapeDtypeStruct((M, N), jnp.float32),
        in_specs=[_vmem()] * 5,
        out_specs=_vmem(),
    )(x2d, g.reshape(1, D_MODEL), b.reshape(1, D_MODEL), fc_w_pad, fc_b_pad)


# ------------------------- parameter fusion (one-time prep) -------------------------

def fuse_params(params):
    scale = 1.0 / math.sqrt(HEAD_DIM)

    def fuse_self(ap):
        wqkv = jnp.concatenate([ap['wq'] * scale, ap['wk'], ap['wv']], axis=1)
        bqkv = jnp.concatenate(
            [ap['bq'] * scale, ap['bk'], ap['bv']]).reshape(1, -1)
        return wqkv, bqkv, ap['wo'], ap['bo'].reshape(1, -1)

    def fuse_cross(ap):
        wq = ap['wq'] * scale
        bq = (ap['bq'] * scale).reshape(1, -1)
        wkv = jnp.concatenate([ap['wk'], ap['wv']], axis=1)
        bkv = jnp.concatenate([ap['bk'], ap['bv']]).reshape(1, -1)
        return wq, bq, wkv, bkv, ap['wo'], ap['bo'].reshape(1, -1)

    enc_layers = []
    for lp in params['enc_layers']:
        wqkv, bqkv, wo, bo = fuse_self(lp['self_attn'])
        enc_layers.append((
            wqkv, bqkv, wo, bo,
            lp['ln1_g'].reshape(1, -1), lp['ln1_b'].reshape(1, -1),
            lp['w1'], lp['b1'].reshape(1, -1),
            lp['w2'], lp['b2'].reshape(1, -1),
            lp['ln2_g'].reshape(1, -1), lp['ln2_b'].reshape(1, -1),
        ))

    dec_layers = []
    for lp in params['dec_layers']:
        wqkv, bqkv, wos, bos = fuse_self(lp['self_attn'])
        wqc, bqc, wkvc, bkvc, woc, boc = fuse_cross(lp['cross_attn'])
        dec_layers.append((
            wqkv, bqkv, wos, bos,
            lp['ln1_g'].reshape(1, -1), lp['ln1_b'].reshape(1, -1),
            wqc, bqc, wkvc, bkvc, woc, boc,
            lp['ln2_g'].reshape(1, -1), lp['ln2_b'].reshape(1, -1),
            lp['w1'], lp['b1'].reshape(1, -1),
            lp['w2'], lp['b2'].reshape(1, -1),
            lp['ln3_g'].reshape(1, -1), lp['ln3_b'].reshape(1, -1),
        ))

    # pad final projection to a lane-dense 128-wide output; slice to 17 outside
    n_pad = 128
    fc_w_pad = jnp.zeros((D_MODEL, n_pad), jnp.float32).at[:, :TGT_VOCAB].set(
        params['fc_w'])
    fc_b_pad = jnp.zeros((1, n_pad), jnp.float32).at[0, :TGT_VOCAB].set(
        params['fc_b'])

    return dict(
        src_emb=params['src_emb'], tgt_emb=params['tgt_emb'],
        enc_layers=enc_layers, dec_layers=dec_layers,
        enc_norm_g=params['enc_norm_g'], enc_norm_b=params['enc_norm_b'],
        dec_norm_g=params['dec_norm_g'], dec_norm_b=params['dec_norm_b'],
        fc_w_pad=fc_w_pad, fc_b_pad=fc_b_pad,
    )


# ------------------------- forward pass -------------------------

def make_pos_encoding(max_len, d_model):
    position = jnp.arange(max_len, dtype=jnp.float32)[:, None]
    div_term = jnp.exp(jnp.arange(0, d_model, 2, dtype=jnp.float32)
                       * (-math.log(10000.0) / d_model))
    pe = jnp.zeros((max_len, d_model), jnp.float32)
    pe = pe.at[:, 0::2].set(jnp.sin(position * div_term))
    pe = pe.at[:, 1::2].set(jnp.cos(position * div_term))
    return pe


def tiny_transformer_forward(fp, src_tokens, tgt_tokens, pe):
    B, Ss = src_tokens.shape
    _, St = tgt_tokens.shape
    emb_scale = math.sqrt(D_MODEL)

    # embedding gather + scale + positional encoding: trivial elementwise glue
    src = jnp.take(fp['src_emb'], src_tokens, axis=0) * emb_scale + pe[:Ss][None]
    tgt = jnp.take(fp['tgt_emb'], tgt_tokens, axis=0) * emb_scale + pe[:St][None]

    mem = src.reshape(B * Ss, D_MODEL)
    for wts in fp['enc_layers']:
        mem = encoder_layer(mem, wts, B, Ss)
    mem = layer_norm(mem, fp['enc_norm_g'], fp['enc_norm_b'])

    x = tgt.reshape(B * St, D_MODEL)
    for wts in fp['dec_layers']:
        x = decoder_layer(x, mem, wts, B, St, Ss)

    logits = final_norm_fc(x, fp['dec_norm_g'], fp['dec_norm_b'],
                           fp['fc_w_pad'], fp['fc_b_pad'])
    return logits[:, :TGT_VOCAB].reshape(B, St, TGT_VOCAB)


# ------------------------- deterministic parameter init -------------------------

def _dense_params(key, fan_in, fan_out):
    kw, kb = jax.random.split(key)
    bound = 1.0 / math.sqrt(fan_in)
    w = jax.random.uniform(kw, (fan_in, fan_out), jnp.float32, -bound, bound)
    b = jax.random.uniform(kb, (fan_out,), jnp.float32, -bound, bound)
    return w, b


def _attn_params(key):
    ks = jax.random.split(key, 4)
    wq, bq = _dense_params(ks[0], D_MODEL, D_MODEL)
    wk, bk = _dense_params(ks[1], D_MODEL, D_MODEL)
    wv, bv = _dense_params(ks[2], D_MODEL, D_MODEL)
    wo, bo = _dense_params(ks[3], D_MODEL, D_MODEL)
    return dict(wq=wq, bq=bq, wk=wk, bk=bk, wv=wv, bv=bv, wo=wo, bo=bo)


def _enc_layer_params(key):
    ks = jax.random.split(key, 3)
    sa = _attn_params(ks[0])
    w1, b1 = _dense_params(ks[1], D_MODEL, DIM_FF)
    w2, b2 = _dense_params(ks[2], DIM_FF, D_MODEL)
    return dict(self_attn=sa, w1=w1, b1=b1, w2=w2, b2=b2,
                ln1_g=jnp.ones(D_MODEL, jnp.float32),
                ln1_b=jnp.zeros(D_MODEL, jnp.float32),
                ln2_g=jnp.ones(D_MODEL, jnp.float32),
                ln2_b=jnp.zeros(D_MODEL, jnp.float32))


def _dec_layer_params(key):
    ks = jax.random.split(key, 4)
    sa = _attn_params(ks[0])
    ca = _attn_params(ks[1])
    w1, b1 = _dense_params(ks[2], D_MODEL, DIM_FF)
    w2, b2 = _dense_params(ks[3], DIM_FF, D_MODEL)
    return dict(self_attn=sa, cross_attn=ca, w1=w1, b1=b1, w2=w2, b2=b2,
                ln1_g=jnp.ones(D_MODEL, jnp.float32),
                ln1_b=jnp.zeros(D_MODEL, jnp.float32),
                ln2_g=jnp.ones(D_MODEL, jnp.float32),
                ln2_b=jnp.zeros(D_MODEL, jnp.float32),
                ln3_g=jnp.ones(D_MODEL, jnp.float32),
                ln3_b=jnp.zeros(D_MODEL, jnp.float32))


def init_params(key):
    ks = jax.random.split(key, 5)
    fc_w, fc_b = _dense_params(ks[4], D_MODEL, TGT_VOCAB)
    return dict(
        src_emb=jax.random.normal(ks[0], (SRC_VOCAB, D_MODEL), jnp.float32),
        tgt_emb=jax.random.normal(ks[1], (TGT_VOCAB, D_MODEL), jnp.float32),
        enc_layers=[_enc_layer_params(k)
                    for k in jax.random.split(ks[2], NUM_LAYERS)],
        dec_layers=[_dec_layer_params(k)
                    for k in jax.random.split(ks[3], NUM_LAYERS)],
        enc_norm_g=jnp.ones(D_MODEL, jnp.float32),
        enc_norm_b=jnp.zeros(D_MODEL, jnp.float32),
        dec_norm_g=jnp.ones(D_MODEL, jnp.float32),
        dec_norm_b=jnp.zeros(D_MODEL, jnp.float32),
        fc_w=fc_w, fc_b=fc_b,
    )


if __name__ == "__main__":
    key = jax.random.PRNGKey(0)
    kp, k_src, k_tgt = jax.random.split(key, 3)

    params = init_params(kp)
    fused = fuse_params(params)       # one-time weight fusion / scale folding
    pe = make_pos_encoding(100, D_MODEL)

    # small deterministic token inputs: batch=2, src_len=8, tgt_len=8
    src = jax.random.randint(k_src, (2, 8), 0, SRC_VOCAB, dtype=jnp.int32)
    tgt = jax.random.randint(k_tgt, (2, 8), 0, TGT_VOCAB, dtype=jnp.int32)

    fwd = jax.jit(tiny_transformer_forward)
    out = fwd(fused, src, tgt, pe)
    out = jax.block_until_ready(out)
    assert out.shape == (2, 8, TGT_VOCAB)
    assert bool(jnp.all(jnp.isfinite(out)))
    print("KERNEL_OK")
</pallas_src>

<mosaic_0001>
module attributes {stable_mosaic.version = 11 : i64} {
  func.func @_enc_layer_kernel(%arg0: i32, %arg1: memref<8x128xf32, #tpu.memory_space<vmem>>, %arg2: memref<128x384xf32, #tpu.memory_space<vmem>>, %arg3: memref<1x384xf32, #tpu.memory_space<vmem>>, %arg4: memref<128x128xf32, #tpu.memory_space<vmem>>, %arg5: memref<1x128xf32, #tpu.memory_space<vmem>>, %arg6: memref<1x128xf32, #tpu.memory_space<vmem>>, %arg7: memref<1x128xf32, #tpu.memory_space<vmem>>, %arg8: memref<128x512xf32, #tpu.memory_space<vmem>>, %arg9: memref<1x512xf32, #tpu.memory_space<vmem>>, %arg10: memref<512x128xf32, #tpu.memory_space<vmem>>, %arg11: memref<1x128xf32, #tpu.memory_space<vmem>>, %arg12: memref<1x128xf32, #tpu.memory_space<vmem>>, %arg13: memref<1x128xf32, #tpu.memory_space<vmem>>, %arg14: memref<8x128xf32, #tpu.memory_space<vmem>>) attributes {dimension_semantics = [#tpu.dimension_semantics<parallel>], iteration_bounds = array<i64: 2>, scalar_prefetch = 0 : i64, scratch_operands = 0 : i64, tpu.core_type = #tpu.core_type<tc>, window_params = [{transform_indices = @transform_0, window_bounds = array<i64: 8, 128>}, {pipeline_mode = #tpu.pipeline_mode<synchronous>, transform_indices = @transform_1, window_bounds = array<i64: 128, 384>}, {pipeline_mode = #tpu.pipeline_mode<synchronous>, transform_indices = @transform_2, window_bounds = array<i64: 1, 384>}, {pipeline_mode = #tpu.pipeline_mode<synchronous>, transform_indices = @transform_3, window_bounds = array<i64: 128, 128>}, {pipeline_mode = #tpu.pipeline_mode<synchronous>, transform_indices = @transform_4, window_bounds = array<i64: 1, 128>}, {pipeline_mode = #tpu.pipeline_mode<synchronous>, transform_indices = @transform_5, window_bounds = array<i64: 1, 128>}, {pipeline_mode = #tpu.pipeline_mode<synchronous>, transform_indices = @transform_6, window_bounds = array<i64: 1, 128>}, {pipeline_mode = #tpu.pipeline_mode<synchronous>, transform_indices = @transform_7, window_bounds = array<i64: 128, 512>}, {pipeline_mode = #tpu.pipeline_mode<synchronous>, transform_indices = @transform_8, window_bounds = array<i64: 1, 512>}, {pipeline_mode = #tpu.pipeline_mode<synchronous>, transform_indices = @transform_9, window_bounds = array<i64: 512, 128>}, {pipeline_mode = #tpu.pipeline_mode<synchronous>, transform_indices = @transform_10, window_bounds = array<i64: 1, 128>}, {pipeline_mode = #tpu.pipeline_mode<synchronous>, transform_indices = @transform_11, window_bounds = array<i64: 1, 128>}, {pipeline_mode = #tpu.pipeline_mode<synchronous>, transform_indices = @transform_12, window_bounds = array<i64: 1, 128>}, {transform_indices = @transform_13, window_bounds = array<i64: 8, 128>}]} {
    %c0 = arith.constant 0 : index
    %c0_0 = arith.constant 0 : index
    %0 = vector.load %arg1[%c0, %c0_0] : memref<8x128xf32, #tpu.memory_space<vmem>>, vector<8x128xf32>
    %c0_1 = arith.constant 0 : index
    %c0_2 = arith.constant 0 : index
    %1 = vector.load %arg2[%c0_1, %c0_2] : memref<128x384xf32, #tpu.memory_space<vmem>>, vector<128x384xf32>
    %cst = arith.constant dense<0.000000e+00> : vector<8x384xf32>
    %2 = tpu.matmul %0, %1, %cst {dimension_numbers = #tpu.dot_dimension_numbers<[1], [0], [0], [1], [0, 0, 1, 1], [], []>} : vector<8x128xf32>, vector<128x384xf32>, vector<8x384xf32> -> vector<8x384xf32>
    %c0_3 = arith.constant 0 : index
    %c0_4 = arith.constant 0 : index
    %3 = vector.load %arg3[%c0_3, %c0_4] : memref<1x384xf32, #tpu.memory_space<vmem>>, vector<1x384xf32>
    %4 = vector.broadcast %3 : vector<1x384xf32> to vector<8x384xf32>
    %5 = arith.addf %2, %4 : vector<8x384xf32>
    %6 = vector.extract_strided_slice %5 {offsets = [0, 0], sizes = [8, 128], strides = [1, 1]} : vector<8x384xf32> to vector<8x128xf32>
    %7 = vector.extract_strided_slice %5 {offsets = [0, 128], sizes = [8, 128], strides = [1, 1]} : vector<8x384xf32> to vector<8x128xf32>
    %8 = vector.extract_strided_slice %5 {offsets = [0, 256], sizes = [8, 128], strides = [1, 1]} : vector<8x384xf32> to vector<8x128xf32>
    %9 = vector.extract_strided_slice %6 {offsets = [0, 0], sizes = [8, 32], strides = [1, 1]} : vector<8x128xf32> to vector<8x32xf32>
    %10 = vector.extract_strided_slice %7 {offsets = [0, 0], sizes = [8, 32], strides = [1, 1]} : vector<8x128xf32> to vector<8x32xf32>
    %11 = vector.extract_strided_slice %8 {offsets = [0, 0], sizes = [8, 32], strides = [1, 1]} : vector<8x128xf32> to vector<8x32xf32>
    %12 = tpu.transpose %10, [1, 0] : vector<8x32xf32> -> vector<32x8xf32>
    %cst_5 = arith.constant dense<0.000000e+00> : vector<8x8xf32>
    %13 = tpu.matmul %9, %12, %cst_5 {dimension_numbers = #tpu.dot_dimension_numbers<[1], [0], [0], [1], [0, 0, 1, 1], [], []>} : vector<8x32xf32>, vector<32x8xf32>, vector<8x8xf32> -> vector<8x8xf32>
    %cst_6 = arith.constant dense<0xFF800000> : vector<8xf32>
    %14 = vector.multi_reduction <maximumf>, %13, %cst_6 [1] : vector<8x8xf32> to vector<8xf32>
    %15 = vector.shape_cast %14 : vector<8xf32> to vector<8x1xf32>
    %16 = vector.broadcast %15 : vector<8x1xf32> to vector<8x8xf32>
    %17 = arith.subf %13, %16 : vector<8x8xf32>
    %18 = math.exp %17 : vector<8x8xf32>
    %cst_7 = arith.constant dense<0.000000e+00> : vector<8xf32>
    %19 = vector.multi_reduction <add>, %18, %cst_7 [1] : vector<8x8xf32> to vector<8xf32>
    %20 = vector.shape_cast %19 : vector<8xf32> to vector<8x1xf32>
    %21 = tpu.reciprocal %20 {approx = true} : vector<8x1xf32> -> vector<8x1xf32>
    %22 = vector.broadcast %21 : vector<8x1xf32> to vector<8x8xf32>
    %23 = arith.mulf %18, %22 : vector<8x8xf32>
    %cst_8 = arith.constant dense<0.000000e+00> : vector<8x32xf32>
    %24 = tpu.matmul %23, %11, %cst_8 {dimension_numbers = #tpu.dot_dimension_numbers<[1], [0], [0], [1], [0, 0, 1, 1], [], []>} : vector<8x8xf32>, vector<8x32xf32>, vector<8x32xf32> -> vector<8x32xf32>
    %25 = vector.extract_strided_slice %6 {offsets = [0, 32], sizes = [8, 32], strides = [1, 1]} : vector<8x128xf32> to vector<8x32xf32>
    %26 = vector.extract_strided_slice %7 {offsets = [0, 32], sizes = [8, 32], strides = [1, 1]} : vector<8x128xf32> to vector<8x32xf32>
    %27 = vector.extract_strided_slice %8 {offsets = [0, 32], sizes = [8, 32], strides = [1, 1]} : vector<8x128xf32> to vector<8x32xf32>
    %28 = tpu.transpose %26, [1, 0] : vector<8x32xf32> -> vector<32x8xf32>
    %cst_9 = arith.constant dense<0.000000e+00> : vector<8x8xf32>
    %29 = tpu.matmul %25, %28, %cst_9 {dimension_numbers = #tpu.dot_dimension_numbers<[1], [0], [0], [1], [0, 0, 1, 1], [], []>} : vector<8x32xf32>, vector<32x8xf32>, vector<8x8xf32> -> vector<8x8xf32>
    %cst_10 = arith.constant dense<0xFF800000> : vector<8xf32>
    %30 = vector.multi_reduction <maximumf>, %29, %cst_10 [1] : vector<8x8xf32> to vector<8xf32>
    %31 = vector.shape_cast %30 : vector<8xf32> to vector<8x1xf32>
    %32 = vector.broadcast %31 : vector<8x1xf32> to vector<8x8xf32>
    %33 = arith.subf %29, %32 : vector<8x8xf32>
    %34 = math.exp %33 : vector<8x8xf32>
    %cst_11 = arith.constant dense<0.000000e+00> : vector<8xf32>
    %35 = vector.multi_reduction <add>, %34, %cst_11 [1] : vector<8x8xf32> to vector<8xf32>
    %36 = vector.shape_cast %35 : vector<8xf32> to vector<8x1xf32>
    %37 = tpu.reciprocal %36 {approx = true} : vector<8x1xf32> -> vector<8x1xf32>
    %38 = vector.broadcast %37 : vector<8x1xf32> to vector<8x8xf32>
    %39 = arith.mulf %34, %38 : vector<8x8xf32>
    %cst_12 = arith.constant dense<0.000000e+00> : vector<8x32xf32>
    %40 = tpu.matmul %39, %27, %cst_12 {dimension_numbers = #tpu.dot_dimension_numbers<[1], [0], [0], [1], [0, 0, 1, 1], [], []>} : vector<8x8xf32>, vector<8x32xf32>, vector<8x32xf32> -> vector<8x32xf32>
    %41 = vector.extract_strided_slice %6 {offsets = [0, 64], sizes = [8, 32], strides = [1, 1]} : vector<8x128xf32> to vector<8x32xf32>
    %42 = vector.extract_strided_slice %7 {offsets = [0, 64], sizes = [8, 32], strides = [1, 1]} : vector<8x128xf32> to vector<8x32xf32>
    %43 = vector.extract_strided_slice %8 {offsets = [0, 64], sizes = [8, 32], strides = [1, 1]} : vector<8x128xf32> to vector<8x32xf32>
    %44 = tpu.transpose %42, [1, 0] : vector<8x32xf32> -> vector<32x8xf32>
    %cst_13 = arith.constant dense<0.000000e+00> : vector<8x8xf32>
    %45 = tpu.matmul %41, %44, %cst_13 {dimension_numbers = #tpu.dot_dimension_numbers<[1], [0], [0], [1], [0, 0, 1, 1], [], []>} : vector<8x32xf32>, vector<32x8xf32>, vector<8x8xf32> -> vector<8x8xf32>
    %cst_14 = arith.constant dense<0xFF800000> : vector<8xf32>
    %46 = vector.multi_reduction <maximumf>, %45, %cst_14 [1] : vector<8x8xf32> to vector<8xf32>
    %47 = vector.shape_cast %46 : vector<8xf32> to vector<8x1xf32>
    %48 = vector.broadcast %47 : vector<8x1xf32> to vector<8x8xf32>
    %49 = arith.subf %45, %48 : vector<8x8xf32>
    %50 = math.exp %49 : vector<8x8xf32>
    %cst_15 = arith.constant dense<0.000000e+00> : vector<8xf32>
    %51 = vector.multi_reduction <add>, %50, %cst_15 [1] : vector<8x8xf32> to vector<8xf32>
    %52 = vector.shape_cast %51 : vector<8xf32> to vector<8x1xf32>
    %53 = tpu.reciprocal %52 {approx = true} : vector<8x1xf32> -> vector<8x1xf32>
    %54 = vector.broadcast %53 : vector<8x1xf32> to vector<8x8xf32>
    %55 = arith.mulf %50, %54 : vector<8x8xf32>
    %cst_16 = arith.constant dense<0.000000e+00> : vector<8x32xf32>
    %56 = tpu.matmul %55, %43, %cst_16 {dimension_numbers = #tpu.dot_dimension_numbers<[1], [0], [0], [1], [0, 0, 1, 1], [], []>} : vector<8x8xf32>, vector<8x32xf32>, vector<8x32xf32> -> vector<8x32xf32>
    %57 = vector.extract_strided_slice %6 {offsets = [0, 96], sizes = [8, 32], strides = [1, 1]} : vector<8x128xf32> to vector<8x32xf32>
    %58 = vector.extract_strided_slice %7 {offsets = [0, 96], sizes = [8, 32], strides = [1, 1]} : vector<8x128xf32> to vector<8x32xf32>
    %59 = vector.extract_strided_slice %8 {offsets = [0, 96], sizes = [8, 32], strides = [1, 1]} : vector<8x128xf32> to vector<8x32xf32>
    %60 = tpu.transpose %58, [1, 0] : vector<8x32xf32> -> vector<32x8xf32>
    %cst_17 = arith.constant dense<0.000000e+00> : vector<8x8xf32>
    %61 = tpu.matmul %57, %60, %cst_17 {dimension_numbers = #tpu.dot_dimension_numbers<[1], [0], [0], [1], [0, 0, 1, 1], [], []>} : vector<8x32xf32>, vector<32x8xf32>, vector<8x8xf32> -> vector<8x8xf32>
    %cst_18 = arith.constant dense<0xFF800000> : vector<8xf32>
    %62 = vector.multi_reduction <maximumf>, %61, %cst_18 [1] : vector<8x8xf32> to vector<8xf32>
    %63 = vector.shape_cast %62 : vector<8xf32> to vector<8x1xf32>
    %64 = vector.broadcast %63 : vector<8x1xf32> to vector<8x8xf32>
    %65 = arith.subf %61, %64 : vector<8x8xf32>
    %66 = math.exp %65 : vector<8x8xf32>
    %cst_19 = arith.constant dense<0.000000e+00> : vector<8xf32>
    %67 = vector.multi_reduction <add>, %66, %cst_19 [1] : vector<8x8xf32> to vector<8xf32>
    %68 = vector.shape_cast %67 : vector<8xf32> to vector<8x1xf32>
    %69 = tpu.reciprocal %68 {approx = true} : vector<8x1xf32> -> vector<8x1xf32>
    %70 = vector.broadcast %69 : vector<8x1xf32> to vector<8x8xf32>
    %71 = arith.mulf %66, %70 : vector<8x8xf32>
    %cst_20 = arith.constant dense<0.000000e+00> : vector<8x32xf32>
    %72 = tpu.matmul %71, %59, %cst_20 {dimension_numbers = #tpu.dot_dimension_numbers<[1], [0], [0], [1], [0, 0, 1, 1], [], []>} : vector<8x8xf32>, vector<8x32xf32>, vector<8x32xf32> -> vector<8x32xf32>
    %73 = tpu.concatenate %24, %40, %56, %72 in 1 : vector<8x32xf32>, vector<8x32xf32>, vector<8x32xf32>, vector<8x32xf32> -> vector<8x128xf32>
    %c0_21 = arith.constant 0 : index
    %c0_22 = arith.constant 0 : index
    %74 = vector.load %arg4[%c0_21, %c0_22] : memref<128x128xf32, #tpu.memory_space<vmem>>, vector<128x128xf32>
    %cst_23 = arith.constant dense<0.000000e+00> : vector<8x128xf32>
    %75 = tpu.matmul %73, %74, %cst_23 {dimension_numbers = #tpu.dot_dimension_numbers<[1], [0], [0], [1], [0, 0, 1, 1], [], []>} : vector<8x128xf32>, vector<128x128xf32>, vector<8x128xf32> -> vector<8x128xf32>
    %c0_24 = arith.constant 0 : index
    %c0_25 = arith.constant 0 : index
    %76 = vector.load %arg5[%c0_24, %c0_25] : memref<1x128xf32, #tpu.memory_space<vmem>>, vector<1x128xf32>
    %77 = vector.broadcast %76 : vector<1x128xf32> to vector<8x128xf32>
    %78 = arith.addf %75, %77 : vector<8x128xf32>
    %79 = arith.addf %0, %78 : vector<8x128xf32>
    %c0_26 = arith.constant 0 : index
    %c0_27 = arith.constant 0 : index
    %80 = vector.load %arg6[%c0_26, %c0_27] : memref<1x128xf32, #tpu.memory_space<vmem>>, vector<1x128xf32>
    %c0_28 = arith.constant 0 : index
    %c0_29 = arith.constant 0 : index
    %81 = vector.load %arg7[%c0_28, %c0_29] : memref<1x128xf32, #tpu.memory_space<vmem>>, vector<1x128xf32>
    %cst_30 = arith.constant dense<0.000000e+00> : vector<8xf32>
    %82 = vector.multi_reduction <add>, %79, %cst_30 [1] : vector<8x128xf32> to vector<8xf32>
    %83 = vector.shape_cast %82 : vector<8xf32> to vector<8x1xf32>
    %cst_31 = arith.constant 1.280000e+02 : f32
    %84 = vector.broadcast %cst_31 : f32 to vector<8x1xf32>
    %85 = arith.divf %83, %84 : vector<8x1xf32>
    %86 = vector.broadcast %85 : vector<8x1xf32> to vector<8x128xf32>
    %87 = arith.subf %79, %86 : vector<8x128xf32>
    %88 = arith.mulf %87, %87 : vector<8x128xf32>
    %cst_32 = arith.constant dense<0.000000e+00> : vector<8xf32>
    %89 = vector.multi_reduction <add>, %88, %cst_32 [1] : vector<8x128xf32> to vector<8xf32>
    %90 = vector.shape_cast %89 : vector<8xf32> to vector<8x1xf32>
    %cst_33 = arith.constant 1.280000e+02 : f32
    %91 = vector.broadcast %cst_33 : f32 to vector<8x1xf32>
    %92 = arith.divf %90, %91 : vector<8x1xf32>
    %cst_34 = arith.constant 9.99999974E-6 : f32
    %93 = vector.broadcast %cst_34 : f32 to vector<8x1xf32>
    %94 = arith.addf %92, %93 : vector<8x1xf32>
    %95 = math.rsqrt %94 : vector<8x1xf32>
    %96 = vector.broadcast %95 : vector<8x1xf32> to vector<8x128xf32>
    %97 = arith.mulf %87, %96 : vector<8x128xf32>
    %98 = vector.broadcast %80 : vector<1x128xf32> to vector<8x128xf32>
    %99 = arith.mulf %97, %98 : vector<8x128xf32>
    %100 = vector.broadcast %81 : vector<1x128xf32> to vector<8x128xf32>
    %101 = arith.addf %99, %100 : vector<8x128xf32>
    %c0_35 = arith.constant 0 : index
    %c0_36 = arith.constant 0 : index
    %102 = vector.load %arg8[%c0_35, %c0_36] : memref<128x512xf32, #tpu.memory_space<vmem>>, vector<128x512xf32>
    %cst_37 = arith.constant dense<0.000000e+00> : vector<8x512xf32>
    %103 = tpu.matmul %101, %102, %cst_37 {dimension_numbers = #tpu.dot_dimension_numbers<[1], [0], [0], [1], [0, 0, 1, 1], [], []>} : vector<8x128xf32>, vector<128x512xf32>, vector<8x512xf32> -> vector<8x512xf32>
    %c0_38 = arith.constant 0 : index
    %c0_39 = arith.constant 0 : index
    %104 = vector.load %arg9[%c0_38, %c0_39] : memref<1x512xf32, #tpu.memory_space<vmem>>, vector<1x512xf32>
    %105 = vector.broadcast %104 : vector<1x512xf32> to vector<8x512xf32>
    %106 = arith.addf %103, %105 : vector<8x512xf32>
    %cst_40 = arith.constant 0.000000e+00 : f32
    %107 = vector.broadcast %cst_40 : f32 to vector<8x512xf32>
    %108 = arith.maximumf %106, %107 : vector<8x512xf32>
    %c0_41 = arith.constant 0 : index
    %c0_42 = arith.constant 0 : index
    %109 = vector.load %arg10[%c0_41, %c0_42] : memref<512x128xf32, #tpu.memory_space<vmem>>, vector<512x128xf32>
    %cst_43 = arith.constant dense<0.000000e+00> : vector<8x128xf32>
    %110 = tpu.matmul %108, %109, %cst_43 {dimension_numbers = #tpu.dot_dimension_numbers<[1], [0], [0], [1], [0, 0, 1, 1], [], []>} : vector<8x512xf32>, vector<512x128xf32>, vector<8x128xf32> -> vector<8x128xf32>
    %c0_44 = arith.constant 0 : index
    %c0_45 = arith.constant 0 : index
    %111 = vector.load %arg11[%c0_44, %c0_45] : memref<1x128xf32, #tpu.memory_space<vmem>>, vector<1x128xf32>
    %112 = vector.broadcast %111 : vector<1x128xf32> to vector<8x128xf32>
    %113 = arith.addf %110, %112 : vector<8x128xf32>
    %114 = arith.addf %101, %113 : vector<8x128xf32>
    %c0_46 = arith.constant 0 : index
    %c0_47 = arith.constant 0 : index
    %115 = vector.load %arg12[%c0_46, %c0_47] : memref<1x128xf32, #tpu.memory_space<vmem>>, vector<1x128xf32>
    %c0_48 = arith.constant 0 : index
    %c0_49 = arith.constant 0 : index
    %116 = vector.load %arg13[%c0_48, %c0_49] : memref<1x128xf32, #tpu.memory_space<vmem>>, vector<1x128xf32>
    %cst_50 = arith.constant dense<0.000000e+00> : vector<8xf32>
    %117 = vector.multi_reduction <add>, %114, %cst_50 [1] : vector<8x128xf32> to vector<8xf32>
    %118 = vector.shape_cast %117 : vector<8xf32> to vector<8x1xf32>
    %cst_51 = arith.constant 1.280000e+02 : f32
    %119 = vector.broadcast %cst_51 : f32 to vector<8x1xf32>
    %120 = arith.divf %118, %119 : vector<8x1xf32>
    %121 = vector.broadcast %120 : vector<8x1xf32> to vector<8x128xf32>
    %122 = arith.subf %114, %121 : vector<8x128xf32>
    %123 = arith.mulf %122, %122 : vector<8x128xf32>
    %cst_52 = arith.constant dense<0.000000e+00> : vector<8xf32>
    %124 = vector.multi_reduction <add>, %123, %cst_52 [1] : vector<8x128xf32> to vector<8xf32>
    %125 = vector.shape_cast %124 : vector<8xf32> to vector<8x1xf32>
    %cst_53 = arith.constant 1.280000e+02 : f32
    %126 = vector.broadcast %cst_53 : f32 to vector<8x1xf32>
    %127 = arith.divf %125, %126 : vector<8x1xf32>
    %cst_54 = arith.constant 9.99999974E-6 : f32
    %128 = vector.broadcast %cst_54 : f32 to vector<8x1xf32>
    %129 = arith.addf %127, %128 : vector<8x1xf32>
    %130 = math.rsqrt %129 : vector<8x1xf32>
    %131 = vector.broadcast %130 : vector<8x1xf32> to vector<8x128xf32>
    %132 = arith.mulf %122, %131 : vector<8x128xf32>
    %133 = vector.broadcast %115 : vector<1x128xf32> to vector<8x128xf32>
    %134 = arith.mulf %132, %133 : vector<8x128xf32>
    %135 = vector.broadcast %116 : vector<1x128xf32> to vector<8x128xf32>
    %136 = arith.addf %134, %135 : vector<8x128xf32>
    %c0_55 = arith.constant 0 : index
    %c0_56 = arith.constant 0 : index
    %137 = vector.load %arg14[%c0_55, %c0_56] : memref<8x128xf32, #tpu.memory_space<vmem>>, vector<8x128xf32>
    tpu.vector_store %arg14[%c0_55, %c0_56], %136 {strides = array<i32>} : memref<8x128xf32, #tpu.memory_space<vmem>>, vector<8x128xf32>,
    return
  }
  func.func @transform_0(%arg0: i32) -> (i32, i32) {
    %c0_i32 = arith.constant 0 : i32
    %c0_i32_0 = arith.constant 0 : i32
    return %arg0, %c0_i32 : i32, i32
  }
  func.func @transform_1(%arg0: i32) -> (i32, i32) {
    %c0_i32 = arith.constant 0 : i32
    %c0_i32_0 = arith.constant 0 : i32
    %c0_i32_1 = arith.constant 0 : i32
    return %c0_i32, %c0_i32_0 : i32, i32
  }
  func.func @transform_2(%arg0: i32) -> (i32, i32) {
    %c0_i32 = arith.constant 0 : i32
    %c0_i32_0 = arith.constant 0 : i32
    %c0_i32_1 = arith.constant 0 : i32
    return %c0_i32, %c0_i32_0 : i32, i32
  }
  func.func @transform_3(%arg0: i32) -> (i32, i32) {
    %c0_i32 = arith.constant 0 : i32
    %c0_i32_0 = arith.constant 0 : i32
    %c0_i32_1 = arith.constant 0 : i32
    return %c0_i32, %c0_i32_0 : i32, i32
  }
  func.func @transform_4(%arg0: i32) -> (i32, i32) {
    %c0_i32 = arith.constant 0 : i32
    %c0_i32_0 = arith.constant 0 : i32
    %c0_i32_1 = arith.constant 0 : i32
    return %c0_i32, %c0_i32_0 : i32, i32
  }
  func.func @transform_5(%arg0: i32) -> (i32, i32) {
    %c0_i32 = arith.constant 0 : i32
    %c0_i32_0 = arith.constant 0 : i32
    %c0_i32_1 = arith.constant 0 : i32
    return %c0_i32, %c0_i32_0 : i32, i32
  }
  func.func @transform_6(%arg0: i32) -> (i32, i32) {
    %c0_i32 = arith.constant 0 : i32
    %c0_i32_0 = arith.constant 0 : i32
    %c0_i32_1 = arith.constant 0 : i32
    return %c0_i32, %c0_i32_0 : i32, i32
  }
  func.func @transform_7(%arg0: i32) -> (i32, i32) {
    %c0_i32 = arith.constant 0 : i32
    %c0_i32_0 = arith.constant 0 : i32
    %c0_i32_1 = arith.constant 0 : i32
    return %c0_i32, %c0_i32_0 : i32, i32
  }
  func.func @transform_8(%arg0: i32) -> (i32, i32) {
    %c0_i32 = arith.constant 0 : i32
    %c0_i32_0 = arith.constant 0 : i32
    %c0_i32_1 = arith.constant 0 : i32
    return %c0_i32, %c0_i32_0 : i32, i32
  }
  func.func @transform_9(%arg0: i32) -> (i32, i32) {
    %c0_i32 = arith.constant 0 : i32
    %c0_i32_0 = arith.constant 0 : i32
    %c0_i32_1 = arith.constant 0 : i32
    return %c0_i32, %c0_i32_0 : i32, i32
  }
  func.func @transform_10(%arg0: i32) -> (i32, i32) {
    %c0_i32 = arith.constant 0 : i32
    %c0_i32_0 = arith.constant 0 : i32
    %c0_i32_1 = arith.constant 0 : i32
    return %c0_i32, %c0_i32_0 : i32, i32
  }
  func.func @transform_11(%arg0: i32) -> (i32, i32) {
    %c0_i32 = arith.constant 0 : i32
    %c0_i32_0 = arith.constant 0 : i32
    %c0_i32_1 = arith.constant 0 : i32
    return %c0_i32, %c0_i32_0 : i32, i32
  }
  func.func @transform_12(%arg0: i32) -> (i32, i32) {
    %c0_i32 = arith.constant 0 : i32
    %c0_i32_0 = arith.constant 0 : i32
    %c0_i32_1 = arith.constant 0 : i32
    return %c0_i32, %c0_i32_0 : i32, i32
  }
  func.func @transform_13(%arg0: i32) -> (i32, i32) {
    %c0_i32 = arith.constant 0 : i32
    %c0_i32_0 = arith.constant 0 : i32
    return %arg0, %c0_i32 : i32, i32
  }
}

module attributes {stable_mosaic.version = 11 : i64} {
  func.func @_layernorm_kernel(%arg0: memref<16x128xf32, #tpu.memory_space<vmem>>, %arg1: memref<1x128xf32, #tpu.memory_space<vmem>>, %arg2: memref<1x128xf32, #tpu.memory_space<vmem>>, %arg3: memref<16x128xf32, #tpu.memory_space<vmem>>) attributes {dimension_semantics = [], scalar_prefetch = 0 : i64, scratch_operands = 0 : i64, tpu.core_type = #tpu.core_type<tc>} {
    %c0 = arith.constant 0 : index
    %c0_0 = arith.constant 0 : index
    %0 = vector.load %arg0[%c0, %c0_0] : memref<16x128xf32, #tpu.memory_space<vmem>>, vector<16x128xf32>
    %c0_1 = arith.constant 0 : index
    %c0_2 = arith.constant 0 : index
    %1 = vector.load %arg1[%c0_1, %c0_2] : memref<1x128xf32, #tpu.memory_space<vmem>>, vector<1x128xf32>
    %c0_3 = arith.constant 0 : index
    %c0_4 = arith.constant 0 : index
    %2 = vector.load %arg2[%c0_3, %c0_4] : memref<1x128xf32, #tpu.memory_space<vmem>>, vector<1x128xf32>
    %cst = arith.constant dense<0.000000e+00> : vector<16xf32>
    %3 = vector.multi_reduction <add>, %0, %cst [1] : vector<16x128xf32> to vector<16xf32>
    %4 = vector.shape_cast %3 : vector<16xf32> to vector<16x1xf32>
    %cst_5 = arith.constant 1.280000e+02 : f32
    %5 = vector.broadcast %cst_5 : f32 to vector<16x1xf32>
    %6 = arith.divf %4, %5 : vector<16x1xf32>
    %7 = vector.broadcast %6 : vector<16x1xf32> to vector<16x128xf32>
    %8 = arith.subf %0, %7 : vector<16x128xf32>
    %9 = arith.mulf %8, %8 : vector<16x128xf32>
    %cst_6 = arith.constant dense<0.000000e+00> : vector<16xf32>
    %10 = vector.multi_reduction <add>, %9, %cst_6 [1] : vector<16x128xf32> to vector<16xf32>
    %11 = vector.shape_cast %10 : vector<16xf32> to vector<16x1xf32>
    %cst_7 = arith.constant 1.280000e+02 : f32
    %12 = vector.broadcast %cst_7 : f32 to vector<16x1xf32>
    %13 = arith.divf %11, %12 : vector<16x1xf32>
    %cst_8 = arith.constant 9.99999974E-6 : f32
    %14 = vector.broadcast %cst_8 : f32 to vector<16x1xf32>
    %15 = arith.addf %13, %14 : vector<16x1xf32>
    %16 = math.rsqrt %15 : vector<16x1xf32>
    %17 = vector.broadcast %16 : vector<16x1xf32> to vector<16x128xf32>
    %18 = arith.mulf %8, %17 : vector<16x128xf32>
    %19 = vector.broadcast %1 : vector<1x128xf32> to vector<16x128xf32>
    %20 = arith.mulf %18, %19 : vector<16x128xf32>
    %21 = vector.broadcast %2 : vector<1x128xf32> to vector<16x128xf32>
    %22 = arith.addf %20, %21 : vector<16x128xf32>
    %c0_9 = arith.constant 0 : index
    %c0_10 = arith.constant 0 : index
    %23 = vector.load %arg3[%c0_9, %c0_10] : memref<16x128xf32, #tpu.memory_space<vmem>>, vector<16x128xf32>
    tpu.vector_store %arg3[%c0_9, %c0_10], %22 {strides = array<i32>} : memref<16x128xf32, #tpu.memory_space<vmem>>, vector<16x128xf32>,
    return
  }
}

module attributes {stable_mosaic.version = 11 : i64} {
  func.func @_dec_layer_kernel(%arg0: i32, %arg1: memref<8x128xf32, #tpu.memory_space<vmem>>, %arg2: memref<8x128xf32, #tpu.memory_space<vmem>>, %arg3: memref<128x384xf32, #tpu.memory_space<vmem>>, %arg4: memref<1x384xf32, #tpu.memory_space<vmem>>, %arg5: memref<128x128xf32, #tpu.memory_space<vmem>>, %arg6: memref<1x128xf32, #tpu.memory_space<vmem>>, %arg7: memref<1x128xf32, #tpu.memory_space<vmem>>, %arg8: memref<1x128xf32, #tpu.memory_space<vmem>>, %arg9: memref<128x128xf32, #tpu.memory_space<vmem>>, %arg10: memref<1x128xf32, #tpu.memory_space<vmem>>, %arg11: memref<128x256xf32, #tpu.memory_space<vmem>>, %arg12: memref<1x256xf32, #tpu.memory_space<vmem>>, %arg13: memref<128x128xf32, #tpu.memory_space<vmem>>, %arg14: memref<1x128xf32, #tpu.memory_space<vmem>>, %arg15: memref<1x128xf32, #tpu.memory_space<vmem>>, %arg16: memref<1x128xf32, #tpu.memory_space<vmem>>, %arg17: memref<128x512xf32, #tpu.memory_space<vmem>>, %arg18: memref<1x512xf32, #tpu.memory_space<vmem>>, %arg19: memref<512x128xf32, #tpu.memory_space<vmem>>, %arg20: memref<1x128xf32, #tpu.memory_space<vmem>>, %arg21: memref<1x128xf32, #tpu.memory_space<vmem>>, %arg22: memref<1x128xf32, #tpu.memory_space<vmem>>, %arg23: memref<8x128xf32, #tpu.memory_space<vmem>>) attributes {dimension_semantics = [#tpu.dimension_semantics<parallel>], iteration_bounds = array<i64: 2>, scalar_prefetch = 0 : i64, scratch_operands = 0 : i64, tpu.core_type = #tpu.core_type<tc>, window_params = [{transform_indices = @transform_0, window_bounds = array<i64: 8, 128>}, {transform_indices = @transform_1, window_bounds = array<i64: 8, 128>}, {pipeline_mode = #tpu.pipeline_mode<synchronous>, transform_indices = @transform_2, window_bounds = array<i64: 128, 384>}, {pipeline_mode = #tpu.pipeline_mode<synchronous>, transform_indices = @transform_3, window_bounds = array<i64: 1, 384>}, {pipeline_mode = #tpu.pipeline_mode<synchronous>, transform_indices = @transform_4, window_bounds = array<i64: 128, 128>}, {pipeline_mode = #tpu.pipeline_mode<synchronous>, transform_indices = @transform_5, window_bounds = array<i64: 1, 128>}, {pipeline_mode = #tpu.pipeline_mode<synchronous>, transform_indices = @transform_6, window_bounds = array<i64: 1, 128>}, {pipeline_mode = #tpu.pipeline_mode<synchronous>, transform_indices = @transform_7, window_bounds = array<i64: 1, 128>}, {pipeline_mode = #tpu.pipeline_mode<synchronous>, transform_indices = @transform_8, window_bounds = array<i64: 128, 128>}, {pipeline_mode = #tpu.pipeline_mode<synchronous>, transform_indices = @transform_9, window_bounds = array<i64: 1, 128>}, {pipeline_mode = #tpu.pipeline_mode<synchronous>, transform_indices = @transform_10, window_bounds = array<i64: 128, 256>}, {pipeline_mode = #tpu.pipeline_mode<synchronous>, transform_indices = @transform_11, window_bounds = array<i64: 1, 256>}, {pipeline_mode = #tpu.pipeline_mode<synchronous>, transform_indices = @transform_12, window_bounds = array<i64: 128, 128>}, {pipeline_mode = #tpu.pipeline_mode<synchronous>, transform_indices = @transform_13, window_bounds = array<i64: 1, 128>}, {pipeline_mode = #tpu.pipeline_mode<synchronous>, transform_indices = @transform_14, window_bounds = array<i64: 1, 128>}, {pipeline_mode = #tpu.pipeline_mode<synchronous>, transform_indices = @transform_15, window_bounds = array<i64: 1, 128>}, {pipeline_mode = #tpu.pipeline_mode<synchronous>, transform_indices = @transform_16, window_bounds = array<i64: 128, 512>}, {pipeline_mode = #tpu.pipeline_mode<synchronous>, transform_indices = @transform_17, window_bounds = array<i64: 1, 512>}, {pipeline_mode = #tpu.pipeline_mode<synchronous>, transform_indices = @transform_18, window_bounds = array<i64: 512, 128>}, {pipeline_mode = #tpu.pipeline_mode<synchronous>, transform_indices = @transform_19, window_bounds = array<i64: 1, 128>}, {pipeline_mode = #tpu.pipeline_mode<synchronous>, transform_indices = @transform_20, window_bounds = array<i64: 1, 128>}, {pipeline_mode = #tpu.pipeline_mode<synchronous>, transform_indices = @transform_21, window_bounds = array<i64: 1, 128>}, {transform_indices = @transform_22, window_bounds = array<i64: 8, 128>}]} {
    %c0 = arith.constant 0 : index
    %c0_0 = arith.constant 0 : index
    %0 = vector.load %arg1[%c0, %c0_0] : memref<8x128xf32, #tpu.memory_space<vmem>>, vector<8x128xf32>
    %c0_1 = arith.constant 0 : index
    %c0_2 = arith.constant 0 : index
    %1 = vector.load %arg2[%c0_1, %c0_2] : memref<8x128xf32, #tpu.memory_space<vmem>>, vector<8x128xf32>
    %c0_3 = arith.constant 0 : index
    %c0_4 = arith.constant 0 : index
    %2 = vector.load %arg3[%c0_3, %c0_4] : memref<128x384xf32, #tpu.memory_space<vmem>>, vector<128x384xf32>
    %cst = arith.constant dense<0.000000e+00> : vector<8x384xf32>
    %3 = tpu.matmul %0, %2, %cst {dimension_numbers = #tpu.dot_dimension_numbers<[1], [0], [0], [1], [0, 0, 1, 1], [], []>} : vector<8x128xf32>, vector<128x384xf32>, vector<8x384xf32> -> vector<8x384xf32>
    %c0_5 = arith.constant 0 : index
    %c0_6 = arith.constant 0 : index
    %4 = vector.load %arg4[%c0_5, %c0_6] : memref<1x384xf32, #tpu.memory_space<vmem>>, vector<1x384xf32>
    %5 = vector.broadcast %4 : vector<1x384xf32> to vector<8x384xf32>
    %6 = arith.addf %3, %5 : vector<8x384xf32>
    %7 = tpu.iota {dimensions = array<i32: 0>} : vector<8x8xi32>
    %8 = tpu.iota {dimensions = array<i32: 1>} : vector<8x8xi32>
    %9 = arith.cmpi sgt, %8, %7 : vector<8x8xi32>
    %cst_7 = arith.constant -1.000000e+09 : f32
    %cst_8 = arith.constant 0.000000e+00 : f32
    %10 = vector.broadcast %cst_7 : f32 to vector<8x8xf32>
    %11 = vector.broadcast %cst_8 : f32 to vector<8x8xf32>
    %12 = arith.select %9, %10, %11 : vector<8x8xi1>, vector<8x8xf32>
    %13 = vector.extract_strided_slice %6 {offsets = [0, 0], sizes = [8, 128], strides = [1, 1]} : vector<8x384xf32> to vector<8x128xf32>
    %14 = vector.extract_strided_slice %6 {offsets = [0, 128], sizes = [8, 128], strides = [1, 1]} : vector<8x384xf32> to vector<8x128xf32>
    %15 = vector.extract_strided_slice %6 {offsets = [0, 256], sizes = [8, 128], strides = [1, 1]} : vector<8x384xf32> to vector<8x128xf32>
    %16 = vector.extract_strided_slice %13 {offsets = [0, 0], sizes = [8, 32], strides = [1, 1]} : vector<8x128xf32> to vector<8x32xf32>
    %17 = vector.extract_strided_slice %14 {offsets = [0, 0], sizes = [8, 32], strides = [1, 1]} : vector<8x128xf32> to vector<8x32xf32>
    %18 = vector.extract_strided_slice %15 {offsets = [0, 0], sizes = [8, 32], strides = [1, 1]} : vector<8x128xf32> to vector<8x32xf32>
    %19 = tpu.transpose %17, [1, 0] : vector<8x32xf32> -> vector<32x8xf32>
    %cst_9 = arith.constant dense<0.000000e+00> : vector<8x8xf32>
    %20 = tpu.matmul %16, %19, %cst_9 {dimension_numbers = #tpu.dot_dimension_numbers<[1], [0], [0], [1], [0, 0, 1, 1], [], []>} : vector<8x32xf32>, vector<32x8xf32>, vector<8x8xf32> -> vector<8x8xf32>
    %21 = arith.addf %20, %12 : vector<8x8xf32>
    %cst_10 = arith.constant dense<0xFF800000> : vector<8xf32>
    %22 = vector.multi_reduction <maximumf>, %21, %cst_10 [1] : vector<8x8xf32> to vector<8xf32>
    %23 = vector.shape_cast %22 : vector<8xf32> to vector<8x1xf32>
    %24 = vector.broadcast %23 : vector<8x1xf32> to vector<8x8xf32>
    %25 = arith.subf %21, %24 : vector<8x8xf32>
    %26 = math.exp %25 : vector<8x8xf32>
    %cst_11 = arith.constant dense<0.000000e+00> : vector<8xf32>
    %27 = vector.multi_reduction <add>, %26, %cst_11 [1] : vector<8x8xf32> to vector<8xf32>
    %28 = vector.shape_cast %27 : vector<8xf32> to vector<8x1xf32>
    %29 = tpu.reciprocal %28 {approx = true} : vector<8x1xf32> -> vector<8x1xf32>
    %30 = vector.broadcast %29 : vector<8x1xf32> to vector<8x8xf32>
    %31 = arith.mulf %26, %30 : vector<8x8xf32>
    %cst_12 = arith.constant dense<0.000000e+00> : vector<8x32xf32>
    %32 = tpu.matmul %31, %18, %cst_12 {dimension_numbers = #tpu.dot_dimension_numbers<[1], [0], [0], [1], [0, 0, 1, 1], [], []>} : vector<8x8xf32>, vector<8x32xf32>, vector<8x32xf32> -> vector<8x32xf32>
    %33 = vector.extract_strided_slice %13 {offsets = [0, 32], sizes = [8, 32], strides = [1, 1]} : vector<8x128xf32> to vector<8x32xf32>
    %34 = vector.extract_strided_slice %14 {offsets = [0, 32], sizes = [8, 32], strides = [1, 1]} : vector<8x128xf32> to vector<8x32xf32>
    %35 = vector.extract_strided_slice %15 {offsets = [0, 32], sizes = [8, 32], strides = [1, 1]} : vector<8x128xf32> to vector<8x32xf32>
    %36 = tpu.transpose %34, [1, 0] : vector<8x32xf32> -> vector<32x8xf32>
    %cst_13 = arith.constant dense<0.000000e+00> : vector<8x8xf32>
    %37 = tpu.matmul %33, %36, %cst_13 {dimension_numbers = #tpu.dot_dimension_numbers<[1], [0], [0], [1], [0, 0, 1, 1], [], []>} : vector<8x32xf32>, vector<32x8xf32>, vector<8x8xf32> -> vector<8x8xf32>
    %38 = arith.addf %37, %12 : vector<8x8xf32>
    %cst_14 = arith.constant dense<0xFF800000> : vector<8xf32>
    %39 = vector.multi_reduction <maximumf>, %38, %cst_14 [1] : vector<8x8xf32> to vector<8xf32>
    %40 = vector.shape_cast %39 : vector<8xf32> to vector<8x1xf32>
    %41 = vector.broadcast %40 : vector<8x1xf32> to vector<8x8xf32>
    %42 = arith.subf %38, %41 : vector<8x8xf32>
    %43 = math.exp %42 : vector<8x8xf32>
    %cst_15 = arith.constant dense<0.000000e+00> : vector<8xf32>
    %44 = vector.multi_reduction <add>, %43, %cst_15 [1] : vector<8x8xf32> to vector<8xf32>
    %45 = vector.shape_cast %44 : vector<8xf32> to vector<8x1xf32>
    %46 = tpu.reciprocal %45 {approx = true} : vector<8x1xf32> -> vector<8x1xf32>
    %47 = vector.broadcast %46 : vector<8x1xf32> to vector<8x8xf32>
    %48 = arith.mulf %43, %47 : vector<8x8xf32>
    %cst_16 = arith.constant dense<0.000000e+00> : vector<8x32xf32>
    %49 = tpu.matmul %48, %35, %cst_16 {dimension_numbers = #tpu.dot_dimension_numbers<[1], [0], [0], [1], [0, 0, 1, 1], [], []>} : vector<8x8xf32>, vector<8x32xf32>, vector<8x32xf32> -> vector<8x32xf32>
    %50 = vector.extract_strided_slice %13 {offsets = [0, 64], sizes = [8, 32], strides = [1, 1]} : vector<8x128xf32> to vector<8x32xf32>
    %51 = vector.extract_strided_slice %14 {offsets = [0, 64], sizes = [8, 32], strides = [1, 1]} : vector<8x128xf32> to vector<8x32xf32>
    %52 = vector.extract_strided_slice %15 {offsets = [0, 64], sizes = [8, 32], strides = [1, 1]} : vector<8x128xf32> to vector<8x32xf32>
    %53 = tpu.transpose %51, [1, 0] : vector<8x32xf32> -> vector<32x8xf32>
    %cst_17 = arith.constant dense<0.000000e+00> : vector<8x8xf32>
    %54 = tpu.matmul %50, %53, %cst_17 {dimension_numbers = #tpu.dot_dimension_numbers<[1], [0], [0], [1], [0, 0, 1, 1], [], []>} : vector<8x32xf32>, vector<32x8xf32>, vector<8x8xf32> -> vector<8x8xf32>
    %55 = arith.addf %54, %12 : vector<8x8xf32>
    %cst_18 = arith.constant dense<0xFF800000> : vector<8xf32>
    %56 = vector.multi_reduction <maximumf>, %55, %cst_18 [1] : vector<8x8xf32> to vector<8xf32>
    %57 = vector.shape_cast %56 : vector<8xf32> to vector<8x1xf32>
    %58 = vector.broadcast %57 : vector<8x1xf32> to vector<8x8xf32>
    %59 = arith.subf %55, %58 : vector<8x8xf32>
    %60 = math.exp %59 : vector<8x8xf32>
    %cst_19 = arith.constant dense<0.000000e+00> : vector<8xf32>
    %61 = vector.multi_reduction <add>, %60, %cst_19 [1] : vector<8x8xf32> to vector<8xf32>
    %62 = vector.shape_cast %61 : vector<8xf32> to vector<8x1xf32>
    %63 = tpu.reciprocal %62 {approx = true} : vector<8x1xf32> -> vector<8x1xf32>
    %64 = vector.broadcast %63 : vector<8x1xf32> to vector<8x8xf32>
    %65 = arith.mulf %60, %64 : vector<8x8xf32>
    %cst_20 = arith.constant dense<0.000000e+00> : vector<8x32xf32>
    %66 = tpu.matmul %65, %52, %cst_20 {dimension_numbers = #tpu.dot_dimension_numbers<[1], [0], [0], [1], [0, 0, 1, 1], [], []>} : vector<8x8xf32>, vector<8x32xf32>, vector<8x32xf32> -> vector<8x32xf32>
    %67 = vector.extract_strided_slice %13 {offsets = [0, 96], sizes = [8, 32], strides = [1, 1]} : vector<8x128xf32> to vector<8x32xf32>
    %68 = vector.extract_strided_slice %14 {offsets = [0, 96], sizes = [8, 32], strides = [1, 1]} : vector<8x128xf32> to vector<8x32xf32>
    %69 = vector.extract_strided_slice %15 {offsets = [0, 96], sizes = [8, 32], strides = [1, 1]} : vector<8x128xf32> to vector<8x32xf32>
    %70 = tpu.transpose %68, [1, 0] : vector<8x32xf32> -> vector<32x8xf32>
    %cst_21 = arith.constant dense<0.000000e+00> : vector<8x8xf32>
    %71 = tpu.matmul %67, %70, %cst_21 {dimension_numbers = #tpu.dot_dimension_numbers<[1], [0], [0], [1], [0, 0, 1, 1], [], []>} : vector<8x32xf32>, vector<32x8xf32>, vector<8x8xf32> -> vector<8x8xf32>
    %72 = arith.addf %71, %12 : vector<8x8xf32>
    %cst_22 = arith.constant dense<0xFF800000> : vector<8xf32>
    %73 = vector.multi_reduction <maximumf>, %72, %cst_22 [1] : vector<8x8xf32> to vector<8xf32>
    %74 = vector.shape_cast %73 : vector<8xf32> to vector<8x1xf32>
    %75 = vector.broadcast %74 : vector<8x1xf32> to vector<8x8xf32>
    %76 = arith.subf %72, %75 : vector<8x8xf32>
    %77 = math.exp %76 : vector<8x8xf32>
    %cst_23 = arith.constant dense<0.000000e+00> : vector<8xf32>
    %78 = vector.multi_reduction <add>, %77, %cst_23 [1] : vector<8x8xf32> to vector<8xf32>
    %79 = vector.shape_cast %78 : vector<8xf32> to vector<8x1xf32>
    %80 = tpu.reciprocal %79 {approx = true} : vector<8x1xf32> -> vector<8x1xf32>
    %81 = vector.broadcast %80 : vector<8x1xf32> to vector<8x8xf32>
    %82 = arith.mulf %77, %81 : vector<8x8xf32>
    %cst_24 = arith.constant dense<0.000000e+00> : vector<8x32xf32>
    %83 = tpu.matmul %82, %69, %cst_24 {dimension_numbers = #tpu.dot_dimension_numbers<[1], [0], [0], [1], [0, 0, 1, 1], [], []>} : vector<8x8xf32>, vector<8x32xf32>, vector<8x32xf32> -> vector<8x32xf32>
    %84 = tpu.concatenate %32, %49, %66, %83 in 1 : vector<8x32xf32>, vector<8x32xf32>, vector<8x32xf32>, vector<8x32xf32> -> vector<8x128xf32>
    %c0_25 = arith.constant 0 : index
    %c0_26 = arith.constant 0 : index
    %85 = vector.load %arg5[%c0_25, %c0_26] : memref<128x128xf32, #tpu.memory_space<vmem>>, vector<128x128xf32>
    %cst_27 = arith.constant dense<0.000000e+00> : vector<8x128xf32>
    %86 = tpu.matmul %84, %85, %cst_27 {dimension_numbers = #tpu.dot_dimension_numbers<[1], [0], [0], [1], [0, 0, 1, 1], [], []>} : vector<8x128xf32>, vector<128x128xf32>, vector<8x128xf32> -> vector<8x128xf32>
    %c0_28 = arith.constant 0 : index
    %c0_29 = arith.constant 0 : index
    %87 = vector.load %arg6[%c0_28, %c0_29] : memref<1x128xf32, #tpu.memory_space<vmem>>, vector<1x128xf32>
    %88 = vector.broadcast %87 : vector<1x128xf32> to vector<8x128xf32>
    %89 = arith.addf %86, %88 : vector<8x128xf32>
    %90 = arith.addf %0, %89 : vector<8x128xf32>
    %c0_30 = arith.constant 0 : index
    %c0_31 = arith.constant 0 : index
    %91 = vector.load %arg7[%c0_30, %c0_31] : memref<1x128xf32, #tpu.memory_space<vmem>>, vector<1x128xf32>
    %c0_32 = arith.constant 0 : index
    %c0_33 = arith.constant 0 : index
    %92 = vector.load %arg8[%c0_32, %c0_33] : memref<1x128xf32, #tpu.memory_space<vmem>>, vector<1x128xf32>
    %cst_34 = arith.constant dense<0.000000e+00> : vector<8xf32>
    %93 = vector.multi_reduction <add>, %90, %cst_34 [1] : vector<8x128xf32> to vector<8xf32>
    %94 = vector.shape_cast %93 : vector<8xf32> to vector<8x1xf32>
    %cst_35 = arith.constant 1.280000e+02 : f32
    %95 = vector.broadcast %cst_35 : f32 to vector<8x1xf32>
    %96 = arith.divf %94, %95 : vector<8x1xf32>
    %97 = vector.broadcast %96 : vector<8x1xf32> to vector<8x128xf32>
    %98 = arith.subf %90, %97 : vector<8x128xf32>
    %99 = arith.mulf %98, %98 : vector<8x128xf32>
    %cst_36 = arith.constant dense<0.000000e+00> : vector<8xf32>
    %100 = vector.multi_reduction <add>, %99, %cst_36 [1] : vector<8x128xf32> to vector<8xf32>
    %101 = vector.shape_cast %100 : vector<8xf32> to vector<8x1xf32>
    %cst_37 = arith.constant 1.280000e+02 : f32
    %102 = vector.broadcast %cst_37 : f32 to vector<8x1xf32>
    %103 = arith.divf %101, %102 : vector<8x1xf32>
    %cst_38 = arith.constant 9.99999974E-6 : f32
    %104 = vector.broadcast %cst_38 : f32 to vector<8x1xf32>
    %105 = arith.addf %103, %104 : vector<8x1xf32>
    %106 = math.rsqrt %105 : vector<8x1xf32>
    %107 = vector.broadcast %106 : vector<8x1xf32> to vector<8x128xf32>
    %108 = arith.mulf %98, %107 : vector<8x128xf32>
    %109 = vector.broadcast %91 : vector<1x128xf32> to vector<8x128xf32>
    %110 = arith.mulf %108, %109 : vector<8x128xf32>
    %111 = vector.broadcast %92 : vector<1x128xf32> to vector<8x128xf32>
    %112 = arith.addf %110, %111 : vector<8x128xf32>
    %c0_39 = arith.constant 0 : index
    %c0_40 = arith.constant 0 : index
    %113 = vector.load %arg9[%c0_39, %c0_40] : memref<128x128xf32, #tpu.memory_space<vmem>>, vector<128x128xf32>
    %cst_41 = arith.constant dense<0.000000e+00> : vector<8x128xf32>
    %114 = tpu.matmul %112, %113, %cst_41 {dimension_numbers = #tpu.dot_dimension_numbers<[1], [0], [0], [1], [0, 0, 1, 1], [], []>} : vector<8x128xf32>, vector<128x128xf32>, vector<8x128xf32> -> vector<8x128xf32>
    %c0_42 = arith.constant 0 : index
    %c0_43 = arith.constant 0 : index
    %115 = vector.load %arg10[%c0_42, %c0_43] : memref<1x128xf32, #tpu.memory_space<vmem>>, vector<1x128xf32>
    %116 = vector.broadcast %115 : vector<1x128xf32> to vector<8x128xf32>
    %117 = arith.addf %114, %116 : vector<8x128xf32>
    %c0_44 = arith.constant 0 : index
    %c0_45 = arith.constant 0 : index
    %118 = vector.load %arg11[%c0_44, %c0_45] : memref<128x256xf32, #tpu.memory_space<vmem>>, vector<128x256xf32>
    %cst_46 = arith.constant dense<0.000000e+00> : vector<8x256xf32>
    %119 = tpu.matmul %1, %118, %cst_46 {dimension_numbers = #tpu.dot_dimension_numbers<[1], [0], [0], [1], [0, 0, 1, 1], [], []>} : vector<8x128xf32>, vector<128x256xf32>, vector<8x256xf32> -> vector<8x256xf32>
    %c0_47 = arith.constant 0 : index
    %c0_48 = arith.constant 0 : index
    %120 = vector.load %arg12[%c0_47, %c0_48] : memref<1x256xf32, #tpu.memory_space<vmem>>, vector<1x256xf32>
    %121 = vector.broadcast %120 : vector<1x256xf32> to vector<8x256xf32>
    %122 = arith.addf %119, %121 : vector<8x256xf32>
    %123 = vector.extract_strided_slice %122 {offsets = [0, 0], sizes = [8, 128], strides = [1, 1]} : vector<8x256xf32> to vector<8x128xf32>
    %124 = vector.extract_strided_slice %122 {offsets = [0, 128], sizes = [8, 128], strides = [1, 1]} : vector<8x256xf32> to vector<8x128xf32>
    %125 = vector.extract_strided_slice %117 {offsets = [0, 0], sizes = [8, 32], strides = [1, 1]} : vector<8x128xf32> to vector<8x32xf32>
    %126 = vector.extract_strided_slice %123 {offsets = [0, 0], sizes = [8, 32], strides = [1, 1]} : vector<8x128xf32> to vector<8x32xf32>
    %127 = vector.extract_strided_slice %124 {offsets = [0, 0], sizes = [8, 32], strides = [1, 1]} : vector<8x128xf32> to vector<8x32xf32>
    %128 = tpu.transpose %126, [1, 0] : vector<8x32xf32> -> vector<32x8xf32>
    %cst_49 = arith.constant dense<0.000000e+00> : vector<8x8xf32>
    %129 = tpu.matmul %125, %128, %cst_49 {dimension_numbers = #tpu.dot_dimension_numbers<[1], [0], [0], [1], [0, 0, 1, 1], [], []>} : vector<8x32xf32>, vector<32x8xf32>, vector<8x8xf32> -> vector<8x8xf32>
    %cst_50 = arith.constant dense<0xFF800000> : vector<8xf32>
    %130 = vector.multi_reduction <maximumf>, %129, %cst_50 [1] : vector<8x8xf32> to vector<8xf32>
    %131 = vector.shape_cast %130 : vector<8xf32> to vector<8x1xf32>
    %132 = vector.broadcast %131 : vector<8x1xf32> to vector<8x8xf32>
    %133 = arith.subf %129, %132 : vector<8x8xf32>
    %134 = math.exp %133 : vector<8x8xf32>
    %cst_51 = arith.constant dense<0.000000e+00> : vector<8xf32>
    %135 = vector.multi_reduction <add>, %134, %cst_51 [1] : vector<8x8xf32> to vector<8xf32>
    %136 = vector.shape_cast %135 : vector<8xf32> to vector<8x1xf32>
    %137 = tpu.reciprocal %136 {approx = true} : vector<8x1xf32> -> vector<8x1xf32>
    %138 = vector.broadcast %137 : vector<8x1xf32> to vector<8x8xf32>
    %139 = arith.mulf %134, %138 : vector<8x8xf32>
    %cst_52 = arith.constant dense<0.000000e+00> : vector<8x32xf32>
    %140 = tpu.matmul %139, %127, %cst_52 {dimension_numbers = #tpu.dot_dimension_numbers<[1], [0], [0], [1], [0, 0, 1, 1], [], []>} : vector<8x8xf32>, vector<8x32xf32>, vector<8x32xf32> -> vector<8x32xf32>
    %141 = vector.extract_strided_slice %117 {offsets = [0, 32], sizes = [8, 32], strides = [1, 1]} : vector<8x128xf32> to vector<8x32xf32>
    %142 = vector.extract_strided_slice %123 {offsets = [0, 32], sizes = [8, 32], strides = [1, 1]} : vector<8x128xf32> to vector<8x32xf32>
    %143 = vector.extract_strided_slice %124 {offsets = [0, 32], sizes = [8, 32], strides = [1, 1]} : vector<8x128xf32> to vector<8x32xf32>
    %144 = tpu.transpose %142, [1, 0] : vector<8x32xf32> -> vector<32x8xf32>
    %cst_53 = arith.constant dense<0.000000e+00> : vector<8x8xf32>
    %145 = tpu.matmul %141, %144, %cst_53 {dimension_numbers = #tpu.dot_dimension_numbers<[1], [0], [0], [1], [0, 0, 1, 1], [], []>} : vector<8x32xf32>, vector<32x8xf32>, vector<8x8xf32> -> vector<8x8xf32>
    %cst_54 = arith.constant dense<0xFF800000> : vector<8xf32>
    %146 = vector.multi_reduction <maximumf>, %145, %cst_54 [1] : vector<8x8xf32> to vector<8xf32>
    %147 = vector.shape_cast %146 : vector<8xf32> to vector<8x1xf32>
    %148 = vector.broadcast %147 : vector<8x1xf32> to vector<8x8xf32>
    %149 = arith.subf %145, %148 : vector<8x8xf32>
    %150 = math.exp %149 : vector<8x8xf32>
    %cst_55 = arith.constant dense<0.000000e+00> : vector<8xf32>
    %151 = vector.multi_reduction <add>, %150, %cst_55 [1] : vector<8x8xf32> to vector<8xf32>
    %152 = vector.shape_cast %151 : vector<8xf32> to vector<8x1xf32>
    %153 = tpu.reciprocal %152 {approx = true} : vector<8x1xf32> -> vector<8x1xf32>
    %154 = vector.broadcast %153 : vector<8x1xf32> to vector<8x8xf32>
    %155 = arith.mulf %150, %154 : vector<8x8xf32>
    %cst_56 = arith.constant dense<0.000000e+00> : vector<8x32xf32>
    %156 = tpu.matmul %155, %143, %cst_56 {dimension_numbers = #tpu.dot_dimension_numbers<[1], [0], [0], [1], [0, 0, 1, 1], [], []>} : vector<8x8xf32>, vector<8x32xf32>, vector<8x32xf32> -> vector<8x32xf32>
    %157 = vector.extract_strided_slice %117 {offsets = [0, 64], sizes = [8, 32], strides = [1, 1]} : vector<8x128xf32> to vector<8x32xf32>
    %158 = vector.extract_strided_slice %123 {offsets = [0, 64], sizes = [8, 32], strides = [1, 1]} : vector<8x128xf32> to vector<8x32xf32>
    %159 = vector.extract_strided_slice %124 {offsets = [0, 64], sizes = [8, 32], strides = [1, 1]} : vector<8x128xf32> to vector<8x32xf32>
    %160 = tpu.transpose %158, [1, 0] : vector<8x32xf32> -> vector<32x8xf32>
    %cst_57 = arith.constant dense<0.000000e+00> : vector<8x8xf32>
    %161 = tpu.matmul %157, %160, %cst_57 {dimension_numbers = #tpu.dot_dimension_numbers<[1], [0], [0], [1], [0, 0, 1, 1], [], []>} : vector<8x32xf32>, vector<32x8xf32>, vector<8x8xf32> -> vector<8x8xf32>
    %cst_58 = arith.constant dense<0xFF800000> : vector<8xf32>
    %162 = vector.multi_reduction <maximumf>, %161, %cst_58 [1] : vector<8x8xf32> to vector<8xf32>
    %163 = vector.shape_cast %162 : vector<8xf32> to vector<8x1xf32>
    %164 = vector.broadcast %163 : vector<8x1xf32> to vector<8x8xf32>
    %165 = arith.subf %161, %164 : vector<8x8xf32>
    %166 = math.exp %165 : vector<8x8xf32>
    %cst_59 = arith.constant dense<0.000000e+00> : vector<8xf32>
    %167 = vector.multi_reduction <add>, %166, %cst_59 [1] : vector<8x8xf32> to vector<8xf32>
    %168 = vector.shape_cast %167 : vector<8xf32> to vector<8x1xf32>
    %169 = tpu.reciprocal %168 {approx = true} : vector<8x1xf32> -> vector<8x1xf32>
    %170 = vector.broadcast %169 : vector<8x1xf32> to vector<8x8xf32>
    %171 = arith.mulf %166, %170 : vector<8x8xf32>
    %cst_60 = arith.constant dense<0.000000e+00> : vector<8x32xf32>
    %172 = tpu.matmul %171, %159, %cst_60 {dimension_numbers = #tpu.dot_dimension_numbers<[1], [0], [0], [1], [0, 0, 1, 1], [], []>} : vector<8x8xf32>, vector<8x32xf32>, vector<8x32xf32> -> vector<8x32xf32>
    %173 = vector.extract_strided_slice %117 {offsets = [0, 96], sizes = [8, 32], strides = [1, 1]} : vector<8x128xf32> to vector<8x32xf32>
    %174 = vector.extract_strided_slice %123 {offsets = [0, 96], sizes = [8, 32], strides = [1, 1]} : vector<8x128xf32> to vector<8x32xf32>
    %175 = vector.extract_strided_slice %124 {offsets = [0, 96], sizes = [8, 32], strides = [1, 1]} : vector<8x128xf32> to vector<8x32xf32>
    %176 = tpu.transpose %174, [1, 0] : vector<8x32xf32> -> vector<32x8xf32>
    %cst_61 = arith.constant dense<0.000000e+00> : vector<8x8xf32>
    %177 = tpu.matmul %173, %176, %cst_61 {dimension_numbers = #tpu.dot_dimension_numbers<[1], [0], [0], [1], [0, 0, 1, 1], [], []>} : vector<8x32xf32>, vector<32x8xf32>, vector<8x8xf32> -> vector<8x8xf32>
    %cst_62 = arith.constant dense<0xFF800000> : vector<8xf32>
    %178 = vector.multi_reduction <maximumf>, %177, %cst_62 [1] : vector<8x8xf32> to vector<8xf32>
    %179 = vector.shape_cast %178 : vector<8xf32> to vector<8x1xf32>
    %180 = vector.broadcast %179 : vector<8x1xf32> to vector<8x8xf32>
    %181 = arith.subf %177, %180 : vector<8x8xf32>
    %182 = math.exp %181 : vector<8x8xf32>
    %cst_63 = arith.constant dense<0.000000e+00> : vector<8xf32>
    %183 = vector.multi_reduction <add>, %182, %cst_63 [1] : vector<8x8xf32> to vector<8xf32>
    %184 = vector.shape_cast %183 : vector<8xf32> to vector<8x1xf32>
    %185 = tpu.reciprocal %184 {approx = true} : vector<8x1xf32> -> vector<8x1xf32>
    %186 = vector.broadcast %185 : vector<8x1xf32> to vector<8x8xf32>
    %187 = arith.mulf %182, %186 : vector<8x8xf32>
    %cst_64 = arith.constant dense<0.000000e+00> : vector<8x32xf32>
    %188 = tpu.matmul %187, %175, %cst_64 {dimension_numbers = #tpu.dot_dimension_numbers<[1], [0], [0], [1], [0, 0, 1, 1], [], []>} : vector<8x8xf32>, vector<8x32xf32>, vector<8x32xf32> -> vector<8x32xf32>
    %189 = tpu.concatenate %140, %156, %172, %188 in 1 : vector<8x32xf32>, vector<8x32xf32>, vector<8x32xf32>, vector<8x32xf32> -> vector<8x128xf32>
    %c0_65 = arith.constant 0 : index
    %c0_66 = arith.constant 0 : index
    %190 = vector.load %arg13[%c0_65, %c0_66] : memref<128x128xf32, #tpu.memory_space<vmem>>, vector<128x128xf32>
    %cst_67 = arith.constant dense<0.000000e+00> : vector<8x128xf32>
    %191 = tpu.matmul %189, %190, %cst_67 {dimension_numbers = #tpu.dot_dimension_numbers<[1], [0], [0], [1], [0, 0, 1, 1], [], []>} : vector<8x128xf32>, vector<128x128xf32>, vector<8x128xf32> -> vector<8x128xf32>
    %c0_68 = arith.constant 0 : index
    %c0_69 = arith.constant 0 : index
    %192 = vector.load %arg14[%c0_68, %c0_69] : memref<1x128xf32, #tpu.memory_space<vmem>>, vector<1x128xf32>
    %193 = vector.broadcast %192 : vector<1x128xf32> to vector<8x128xf32>
    %194 = arith.addf %191, %193 : vector<8x128xf32>
    %195 = arith.addf %112, %194 : vector<8x128xf32>
    %c0_70 = arith.constant 0 : index
    %c0_71 = arith.constant 0 : index
    %196 = vector.load %arg15[%c0_70, %c0_71] : memref<1x128xf32, #tpu.memory_space<vmem>>, vector<1x128xf32>
    %c0_72 = arith.constant 0 : index
    %c0_73 = arith.constant 0 : index
    %197 = vector.load %arg16[%c0_72, %c0_73] : memref<1x128xf32, #tpu.memory_space<vmem>>, vector<1x128xf32>
    %cst_74 = arith.constant dense<0.000000e+00> : vector<8xf32>
    %198 = vector.multi_reduction <add>, %195, %cst_74 [1] : vector<8x128xf32> to vector<8xf32>
    %199 = vector.shape_cast %198 : vector<8xf32> to vector<8x1xf32>
    %cst_75 = arith.constant 1.280000e+02 : f32
    %200 = vector.broadcast %cst_75 : f32 to vector<8x1xf32>
    %201 = arith.divf %199, %200 : vector<8x1xf32>
    %202 = vector.broadcast %201 : vector<8x1xf32> to vector<8x128xf32>
    %203 = arith.subf %195, %202 : vector<8x128xf32>
    %204 = arith.mulf %203, %203 : vector<8x128xf32>
    %cst_76 = arith.constant dense<0.000000e+00> : vector<8xf32>
    %205 = vector.multi_reduction <add>, %204, %cst_76 [1] : vector<8x128xf32> to vector<8xf32>
    %206 = vector.shape_cast %205 : vector<8xf32> to vector<8x1xf32>
    %cst_77 = arith.constant 1.280000e+02 : f32
    %207 = vector.broadcast %cst_77 : f32 to vector<8x1xf32>
    %208 = arith.divf %206, %207 : vector<8x1xf32>
    %cst_78 = arith.constant 9.99999974E-6 : f32
    %209 = vector.broadcast %cst_78 : f32 to vector<8x1xf32>
    %210 = arith.addf %208, %209 : vector<8x1xf32>
    %211 = math.rsqrt %210 : vector<8x1xf32>
    %212 = vector.broadcast %211 : vector<8x1xf32> to vector<8x128xf32>
    %213 = arith.mulf %203, %212 : vector<8x128xf32>
    %214 = vector.broadcast %196 : vector<1x128xf32> to vector<8x128xf32>
    %215 = arith.mulf %213, %214 : vector<8x128xf32>
    %216 = vector.broadcast %197 : vector<1x128xf32> to vector<8x128xf32>
    %217 = arith.addf %215, %216 : vector<8x128xf32>
    %c0_79 = arith.constant 0 : index
    %c0_80 = arith.constant 0 : index
    %218 = vector.load %arg17[%c0_79, %c0_80] : memref<128x512xf32, #tpu.memory_space<vmem>>, vector<128x512xf32>
    %cst_81 = arith.constant dense<0.000000e+00> : vector<8x512xf32>
    %219 = tpu.matmul %217, %218, %cst_81 {dimension_numbers = #tpu.dot_dimension_numbers<[1], [0], [0], [1], [0, 0, 1, 1], [], []>} : vector<8x128xf32>, vector<128x512xf32>, vector<8x512xf32> -> vector<8x512xf32>
    %c0_82 = arith.constant 0 : index
    %c0_83 = arith.constant 0 : index
    %220 = vector.load %arg18[%c0_82, %c0_83] : memref<1x512xf32, #tpu.memory_space<vmem>>, vector<1x512xf32>
    %221 = vector.broadcast %220 : vector<1x512xf32> to vector<8x512xf32>
    %222 = arith.addf %219, %221 : vector<8x512xf32>
    %cst_84 = arith.constant 0.000000e+00 : f32
    %223 = vector.broadcast %cst_84 : f32 to vector<8x512xf32>
    %224 = arith.maximumf %222, %223 : vector<8x512xf32>
    %c0_85 = arith.constant 0 : index
    %c0_86 = arith.constant 0 : index
    %225 = vector.load %arg19[%c0_85, %c0_86] : memref<512x128xf32, #tpu.memory_space<vmem>>, vector<512x128xf32>
    %cst_87 = arith.constant dense<0.000000e+00> : vector<8x128xf32>
    %226 = tpu.matmul %224, %225, %cst_87 {dimension_numbers = #tpu.dot_dimension_numbers<[1], [0], [0], [1], [0, 0, 1, 1], [], []>} : vector<8x512xf32>, vector<512x128xf32>, vector<8x128xf32> -> vector<8x128xf32>
    %c0_88 = arith.constant 0 : index
    %c0_89 = arith.constant 0 : index
    %227 = vector.load %arg20[%c0_88, %c0_89] : memref<1x128xf32, #tpu.memory_space<vmem>>, vector<1x128xf32>
    %228 = vector.broadcast %227 : vector<1x128xf32> to vector<8x128xf32>
    %229 = arith.addf %226, %228 : vector<8x128xf32>
    %230 = arith.addf %217, %229 : vector<8x128xf32>
    %c0_90 = arith.constant 0 : index
    %c0_91 = arith.constant 0 : index
    %231 = vector.load %arg21[%c0_90, %c0_91] : memref<1x128xf32, #tpu.memory_space<vmem>>, vector<1x128xf32>
    %c0_92 = arith.constant 0 : index
    %c0_93 = arith.constant 0 : index
    %232 = vector.load %arg22[%c0_92, %c0_93] : memref<1x128xf32, #tpu.memory_space<vmem>>, vector<1x128xf32>
    %cst_94 = arith.constant dense<0.000000e+00> : vector<8xf32>
    %233 = vector.multi_reduction <add>, %230, %cst_94 [1] : vector<8x128xf32> to vector<8xf32>
    %234 = vector.shape_cast %233 : vector<8xf32> to vector<8x1xf32>
    %cst_95 = arith.constant 1.280000e+02 : f32
    %235 = vector.broadcast %cst_95 : f32 to vector<8x1xf32>
    %236 = arith.divf %234, %235 : vector<8x1xf32>
    %237 = vector.broadcast %236 : vector<8x1xf32> to vector<8x128xf32>
    %238 = arith.subf %230, %237 : vector<8x128xf32>
    %239 = arith.mulf %238, %238 : vector<8x128xf32>
    %cst_96 = arith.constant dense<0.000000e+00> : vector<8xf32>
    %240 = vector.multi_reduction <add>, %239, %cst_96 [1] : vector<8x128xf32> to vector<8xf32>
    %241 = vector.shape_cast %240 : vector<8xf32> to vector<8x1xf32>
    %cst_97 = arith.constant 1.280000e+02 : f32
    %242 = vector.broadcast %cst_97 : f32 to vector<8x1xf32>
    %243 = arith.divf %241, %242 : vector<8x1xf32>
    %cst_98 = arith.constant 9.99999974E-6 : f32
    %244 = vector.broadcast %cst_98 : f32 to vector<8x1xf32>
    %245 = arith.addf %243, %244 : vector<8x1xf32>
    %246 = math.rsqrt %245 : vector<8x1xf32>
    %247 = vector.broadcast %246 : vector<8x1xf32> to vector<8x128xf32>
    %248 = arith.mulf %238, %247 : vector<8x128xf32>
    %249 = vector.broadcast %231 : vector<1x128xf32> to vector<8x128xf32>
    %250 = arith.mulf %248, %249 : vector<8x128xf32>
    %251 = vector.broadcast %232 : vector<1x128xf32> to vector<8x128xf32>
    %252 = arith.addf %250, %251 : vector<8x128xf32>
    %c0_99 = arith.constant 0 : index
    %c0_100 = arith.constant 0 : index
    %253 = vector.load %arg23[%c0_99, %c0_100] : memref<8x128xf32, #tpu.memory_space<vmem>>, vector<8x128xf32>
    tpu.vector_store %arg23[%c0_99, %c0_100], %252 {strides = array<i32>} : memref<8x128xf32, #tpu.memory_space<vmem>>, vector<8x128xf32>,
    return
  }
  func.func @transform_0(%arg0: i32) -> (i32, i32) {
    %c0_i32 = arith.constant 0 : i32
    %c0_i32_0 = arith.constant 0 : i32
    return %arg0, %c0_i32 : i32, i32
  }
  func.func @transform_1(%arg0: i32) -> (i32, i32) {
    %c0_i32 = arith.constant 0 : i32
    %c0_i32_0 = arith.constant 0 : i32
    return %arg0, %c0_i32 : i32, i32
  }
  func.func @transform_2(%arg0: i32) -> (i32, i32) {
    %c0_i32 = arith.constant 0 : i32
    %c0_i32_0 = arith.constant 0 : i32
    %c0_i32_1 = arith.constant 0 : i32
    return %c0_i32, %c0_i32_0 : i32, i32
  }
  func.func @transform_3(%arg0: i32) -> (i32, i32) {
    %c0_i32 = arith.constant 0 : i32
    %c0_i32_0 = arith.constant 0 : i32
    %c0_i32_1 = arith.constant 0 : i32
    return %c0_i32, %c0_i32_0 : i32, i32
  }
  func.func @transform_4(%arg0: i32) -> (i32, i32) {
    %c0_i32 = arith.constant 0 : i32
    %c0_i32_0 = arith.constant 0 : i32
    %c0_i32_1 = arith.constant 0 : i32
    return %c0_i32, %c0_i32_0 : i32, i32
  }
  func.func @transform_5(%arg0: i32) -> (i32, i32) {
    %c0_i32 = arith.constant 0 : i32
    %c0_i32_0 = arith.constant 0 : i32
    %c0_i32_1 = arith.constant 0 : i32
    return %c0_i32, %c0_i32_0 : i32, i32
  }
  func.func @transform_6(%arg0: i32) -> (i32, i32) {
    %c0_i32 = arith.constant 0 : i32
    %c0_i32_0 = arith.constant 0 : i32
    %c0_i32_1 = arith.constant 0 : i32
    return %c0_i32, %c0_i32_0 : i32, i32
  }
  func.func @transform_7(%arg0: i32) -> (i32, i32) {
    %c0_i32 = arith.constant 0 : i32
    %c0_i32_0 = arith.constant 0 : i32
    %c0_i32_1 = arith.constant 0 : i32
    return %c0_i32, %c0_i32_0 : i32, i32
  }
  func.func @transform_8(%arg0: i32) -> (i32, i32) {
    %c0_i32 = arith.constant 0 : i32
    %c0_i32_0 = arith.constant 0 : i32
    %c0_i32_1 = arith.constant 0 : i32
    return %c0_i32, %c0_i32_0 : i32, i32
  }
  func.func @transform_9(%arg0: i32) -> (i32, i32) {
    %c0_i32 = arith.constant 0 : i32
    %c0_i32_0 = arith.constant 0 : i32
    %c0_i32_1 = arith.constant 0 : i32
    return %c0_i32, %c0_i32_0 : i32, i32
  }
  func.func @transform_10(%arg0: i32) -> (i32, i32) {
    %c0_i32 = arith.constant 0 : i32
    %c0_i32_0 = arith.constant 0 : i32
    %c0_i32_1 = arith.constant 0 : i32
    return %c0_i32, %c0_i32_0 : i32, i32
  }
  func.func @transform_11(%arg0: i32) -> (i32, i32) {
    %c0_i32 = arith.constant 0 : i32
    %c0_i32_0 = arith.constant 0 : i32
    %c0_i32_1 = arith.constant 0 : i32
    return %c0_i32, %c0_i32_0 : i32, i32
  }
  func.func @transform_12(%arg0: i32) -> (i32, i32) {
    %c0_i32 = arith.constant 0 : i32
    %c0_i32_0 = arith.constant 0 : i32
    %c0_i32_1 = arith.constant 0 : i32
    return %c0_i32, %c0_i32_0 : i32, i32
  }
  func.func @transform_13(%arg0: i32) -> (i32, i32) {
    %c0_i32 = arith.constant 0 : i32
    %c0_i32_0 = arith.constant 0 : i32
    %c0_i32_1 = arith.constant 0 : i32
    return %c0_i32, %c0_i32_0 : i32, i32
  }
  func.func @transform_14(%arg0: i32) -> (i32, i32) {
    %c0_i32 = arith.constant 0 : i32
    %c0_i32_0 = arith.constant 0 : i32
    %c0_i32_1 = arith.constant 0 : i32
    return %c0_i32, %c0_i32_0 : i32, i32
  }
  func.func @transform_15(%arg0: i32) -> (i32, i32) {
    %c0_i32 = arith.constant 0 : i32
    %c0_i32_0 = arith.constant 0 : i32
    %c0_i32_1 = arith.constant 0 : i32
    return %c0_i32, %c0_i32_0 : i32, i32
  }
  func.func @transform_16(%arg0: i32) -> (i32, i32) {
    %c0_i32 = arith.constant 0 : i32
    %c0_i32_0 = arith.constant 0 : i32
    %c0_i32_1 = arith.constant 0 : i32
    return %c0_i32, %c0_i32_0 : i32, i32
  }
  func.func @transform_17(%arg0: i32) -> (i32, i32) {
    %c0_i32 = arith.constant 0 : i32
    %c0_i32_0 = arith.constant 0 : i32
    %c0_i32_1 = arith.constant 0 : i32
    return %c0_i32, %c0_i32_0 : i32, i32
  }
  func.func @transform_18(%arg0: i32) -> (i32, i32) {
    %c0_i32 = arith.constant 0 : i32
    %c0_i32_0 = arith.constant 0 : i32
    %c0_i32_1 = arith.constant 0 : i32
    return %c0_i32, %c0_i32_0 : i32, i32
  }
  func.func @transform_19(%arg0: i32) -> (i32, i32) {
    %c0_i32 = arith.constant 0 : i32
    %c0_i32_0 = arith.constant 0 : i32
    %c0_i32_1 = arith.constant 0 : i32
    return %c0_i32, %c0_i32_0 : i32, i32
  }
  func.func @transform_20(%arg0: i32) -> (i32, i32) {
    %c0_i32 = arith.constant 0 : i32
    %c0_i32_0 = arith.constant 0 : i32
    %c0_i32_1 = arith.constant 0 : i32
    return %c0_i32, %c0_i32_0 : i32, i32
  }
  func.func @transform_21(%arg0: i32) -> (i32, i32) {
    %c0_i32 = arith.constant 0 : i32
    %c0_i32_0 = arith.constant 0 : i32
    %c0_i32_1 = arith.constant 0 : i32
    return %c0_i32, %c0_i32_0 : i32, i32
  }
  func.func @transform_22(%arg0: i32) -> (i32, i32) {
    %c0_i32 = arith.constant 0 : i32
    %c0_i32_0 = arith.constant 0 : i32
    return %arg0, %c0_i32 : i32, i32
  }
}

module attributes {stable_mosaic.version = 11 : i64} {
  func.func @_dec_layer_kernel(%arg0: i32, %arg1: memref<8x128xf32, #tpu.memory_space<vmem>>, %arg2: memref<8x128xf32, #tpu.memory_space<vmem>>, %arg3: memref<128x384xf32, #tpu.memory_space<vmem>>, %arg4: memref<1x384xf32, #tpu.memory_space<vmem>>, %arg5: memref<128x128xf32, #tpu.memory_space<vmem>>, %arg6: memref<1x128xf32, #tpu.memory_space<vmem>>, %arg7: memref<1x128xf32, #tpu.memory_space<vmem>>, %arg8: memref<1x128xf32, #tpu.memory_space<vmem>>, %arg9: memref<128x128xf32, #tpu.memory_space<vmem>>, %arg10: memref<1x128xf32, #tpu.memory_space<vmem>>, %arg11: memref<128x256xf32, #tpu.memory_space<vmem>>, %arg12: memref<1x256xf32, #tpu.memory_space<vmem>>, %arg13: memref<128x128xf32, #tpu.memory_space<vmem>>, %arg14: memref<1x128xf32, #tpu.memory_space<vmem>>, %arg15: memref<1x128xf32, #tpu.memory_space<vmem>>, %arg16: memref<1x128xf32, #tpu.memory_space<vmem>>, %arg17: memref<128x512xf32, #tpu.memory_space<vmem>>, %arg18: memref<1x512xf32, #tpu.memory_space<vmem>>, %arg19: memref<512x128xf32, #tpu.memory_space<vmem>>, %arg20: memref<1x128xf32, #tpu.memory_space<vmem>>, %arg21: memref<1x128xf32, #tpu.memory_space<vmem>>, %arg22: memref<1x128xf32, #tpu.memory_space<vmem>>, %arg23: memref<8x128xf32, #tpu.memory_space<vmem>>) attributes {dimension_semantics = [#tpu.dimension_semantics<parallel>], iteration_bounds = array<i64: 2>, scalar_prefetch = 0 : i64, scratch_operands = 0 : i64, tpu.core_type = #tpu.core_type<tc>, window_params = [{transform_indices = @transform_0, window_bounds = array<i64: 8, 128>}, {transform_indices = @transform_1, window_bounds = array<i64: 8, 128>}, {pipeline_mode = #tpu.pipeline_mode<synchronous>, transform_indices = @transform_2, window_bounds = array<i64: 128, 384>}, {pipeline_mode = #tpu.pipeline_mode<synchronous>, transform_indices = @transform_3, window_bounds = array<i64: 1, 384>}, {pipeline_mode = #tpu.pipeline_mode<synchronous>, transform_indices = @transform_4, window_bounds = array<i64: 128, 128>}, {pipeline_mode = #tpu.pipeline_mode<synchronous>, transform_indices = @transform_5, window_bounds = array<i64: 1, 128>}, {pipeline_mode = #tpu.pipeline_mode<synchronous>, transform_indices = @transform_6, window_bounds = array<i64: 1, 128>}, {pipeline_mode = #tpu.pipeline_mode<synchronous>, transform_indices = @transform_7, window_bounds = array<i64: 1, 128>}, {pipeline_mode = #tpu.pipeline_mode<synchronous>, transform_indices = @transform_8, window_bounds = array<i64: 128, 128>}, {pipeline_mode = #tpu.pipeline_mode<synchronous>, transform_indices = @transform_9, window_bounds = array<i64: 1, 128>}, {pipeline_mode = #tpu.pipeline_mode<synchronous>, transform_indices = @transform_10, window_bounds = array<i64: 128, 256>}, {pipeline_mode = #tpu.pipeline_mode<synchronous>, transform_indices = @transform_11, window_bounds = array<i64: 1, 256>}, {pipeline_mode = #tpu.pipeline_mode<synchronous>, transform_indices = @transform_12, window_bounds = array<i64: 128, 128>}, {pipeline_mode = #tpu.pipeline_mode<synchronous>, transform_indices = @transform_13, window_bounds = array<i64: 1, 128>}, {pipeline_mode = #tpu.pipeline_mode<synchronous>, transform_indices = @transform_14, window_bounds = array<i64: 1, 128>}, {pipeline_mode = #tpu.pipeline_mode<synchronous>, transform_indices = @transform_15, window_bounds = array<i64: 1, 128>}, {pipeline_mode = #tpu.pipeline_mode<synchronous>, transform_indices = @transform_16, window_bounds = array<i64: 128, 512>}, {pipeline_mode = #tpu.pipeline_mode<synchronous>, transform_indices = @transform_17, window_bounds = array<i64: 1, 512>}, {pipeline_mode = #tpu.pipeline_mode<synchronous>, transform_indices = @transform_18, window_bounds = array<i64: 512, 128>}, {pipeline_mode = #tpu.pipeline_mode<synchronous>, transform_indices = @transform_19, window_bounds = array<i64: 1, 128>}, {pipeline_mode = #tpu.pipeline_mode<synchronous>, transform_indices = @transform_20, window_bounds = array<i64: 1, 128>}, {pipeline_mode = #tpu.pipeline_mode<synchronous>, transform_indices = @transform_21, window_bounds = array<i64: 1, 128>}, {transform_indices = @transform_22, window_bounds = array<i64: 8, 128>}]} {
    %c0 = arith.constant 0 : index
    %c0_0 = arith.constant 0 : index
    %0 = vector.load %arg1[%c0, %c0_0] : memref<8x128xf32, #tpu.memory_space<vmem>>, vector<8x128xf32>
    %c0_1 = arith.constant 0 : index
    %c0_2 = arith.constant 0 : index
    %1 = vector.load %arg2[%c0_1, %c0_2] : memref<8x128xf32, #tpu.memory_space<vmem>>, vector<8x128xf32>
    %c0_3 = arith.constant 0 : index
    %c0_4 = arith.constant 0 : index
    %2 = vector.load %arg3[%c0_3, %c0_4] : memref<128x384xf32, #tpu.memory_space<vmem>>, vector<128x384xf32>
    %cst = arith.constant dense<0.000000e+00> : vector<8x384xf32>
    %3 = tpu.matmul %0, %2, %cst {dimension_numbers = #tpu.dot_dimension_numbers<[1], [0], [0], [1], [0, 0, 1, 1], [], []>} : vector<8x128xf32>, vector<128x384xf32>, vector<8x384xf32> -> vector<8x384xf32>
    %c0_5 = arith.constant 0 : index
    %c0_6 = arith.constant 0 : index
    %4 = vector.load %arg4[%c0_5, %c0_6] : memref<1x384xf32, #tpu.memory_space<vmem>>, vector<1x384xf32>
    %5 = vector.broadcast %4 : vector<1x384xf32> to vector<8x384xf32>
    %6 = arith.addf %3, %5 : vector<8x384xf32>
    %7 = tpu.iota {dimensions = array<i32: 0>} : vector<8x8xi32>
    %8 = tpu.iota {dimensions = array<i32: 1>} : vector<8x8xi32>
    %9 = arith.cmpi sgt, %8, %7 : vector<8x8xi32>
    %cst_7 = arith.constant -1.000000e+09 : f32
    %cst_8 = arith.constant 0.000000e+00 : f32
    %10 = vector.broadcast %cst_7 : f32 to vector<8x8xf32>
    %11 = vector.broadcast %cst_8 : f32 to vector<8x8xf32>
    %12 = arith.select %9, %10, %11 : vector<8x8xi1>, vector<8x8xf32>
    %13 = vector.extract_strided_slice %6 {offsets = [0, 0], sizes = [8, 128], strides = [1, 1]} : vector<8x384xf32> to vector<8x128xf32>
    %14 = vector.extract_strided_slice %6 {offsets = [0, 128], sizes = [8, 128], strides = [1, 1]} : vector<8x384xf32> to vector<8x128xf32>
    %15 = vector.extract_strided_slice %6 {offsets = [0, 256], sizes = [8, 128], strides = [1, 1]} : vector<8x384xf32> to vector<8x128xf32>
    %16 = vector.extract_strided_slice %13 {offsets = [0, 0], sizes = [8, 32], strides = [1, 1]} : vector<8x128xf32> to vector<8x32xf32>
    %17 = vector.extract_strided_slice %14 {offsets = [0, 0], sizes = [8, 32], strides = [1, 1]} : vector<8x128xf32> to vector<8x32xf32>
    %18 = vector.extract_strided_slice %15 {offsets = [0, 0], sizes = [8, 32], strides = [1, 1]} : vector<8x128xf32> to vector<8x32xf32>
    %19 = tpu.transpose %17, [1, 0] : vector<8x32xf32> -> vector<32x8xf32>
    %cst_9 = arith.constant dense<0.000000e+00> : vector<8x8xf32>
    %20 = tpu.matmul %16, %19, %cst_9 {dimension_numbers = #tpu.dot_dimension_numbers<[1], [0], [0], [1], [0, 0, 1, 1], [], []>} : vector<8x32xf32>, vector<32x8xf32>, vector<8x8xf32> -> vector<8x8xf32>
    %21 = arith.addf %20, %12 : vector<8x8xf32>
    %cst_10 = arith.constant dense<0xFF800000> : vector<8xf32>
    %22 = vector.multi_reduction <maximumf>, %21, %cst_10 [1] : vector<8x8xf32> to vector<8xf32>
    %23 = vector.shape_cast %22 : vector<8xf32> to vector<8x1xf32>
    %24 = vector.broadcast %23 : vector<8x1xf32> to vector<8x8xf32>
    %25 = arith.subf %21, %24 : vector<8x8xf32>
    %26 = math.exp %25 : vector<8x8xf32>
    %cst_11 = arith.constant dense<0.000000e+00> : vector<8xf32>
    %27 = vector.multi_reduction <add>, %26, %cst_11 [1] : vector<8x8xf32> to vector<8xf32>
    %28 = vector.shape_cast %27 : vector<8xf32> to vector<8x1xf32>
    %29 = tpu.reciprocal %28 {approx = true} : vector<8x1xf32> -> vector<8x1xf32>
    %30 = vector.broadcast %29 : vector<8x1xf32> to vector<8x8xf32>
    %31 = arith.mulf %26, %30 : vector<8x8xf32>
    %cst_12 = arith.constant dense<0.000000e+00> : vector<8x32xf32>
    %32 = tpu.matmul %31, %18, %cst_12 {dimension_numbers = #tpu.dot_dimension_numbers<[1], [0], [0], [1], [0, 0, 1, 1], [], []>} : vector<8x8xf32>, vector<8x32xf32>, vector<8x32xf32> -> vector<8x32xf32>
    %33 = vector.extract_strided_slice %13 {offsets = [0, 32], sizes = [8, 32], strides = [1, 1]} : vector<8x128xf32> to vector<8x32xf32>
    %34 = vector.extract_strided_slice %14 {offsets = [0, 32], sizes = [8, 32], strides = [1, 1]} : vector<8x128xf32> to vector<8x32xf32>
    %35 = vector.extract_strided_slice %15 {offsets = [0, 32], sizes = [8, 32], strides = [1, 1]} : vector<8x128xf32> to vector<8x32xf32>
    %36 = tpu.transpose %34, [1, 0] : vector<8x32xf32> -> vector<32x8xf32>
    %cst_13 = arith.constant dense<0.000000e+00> : vector<8x8xf32>
    %37 = tpu.matmul %33, %36, %cst_13 {dimension_numbers = #tpu.dot_dimension_numbers<[1], [0], [0], [1], [0, 0, 1, 1], [], []>} : vector<8x32xf32>, vector<32x8xf32>, vector<8x8xf32> -> vector<8x8xf32>
    %38 = arith.addf %37, %12 : vector<8x8xf32>
    %cst_14 = arith.constant dense<0xFF800000> : vector<8xf32>
    %39 = vector.multi_reduction <maximumf>, %38, %cst_14 [1] : vector<8x8xf32> to vector<8xf32>
    %40 = vector.shape_cast %39 : vector<8xf32> to vector<8x1xf32>
    %41 = vector.broadcast %40 : vector<8x1xf32> to vector<8x8xf32>
    %42 = arith.subf %38, %41 : vector<8x8xf32>
    %43 = math.exp %42 : vector<8x8xf32>
    %cst_15 = arith.constant dense<0.000000e+00> : vector<8xf32>
    %44 = vector.multi_reduction <add>, %43, %cst_15 [1] : vector<8x8xf32> to vector<8xf32>
    %45 = vector.shape_cast %44 : vector<8xf32> to vector<8x1xf32>
    %46 = tpu.reciprocal %45 {approx = true} : vector<8x1xf32> -> vector<8x1xf32>
    %47 = vector.broadcast %46 : vector<8x1xf32> to vector<8x8xf32>
    %48 = arith.mulf %43, %47 : vector<8x8xf32>
    %cst_16 = arith.constant dense<0.000000e+00> : vector<8x32xf32>
    %49 = tpu.matmul %48, %35, %cst_16 {dimension_numbers = #tpu.dot_dimension_numbers<[1], [0], [0], [1], [0, 0, 1, 1], [], []>} : vector<8x8xf32>, vector<8x32xf32>, vector<8x32xf32> -> vector<8x32xf32>
    %50 = vector.extract_strided_slice %13 {offsets = [0, 64], sizes = [8, 32], strides = [1, 1]} : vector<8x128xf32> to vector<8x32xf32>
    %51 = vector.extract_strided_slice %14 {offsets = [0, 64], sizes = [8, 32], strides = [1, 1]} : vector<8x128xf32> to vector<8x32xf32>
    %52 = vector.extract_strided_slice %15 {offsets = [0, 64], sizes = [8, 32], strides = [1, 1]} : vector<8x128xf32> to vector<8x32xf32>
    %53 = tpu.transpose %51, [1, 0] : vector<8x32xf32> -> vector<32x8xf32>
    %cst_17 = arith.constant dense<0.000000e+00> : vector<8x8xf32>
    %54 = tpu.matmul %50, %53, %cst_17 {dimension_numbers = #tpu.dot_dimension_numbers<[1], [0], [0], [1], [0, 0, 1, 1], [], []>} : vector<8x32xf32>, vector<32x8xf32>, vector<8x8xf32> -> vector<8x8xf32>
    %55 = arith.addf %54, %12 : vector<8x8xf32>
    %cst_18 = arith.constant dense<0xFF800000> : vector<8xf32>
    %56 = vector.multi_reduction <maximumf>, %55, %cst_18 [1] : vector<8x8xf32> to vector<8xf32>
    %57 = vector.shape_cast %56 : vector<8xf32> to vector<8x1xf32>
    %58 = vector.broadcast %57 : vector<8x1xf32> to vector<8x8xf32>
    %59 = arith.subf %55, %58 : vector<8x8xf32>
    %60 = math.exp %59 : vector<8x8xf32>
    %cst_19 = arith.constant dense<0.000000e+00> : vector<8xf32>
    %61 = vector.multi_reduction <add>, %60, %cst_19 [1] : vector<8x8xf32> to vector<8xf32>
    %62 = vector.shape_cast %61 : vector<8xf32> to vector<8x1xf32>
    %63 = tpu.reciprocal %62 {approx = true} : vector<8x1xf32> -> vector<8x1xf32>
    %64 = vector.broadcast %63 : vector<8x1xf32> to vector<8x8xf32>
    %65 = arith.mulf %60, %64 : vector<8x8xf32>
    %cst_20 = arith.constant dense<0.000000e+00> : vector<8x32xf32>
    %66 = tpu.matmul %65, %52, %cst_20 {dimension_numbers = #tpu.dot_dimension_numbers<[1], [0], [0], [1], [0, 0, 1, 1], [], []>} : vector<8x8xf32>, vector<8x32xf32>, vector<8x32xf32> -> vector<8x32xf32>
    %67 = vector.extract_strided_slice %13 {offsets = [0, 96], sizes = [8, 32], strides = [1, 1]} : vector<8x128xf32> to vector<8x32xf32>
    %68 = vector.extract_strided_slice %14 {offsets = [0, 96], sizes = [8, 32], strides = [1, 1]} : vector<8x128xf32> to vector<8x32xf32>
    %69 = vector.extract_strided_slice %15 {offsets = [0, 96], sizes = [8, 32], strides = [1, 1]} : vector<8x128xf32> to vector<8x32xf32>
    %70 = tpu.transpose %68, [1, 0] : vector<8x32xf32> -> vector<32x8xf32>
    %cst_21 = arith.constant dense<0.000000e+00> : vector<8x8xf32>
    %71 = tpu.matmul %67, %70, %cst_21 {dimension_numbers = #tpu.dot_dimension_numbers<[1], [0], [0], [1], [0, 0, 1, 1], [], []>} : vector<8x32xf32>, vector<32x8xf32>, vector<8x8xf32> -> vector<8x8xf32>
    %72 = arith.addf %71, %12 : vector<8x8xf32>
    %cst_22 = arith.constant dense<0xFF800000> : vector<8xf32>
    %73 = vector.multi_reduction <maximumf>, %72, %cst_22 [1] : vector<8x8xf32> to vector<8xf32>
    %74 = vector.shape_cast %73 : vector<8xf32> to vector<8x1xf32>
    %75 = vector.broadcast %74 : vector<8x1xf32> to vector<8x8xf32>
    %76 = arith.subf %72, %75 : vector<8x8xf32>
    %77 = math.exp %76 : vector<8x8xf32>
    %cst_23 = arith.constant dense<0.000000e+00> : vector<8xf32>
    %78 = vector.multi_reduction <add>, %77, %cst_23 [1] : vector<8x8xf32> to vector<8xf32>
    %79 = vector.shape_cast %78 : vector<8xf32> to vector<8x1xf32>
    %80 = tpu.reciprocal %79 {approx = true} : vector<8x1xf32> -> vector<8x1xf32>
    %81 = vector.broadcast %80 : vector<8x1xf32> to vector<8x8xf32>
    %82 = arith.mulf %77, %81 : vector<8x8xf32>
    %cst_24 = arith.constant dense<0.000000e+00> : vector<8x32xf32>
    %83 = tpu.matmul %82, %69, %cst_24 {dimension_numbers = #tpu.dot_dimension_numbers<[1], [0], [0], [1], [0, 0, 1, 1], [], []>} : vector<8x8xf32>, vector<8x32xf32>, vector<8x32xf32> -> vector<8x32xf32>
    %84 = tpu.concatenate %32, %49, %66, %83 in 1 : vector<8x32xf32>, vector<8x32xf32>, vector<8x32xf32>, vector<8x32xf32> -> vector<8x128xf32>
    %c0_25 = arith.constant 0 : index
    %c0_26 = arith.constant 0 : index
    %85 = vector.load %arg5[%c0_25, %c0_26] : memref<128x128xf32, #tpu.memory_space<vmem>>, vector<128x128xf32>
    %cst_27 = arith.constant dense<0.000000e+00> : vector<8x128xf32>
    %86 = tpu.matmul %84, %85, %cst_27 {dimension_numbers = #tpu.dot_dimension_numbers<[1], [0], [0], [1], [0, 0, 1, 1], [], []>} : vector<8x128xf32>, vector<128x128xf32>, vector<8x128xf32> -> vector<8x128xf32>
    %c0_28 = arith.constant 0 : index
    %c0_29 = arith.constant 0 : index
    %87 = vector.load %arg6[%c0_28, %c0_29] : memref<1x128xf32, #tpu.memory_space<vmem>>, vector<1x128xf32>
    %88 = vector.broadcast %87 : vector<1x128xf32> to vector<8x128xf32>
    %89 = arith.addf %86, %88 : vector<8x128xf32>
    %90 = arith.addf %0, %89 : vector<8x128xf32>
    %c0_30 = arith.constant 0 : index
    %c0_31 = arith.constant 0 : index
    %91 = vector.load %arg7[%c0_30, %c0_31] : memref<1x128xf32, #tpu.memory_space<vmem>>, vector<1x128xf32>
    %c0_32 = arith.constant 0 : index
    %c0_33 = arith.constant 0 : index
    %92 = vector.load %arg8[%c0_32, %c0_33] : memref<1x128xf32, #tpu.memory_space<vmem>>, vector<1x128xf32>
    %cst_34 = arith.constant dense<0.000000e+00> : vector<8xf32>
    %93 = vector.multi_reduction <add>, %90, %cst_34 [1] : vector<8x128xf32> to vector<8xf32>
    %94 = vector.shape_cast %93 : vector<8xf32> to vector<8x1xf32>
    %cst_35 = arith.constant 1.280000e+02 : f32
    %95 = vector.broadcast %cst_35 : f32 to vector<8x1xf32>
    %96 = arith.divf %94, %95 : vector<8x1xf32>
    %97 = vector.broadcast %96 : vector<8x1xf32> to vector<8x128xf32>
    %98 = arith.subf %90, %97 : vector<8x128xf32>
    %99 = arith.mulf %98, %98 : vector<8x128xf32>
    %cst_36 = arith.constant dense<0.000000e+00> : vector<8xf32>
    %100 = vector.multi_reduction <add>, %99, %cst_36 [1] : vector<8x128xf32> to vector<8xf32>
    %101 = vector.shape_cast %100 : vector<8xf32> to vector<8x1xf32>
    %cst_37 = arith.constant 1.280000e+02 : f32
    %102 = vector.broadcast %cst_37 : f32 to vector<8x1xf32>
    %103 = arith.divf %101, %102 : vector<8x1xf32>
    %cst_38 = arith.constant 9.99999974E-6 : f32
    %104 = vector.broadcast %cst_38 : f32 to vector<8x1xf32>
    %105 = arith.addf %103, %104 : vector<8x1xf32>
    %106 = math.rsqrt %105 : vector<8x1xf32>
    %107 = vector.broadcast %106 : vector<8x1xf32> to vector<8x128xf32>
    %108 = arith.mulf %98, %107 : vector<8x128xf32>
    %109 = vector.broadcast %91 : vector<1x128xf32> to vector<8x128xf32>
    %110 = arith.mulf %108, %109 : vector<8x128xf32>
    %111 = vector.broadcast %92 : vector<1x128xf32> to vector<8x128xf32>
    %112 = arith.addf %110, %111 : vector<8x128xf32>
    %c0_39 = arith.constant 0 : index
    %c0_40 = arith.constant 0 : index
    %113 = vector.load %arg9[%c0_39, %c0_40] : memref<128x128xf32, #tpu.memory_space<vmem>>, vector<128x128xf32>
    %cst_41 = arith.constant dense<0.000000e+00> : vector<8x128xf32>
    %114 = tpu.matmul %112, %113, %cst_41 {dimension_numbers = #tpu.dot_dimension_numbers<[1], [0], [0], [1], [0, 0, 1, 1], [], []>} : vector<8x128xf32>, vector<128x128xf32>, vector<8x128xf32> -> vector<8x128xf32>
    %c0_42 = arith.constant 0 : index
    %c0_43 = arith.constant 0 : index
    %115 = vector.load %arg10[%c0_42, %c0_43] : memref<1x128xf32, #tpu.memory_space<vmem>>, vector<1x128xf32>
    %116 = vector.broadcast %115 : vector<1x128xf32> to vector<8x128xf32>
    %117 = arith.addf %114, %116 : vector<8x128xf32>
    %c0_44 = arith.constant 0 : index
    %c0_45 = arith.constant 0 : index
    %118 = vector.load %arg11[%c0_44, %c0_45] : memref<128x256xf32, #tpu.memory_space<vmem>>, vector<128x256xf32>
    %cst_46 = arith.constant dense<0.000000e+00> : vector<8x256xf32>
    %119 = tpu.matmul %1, %118, %cst_46 {dimension_numbers = #tpu.dot_dimension_numbers<[1], [0], [0], [1], [0, 0, 1, 1], [], []>} : vector<8x128xf32>, vector<128x256xf32>, vector<8x256xf32> -> vector<8x256xf32>
    %c0_47 = arith.constant 0 : index
    %c0_48 = arith.constant 0 : index
    %120 = vector.load %arg12[%c0_47, %c0_48] : memref<1x256xf32, #tpu.memory_space<vmem>>, vector<1x256xf32>
    %121 = vector.broadcast %120 : vector<1x256xf32> to vector<8x256xf32>
    %122 = arith.addf %119, %121 : vector<8x256xf32>
    %123 = vector.extract_strided_slice %122 {offsets = [0, 0], sizes = [8, 128], strides = [1, 1]} : vector<8x256xf32> to vector<8x128xf32>
    %124 = vector.extract_strided_slice %122 {offsets = [0, 128], sizes = [8, 128], strides = [1, 1]} : vector<8x256xf32> to vector<8x128xf32>
    %125 = vector.extract_strided_slice %117 {offsets = [0, 0], sizes = [8, 32], strides = [1, 1]} : vector<8x128xf32> to vector<8x32xf32>
    %126 = vector.extract_strided_slice %123 {offsets = [0, 0], sizes = [8, 32], strides = [1, 1]} : vector<8x128xf32> to vector<8x32xf32>
    %127 = vector.extract_strided_slice %124 {offsets = [0, 0], sizes = [8, 32], strides = [1, 1]} : vector<8x128xf32> to vector<8x32xf32>
    %128 = tpu.transpose %126, [1, 0] : vector<8x32xf32> -> vector<32x8xf32>
    %cst_49 = arith.constant dense<0.000000e+00> : vector<8x8xf32>
    %129 = tpu.matmul %125, %128, %cst_49 {dimension_numbers = #tpu.dot_dimension_numbers<[1], [0], [0], [1], [0, 0, 1, 1], [], []>} : vector<8x32xf32>, vector<32x8xf32>, vector<8x8xf32> -> vector<8x8xf32>
    %cst_50 = arith.constant dense<0xFF800000> : vector<8xf32>
    %130 = vector.multi_reduction <maximumf>, %129, %cst_50 [1] : vector<8x8xf32> to vector<8xf32>
    %131 = vector.shape_cast %130 : vector<8xf32> to vector<8x1xf32>
    %132 = vector.broadcast %131 : vector<8x1xf32> to vector<8x8xf32>
    %133 = arith.subf %129, %132 : vector<8x8xf32>
    %134 = math.exp %133 : vector<8x8xf32>
    %cst_51 = arith.constant dense<0.000000e+00> : vector<8xf32>
    %135 = vector.multi_reduction <add>, %134, %cst_51 [1] : vector<8x8xf32> to vector<8xf32>
    %136 = vector.shape_cast %135 : vector<8xf32> to vector<8x1xf32>
    %137 = tpu.reciprocal %136 {approx = true} : vector<8x1xf32> -> vector<8x1xf32>
    %138 = vector.broadcast %137 : vector<8x1xf32> to vector<8x8xf32>
    %139 = arith.mulf %134, %138 : vector<8x8xf32>
    %cst_52 = arith.constant dense<0.000000e+00> : vector<8x32xf32>
    %140 = tpu.matmul %139, %127, %cst_52 {dimension_numbers = #tpu.dot_dimension_numbers<[1], [0], [0], [1], [0, 0, 1, 1], [], []>} : vector<8x8xf32>, vector<8x32xf32>, vector<8x32xf32> -> vector<8x32xf32>
    %141 = vector.extract_strided_slice %117 {offsets = [0, 32], sizes = [8, 32], strides = [1, 1]} : vector<8x128xf32> to vector<8x32xf32>
    %142 = vector.extract_strided_slice %123 {offsets = [0, 32], sizes = [8, 32], strides = [1, 1]} : vector<8x128xf32> to vector<8x32xf32>
    %143 = vector.extract_strided_slice %124 {offsets = [0, 32], sizes = [8, 32], strides = [1, 1]} : vector<8x128xf32> to vector<8x32xf32>
    %144 = tpu.transpose %142, [1, 0] : vector<8x32xf32> -> vector<32x8xf32>
    %cst_53 = arith.constant dense<0.000000e+00> : vector<8x8xf32>
    %145 = tpu.matmul %141, %144, %cst_53 {dimension_numbers = #tpu.dot_dimension_numbers<[1], [0], [0], [1], [0, 0, 1, 1], [], []>} : vector<8x32xf32>, vector<32x8xf32>, vector<8x8xf32> -> vector<8x8xf32>
    %cst_54 = arith.constant dense<0xFF800000> : vector<8xf32>
    %146 = vector.multi_reduction <maximumf>, %145, %cst_54 [1] : vector<8x8xf32> to vector<8xf32>
    %147 = vector.shape_cast %146 : vector<8xf32> to vector<8x1xf32>
    %148 = vector.broadcast %147 : vector<8x1xf32> to vector<8x8xf32>
    %149 = arith.subf %145, %148 : vector<8x8xf32>
    %150 = math.exp %149 : vector<8x8xf32>
    %cst_55 = arith.constant dense<0.000000e+00> : vector<8xf32>
    %151 = vector.multi_reduction <add>, %150, %cst_55 [1] : vector<8x8xf32> to vector<8xf32>
    %152 = vector.shape_cast %151 : vector<8xf32> to vector<8x1xf32>
    %153 = tpu.reciprocal %152 {approx = true} : vector<8x1xf32> -> vector<8x1xf32>
    %154 = vector.broadcast %153 : vector<8x1xf32> to vector<8x8xf32>
    %155 = arith.mulf %150, %154 : vector<8x8xf32>
    %cst_56 = arith.constant dense<0.000000e+00> : vector<8x32xf32>
    %156 = tpu.matmul %155, %143, %cst_56 {dimension_numbers = #tpu.dot_dimension_numbers<[1], [0], [0], [1], [0, 0, 1, 1], [], []>} : vector<8x8xf32>, vector<8x32xf32>, vector<8x32xf32> -> vector<8x32xf32>
    %157 = vector.extract_strided_slice %117 {offsets = [0, 64], sizes = [8, 32], strides = [1, 1]} : vector<8x128xf32> to vector<8x32xf32>
    %158 = vector.extract_strided_slice %123 {offsets = [0, 64], sizes = [8, 32], strides = [1, 1]} : vector<8x128xf32> to vector<8x32xf32>
    %159 = vector.extract_strided_slice %124 {offsets = [0, 64], sizes = [8, 32], strides = [1, 1]} : vector<8x128xf32> to vector<8x32xf32>
    %160 = tpu.transpose %158, [1, 0] : vector<8x32xf32> -> vector<32x8xf32>
    %cst_57 = arith.constant dense<0.000000e+00> : vector<8x8xf32>
    %161 = tpu.matmul %157, %160, %cst_57 {dimension_numbers = #tpu.dot_dimension_numbers<[1], [0], [0], [1], [0, 0, 1, 1], [], []>} : vector<8x32xf32>, vector<32x8xf32>, vector<8x8xf32> -> vector<8x8xf32>
    %cst_58 = arith.constant dense<0xFF800000> : vector<8xf32>
    %162 = vector.multi_reduction <maximumf>, %161, %cst_58 [1] : vector<8x8xf32> to vector<8xf32>
    %163 = vector.shape_cast %162 : vector<8xf32> to vector<8x1xf32>
    %164 = vector.broadcast %163 : vector<8x1xf32> to vector<8x8xf32>
    %165 = arith.subf %161, %164 : vector<8x8xf32>
    %166 = math.exp %165 : vector<8x8xf32>
    %cst_59 = arith.constant dense<0.000000e+00> : vector<8xf32>
    %167 = vector.multi_reduction <add>, %166, %cst_59 [1] : vector<8x8xf32> to vector<8xf32>
    %168 = vector.shape_cast %167 : vector<8xf32> to vector<8x1xf32>
    %169 = tpu.reciprocal %168 {approx = true} : vector<8x1xf32> -> vector<8x1xf32>
    %170 = vector.broadcast %169 : vector<8x1xf32> to vector<8x8xf32>
    %171 = arith.mulf %166, %170 : vector<8x8xf32>
    %cst_60 = arith.constant dense<0.000000e+00> : vector<8x32xf32>
    %172 = tpu.matmul %171, %159, %cst_60 {dimension_numbers = #tpu.dot_dimension_numbers<[1], [0], [0], [1], [0, 0, 1, 1], [], []>} : vector<8x8xf32>, vector<8x32xf32>, vector<8x32xf32> -> vector<8x32xf32>
    %173 = vector.extract_strided_slice %117 {offsets = [0, 96], sizes = [8, 32], strides = [1, 1]} : vector<8x128xf32> to vector<8x32xf32>
    %174 = vector.extract_strided_slice %123 {offsets = [0, 96], sizes = [8, 32], strides = [1, 1]} : vector<8x128xf32> to vector<8x32xf32>
    %175 = vector.extract_strided_slice %124 {offsets = [0, 96], sizes = [8, 32], strides = [1, 1]} : vector<8x128xf32> to vector<8x32xf32>
    %176 = tpu.transpose %174, [1, 0] : vector<8x32xf32> -> vector<32x8xf32>
    %cst_61 = arith.constant dense<0.000000e+00> : vector<8x8xf32>
    %177 = tpu.matmul %173, %176, %cst_61 {dimension_numbers = #tpu.dot_dimension_numbers<[1], [0], [0], [1], [0, 0, 1, 1], [], []>} : vector<8x32xf32>, vector<32x8xf32>, vector<8x8xf32> -> vector<8x8xf32>
    %cst_62 = arith.constant dense<0xFF800000> : vector<8xf32>
    %178 = vector.multi_reduction <maximumf>, %177, %cst_62 [1] : vector<8x8xf32> to vector<8xf32>
    %179 = vector.shape_cast %178 : vector<8xf32> to vector<8x1xf32>
    %180 = vector.broadcast %179 : vector<8x1xf32> to vector<8x8xf32>
    %181 = arith.subf %177, %180 : vector<8x8xf32>
    %182 = math.exp %181 : vector<8x8xf32>
    %cst_63 = arith.constant dense<0.000000e+00> : vector<8xf32>
    %183 = vector.multi_reduction <add>, %182, %cst_63 [1] : vector<8x8xf32> to vector<8xf32>
    %184 = vector.shape_cast %183 : vector<8xf32> to vector<8x1xf32>
    %185 = tpu.reciprocal %184 {approx = true} : vector<8x1xf32> -> vector<8x1xf32>
    %186 = vector.broadcast %185 : vector<8x1xf32> to vector<8x8xf32>
    %187 = arith.mulf %182, %186 : vector<8x8xf32>
    %cst_64 = arith.constant dense<0.000000e+00> : vector<8x32xf32>
    %188 = tpu.matmul %187, %175, %cst_64 {dimension_numbers = #tpu.dot_dimension_numbers<[1], [0], [0], [1], [0, 0, 1, 1], [], []>} : vector<8x8xf32>, vector<8x32xf32>, vector<8x32xf32> -> vector<8x32xf32>
    %189 = tpu.concatenate %140, %156, %172, %188 in 1 : vector<8x32xf32>, vector<8x32xf32>, vector<8x32xf32>, vector<8x32xf32> -> vector<8x128xf32>
    %c0_65 = arith.constant 0 : index
    %c0_66 = arith.constant 0 : index
    %190 = vector.load %arg13[%c0_65, %c0_66] : memref<128x128xf32, #tpu.memory_space<vmem>>, vector<128x128xf32>
    %cst_67 = arith.constant dense<0.000000e+00> : vector<8x128xf32>
    %191 = tpu.matmul %189, %190, %cst_67 {dimension_numbers = #tpu.dot_dimension_numbers<[1], [0], [0], [1], [0, 0, 1, 1], [], []>} : vector<8x128xf32>, vector<128x128xf32>, vector<8x128xf32> -> vector<8x128xf32>
    %c0_68 = arith.constant 0 : index
    %c0_69 = arith.constant 0 : index
    %192 = vector.load %arg14[%c0_68, %c0_69] : memref<1x128xf32, #tpu.memory_space<vmem>>, vector<1x128xf32>
    %193 = vector.broadcast %192 : vector<1x128xf32> to vector<8x128xf32>
    %194 = arith.addf %191, %193 : vector<8x128xf32>
    %195 = arith.addf %112, %194 : vector<8x128xf32>
    %c0_70 = arith.constant 0 : index
    %c0_71 = arith.constant 0 : index
    %196 = vector.load %arg15[%c0_70, %c0_71] : memref<1x128xf32, #tpu.memory_space<vmem>>, vector<1x128xf32>
    %c0_72 = arith.constant 0 : index
    %c0_73 = arith.constant 0 : index
    %197 = vector.load %arg16[%c0_72, %c0_73] : memref<1x128xf32, #tpu.memory_space<vmem>>, vector<1x128xf32>
    %cst_74 = arith.constant dense<0.000000e+00> : vector<8xf32>
    %198 = vector.multi_reduction <add>, %195, %cst_74 [1] : vector<8x128xf32> to vector<8xf32>
    %199 = vector.shape_cast %198 : vector<8xf32> to vector<8x1xf32>
    %cst_75 = arith.constant 1.280000e+02 : f32
    %200 = vector.broadcast %cst_75 : f32 to vector<8x1xf32>
    %201 = arith.divf %199, %200 : vector<8x1xf32>
    %202 = vector.broadcast %201 : vector<8x1xf32> to vector<8x128xf32>
    %203 = arith.subf %195, %202 : vector<8x128xf32>
    %204 = arith.mulf %203, %203 : vector<8x128xf32>
    %cst_76 = arith.constant dense<0.000000e+00> : vector<8xf32>
    %205 = vector.multi_reduction <add>, %204, %cst_76 [1] : vector<8x128xf32> to vector<8xf32>
    %206 = vector.shape_cast %205 : vector<8xf32> to vector<8x1xf32>
    %cst_77 = arith.constant 1.280000e+02 : f32
    %207 = vector.broadcast %cst_77 : f32 to vector<8x1xf32>
    %208 = arith.divf %206, %207 : vector<8x1xf32>
    %cst_78 = arith.constant 9.99999974E-6 : f32
    %209 = vector.broadcast %cst_78 : f32 to vector<8x1xf32>
    %210 = arith.addf %208, %209 : vector<8x1xf32>
    %211 = math.rsqrt %210 : vector<8x1xf32>
    %212 = vector.broadcast %211 : vector<8x1xf32> to vector<8x128xf32>
    %213 = arith.mulf %203, %212 : vector<8x128xf32>
    %214 = vector.broadcast %196 : vector<1x128xf32> to vector<8x128xf32>
    %215 = arith.mulf %213, %214 : vector<8x128xf32>
    %216 = vector.broadcast %197 : vector<1x128xf32> to vector<8x128xf32>
    %217 = arith.addf %215, %216 : vector<8x128xf32>
    %c0_79 = arith.constant 0 : index
    %c0_80 = arith.constant 0 : index
    %218 = vector.load %arg17[%c0_79, %c0_80] : memref<128x512xf32, #tpu.memory_space<vmem>>, vector<128x512xf32>
    %cst_81 = arith.constant dense<0.000000e+00> : vector<8x512xf32>
    %219 = tpu.matmul %217, %218, %cst_81 {dimension_numbers = #tpu.dot_dimension_numbers<[1], [0], [0], [1], [0, 0, 1, 1], [], []>} : vector<8x128xf32>, vector<128x512xf32>, vector<8x512xf32> -> vector<8x512xf32>
    %c0_82 = arith.constant 0 : index
    %c0_83 = arith.constant 0 : index
    %220 = vector.load %arg18[%c0_82, %c0_83] : memref<1x512xf32, #tpu.memory_space<vmem>>, vector<1x512xf32>
    %221 = vector.broadcast %220 : vector<1x512xf32> to vector<8x512xf32>
    %222 = arith.addf %219, %221 : vector<8x512xf32>
    %cst_84 = arith.constant 0.000000e+00 : f32
    %223 = vector.broadcast %cst_84 : f32 to vector<8x512xf32>
    %224 = arith.maximumf %222, %223 : vector<8x512xf32>
    %c0_85 = arith.constant 0 : index
    %c0_86 = arith.constant 0 : index
    %225 = vector.load %arg19[%c0_85, %c0_86] : memref<512x128xf32, #tpu.memory_space<vmem>>, vector<512x128xf32>
    %cst_87 = arith.constant dense<0.000000e+00> : vector<8x128xf32>
    %226 = tpu.matmul %224, %225, %cst_87 {dimension_numbers = #tpu.dot_dimension_numbers<[1], [0], [0], [1], [0, 0, 1, 1], [], []>} : vector<8x512xf32>, vector<512x128xf32>, vector<8x128xf32> -> vector<8x128xf32>
    %c0_88 = arith.constant 0 : index
    %c0_89 = arith.constant 0 : index
    %227 = vector.load %arg20[%c0_88, %c0_89] : memref<1x128xf32, #tpu.memory_space<vmem>>, vector<1x128xf32>
    %228 = vector.broadcast %227 : vector<1x128xf32> to vector<8x128xf32>
    %229 = arith.addf %226, %228 : vector<8x128xf32>
    %230 = arith.addf %217, %229 : vector<8x128xf32>
    %c0_90 = arith.constant 0 : index
    %c0_91 = arith.constant 0 : index
    %231 = vector.load %arg21[%c0_90, %c0_91] : memref<1x128xf32, #tpu.memory_space<vmem>>, vector<1x128xf32>
    %c0_92 = arith.constant 0 : index
    %c0_93 = arith.constant 0 : index
    %232 = vector.load %arg22[%c0_92, %c0_93] : memref<1x128xf32, #tpu.memory_space<vmem>>, vector<1x128xf32>
    %cst_94 = arith.constant dense<0.000000e+00> : vector<8xf32>
    %233 = vector.multi_reduction <add>, %230, %cst_94 [1] : vector<8x128xf32> to vector<8xf32>
    %234 = vector.shape_cast %233 : vector<8xf32> to vector<8x1xf32>
    %cst_95 = arith.constant 1.280000e+02 : f32
    %235 = vector.broadcast %cst_95 : f32 to vector<8x1xf32>
    %236 = arith.divf %234, %235 : vector<8x1xf32>
    %237 = vector.broadcast %236 : vector<8x1xf32> to vector<8x128xf32>
    %238 = arith.subf %230, %237 : vector<8x128xf32>
    %239 = arith.mulf %238, %238 : vector<8x128xf32>
    %cst_96 = arith.constant dense<0.000000e+00> : vector<8xf32>
    %240 = vector.multi_reduction <add>, %239, %cst_96 [1] : vector<8x128xf32> to vector<8xf32>
    %241 = vector.shape_cast %240 : vector<8xf32> to vector<8x1xf32>
    %cst_97 = arith.constant 1.280000e+02 : f32
    %242 = vector.broadcast %cst_97 : f32 to vector<8x1xf32>
    %243 = arith.divf %241, %242 : vector<8x1xf32>
    %cst_98 = arith.constant 9.99999974E-6 : f32
    %244 = vector.broadcast %cst_98 : f32 to vector<8x1xf32>
    %245 = arith.addf %243, %244 : vector<8x1xf32>
    %246 = math.rsqrt %245 : vector<8x1xf32>
    %247 = vector.broadcast %246 : vector<8x1xf32> to vector<8x128xf32>
    %248 = arith.mulf %238, %247 : vector<8x128xf32>
    %249 = vector.broadcast %231 : vector<1x128xf32> to vector<8x128xf32>
    %250 = arith.mulf %248, %249 : vector<8x128xf32>
    %251 = vector.broadcast %232 : vector<1x128xf32> to vector<8x128xf32>
    %252 = arith.addf %250, %251 : vector<8x128xf32>
    %c0_99 = arith.constant 0 : index
    %c0_100 = arith.constant 0 : index
    %253 = vector.load %arg23[%c0_99, %c0_100] : memref<8x128xf32, #tpu.memory_space<vmem>>, vector<8x128xf32>
    tpu.vector_store %arg23[%c0_99, %c0_100], %252 {strides = array<i32>} : memref<8x128xf32, #tpu.memory_space<vmem>>, vector<8x128xf32>,
    return
  }
  func.func @transform_0(%arg0: i32) -> (i32, i32) {
    %c0_i32 = arith.constant 0 : i32
    %c0_i32_0 = arith.constant 0 : i32
    return %arg0, %c0_i32 : i32, i32
  }
  func.func @transform_1(%arg0: i32) -> (i32, i32) {
    %c0_i32 = arith.constant 0 : i32
    %c0_i32_0 = arith.constant 0 : i32
    return %arg0, %c0_i32 : i32, i32
  }
  func.func @transform_2(%arg0: i32) -> (i32, i32) {
    %c0_i32 = arith.constant 0 : i32
    %c0_i32_0 = arith.constant 0 : i32
    %c0_i32_1 = arith.constant 0 : i32
    return %c0_i32, %c0_i32_0 : i32, i32
  }
  func.func @transform_3(%arg0: i32) -> (i32, i32) {
    %c0_i32 = arith.constant 0 : i32
    %c0_i32_0 = arith.constant 0 : i32
    %c0_i32_1 = arith.constant 0 : i32
    return %c0_i32, %c0_i32_0 : i32, i32
  }
  func.func @transform_4(%arg0: i32) -> (i32, i32) {
    %c0_i32 = arith.constant 0 : i32
    %c0_i32_0 = arith.constant 0 : i32
    %c0_i32_1 = arith.constant 0 : i32
    return %c0_i32, %c0_i32_0 : i32, i32
  }
  func.func @transform_5(%arg0: i32) -> (i32, i32) {
    %c0_i32 = arith.constant 0 : i32
    %c0_i32_0 = arith.constant 0 : i32
    %c0_i32_1 = arith.constant 0 : i32
    return %c0_i32, %c0_i32_0 : i32, i32
  }
  func.func @transform_6(%arg0: i32) -> (i32, i32) {
    %c0_i32 = arith.constant 0 : i32
    %c0_i32_0 = arith.constant 0 : i32
    %c0_i32_1 = arith.constant 0 : i32
    return %c0_i32, %c0_i32_0 : i32, i32
  }
  func.func @transform_7(%arg0: i32) -> (i32, i32) {
    %c0_i32 = arith.constant 0 : i32
    %c0_i32_0 = arith.constant 0 : i32
    %c0_i32_1 = arith.constant 0 : i32
    return %c0_i32, %c0_i32_0 : i32, i32
  }
  func.func @transform_8(%arg0: i32) -> (i32, i32) {
    %c0_i32 = arith.constant 0 : i32
    %c0_i32_0 = arith.constant 0 : i32
    %c0_i32_1 = arith.constant 0 : i32
    return %c0_i32, %c0_i32_0 : i32, i32
  }
  func.func @transform_9(%arg0: i32) -> (i32, i32) {
    %c0_i32 = arith.constant 0 : i32
    %c0_i32_0 = arith.constant 0 : i32
    %c0_i32_1 = arith.constant 0 : i32
    return %c0_i32, %c0_i32_0 : i32, i32
  }
  func.func @transform_10(%arg0: i32) -> (i32, i32) {
    %c0_i32 = arith.constant 0 : i32
    %c0_i32_0 = arith.constant 0 : i32
    %c0_i32_1 = arith.constant 0 : i32
    return %c0_i32, %c0_i32_0 : i32, i32
  }
  func.func @transform_11(%arg0: i32) -> (i32, i32) {
    %c0_i32 = arith.constant 0 : i32
    %c0_i32_0 = arith.constant 0 : i32
    %c0_i32_1 = arith.constant 0 : i32
    return %c0_i32, %c0_i32_0 : i32, i32
  }
  func.func @transform_12(%arg0: i32) -> (i32, i32) {
    %c0_i32 = arith.constant 0 : i32
    %c0_i32_0 = arith.constant 0 : i32
    %c0_i32_1 = arith.constant 0 : i32
    return %c0_i32, %c0_i32_0 : i32, i32
  }
  func.func @transform_13(%arg0: i32) -> (i32, i32) {
    %c0_i32 = arith.constant 0 : i32
    %c0_i32_0 = arith.constant 0 : i32
    %c0_i32_1 = arith.constant 0 : i32
    return %c0_i32, %c0_i32_0 : i32, i32
  }
  func.func @transform_14(%arg0: i32) -> (i32, i32) {
    %c0_i32 = arith.constant 0 : i32
    %c0_i32_0 = arith.constant 0 : i32
    %c0_i32_1 = arith.constant 0 : i32
    return %c0_i32, %c0_i32_0 : i32, i32
  }
  func.func @transform_15(%arg0: i32) -> (i32, i32) {
    %c0_i32 = arith.constant 0 : i32
    %c0_i32_0 = arith.constant 0 : i32
    %c0_i32_1 = arith.constant 0 : i32
    return %c0_i32, %c0_i32_0 : i32, i32
  }
  func.func @transform_16(%arg0: i32) -> (i32, i32) {
    %c0_i32 = arith.constant 0 : i32
    %c0_i32_0 = arith.constant 0 : i32
    %c0_i32_1 = arith.constant 0 : i32
    return %c0_i32, %c0_i32_0 : i32, i32
  }
  func.func @transform_17(%arg0: i32) -> (i32, i32) {
    %c0_i32 = arith.constant 0 : i32
    %c0_i32_0 = arith.constant 0 : i32
    %c0_i32_1 = arith.constant 0 : i32
    return %c0_i32, %c0_i32_0 : i32, i32
  }
  func.func @transform_18(%arg0: i32) -> (i32, i32) {
    %c0_i32 = arith.constant 0 : i32
    %c0_i32_0 = arith.constant 0 : i32
    %c0_i32_1 = arith.constant 0 : i32
    return %c0_i32, %c0_i32_0 : i32, i32
  }
  func.func @transform_19(%arg0: i32) -> (i32, i32) {
    %c0_i32 = arith.constant 0 : i32
    %c0_i32_0 = arith.constant 0 : i32
    %c0_i32_1 = arith.constant 0 : i32
    return %c0_i32, %c0_i32_0 : i32, i32
  }
  func.func @transform_20(%arg0: i32) -> (i32, i32) {
    %c0_i32 = arith.constant 0 : i32
    %c0_i32_0 = arith.constant 0 : i32
    %c0_i32_1 = arith.constant 0 : i32
    return %c0_i32, %c0_i32_0 : i32, i32
  }
  func.func @transform_21(%arg0: i32) -> (i32, i32) {
    %c0_i32 = arith.constant 0 : i32
    %c0_i32_0 = arith.constant 0 : i32
    %c0_i32_1 = arith.constant 0 : i32
    return %c0_i32, %c0_i32_0 : i32, i32
  }
  func.func @transform_22(%arg0: i32) -> (i32, i32) {
    %c0_i32 = arith.constant 0 : i32
    %c0_i32_0 = arith.constant 0 : i32
    return %arg0, %c0_i32 : i32, i32
  }
}

module attributes {stable_mosaic.version = 11 : i64} {
  func.func @_final_norm_fc_kernel(%arg0: memref<16x128xf32, #tpu.memory_space<vmem>>, %arg1: memref<1x128xf32, #tpu.memory_space<vmem>>, %arg2: memref<1x128xf32, #tpu.memory_space<vmem>>, %arg3: memref<128x128xf32, #tpu.memory_space<vmem>>, %arg4: memref<1x128xf32, #tpu.memory_space<vmem>>, %arg5: memref<16x128xf32, #tpu.memory_space<vmem>>) attributes {dimension_semantics = [], scalar_prefetch = 0 : i64, scratch_operands = 0 : i64, tpu.core_type = #tpu.core_type<tc>} {
    %c0 = arith.constant 0 : index
    %c0_0 = arith.constant 0 : index
    %0 = vector.load %arg0[%c0, %c0_0] : memref<16x128xf32, #tpu.memory_space<vmem>>, vector<16x128xf32>
    %c0_1 = arith.constant 0 : index
    %c0_2 = arith.constant 0 : index
    %1 = vector.load %arg1[%c0_1, %c0_2] : memref<1x128xf32, #tpu.memory_space<vmem>>, vector<1x128xf32>
    %c0_3 = arith.constant 0 : index
    %c0_4 = arith.constant 0 : index
    %2 = vector.load %arg2[%c0_3, %c0_4] : memref<1x128xf32, #tpu.memory_space<vmem>>, vector<1x128xf32>
    %cst = arith.constant dense<0.000000e+00> : vector<16xf32>
    %3 = vector.multi_reduction <add>, %0, %cst [1] : vector<16x128xf32> to vector<16xf32>
    %4 = vector.shape_cast %3 : vector<16xf32> to vector<16x1xf32>
    %cst_5 = arith.constant 1.280000e+02 : f32
    %5 = vector.broadcast %cst_5 : f32 to vector<16x1xf32>
    %6 = arith.divf %4, %5 : vector<16x1xf32>
    %7 = vector.broadcast %6 : vector<16x1xf32> to vector<16x128xf32>
    %8 = arith.subf %0, %7 : vector<16x128xf32>
    %9 = arith.mulf %8, %8 : vector<16x128xf32>
    %cst_6 = arith.constant dense<0.000000e+00> : vector<16xf32>
    %10 = vector.multi_reduction <add>, %9, %cst_6 [1] : vector<16x128xf32> to vector<16xf32>
    %11 = vector.shape_cast %10 : vector<16xf32> to vector<16x1xf32>
    %cst_7 = arith.constant 1.280000e+02 : f32
    %12 = vector.broadcast %cst_7 : f32 to vector<16x1xf32>
    %13 = arith.divf %11, %12 : vector<16x1xf32>
    %cst_8 = arith.constant 9.99999974E-6 : f32
    %14 = vector.broadcast %cst_8 : f32 to vector<16x1xf32>
    %15 = arith.addf %13, %14 : vector<16x1xf32>
    %16 = math.rsqrt %15 : vector<16x1xf32>
    %17 = vector.broadcast %16 : vector<16x1xf32> to vector<16x128xf32>
    %18 = arith.mulf %8, %17 : vector<16x128xf32>
    %19 = vector.broadcast %1 : vector<1x128xf32> to vector<16x128xf32>
    %20 = arith.mulf %18, %19 : vector<16x128xf32>
    %21 = vector.broadcast %2 : vector<1x128xf32> to vector<16x128xf32>
    %22 = arith.addf %20, %21 : vector<16x128xf32>
    %c0_9 = arith.constant 0 : index
    %c0_10 = arith.constant 0 : index
    %23 = vector.load %arg3[%c0_9, %c0_10] : memref<128x128xf32, #tpu.memory_space<vmem>>, vector<128x128xf32>
    %cst_11 = arith.constant dense<0.000000e+00> : vector<16x128xf32>
    %24 = tpu.matmul %22, %23, %cst_11 {dimension_numbers = #tpu.dot_dimension_numbers<[1], [0], [0], [1], [0, 0, 1, 1], [], []>} : vector<16x128xf32>, vector<128x128xf32>, vector<16x128xf32> -> vector<16x128xf32>
    %c0_12 = arith.constant 0 : index
    %c0_13 = arith.constant 0 : index
    %25 = vector.load %arg4[%c0_12, %c0_13] : memref<1x128xf32, #tpu.memory_space<vmem>>, vector<1x128xf32>
    %26 = vector.broadcast %25 : vector<1x128xf32> to vector<16x128xf32>
    %27 = arith.addf %24, %26 : vector<16x128xf32>
    %c0_14 = arith.constant 0 : index
    %c0_15 = arith.constant 0 : index
    %28 = vector.load %arg5[%c0_14, %c0_15] : memref<16x128xf32, #tpu.memory_space<vmem>>, vector<16x128xf32>
    tpu.vector_store %arg5[%c0_14, %c0_15], %27 {strides = array<i32>} : memref<16x128xf32, #tpu.memory_space<vmem>>, vector<16x128xf32>,
    return
  }
}

</mosaic_0001>

<llo_original>
// kernel: tiny_transformer_forward.8
$region0: #{tiny_transformer_forward.8}
  #allocation0 [shape = 'u32[]', space=smem, size = 0x4, offset = 0x4, fixed_abs, tag = 'smem constant byte address 0x4 - core index']
  #allocation1 [shape = 'u32[72,128]{1,0:T(1,128)}', space=vmem, size = 0x9000, scoped, tag = 'internal scratch']
  %s0 = inlined_call_operand.vmem [shape: f32[16,128], index: 0, kind: input, shape index: {}]
  %s1 = inlined_call_operand.vmem [shape: f32[1,128], index: 1, kind: input, shape index: {}]
  %s2 = inlined_call_operand.vmem [shape: f32[1,128], index: 2, kind: input, shape index: {}]
  %s3 = inlined_call_operand.vmem [shape: f32[16,128], index: 3, kind: output, shape index: {}]
  %s4 = sld [smem:[#allocation0]]
  $region22: #{tiny_transformer_forward.8} parent=0
    _
  %s6 = ssub.s32 1, %s4
  %s7 = scalar_select 0, %s6, %s4
  // Predicated region
  $region2: #{tiny_transformer_forward.8} parent=0 // pred_check
    _
  $region3: #{tiny_transformer_forward.8} parent=0 // pred_check_branch
    %9 = sbr.rel (0) target = $region5
  $region4: #{tiny_transformer_forward.8} parent=0 // pred_region
    _
  $region5: #{tiny_transformer_forward.8} parent=0 // pred_fallthru
    _
  // Predicated region
  $region6: #{tiny_transformer_forward.8} parent=0 // pred_check
    _
  $region7: #{tiny_transformer_forward.8} parent=0 // pred_check_branch
    %11 = sbr.rel (0) target = $region9
  $region8: #{tiny_transformer_forward.8} parent=0 // pred_region
    _
  $region9: #{tiny_transformer_forward.8} parent=0 // pred_fallthru
    _
  // Predicated region
  $region10: #{tiny_transformer_forward.8} parent=0 // pred_check
    _
  $region11: #{tiny_transformer_forward.8} parent=0 // pred_check_branch
    %13 = sbr.rel (0) target = $region13
  $region12: #{tiny_transformer_forward.8} parent=0 // pred_region
    _
  $region13: #{tiny_transformer_forward.8} parent=0 // pred_fallthru
    _
  %v14 = vld [vmem:[%s0] sm:$0xff]
  %v15 = vld [vmem:[%s0 + $0x8] sm:$0xff]
  %v16 = vld [vmem:[%s1] sm:$0x1]
  %v17 = vld [vmem:[%s2] sm:$0x1]
  %18 = vadd.xlane.f32.xlu0 %v14
  %v19 = vpop.xlane.xlu0 %18
  %20 = vadd.xlane.f32.xlu0 %v15
  %v21 = vpop.xlane.xlu0 %20
  %v22 = vrcp.pop 128.0
  %v23 = vmul.f32 128.0, %v22
  %v24 = vsub.f32 1.0, %v23
  %v25 = vmul.f32 %v22, %v24
  %v26 = vadd.f32 %v22, %v25
  %vm27 = vweird.f32 %v22
  %v28 = vsel %vm27, %v22, %v26
  %v29 = vmul.f32 %v19, %v28
  %v30 = vmul.f32 %v21, %v28
  %v31 = vsub.f32 %v14, %v29
  %v32 = vsub.f32 %v15, %v30
  %v33 = vmul.f32 %v31, %v31
  %v34 = vmul.f32 %v32, %v32
  %35 = vadd.xlane.f32.xlu0 %v33
  %v36 = vpop.xlane.xlu0 %35
  %37 = vadd.xlane.f32.xlu0 %v34
  %v38 = vpop.xlane.xlu0 %37
  %v39 = vmul.f32 %v36, %v28
  %v40 = vmul.f32 %v38, %v28
  %v41 = vadd.f32 %v39, 1e-05
  %v42 = vadd.f32 %v40, 1e-05
  %v43 = vrsqrt.pop %v41
  %v44 = vmul.f32 %v43, %v41
  %v45 = vmul.f32 %v44, %v43
  %v46 = vmul.f32 0.5, %v45
  %v47 = vsub.f32 1.5, %v46
  %v48 = vmul.f32 %v43, %v47
  %vm49 = vweird.f32 %v41
  %vm50 = vweird.f32 %v43
  %vm51 = vmor %vm49, %vm50
  %v52 = vsel %vm51, %v43, %v48
  %v53 = vrsqrt.pop %v42
  %v54 = vmul.f32 %v53, %v42
  %v55 = vmul.f32 %v54, %v53
  %v56 = vmul.f32 0.5, %v55
  %v57 = vsub.f32 1.5, %v56
  %v58 = vmul.f32 %v53, %v57
  %vm59 = vweird.f32 %v42
  %vm60 = vweird.f32 %v53
  %vm61 = vmor %vm59, %vm60
  %v62 = vsel %vm61, %v53, %v58
  %v63 = vmul.f32 %v31, %v52
  %v64 = vmul.f32 %v32, %v62
  %v66 = vperm.slane %v16, 0
  %v68 = vmul.f32 %v63, %v66
  %v69 = vmul.f32 %v64, %v66
  %v71 = vperm.slane %v17, 0
  %v73 = vadd.f32 %v68, %v71
  %v74 = vadd.f32 %v69, %v71
  %75 = vst [vmem:[%s3] sm:$0xff] %v73
  %76 = vst [vmem:[%s3 + $0x8] sm:$0xff] %v74
  // Predicated region
  $region14: #{tiny_transformer_forward.8} parent=0 // pred_check
    _
  $region15: #{tiny_transformer_forward.8} parent=0 // pred_check_branch
    %78 = sbr.rel (0) target = $region17
  $region16: #{tiny_transformer_forward.8} parent=0 // pred_region
    _
  $region17: #{tiny_transformer_forward.8} parent=0 // pred_fallthru
    _
  // Predicated region
  $region18: #{tiny_transformer_forward.8} parent=0 // pred_check
    _
  $region19: #{tiny_transformer_forward.8} parent=0 // pred_check_branch
    %80 = sbr.rel (0) target = $region21
  $region20: #{tiny_transformer_forward.8} parent=0 // pred_region
    _
  $region21: #{tiny_transformer_forward.8} parent=0 // pred_fallthru
    _

// kernel: tiny_transformer_forward.6
$region0: #{tiny_transformer_forward.6}
  #allocation0 [shape = 'u32[]', space=smem, size = 0x4, offset = 0x4, fixed_abs, tag = 'smem constant byte address 0x4 - core index']
  #allocation1 [shape = 'u32[72,128]{1,0:T(1,128)}', space=vmem, size = 0x9000, scoped, tag = 'internal scratch']
  %s0 = inlined_call_operand.vmem [shape: f32[16,128], index: 0, kind: input, shape index: {}]
  %s1 = inlined_call_operand.hbm [shape: f32[128,384], index: 1, kind: input, shape index: {}]
  %s2 = inlined_call_operand.vmem [shape: f32[1,384], index: 2, kind: input, shape index: {}]
  %s3 = inlined_call_operand.hbm [shape: f32[128,128], index: 3, kind: input, shape index: {}]
  %s4 = inlined_call_operand.vmem [shape: f32[1,128], index: 4, kind: input, shape index: {}]
  %s5 = inlined_call_operand.vmem [shape: f32[1,128], index: 5, kind: input, shape index: {}]
  %s6 = inlined_call_operand.vmem [shape: f32[1,128], index: 6, kind: input, shape index: {}]
  %s7 = inlined_call_operand.hbm [shape: f32[128,512], index: 7, kind: input, shape index: {}]
  %s8 = inlined_call_operand.vmem [shape: f32[1,512], index: 8, kind: input, shape index: {}]
  %s9 = inlined_call_operand.hbm [shape: f32[512,128], index: 9, kind: input, shape index: {}]
  %s10 = inlined_call_operand.vmem [shape: f32[1,128], index: 10, kind: input, shape index: {}]
  %s11 = inlined_call_operand.vmem [shape: f32[1,128], index: 11, kind: input, shape index: {}]
  %s12 = inlined_call_operand.vmem [shape: f32[1,128], index: 12, kind: input, shape index: {}]
  %s13 = inlined_call_operand.vmem [shape: f32[16,128], index: 13, kind: output, shape index: {}]
  %s14 = sld [smem:[#allocation0]]
  $region101: #{tiny_transformer_forward.6} parent=0
    _
  %s16 = ssub.s32 1, %s14
  %s17 = scalar_select 0, %s16, %s14
  $region1: #{tiny_transformer_forward.6} parent=0
    #allocation2 [shape = 'u8[196608]{0}', space=vmem, size = 0x30000, scoped, tag = 'input window, operand 1, single buffered']
    #allocation3 [shape = 's32[2]{0}', space=sflag, size = 0x8, scoped, tag = 'scoped memory for tiny_transformer_forward.6']
    #allocation4 [shape = 'u8[65536]{0}', space=vmem, size = 0x10000, scoped, tag = 'input window, operand 3, single buffered']
    #allocation5 [shape = 's32[1]{0}', space=sflag, size = 0x4, scoped, tag = 'scoped memory for tiny_transformer_forward.6']
    #allocation6 [shape = 'u8[262144]{0}', space=vmem, size = 0x40000, scoped, tag = 'input window, operand 7, single buffered']
    #allocation7 [shape = 'u8[262144]{0}', space=vmem, size = 0x40000, scoped, tag = 'input window, operand 9, single buffered']
    #allocation8 [shape = 's32[1]{0}', space=sflag, size = 0x4, scoped, tag = 'scoped memory for tiny_transformer_forward.6']
    %18 = vsyncpa [#allocation3], 0
    %19 = vsyncpa [#allocation5], 0
    %20 = vsyncpa [#allocation8], 0
    loop: start=0, step=1, limit=4
    $region2: #{tiny_transformer_forward.6} parent=1 // loop_pre_header
      _
    $region3: #{tiny_transformer_forward.6} parent=1 // loop_header
      %s22 = sphi 0, %s26
      %p23 = scmp.ge.s32.totalorder %s22, 4
      %s32 = sphi 0, %s34
      %s35 = sphi 0, %s32
      %s36 = sphi 0, %s35
      %s52 = sphi 0, %s36
      %s56 = sphi 0, %s56
      %s58 = sphi 0, %s56
      %s59 = sphi 0, %s58
      %s73 = sphi 0, %s59
      %s77 = sphi 0, %s77
      %s79 = sphi 0, %s77
      %s80 = sphi 0, %s79
      %s94 = sphi 0, %s80
      %s98 = sphi 0, %s98
      %s100 = sphi 0, %s98
      %s101 = sphi 0, %s100
      %s115 = sphi 0, %s101
      %s119 = sphi 0, %s119
      %s121 = sphi 0, %s119
      %s122 = sphi 0, %s121
      %s136 = sphi 0, %s122
      %s140 = sphi 0, %s140
      %s142 = sphi 0, %s140
      %s143 = sphi 0, %s142
      %s157 = sphi 0, %s143
      %s161 = sphi 0, %s161
      %s163 = sphi 0, %s161
      %s164 = sphi 0, %s163
      %s178 = sphi 0, %s164
      %s182 = sphi 0, %s182
      %s184 = sphi 0, %s182
      %s185 = sphi 0, %s184
      %s199 = sphi 0, %s185
      %s203 = sphi 0, %s203
      %s205 = sphi 0, %s203
      %s206 = sphi 0, %s205
      %s220 = sphi 0, %s206
      %s224 = sphi 0, %s224
      %s226 = sphi 0, %s224
      %s227 = sphi 0, %s226
      %s241 = sphi 0, %s227
      %s245 = sphi 0, %s245
      %s247 = sphi 0, %s245
      %s248 = sphi 0, %s247
      %s262 = sphi 0, %s248
      %s266 = sphi 0, %s266
      %s268 = sphi 0, %s266
      %s269 = sphi 0, %s268
      %s283 = sphi 0, %s269
      %s287 = sphi 0, %s287
      %s289 = sphi 0, %s287
      %s290 = sphi 0, %s289
      %s304 = sphi 0, %s290
      %s310 = sphi 0, %s312
      %s313 = sphi 0, %s310
      %s314 = sphi 0, %s313
      %s330 = sphi 0, %s314
    $region4: #{tiny_transformer_forward.6} parent=1 // loop_header_branch
      %25 = sbr.rel (%p23) target = $region8
    $region5: #{tiny_transformer_forward.6} parent=1 // loop_body
      %s27 = ssub.s32 %s22, 1
      %s28 = ssub.s32 %s22, 2
      %s29 = sadd.s32 %s22, 1
      %s30 = ssub.s32 %s22, %s29
      %p31 = scmp.eq.s32.totalorder %s30, 0
      %s33 = sadd.s32 %s32, 1
      %s34 = scalar_select %p31, %s32, %s33
      %p37 = pneg %p31
      %p38 = scmp.eq.s32.totalorder %s22, 1
      %p39 = por %p37, %p38
      %p40 = scmp.ne.s32.totalorder %s32, %s35
      %p41 = scmp.eq.s32.totalorder %s22, 0
      %p42 = por %p40, %p41
      %p43 = scmp.ne.s32.totalorder %s32, %s35
      %p44 = scmp.eq.s32.totalorder %s27, 1
      %p45 = por %p43, %p44
      %p46 = scmp.ne.s32.totalorder %s35, %s36
      %p47 = scmp.eq.s32.totalorder %s27, 0
      %p48 = por %p46, %p47
      %p49 = scmp.ne.s32.totalorder %s35, %s36
      %p50 = scmp.eq.s32.totalorder %s28, 1
      %p51 = por %p49, %p50
      %p53 = scmp.ne.s32.totalorder %s36, %s52
      %p54 = scmp.eq.s32.totalorder %s28, 0
      %p55 = por %p53, %p54
      %s57 = sadd.s32 %s56, 1
      %p60 = scmp.eq.s32.totalorder %s22, 1
      %p61 = scmp.ne.s32.totalorder %s56, %s58
      %p62 = scmp.eq.s32.totalorder %s22, 0
      %p63 = por %p61, %p62
      %p64 = scmp.ne.s32.totalorder %s56, %s58
      %p65 = scmp.eq.s32.totalorder %s27, 1
      %p66 = por %p64, %p65
      %p67 = scmp.ne.s32.totalorder %s58, %s59
      %p68 = scmp.eq.s32.totalorder %s27, 0
      %p69 = por %p67, %p68
      %p70 = scmp.ne.s32.totalorder %s58, %s59
      %p71 = scmp.eq.s32.totalorder %s28, 1
      %p72 = por %p70, %p71
      %p74 = scmp.ne.s32.totalorder %s59, %s73
      %p75 = scmp.eq.s32.totalorder %s28, 0
      %p76 = por %p74, %p75
      %s78 = sadd.s32 %s77, 1
      %p81 = scmp.eq.s32.totalorder %s22, 1
      %p82 = scmp.ne.s32.totalorder %s77, %s79
      %p83 = scmp.eq.s32.totalorder %s22, 0
      %p84 = por %p82, %p83
      %p85 = scmp.ne.s32.totalorder %s77, %s79
      %p86 = scmp.eq.s32.totalorder %s27, 1
      %p87 = por %p85, %p86
      %p88 = scmp.ne.s32.totalorder %s79, %s80
      %p89 = scmp.eq.s32.totalorder %s27, 0
      %p90 = por %p88, %p89
      %p91 = scmp.ne.s32.totalorder %s79, %s80
      %p92 = scmp.eq.s32.totalorder %s28, 1
      %p93 = por %p91, %p92
      %p95 = scmp.ne.s32.totalorder %s80, %s94
      %p96 = scmp.eq.s32.totalorder %s28, 0
      %p97 = por %p95, %p96
      %s99 = sadd.s32 %s98, 1
      %p102 = scmp.eq.s32.totalorder %s22, 1
      %p103 = scmp.ne.s32.totalorder %s98, %s100
      %p104 = scmp.eq.s32.totalorder %s22, 0
      %p105 = por %p103, %p104
      %p106 = scmp.ne.s32.totalorder %s98, %s100
      %p107 = scmp.eq.s32.totalorder %s27, 1
      %p108 = por %p106, %p107
      %p109 = scmp.ne.s32.totalorder %s100, %s101
      %p110 = scmp.eq.s32.totalorder %s27, 0
      %p111 = por %p109, %p110
      %p112 = scmp.ne.s32.totalorder %s100, %s101
      %p113 = scmp.eq.s32.totalorder %s28, 1
      %p114 = por %p112, %p113
      %p116 = scmp.ne.s32.totalorder %s101, %s115
      %p117 = scmp.eq.s32.totalorder %s28, 0
      %p118 = por %p116, %p117
      %s120 = sadd.s32 %s119, 1
      %p123 = scmp.eq.s32.totalorder %s22, 1
      %p124 = scmp.ne.s32.totalorder %s119, %s121
      %p125 = scmp.eq.s32.totalorder %s22, 0
      %p126 = por %p124, %p125
      %p127 = scmp.ne.s32.totalorder %s119, %s121
      %p128 = scmp.eq.s32.totalorder %s27, 1
      %p129 = por %p127, %p128
      %p130 = scmp.ne.s32.totalorder %s121, %s122
      %p131 = scmp.eq.s32.totalorder %s27, 0
      %p132 = por %p130, %p131
      %p133 = scmp.ne.s32.totalorder %s121, %s122
      %p134 = scmp.eq.s32.totalorder %s28, 1
      %p135 = por %p133, %p134
      %p137 = scmp.ne.s32.totalorder %s122, %s136
      %p138 = scmp.eq.s32.totalorder %s28, 0
      %p139 = por %p137, %p138
      %s141 = sadd.s32 %s140, 1
      %p144 = scmp.eq.s32.totalorder %s22, 1
      %p145 = scmp.ne.s32.totalorder %s140, %s142
      %p146 = scmp.eq.s32.totalorder %s22, 0
      %p147 = por %p145, %p146
      %p148 = scmp.ne.s32.totalorder %s140, %s142
      %p149 = scmp.eq.s32.totalorder %s27, 1
      %p150 = por %p148, %p149
      %p151 = scmp.ne.s32.totalorder %s142, %s143
      %p152 = scmp.eq.s32.totalorder %s27, 0
      %p153 = por %p151, %p152
      %p154 = scmp.ne.s32.totalorder %s142, %s143
      %p155 = scmp.eq.s32.totalorder %s28, 1
      %p156 = por %p154, %p155
      %p158 = scmp.ne.s32.totalorder %s143, %s157
      %p159 = scmp.eq.s32.totalorder %s28, 0
      %p160 = por %p158, %p159
      %s162 = sadd.s32 %s161, 1
      %p165 = scmp.eq.s32.totalorder %s22, 1
      %p166 = scmp.ne.s32.totalorder %s161, %s163
      %p167 = scmp.eq.s32.totalorder %s22, 0
      %p168 = por %p166, %p167
      %p169 = scmp.ne.s32.totalorder %s161, %s163
      %p170 = scmp.eq.s32.totalorder %s27, 1
      %p171 = por %p169, %p170
      %p172 = scmp.ne.s32.totalorder %s163, %s164
      %p173 = scmp.eq.s32.totalorder %s27, 0
      %p174 = por %p172, %p173
      %p175 = scmp.ne.s32.totalorder %s163, %s164
      %p176 = scmp.eq.s32.totalorder %s28, 1
      %p177 = por %p175, %p176
      %p179 = scmp.ne.s32.totalorder %s164, %s178
      %p180 = scmp.eq.s32.totalorder %s28, 0
      %p181 = por %p179, %p180
      %s183 = sadd.s32 %s182, 1
      %p186 = scmp.eq.s32.totalorder %s22, 1
      %p187 = scmp.ne.s32.totalorder %s182, %s184
      %p188 = scmp.eq.s32.totalorder %s22, 0
      %p189 = por %p187, %p188
      %p190 = scmp.ne.s32.totalorder %s182, %s184
      %p191 = scmp.eq.s32.totalorder %s27, 1
      %p192 = por %p190, %p191
      %p193 = scmp.ne.s32.totalorder %s184, %s185
      %p194 = scmp.eq.s32.totalorder %s27, 0
      %p195 = por %p193, %p194
      %p196 = scmp.ne.s32.totalorder %s184, %s185
      %p197 = scmp.eq.s32.totalorder %s28, 1
      %p198 = por %p196, %p197
      %p200 = scmp.ne.s32.totalorder %s185, %s199
      %p201 = scmp.eq.s32.totalorder %s28, 0
      %p202 = por %p200, %p201
      %s204 = sadd.s32 %s203, 1
      %p207 = scmp.eq.s32.totalorder %s22, 1
      %p208 = scmp.ne.s32.totalorder %s203, %s205
      %p209 = scmp.eq.s32.totalorder %s22, 0
      %p210 = por %p208, %p209
      %p211 = scmp.ne.s32.totalorder %s203, %s205
      %p212 = scmp.eq.s32.totalorder %s27, 1
      %p213 = por %p211, %p212
      %p214 = scmp.ne.s32.totalorder %s205, %s206
      %p215 = scmp.eq.s32.totalorder %s27, 0
      %p216 = por %p214, %p215
      %p217 = scmp.ne.s32.totalorder %s205, %s206
      %p218 = scmp.eq.s32.totalorder %s28, 1
      %p219 = por %p217, %p218
      %p221 = scmp.ne.s32.totalorder %s206, %s220
      %p222 = scmp.eq.s32.totalorder %s28, 0
      %p223 = por %p221, %p222
      %s225 = sadd.s32 %s224, 1
      %p228 = scmp.eq.s32.totalorder %s22, 1
      %p229 = scmp.ne.s32.totalorder %s224, %s226
      %p230 = scmp.eq.s32.totalorder %s22, 0
      %p231 = por %p229, %p230
      %p232 = scmp.ne.s32.totalorder %s224, %s226
      %p233 = scmp.eq.s32.totalorder %s27, 1
      %p234 = por %p232, %p233
      %p235 = scmp.ne.s32.totalorder %s226, %s227
      %p236 = scmp.eq.s32.totalorder %s27, 0
      %p237 = por %p235, %p236
      %p238 = scmp.ne.s32.totalorder %s226, %s227
      %p239 = scmp.eq.s32.totalorder %s28, 1
      %p240 = por %p238, %p239
      %p242 = scmp.ne.s32.totalorder %s227, %s241
      %p243 = scmp.eq.s32.totalorder %s28, 0
      %p244 = por %p242, %p243
      %s246 = sadd.s32 %s245, 1
      %p249 = scmp.eq.s32.totalorder %s22, 1
      %p250 = scmp.ne.s32.totalorder %s245, %s247
      %p251 = scmp.eq.s32.totalorder %s22, 0
      %p252 = por %p250, %p251
      %p253 = scmp.ne.s32.totalorder %s245, %s247
      %p254 = scmp.eq.s32.totalorder %s27, 1
      %p255 = por %p253, %p254
      %p256 = scmp.ne.s32.totalorder %s247, %s248
      %p257 = scmp.eq.s32.totalorder %s27, 0
      %p258 = por %p256, %p257
      %p259 = scmp.ne.s32.totalorder %s247, %s248
      %p260 = scmp.eq.s32.totalorder %s28, 1
      %p261 = por %p259, %p260
      %p263 = scmp.ne.s32.totalorder %s248, %s262
      %p264 = scmp.eq.s32.totalorder %s28, 0
      %p265 = por %p263, %p264
      %s267 = sadd.s32 %s266, 1
      %p270 = scmp.eq.s32.totalorder %s22, 1
      %p271 = scmp.ne.s32.totalorder %s266, %s268
      %p272 = scmp.eq.s32.totalorder %s22, 0
      %p273 = por %p271, %p272
      %p274 = scmp.ne.s32.totalorder %s266, %s268
      %p275 = scmp.eq.s32.totalorder %s27, 1
      %p276 = por %p274, %p275
      %p277 = scmp.ne.s32.totalorder %s268, %s269
      %p278 = scmp.eq.s32.totalorder %s27, 0
      %p279 = por %p277, %p278
      %p280 = scmp.ne.s32.totalorder %s268, %s269
      %p281 = scmp.eq.s32.totalorder %s28, 1
      %p282 = por %p280, %p281
      %p284 = scmp.ne.s32.totalorder %s269, %s283
      %p285 = scmp.eq.s32.totalorder %s28, 0
      %p286 = por %p284, %p285
      %s288 = sadd.s32 %s287, 1
      %p291 = scmp.eq.s32.totalorder %s22, 1
      %p292 = scmp.ne.s32.totalorder %s287, %s289
      %p293 = scmp.eq.s32.totalorder %s22, 0
      %p294 = por %p292, %p293
      %p295 = scmp.ne.s32.totalorder %s287, %s289
      %p296 = scmp.eq.s32.totalorder %s27, 1
      %p297 = por %p295, %p296
      %p298 = scmp.ne.s32.totalorder %s289, %s290
      %p299 = scmp.eq.s32.totalorder %s27, 0
      %p300 = por %p298, %p299
      %p301 = scmp.ne.s32.totalorder %s289, %s290
      %p302 = scmp.eq.s32.totalorder %s28, 1
      %p303 = por %p301, %p302
      %p305 = scmp.ne.s32.totalorder %s290, %s304
      %p306 = scmp.eq.s32.totalorder %s28, 0
      %p307 = por %p305, %p306
      %s308 = ssub.s32 %s22, %s29
      %p309 = scmp.eq.s32.totalorder %s308, 0
      %s311 = sadd.s32 %s310, 1
      %s312 = scalar_select %p309, %s310, %s311
      %p315 = pneg %p309
      %p316 = scmp.eq.s32.totalorder %s22, 1
      %p317 = por %p315, %p316
      %p318 = scmp.ne.s32.totalorder %s310, %s313
      %p319 = scmp.eq.s32.totalorder %s22, 0
      %p320 = por %p318, %p319
      %p321 = scmp.ne.s32.totalorder %s310, %s313
      %p322 = scmp.eq.s32.totalorder %s27, 1
      %p323 = por %p321, %p322
      %p324 = scmp.ne.s32.totalorder %s313, %s314
      %p325 = scmp.eq.s32.totalorder %s27, 0
      %p326 = por %p324, %p325
      %p327 = scmp.ne.s32.totalorder %s313, %s314
      %p328 = scmp.eq.s32.totalorder %s28, 1
      %p329 = por %p327, %p328
      %p331 = scmp.ne.s32.totalorder %s314, %s330
      %p332 = scmp.eq.s32.totalorder %s28, 0
      %p333 = por %p331, %p332
      %p334 = scmp.le.s32.totalorder 1, %s22
      %p335 = scmp.lt.s32.totalorder %s22, 3
      %p336 = pnand %p334, %p335
      %p337 = pneg %p336
      // Predicated region
      $region9: #{tiny_transformer_forward.6} parent=5 // pred_check
        _
      $region10: #{tiny_transformer_forward.6} parent=5 // pred_check_branch
        %339 = sbr.rel (%p336) target = $region12
      $region11: #{tiny_transformer_forward.6} parent=5 // pred_region
        %s340 = ssub.s32 %s22, 1
        // Predicated region
        $region13: #{tiny_transformer_forward.6} parent=11 // pred_check
          %p341 = pneg %p69
        $region14: #{tiny_transformer_forward.6} parent=11 // pred_check_branch
          %343 = sbr.rel (%p341) target = $region16
        $region15: #{tiny_transformer_forward.6} parent=11 // pred_region
          %345 = vsyncadd [#allocation3], 0
          %s346 = sshll.u32 %s1, 4
          %s347 = int_to_ptr.hbm [resolvable:$true] %s346
          %s348 = sshll.u32 [#allocation2], 4
          %s349 = int_to_ptr.vmem [resolvable:$true] %s348
          %354 = dma.hbm_to_vmem [thread:$0]  %s347, 6144, %s349, [#allocation3], 384, 384, 24
        $region16: #{tiny_transformer_forward.6} parent=11 // pred_fallthru
          _
        // Predicated region
        $region17: #{tiny_transformer_forward.6} parent=11 // pred_check
          %p355 = pneg %p90
        $region18: #{tiny_transformer_forward.6} parent=11 // pred_check_branch
          %357 = sbr.rel (%p355) target = $region20
        $region19: #{tiny_transformer_forward.6} parent=11 // pred_region
          _
        $region20: #{tiny_transformer_forward.6} parent=11 // pred_fallthru
          _
        // Predicated region
        $region21: #{tiny_transformer_forward.6} parent=11 // pred_check
          %p358 = pneg %p111
        $region22: #{tiny_transformer_forward.6} parent=11 // pred_check_branch
          %360 = sbr.rel (%p358) target = $region24
        $region23: #{tiny_transformer_forward.6} parent=11 // pred_region
          %362 = vsyncadd [#allocation5], 0
          %s363 = sshll.u32 %s3, 4
          %s364 = int_to_ptr.hbm [resolvable:$true] %s363
          %s365 = sshll.u32 [#allocation4], 4
          %s366 = int_to_ptr.vmem [resolvable:$true] %s365
          %371 = dma.hbm_to_vmem [thread:$0]  %s364, 2048, %s366, [#allocation5], 128, 128, 8
        $region24: #{tiny_transformer_forward.6} parent=11 // pred_fallthru
          _
        // Predicated region
        $region25: #{tiny_transformer_forward.6} parent=11 // pred_check
          %p372 = pneg %p132
        $region26: #{tiny_transformer_forward.6} parent=11 // pred_check_branch
          %374 = sbr.rel (%p372) target = $region28
        $region27: #{tiny_transformer_forward.6} parent=11 // pred_region
          _
        $region28: #{tiny_transformer_forward.6} parent=11 // pred_fallthru
          _
        // Predicated region
        $region29: #{tiny_transformer_forward.6} parent=11 // pred_check
          %p375 = pneg %p153
        $region30: #{tiny_transformer_forward.6} parent=11 // pred_check_branch
          %377 = sbr.rel (%p375) target = $region32
        $region31: #{tiny_transformer_forward.6} parent=11 // pred_region
          _
        $region32: #{tiny_transformer_forward.6} parent=11 // pred_fallthru
          _
        // Predicated region
        $region33: #{tiny_transformer_forward.6} parent=11 // pred_check
          %p378 = pneg %p174
        $region34: #{tiny_transformer_forward.6} parent=11 // pred_check_branch
          %380 = sbr.rel (%p378) target = $region36
        $region35: #{tiny_transformer_forward.6} parent=11 // pred_region
          _
        $region36: #{tiny_transformer_forward.6} parent=11 // pred_fallthru
          _
        // Predicated region
        $region37: #{tiny_transformer_forward.6} parent=11 // pred_check
          %p381 = pneg %p195
        $region38: #{tiny_transformer_forward.6} parent=11 // pred_check_branch
          %383 = sbr.rel (%p381) target = $region40
        $region39: #{tiny_transformer_forward.6} parent=11 // pred_region
          %385 = vsyncadd [#allocation5], 0
          %s386 = sshll.u32 %s7, 4
          %s387 = int_to_ptr.hbm [resolvable:$true] %s386
          %s388 = sshll.u32 [#allocation6], 4
          %s389 = int_to_ptr.vmem [resolvable:$true] %s388
          %394 = dma.hbm_to_vmem [thread:$0]  %s387, 8192, %s389, [#allocation5], 512, 512, 32
        $region40: #{tiny_transformer_forward.6} parent=11 // pred_fallthru
          _
        // Predicated region
        $region41: #{tiny_transformer_forward.6} parent=11 // pred_check
          %p395 = pneg %p216
        $region42: #{tiny_transformer_forward.6} parent=11 // pred_check_branch
          %397 = sbr.rel (%p395) target = $region44
        $region43: #{tiny_transformer_forward.6} parent=11 // pred_region
          _
        $region44: #{tiny_transformer_forward.6} parent=11 // pred_fallthru
          _
        // Predicated region
        $region45: #{tiny_transformer_forward.6} parent=11 // pred_check
          %p398 = pneg %p237
        $region46: #{tiny_transformer_forward.6} parent=11 // pred_check_branch
          %400 = sbr.rel (%p398) target = $region48
        $region47: #{tiny_transformer_forward.6} parent=11 // pred_region
          %402 = vsyncadd [#allocation8], 0
          %s403 = sshll.u32 %s9, 4
          %s404 = int_to_ptr.hbm [resolvable:$true] %s403
          %s405 = sshll.u32 [#allocation7], 4
          %s406 = int_to_ptr.vmem [resolvable:$true] %s405
          %411 = dma.hbm_to_vmem [thread:$0]  %s404, 8192, %s406, [#allocation8], 128, 128, 8
        $region48: #{tiny_transformer_forward.6} parent=11 // pred_fallthru
          _
        // Predicated region
        $region49: #{tiny_transformer_forward.6} parent=11 // pred_check
          %p412 = pneg %p258
        $region50: #{tiny_transformer_forward.6} parent=11 // pred_check_branch
          %414 = sbr.rel (%p412) target = $region52
        $region51: #{tiny_transformer_forward.6} parent=11 // pred_region
          _
        $region52: #{tiny_transformer_forward.6} parent=11 // pred_fallthru
          _
        // Predicated region
        $region53: #{tiny_transformer_forward.6} parent=11 // pred_check
          %p415 = pneg %p279
        $region54: #{tiny_transformer_forward.6} parent=11 // pred_check_branch
          %417 = sbr.rel (%p415) target = $region56
        $region55: #{tiny_transformer_forward.6} parent=11 // pred_region
          _
        $region56: #{tiny_transformer_forward.6} parent=11 // pred_fallthru
          _
        // Predicated region
        $region57: #{tiny_transformer_forward.6} parent=11 // pred_check
          %p418 = pneg %p300
        $region58: #{tiny_transformer_forward.6} parent=11 // pred_check_branch
          %420 = sbr.rel (%p418) target = $region60
        $region59: #{tiny_transformer_forward.6} parent=11 // pred_region
          _
        $region60: #{tiny_transformer_forward.6} parent=11 // pred_fallthru
          _
      $region12: #{tiny_transformer_forward.6} parent=5 // pred_fallthru
        _
      %p421 = scmp.lt.s32.totalorder %s22, 2
      // Predicated region
      $region61: #{tiny_transformer_forward.6} parent=5 // pred_check
        %p422 = pneg %p421
      $region62: #{tiny_transformer_forward.6} parent=5 // pred_check_branch
        %424 = sbr.rel (%p422) target = $region64
      $region63: #{tiny_transformer_forward.6} parent=5 // pred_region
        // Predicated region
        $region65: #{tiny_transformer_forward.6} parent=63 // pred_check
          %p425 = pneg %p42
        $region66: #{tiny_transformer_forward.6} parent=63 // pred_check_branch
          %427 = sbr.rel (%p425) target = $region68
        $region67: #{tiny_transformer_forward.6} parent=63 // pred_region
          %p428 = scmp.lt.s32.totalorder %s22, 1
          %s429 = scalar_select %p428, %s22, 1
          %s430 = smul.addr %s429, 8
          %s431 = scalar_lea.vmem %s0, %s430
        $region68: #{tiny_transformer_forward.6} parent=63 // pred_fallthru
          _
      $region64: #{tiny_transformer_forward.6} parent=5 // pred_fallthru
        _
      %p432 = scmp.le.s32.totalorder 1, %s22
      %p433 = scmp.lt.s32.totalorder %s22, 3
      %p434 = pnand %p432, %p433
      %p435 = pneg %p434
      // Predicated region
      $region69: #{tiny_transformer_forward.6} parent=5 // pred_check
        _
      $region70: #{tiny_transformer_forward.6} parent=5 // pred_check_branch
        %437 = sbr.rel (%p434) target = $region72
      $region71: #{tiny_transformer_forward.6} parent=5 // pred_region
        %s438 = ssub.s32 %s22, 1
        // Predicated region
        $region73: #{tiny_transformer_forward.6} parent=71 // pred_check
          %p439 = pneg %p69
        $region74: #{tiny_transformer_forward.6} parent=71 // pred_check_branch
          %441 = sbr.rel (%p439) target = $region76
        $region75: #{tiny_transformer_forward.6} parent=71 // pred_region
          %443 = dma.done [#allocation3], 6144
        $region76: #{tiny_transformer_forward.6} parent=71 // pred_fallthru
          _
        // Predicated region
        $region77: #{tiny_transformer_forward.6} parent=71 // pred_check
          %p444 = pneg %p111
        $region78: #{tiny_transformer_forward.6} parent=71 // pred_check_branch
          %446 = sbr.rel (%p444) target = $region80
        $region79: #{tiny_transformer_forward.6} parent=71 // pred_region
          %448 = dma.done [#allocation5], 2048
        $region80: #{tiny_transformer_forward.6} parent=71 // pred_fallthru
          _
        // Predicated region
        $region81: #{tiny_transformer_forward.6} parent=71 // pred_check
          %p449 = pneg %p195
        $region82: #{tiny_transformer_forward.6} parent=71 // pred_check_branch
          %451 = sbr.rel (%p449) target = $region84
        $region83: #{tiny_transformer_forward.6} parent=71 // pred_region
          %453 = dma.done [#allocation5], 8192
        $region84: #{tiny_transformer_forward.6} parent=71 // pred_fallthru
          _
        // Predicated region
        $region85: #{tiny_transformer_forward.6} parent=71 // pred_check
          %p454 = pneg %p237
        $region86: #{tiny_transformer_forward.6} parent=71 // pred_check_branch
          %456 = sbr.rel (%p454) target = $region88
        $region87: #{tiny_transformer_forward.6} parent=71 // pred_region
          %458 = dma.done [#allocation8], 8192
        $region88: #{tiny_transformer_forward.6} parent=71 // pred_fallthru
          _
        %p459 = scmp.lt.s32.totalorder %s27, 1
        %s460 = scalar_select %p459, %s27, 1
        %s461 = smul.addr %s460, 8
        %s462 = scalar_lea.vmem %s0, %s461
        %p463 = pneg %p48
        %p464 = pneg %p45
        %p465 = pneg %p69
        %p466 = pneg %p66
        %p467 = pneg %p90
        %p468 = pneg %p87
        %p469 = pneg %p111
        %p470 = pneg %p108
        %p471 = pneg %p132
        %p472 = pneg %p129
        %p473 = pneg %p153
        %p474 = pneg %p150
        %p475 = pneg %p174
        %p476 = pneg %p171
        %p477 = pneg %p195
        %p478 = pneg %p192
        %p479 = pneg %p216
        %p480 = pneg %p213
        %p481 = pneg %p237
        %p482 = pneg %p234
        %p483 = pneg %p258
        %p484 = pneg %p255
        %p485 = pneg %p279
        %p486 = pneg %p276
        %p487 = pneg %p300
        %p488 = pneg %p297
        %p489 = pneg %p326
        %p490 = pneg %p323
        %p491 = scmp.lt.s32.totalorder %s27, 1
        %s492 = scalar_select %p491, %s27, 1
        %s493 = smul.addr %s492, 8
        %s494 = scalar_lea.vmem %s13, %s493
        %p495 = scmp.lt.s32.totalorder %s27, 1
        %s496 = scalar_select %p495, %s27, 1
        %s497 = smul.addr %s496, 8
        %s498 = scalar_lea.vmem %s0, %s497
        %p499 = scmp.lt.s32.totalorder %s27, 1
        %s500 = scalar_select %p499, %s27, 1
        %s501 = smul.addr %s500, 8
        %s502 = scalar_lea.vmem %s13, %s501
        %v503 = vld [vmem:[%s498] sm:$0xff]
        %v504 = vld [vmem:[#allocation2] sm:$0xff]
        %v505 = vld [vmem:[#allocation2 + $0x8] sm:$0xff]
        %v506 = vld [vmem:[#allocation2 + $0x10] sm:$0xff]
        %v507 = vld [vmem:[#allocation2 + $0x18] sm:$0xff]
        %v508 = vld [vmem:[#allocation2 + $0x20] sm:$0xff]
        %v509 = vld [vmem:[#allocation2 + $0x28] sm:$0xff]
        %v510 = vld [vmem:[#allocation2 + $0x30] sm:$0xff]
        %v511 = vld [vmem:[#allocation2 + $0x38] sm:$0xff]
        %v512 = vld [vmem:[#allocation2 + $0x40] sm:$0xff]
        %v513 = vld [vmem:[#allocation2 + $0x48] sm:$0xff]
        %v514 = vld [vmem:[#allocation2 + $0x50] sm:$0xff]
        %v515 = vld [vmem:[#allocation2 + $0x58] sm:$0xff]
        %v516 = vld [vmem:[#allocation2 + $0x60] sm:$0xff]
        %v517 = vld [vmem:[#allocation2 + $0x68] sm:$0xff]
        %v518 = vld [vmem:[#allocation2 + $0x70] sm:$0xff]
        %v519 = vld [vmem:[#allocation2 + $0x78] sm:$0xff]
        %v520 = vld [vmem:[#allocation2 + $0x80] sm:$0xff]
        %v521 = vld [vmem:[#allocation2 + $0x88] sm:$0xff]
        %v522 = vld [vmem:[#allocation2 + $0x90] sm:$0xff]
        %v523 = vld [vmem:[#allocation2 + $0x98] sm:$0xff]
        %v524 = vld [vmem:[#allocation2 + $0xa0] sm:$0xff]
        %v525 = vld [vmem:[#allocation2 + $0xa8] sm:$0xff]
        %v526 = vld [vmem:[#allocation2 + $0xb0] sm:$0xff]
        %v527 = vld [vmem:[#allocation2 + $0xb8] sm:$0xff]
        %v528 = vld [vmem:[#allocation2 + $0xc0] sm:$0xff]
        %v529 = vld [vmem:[#allocation2 + $0xc8] sm:$0xff]
        %v530 = vld [vmem:[#allocation2 + $0xd0] sm:$0xff]
        %v531 = vld [vmem:[#allocation2 + $0xd8] sm:$0xff]
        %v532 = vld [vmem:[#allocation2 + $0xe0] sm:$0xff]
        %v533 = vld [vmem:[#allocation2 + $0xe8] sm:$0xff]
        %v534 = vld [vmem:[#allocation2 + $0xf0] sm:$0xff]
        %v535 = vld [vmem:[#allocation2 + $0xf8] sm:$0xff]
        %v536 = vld [vmem:[#allocation2 + $0x100] sm:$0xff]
        %v537 = vld [vmem:[#allocation2 + $0x108] sm:$0xff]
        %v538 = vld [vmem:[#allocation2 + $0x110] sm:$0xff]
        %v539 = vld [vmem:[#allocation2 + $0x118] sm:$0xff]
        %v540 = vld [vmem:[#allocation2 + $0x120] sm:$0xff]
        %v541 = vld [vmem:[#allocation2 + $0x128] sm:$0xff]
        %v542 = vld [vmem:[#allocation2 + $0x130] sm:$0xff]
        %v543 = vld [vmem:[#allocation2 + $0x138] sm:$0xff]
        %v544 = vld [vmem:[#allocation2 + $0x140] sm:$0xff]
        %v545 = vld [vmem:[#allocation2 + $0x148] sm:$0xff]
        %v546 = vld [vmem:[#allocation2 + $0x150] sm:$0xff]
        %v547 = vld [vmem:[#allocation2 + $0x158] sm:$0xff]
        %v548 = vld [vmem:[#allocation2 + $0x160] sm:$0xff]
        %v549 = vld [vmem:[#allocation2 + $0x168] sm:$0xff]
        %v550 = vld [vmem:[#allocation2 + $0x170] sm:$0xff]
        %v551 = vld [vmem:[#allocation2 + $0x178] sm:$0xff]
        %v552 = vld [vmem:[%s2] sm:$0x7]
        %v554 = vperm.slane %v552, 0
        %v555 = vperm.slane %v552, 1
        %v556 = vperm.slane %v552, 2
        %560 = vmatpush.msra.mxu0 %v549
        %561 = vmatpush.msra.mxu0 %v546
        %562 = vmatpush.msra.mxu0 %v543
        %563 = vmatpush.msra.mxu0 %v540
        %564 = vmatpush.msra.mxu0 %v537
        %565 = vmatpush.msra.mxu0 %v534
        %566 = vmatpush.msra.mxu0 %v531
        %567 = vmatpush.msra.mxu0 %v528
        %568 = vmatpush.msra.mxu0 %v525
        %569 = vmatpush.msra.mxu0 %v522
        %570 = vmatpush.msra.mxu0 %v519
        %571 = vmatpush.msra.mxu0 %v516
        %572 = vmatpush.msra.mxu0 %v513
        %573 = vmatpush.msra.mxu0 %v510
        %574 = vmatpush.msra.mxu0 %v507
        %575 = vmatpush.msra.mxu0 %v504
        %576 = vmatmul.f32.gmra.mxu0 %v503
        %v577 = vpop.f32.mrf.mxu0
        %v578 = vadd.f32 %v554, %v577
        %579 = vdwg.mxu0
        %580 = vmatpush.msra.mxu0 %v550
        %581 = vmatpush.msra.mxu0 %v547
        %582 = vmatpush.msra.mxu0 %v544
        %583 = vmatpush.msra.mxu0 %v541
        %584 = vmatpush.msra.mxu0 %v538
        %585 = vmatpush.msra.mxu0 %v535
        %586 = vmatpush.msra.mxu0 %v532
        %587 = vmatpush.msra.mxu0 %v529
        %588 = vmatpush.msra.mxu0 %v526
        %589 = vmatpush.msra.mxu0 %v523
        %590 = vmatpush.msra.mxu0 %v520
        %591 = vmatpush.msra.mxu0 %v517
        %592 = vmatpush.msra.mxu0 %v514
        %593 = vmatpush.msra.mxu0 %v511
        %594 = vmatpush.msra.mxu0 %v508
        %595 = vmatpush.msra.mxu0 %v505
        %596 = vmatmul.f32.gmra.mxu0 %v503
        %v597 = vpop.f32.mrf.mxu0
        %v598 = vadd.f32 %v555, %v597
        %599 = vdwg.mxu0
        %600 = vmatpush.msra.mxu0 %v551
        %601 = vmatpush.msra.mxu0 %v548
        %602 = vmatpush.msra.mxu0 %v545
        %603 = vmatpush.msra.mxu0 %v542
        %604 = vmatpush.msra.mxu0 %v539
        %605 = vmatpush.msra.mxu0 %v536
        %606 = vmatpush.msra.mxu0 %v533
        %607 = vmatpush.msra.mxu0 %v530
        %608 = vmatpush.msra.mxu0 %v527
        %609 = vmatpush.msra.mxu0 %v524
        %610 = vmatpush.msra.mxu0 %v521
        %611 = vmatpush.msra.mxu0 %v518
        %612 = vmatpush.msra.mxu0 %v515
        %613 = vmatpush.msra.mxu0 %v512
        %614 = vmatpush.msra.mxu0 %v509
        %615 = vmatpush.msra.mxu0 %v506
        %616 = vmatmul.f32.gmra.mxu0 %v503
        %v617 = vpop.f32.mrf.mxu0
        %v618 = vadd.f32 %v556, %v617
        %619 = vdwg.mxu0
        %vm620 = vcmask 261120
        %v622 = vsel %vm620, %v578, 0
        %v625 = vsel %vm620, %v598, 0
        %627 = vmatpush.xpose.msra.mxu0 0.0
        %628 = vmatpush.xpose.msra.mxu0 0.0
        %629 = vmatpush.xpose.msra.mxu0 0.0
        %630 = vmatpush.xpose.msra.mxu0 0.0
        %631 = vmatpush.xpose.msra.mxu0 0.0
        %632 = vmatpush.xpose.msra.mxu0 0.0
        %633 = vmatpush.xpose.msra.mxu0 0.0
        %634 = vmatpush.xpose.msra.mxu0 0.0
        %635 = vmatpush.xpose.msra.mxu0 0.0
        %636 = vmatpush.xpose.msra.mxu0 0.0
        %637 = vmatpush.xpose.msra.mxu0 0.0
        %638 = vmatpush.xpose.msra.mxu0 0.0
        %639 = vmatpush.xpose.msra.mxu0 0.0
        %640 = vmatpush.xpose.msra.mxu0 0.0
        %641 = vmatpush.xpose.msra.mxu0 0.0
        %642 = vmatpush.xpose.msra.mxu0 %v625
        %643 = vmatmul.f32.gmra.mxu0 %v622
        %v644 = vpop.f32.mrf.mxu0
        %v645 = vadd.f32 0.0, %v644
        %646 = vdwg.mxu0
        %vm647 = vcmask 64512
        %v648 = vsel %vm647, %v645, -inf
        %649 = vmax.xlane.f32.xlu0 %v648
        %v650 = vpop.xlane.xlu0 %649
        %v651 = vsub.f32 %v645, %v650
        %v652 = vmul.f32 %v651, 1.442695
        %v653 = vpow.pop %v652
        %v654 = vsel %vm647, %v653, 0.0
        %655 = vadd.xlane.f32.xlu0 %v654
        %v656 = vpop.xlane.xlu0 %655
        %v657 = vrcp.pop %v656
        %v658 = vmul.f32 %v653, %v657
        %v660 = vsel %vm647, %v658, 0
        %662 = vmatpush.msra.mxu0 0.0
        %663 = vmatpush.msra.mxu0 0.0
        %664 = vmatpush.msra.mxu0 0.0
        %665 = vmatpush.msra.mxu0 0.0
        %666 = vmatpush.msra.mxu0 0.0
        %667 = vmatpush.msra.mxu0 0.0
        %668 = vmatpush.msra.mxu0 0.0
        %669 = vmatpush.msra.mxu0 0.0
        %670 = vmatpush.msra.mxu0 0.0
        %671 = vmatpush.msra.mxu0 0.0
        %672 = vmatpush.msra.mxu0 0.0
        %673 = vmatpush.msra.mxu0 0.0
        %674 = vmatpush.msra.mxu0 0.0
        %675 = vmatpush.msra.mxu0 0.0
        %676 = vmatpush.msra.mxu0 0.0
        %677 = vmatpush.msra.mxu0 %v618
        %678 = vmatmul.f32.gmra.mxu0 %v660
        %v679 = vpop.f32.mrf.mxu0
        %v680 = vadd.f32 0.0, %v679
        %681 = vdwg.mxu0
        %682 = vrot.lane.b32.xlu0 %v578, 96
        %v683 = vpop.permute.xlu0 %682
        %684 = vrot.lane.b32.xlu0 %v598, 96
        %v685 = vpop.permute.xlu0 %684
        %v686 = vsel %vm620, %v683, 0
        %v688 = vsel %vm620, %v685, 0
        %690 = vmatpush.xpose.msra.mxu0 0.0
        %691 = vmatpush.xpose.msra.mxu0 0.0
        %692 = vmatpush.xpose.msra.mxu0 0.0
        %693 = vmatpush.xpose.msra.mxu0 0.0
        %694 = vmatpush.xpose.msra.mxu0 0.0
        %695 = vmatpush.xpose.msra.mxu0 0.0
        %696 = vmatpush.xpose.msra.mxu0 0.0
        %697 = vmatpush.xpose.msra.mxu0 0.0
        %698 = vmatpush.xpose.msra.mxu0 0.0
        %699 = vmatpush.xpose.msra.mxu0 0.0
        %700 = vmatpush.xpose.msra.mxu0 0.0
        %701 = vmatpush.xpose.msra.mxu0 0.0
        %702 = vmatpush.xpose.msra.mxu0 0.0
        %703 = vmatpush.xpose.msra.mxu0 0.0
        %704 = vmatpush.xpose.msra.mxu0 0.0
        %705 = vmatpush.xpose.msra.mxu0 %v688
        %706 = vmatmul.f32.gmra.mxu0 %v686
        %v707 = vpop.f32.mrf.mxu0
        %v708 = vadd.f32 0.0, %v707
        %709 = vdwg.mxu0
        %v710 = vsel %vm647, %v708, -inf
        %711 = vmax.xlane.f32.xlu0 %v710
        %v712 = vpop.xlane.xlu0 %711
        %v713 = vsub.f32 %v708, %v712
        %v714 = vmul.f32 %v713, 1.442695
        %v715 = vpow.pop %v714
        %v716 = vsel %vm647, %v715, 0.0
        %717 = vadd.xlane.f32.xlu0 %v716
        %v718 = vpop.xlane.xlu0 %717
        %v719 = vrcp.pop %v718
        %v720 = vmul.f32 %v715, %v719
        %722 = vrot.lane.b32.xlu0 %v618, 96
        %v723 = vpop.permute.xlu0 %722
        %v726 = vsel %vm647, %v720, 0
        %728 = vmatpush.msra.mxu0 0.0
        %729 = vmatpush.msra.mxu0 0.0
        %730 = vmatpush.msra.mxu0 0.0
        %731 = vmatpush.msra.mxu0 0.0
        %732 = vmatpush.msra.mxu0 0.0
        %733 = vmatpush.msra.mxu0 0.0
        %734 = vmatpush.msra.mxu0 0.0
        %735 = vmatpush.msra.mxu0 0.0
        %736 = vmatpush.msra.mxu0 0.0
        %737 = vmatpush.msra.mxu0 0.0
        %738 = vmatpush.msra.mxu0 0.0
        %739 = vmatpush.msra.mxu0 0.0
        %740 = vmatpush.msra.mxu0 0.0
        %741 = vmatpush.msra.mxu0 0.0
        %742 = vmatpush.msra.mxu0 0.0
        %743 = vmatpush.msra.mxu0 %v723
        %744 = vmatmul.f32.gmra.mxu0 %v726
        %v745 = vpop.f32.mrf.mxu0
        %v746 = vadd.f32 0.0, %v745
        %747 = vdwg.mxu0
        %748 = vrot.lane.b32.xlu0 %v578, 64
        %v749 = vpop.permute.xlu0 %748
        %750 = vrot.lane.b32.xlu0 %v598, 64
        %v751 = vpop.permute.xlu0 %750
        %v752 = vsel %vm620, %v749, 0
        %v754 = vsel %vm620, %v751, 0
        %756 = vmatpush.xpose.msra.mxu0 0.0
        %757 = vmatpush.xpose.msra.mxu0 0.0
        %758 = vmatpush.xpose.msra.mxu0 0.0
        %759 = vmatpush.xpose.msra.mxu0 0.0
        %760 = vmatpush.xpose.msra.mxu0 0.0
        %761 = vmatpush.xpose.msra.mxu0 0.0
        %762 = vmatpush.xpose.msra.mxu0 0.0
        %763 = vmatpush.xpose.msra.mxu0 0.0
        %764 = vmatpush.xpose.msra.mxu0 0.0
        %765 = vmatpush.xpose.msra.mxu0 0.0
        %766 = vmatpush.xpose.msra.mxu0 0.0
        %767 = vmatpush.xpose.msra.mxu0 0.0
        %768 = vmatpush.xpose.msra.mxu0 0.0
        %769 = vmatpush.xpose.msra.mxu0 0.0
        %770 = vmatpush.xpose.msra.mxu0 0.0
        %771 = vmatpush.xpose.msra.mxu0 %v754
        %772 = vmatmul.f32.gmra.mxu0 %v752
        %v773 = vpop.f32.mrf.mxu0
        %v774 = vadd.f32 0.0, %v773
        %775 = vdwg.mxu0
        %v776 = vsel %vm647, %v774, -inf
        %777 = vmax.xlane.f32.xlu0 %v776
        %v778 = vpop.xlane.xlu0 %777
        %v779 = vsub.f32 %v774, %v778
        %v780 = vmul.f32 %v779, 1.442695
        %v781 = vpow.pop %v780
        %v782 = vsel %vm647, %v781, 0.0
        %783 = vadd.xlane.f32.xlu0 %v782
        %v784 = vpop.xlane.xlu0 %783
        %v785 = vrcp.pop %v784
        %v786 = vmul.f32 %v781, %v785
        %787 = vrot.lane.b32.xlu0 %v618, 64
        %v788 = vpop.permute.xlu0 %787
        %v791 = vsel %vm647, %v786, 0
        %793 = vmatpush.msra.mxu0 0.0
        %794 = vmatpush.msra.mxu0 0.0
        %795 = vmatpush.msra.mxu0 0.0
        %796 = vmatpush.msra.mxu0 0.0
        %797 = vmatpush.msra.mxu0 0.0
        %798 = vmatpush.msra.mxu0 0.0
        %799 = vmatpush.msra.mxu0 0.0
        %800 = vmatpush.msra.mxu0 0.0
        %801 = vmatpush.msra.mxu0 0.0
        %802 = vmatpush.msra.mxu0 0.0
        %803 = vmatpush.msra.mxu0 0.0
        %804 = vmatpush.msra.mxu0 0.0
        %805 = vmatpush.msra.mxu0 0.0
        %806 = vmatpush.msra.mxu0 0.0
        %807 = vmatpush.msra.mxu0 0.0
        %808 = vmatpush.msra.mxu0 %v788
        %809 = vmatmul.f32.gmra.mxu0 %v791
        %v810 = vpop.f32.mrf.mxu0
        %v811 = vadd.f32 0.0, %v810
        %812 = vdwg.mxu0
        %813 = vrot.lane.b32.xlu0 %v578, 32
        %v814 = vpop.permute.xlu0 %813
        %815 = vrot.lane.b32.xlu0 %v598, 32
        %v816 = vpop.permute.xlu0 %815
        %v817 = vsel %vm620, %v814, 0
        %v819 = vsel %vm620, %v816, 0
        %821 = vmatpush.xpose.msra.mxu0 0.0
        %822 = vmatpush.xpose.msra.mxu0 0.0
        %823 = vmatpush.xpose.msra.mxu0 0.0
        %824 = vmatpush.xpose.msra.mxu0 0.0
        %825 = vmatpush.xpose.msra.mxu0 0.0
        %826 = vmatpush.xpose.msra.mxu0 0.0
        %827 = vmatpush.xpose.msra.mxu0 0.0
        %828 = vmatpush.xpose.msra.mxu0 0.0
        %829 = vmatpush.xpose.msra.mxu0 0.0
        %830 = vmatpush.xpose.msra.mxu0 0.0
        %831 = vmatpush.xpose.msra.mxu0 0.0
        %832 = vmatpush.xpose.msra.mxu0 0.0
        %833 = vmatpush.xpose.msra.mxu0 0.0
        %834 = vmatpush.xpose.msra.mxu0 0.0
        %835 = vmatpush.xpose.msra.mxu0 0.0
        %836 = vmatpush.xpose.msra.mxu0 %v819
        %837 = vmatmul.f32.gmra.mxu0 %v817
        %v838 = vpop.f32.mrf.mxu0
        %v839 = vadd.f32 0.0, %v838
        %840 = vdwg.mxu0
        %v841 = vsel %vm647, %v839, -inf
        %842 = vmax.xlane.f32.xlu0 %v841
        %v843 = vpop.xlane.xlu0 %842
        %v844 = vsub.f32 %v839, %v843
        %v845 = vmul.f32 %v844, 1.442695
        %v846 = vpow.pop %v845
        %v847 = vsel %vm647, %v846, 0.0
        %848 = vadd.xlane.f32.xlu0 %v847
        %v849 = vpop.xlane.xlu0 %848
        %v850 = vrcp.pop %v849
        %v851 = vmul.f32 %v846, %v850
        %852 = vrot.lane.b32.xlu0 %v618, 32
        %v853 = vpop.permute.xlu0 %852
        %v856 = vsel %vm647, %v851, 0
        %858 = vmatpush.msra.mxu0 0.0
        %859 = vmatpush.msra.mxu0 0.0
        %860 = vmatpush.msra.mxu0 0.0
        %861 = vmatpush.msra.mxu0 0.0
        %862 = vmatpush.msra.mxu0 0.0
        %863 = vmatpush.msra.mxu0 0.0
        %864 = vmatpush.msra.mxu0 0.0
        %865 = vmatpush.msra.mxu0 0.0
        %866 = vmatpush.msra.mxu0 0.0
        %867 = vmatpush.msra.mxu0 0.0
        %868 = vmatpush.msra.mxu0 0.0
        %869 = vmatpush.msra.mxu0 0.0
        %870 = vmatpush.msra.mxu0 0.0
        %871 = vmatpush.msra.mxu0 0.0
        %872 = vmatpush.msra.mxu0 0.0
        %873 = vmatpush.msra.mxu0 %v853
        %874 = vmatmul.f32.gmra.mxu0 %v856
        %v875 = vpop.f32.mrf.mxu0
        %v876 = vadd.f32 0.0, %v875
        %877 = vdwg.mxu0
        %879 = vrot.lane.b32.xlu0 %v746, 32
        %v880 = vpop.permute.xlu0 %879
        %883 = vrot.lane.b32.xlu0 %v811, 64
        %v884 = vpop.permute.xlu0 %883
        %887 = vrot.lane.b32.xlu0 %v876, 96
        %v888 = vpop.permute.xlu0 %887
        %v890 = vsel %vm620, %v680, %v880
        %vm891 = vcmask 523264
        %v892 = vsel %vm891, %v890, %v884
        %vm893 = vcmask 785408
        %v894 = vsel %vm893, %v892, %v888
        %v895 = vld [vmem:[#allocation4] sm:$0xff]
        %v896 = vld [vmem:[#allocation4 + $0x8] sm:$0xff]
        %v897 = vld [vmem:[#allocation4 + $0x10] sm:$0xff]
        %v898 = vld [vmem:[#allocation4 + $0x18] sm:$0xff]
        %v899 = vld [vmem:[#allocation4 + $0x20] sm:$0xff]
        %v900 = vld [vmem:[#allocation4 + $0x28] sm:$0xff]
        %v901 = vld [vmem:[#allocation4 + $0x30] sm:$0xff]
        %v902 = vld [vmem:[#allocation4 + $0x38] sm:$0xff]
        %v903 = vld [vmem:[#allocation4 + $0x40] sm:$0xff]
        %v904 = vld [vmem:[#allocation4 + $0x48] sm:$0xff]
        %v905 = vld [vmem:[#allocation4 + $0x50] sm:$0xff]
        %v906 = vld [vmem:[#allocation4 + $0x58] sm:$0xff]
        %v907 = vld [vmem:[#allocation4 + $0x60] sm:$0xff]
        %v908 = vld [vmem:[#allocation4 + $0x68] sm:$0xff]
        %v909 = vld [vmem:[#allocation4 + $0x70] sm:$0xff]
        %v910 = vld [vmem:[#allocation4 + $0x78] sm:$0xff]
        %v911 = vld [vmem:[%s4] sm:$0x1]
        %v913 = vperm.slane %v911, 0
        %915 = vmatpush.msra.mxu0 %v910
        %916 = vmatpush.msra.mxu0 %v909
        %917 = vmatpush.msra.mxu0 %v908
        %918 = vmatpush.msra.mxu0 %v907
        %919 = vmatpush.msra.mxu0 %v906
        %920 = vmatpush.msra.mxu0 %v905
        %921 = vmatpush.msra.mxu0 %v904
        %922 = vmatpush.msra.mxu0 %v903
        %923 = vmatpush.msra.mxu0 %v902
        %924 = vmatpush.msra.mxu0 %v901
        %925 = vmatpush.msra.mxu0 %v900
        %926 = vmatpush.msra.mxu0 %v899
        %927 = vmatpush.msra.mxu0 %v898
        %928 = vmatpush.msra.mxu0 %v897
        %929 = vmatpush.msra.mxu0 %v896
        %930 = vmatpush.msra.mxu0 %v895
        %931 = vmatmul.f32.gmra.mxu0 %v894
        %v932 = vpop.f32.mrf.mxu0
        %v933 = vadd.f32 %v913, %v932
        %934 = vdwg.mxu0
        %v935 = vadd.f32 %v503, %v933
        %v936 = vld [vmem:[%s5] sm:$0x1]
        %v937 = vld [vmem:[%s6] sm:$0x1]
        %938 = vadd.xlane.f32.xlu0 %v935
        %v939 = vpop.xlane.xlu0 %938
        %v940 = vrcp.pop 128.0
        %v941 = vmul.f32 128.0, %v940
        %v942 = vsub.f32 1.0, %v941
        %v943 = vmul.f32 %v940, %v942
        %v944 = vadd.f32 %v940, %v943
        %vm945 = vweird.f32 %v940
        %v946 = vsel %vm945, %v940, %v944
        %v947 = vmul.f32 %v939, %v946
        %v948 = vsub.f32 %v935, %v947
        %v949 = vmul.f32 %v948, %v948
        %950 = vadd.xlane.f32.xlu0 %v949
        %v951 = vpop.xlane.xlu0 %950
        %v952 = vmul.f32 %v951, %v946
        %v953 = vadd.f32 %v952, 1e-05
        %v954 = vrsqrt.pop %v953
        %v955 = vmul.f32 %v954, %v953
        %v956 = vmul.f32 %v955, %v954
        %v957 = vmul.f32 0.5, %v956
        %v958 = vsub.f32 1.5, %v957
        %v959 = vmul.f32 %v954, %v958
        %vm960 = vweird.f32 %v953
        %vm961 = vweird.f32 %v954
        %vm962 = vmor %vm960, %vm961
        %v963 = vsel %vm962, %v954, %v959
        %v964 = vmul.f32 %v948, %v963
        %v966 = vperm.slane %v936, 0
        %v968 = vmul.f32 %v964, %v966
        %v970 = vperm.slane %v937, 0
        %v972 = vadd.f32 %v968, %v970
        %v973 = vld [vmem:[#allocation6] sm:$0xff]
        %v974 = vld [vmem:[#allocation6 + $0x8] sm:$0xff]
        %v975 = vld [vmem:[#allocation6 + $0x10] sm:$0xff]
        %v976 = vld [vmem:[#allocation6 + $0x18] sm:$0xff]
        %v977 = vld [vmem:[#allocation6 + $0x20] sm:$0xff]
        %v978 = vld [vmem:[#allocation6 + $0x28] sm:$0xff]
        %v979 = vld [vmem:[#allocation6 + $0x30] sm:$0xff]
        %v980 = vld [vmem:[#allocation6 + $0x38] sm:$0xff]
        %v981 = vld [vmem:[#allocation6 + $0x40] sm:$0xff]
        %v982 = vld [vmem:[#allocation6 + $0x48] sm:$0xff]
        %v983 = vld [vmem:[#allocation6 + $0x50] sm:$0xff]
        %v984 = vld [vmem:[#allocation6 + $0x58] sm:$0xff]
        %v985 = vld [vmem:[#allocation6 + $0x60] sm:$0xff]
        %v986 = vld [vmem:[#allocation6 + $0x68] sm:$0xff]
        %v987 = vld [vmem:[#allocation6 + $0x70] sm:$0xff]
        %v988 = vld [vmem:[#allocation6 + $0x78] sm:$0xff]
        %v989 = vld [vmem:[#allocation6 + $0x80] sm:$0xff]
        %v990 = vld [vmem:[#allocation6 + $0x88] sm:$0xff]
        %v991 = vld [vmem:[#allocation6 + $0x90] sm:$0xff]
        %v992 = vld [vmem:[#allocation6 + $0x98] sm:$0xff]
        %v993 = vld [vmem:[#allocation6 + $0xa0] sm:$0xff]
        %v994 = vld [vmem:[#allocation6 + $0xa8] sm:$0xff]
        %v995 = vld [vmem:[#allocation6 + $0xb0] sm:$0xff]
        %v996 = vld [vmem:[#allocation6 + $0xb8] sm:$0xff]
        %v997 = vld [vmem:[#allocation6 + $0xc0] sm:$0xff]
        %v998 = vld [vmem:[#allocation6 + $0xc8] sm:$0xff]
        %v999 = vld [vmem:[#allocation6 + $0xd0] sm:$0xff]
        %v1000 = vld [vmem:[#allocation6 + $0xd8] sm:$0xff]
        %v1001 = vld [vmem:[#allocation6 + $0xe0] sm:$0xff]
        %v1002 = vld [vmem:[#allocation6 + $0xe8] sm:$0xff]
        %v1003 = vld [vmem:[#allocation6 + $0xf0] sm:$0xff]
        %v1004 = vld [vmem:[#allocation6 + $0xf8] sm:$0xff]
        %v1005 = vld [vmem:[#allocation6 + $0x100] sm:$0xff]
        %v1006 = vld [vmem:[#allocation6 + $0x108] sm:$0xff]
        %v1007 = vld [vmem:[#allocation6 + $0x110] sm:$0xff]
        %v1008 = vld [vmem:[#allocation6 + $0x118] sm:$0xff]
        %v1009 = vld [vmem:[#allocation6 + $0x120] sm:$0xff]
        %v1010 = vld [vmem:[#allocation6 + $0x128] sm:$0xff]
        %v1011 = vld [vmem:[#allocation6 + $0x130] sm:$0xff]
        %v1012 = vld [vmem:[#allocation6 + $0x138] sm:$0xff]
        %v1013 = vld [vmem:[#allocation6 + $0x140] sm:$0xff]
        %v1014 = vld [vmem:[#allocation6 + $0x148] sm:$0xff]
        %v1015 = vld [vmem:[#allocation6 + $0x150] sm:$0xff]
        %v1016 = vld [vmem:[#allocation6 + $0x158] sm:$0xff]
        %v1017 = vld [vmem:[#allocation6 + $0x160] sm:$0xff]
        %v1018 = vld [vmem:[#allocation6 + $0x168] sm:$0xff]
        %v1019 = vld [vmem:[#allocation6 + $0x170] sm:$0xff]
        %v1020 = vld [vmem:[#allocation6 + $0x178] sm:$0xff]
        %v1021 = vld [vmem:[#allocation6 + $0x180] sm:$0xff]
        %v1022 = vld [vmem:[#allocation6 + $0x188] sm:$0xff]
        %v1023 = vld [vmem:[#allocation6 + $0x190] sm:$0xff]
        %v1024 = vld [vmem:[#allocation6 + $0x198] sm:$0xff]
        %v1025 = vld [vmem:[#allocation6 + $0x1a0] sm:$0xff]
        %v1026 = vld [vmem:[#allocation6 + $0x1a8] sm:$0xff]
        %v1027 = vld [vmem:[#allocation6 + $0x1b0] sm:$0xff]
        %v1028 = vld [vmem:[#allocation6 + $0x1b8] sm:$0xff]
        %v1029 = vld [vmem:[#allocation6 + $0x1c0] sm:$0xff]
        %v1030 = vld [vmem:[#allocation6 + $0x1c8] sm:$0xff]
        %v1031 = vld [vmem:[#allocation6 + $0x1d0] sm:$0xff]
        %v1032 = vld [vmem:[#allocation6 + $0x1d8] sm:$0xff]
        %v1033 = vld [vmem:[#allocation6 + $0x1e0] sm:$0xff]
        %v1034 = vld [vmem:[#allocation6 + $0x1e8] sm:$0xff]
        %v1035 = vld [vmem:[#allocation6 + $0x1f0] sm:$0xff]
        %v1036 = vld [vmem:[#allocation6 + $0x1f8] sm:$0xff]
        %v1037 = vld [vmem:[%s8] sm:$0xf]
        %v1039 = vperm.slane %v1037, 0
        %v1040 = vperm.slane %v1037, 1
        %v1041 = vperm.slane %v1037, 2
        %v1042 = vperm.slane %v1037, 3
        %1047 = vmatpush.msra.mxu0 %v1033
        %1048 = vmatpush.msra.mxu0 %v1029
        %1049 = vmatpush.msra.mxu0 %v1025
        %1050 = vmatpush.msra.mxu0 %v1021
        %1051 = vmatpush.msra.mxu0 %v1017
        %1052 = vmatpush.msra.mxu0 %v1013
        %1053 = vmatpush.msra.mxu0 %v1009
        %1054 = vmatpush.msra.mxu0 %v1005
        %1055 = vmatpush.msra.mxu0 %v1001
        %1056 = vmatpush.msra.mxu0 %v997
        %1057 = vmatpush.msra.mxu0 %v993
        %1058 = vmatpush.msra.mxu0 %v989
        %1059 = vmatpush.msra.mxu0 %v985
        %1060 = vmatpush.msra.mxu0 %v981
        %1061 = vmatpush.msra.mxu0 %v977
        %1062 = vmatpush.msra.mxu0 %v973
        %1063 = vmatmul.f32.gmra.mxu0 %v972
        %v1064 = vpop.f32.mrf.mxu0
        %v1065 = vadd.f32 %v1039, %v1064
        %1066 = vdwg.mxu0
        %1067 = vmatpush.msra.mxu0 %v1034
        %1068 = vmatpush.msra.mxu0 %v1030
        %1069 = vmatpush.msra.mxu0 %v1026
        %1070 = vmatpush.msra.mxu0 %v1022
        %1071 = vmatpush.msra.mxu0 %v1018
        %1072 = vmatpush.msra.mxu0 %v1014
        %1073 = vmatpush.msra.mxu0 %v1010
        %1074 = vmatpush.msra.mxu0 %v1006
        %1075 = vmatpush.msra.mxu0 %v1002
        %1076 = vmatpush.msra.mxu0 %v998
        %1077 = vmatpush.msra.mxu0 %v994
        %1078 = vmatpush.msra.mxu0 %v990
        %1079 = vmatpush.msra.mxu0 %v986
        %1080 = vmatpush.msra.mxu0 %v982
        %1081 = vmatpush.msra.mxu0 %v978
        %1082 = vmatpush.msra.mxu0 %v974
        %1083 = vmatmul.f32.gmra.mxu0 %v972
        %v1084 = vpop.f32.mrf.mxu0
        %v1085 = vadd.f32 %v1040, %v1084
        %1086 = vdwg.mxu0
        %1087 = vmatpush.msra.mxu0 %v1035
        %1088 = vmatpush.msra.mxu0 %v1031
        %1089 = vmatpush.msra.mxu0 %v1027
        %1090 = vmatpush.msra.mxu0 %v1023
        %1091 = vmatpush.msra.mxu0 %v1019
        %1092 = vmatpush.msra.mxu0 %v1015
        %1093 = vmatpush.msra.mxu0 %v1011
        %1094 = vmatpush.msra.mxu0 %v1007
        %1095 = vmatpush.msra.mxu0 %v1003
        %1096 = vmatpush.msra.mxu0 %v999
        %1097 = vmatpush.msra.mxu0 %v995
        %1098 = vmatpush.msra.mxu0 %v991
        %1099 = vmatpush.msra.mxu0 %v987
        %1100 = vmatpush.msra.mxu0 %v983
        %1101 = vmatpush.msra.mxu0 %v979
        %1102 = vmatpush.msra.mxu0 %v975
        %1103 = vmatmul.f32.gmra.mxu0 %v972
        %v1104 = vpop.f32.mrf.mxu0
        %v1105 = vadd.f32 %v1041, %v1104
        %1106 = vdwg.mxu0
        %1107 = vmatpush.msra.mxu0 %v1036
        %1108 = vmatpush.msra.mxu0 %v1032
        %1109 = vmatpush.msra.mxu0 %v1028
        %1110 = vmatpush.msra.mxu0 %v1024
        %1111 = vmatpush.msra.mxu0 %v1020
        %1112 = vmatpush.msra.mxu0 %v1016
        %1113 = vmatpush.msra.mxu0 %v1012
        %1114 = vmatpush.msra.mxu0 %v1008
        %1115 = vmatpush.msra.mxu0 %v1004
        %1116 = vmatpush.msra.mxu0 %v1000
        %1117 = vmatpush.msra.mxu0 %v996
        %1118 = vmatpush.msra.mxu0 %v992
        %1119 = vmatpush.msra.mxu0 %v988
        %1120 = vmatpush.msra.mxu0 %v984
        %1121 = vmatpush.msra.mxu0 %v980
        %1122 = vmatpush.msra.mxu0 %v976
        %1123 = vmatmul.f32.gmra.mxu0 %v972
        %v1124 = vpop.f32.mrf.mxu0
        %v1125 = vadd.f32 %v1042, %v1124
        %1126 = vdwg.mxu0
        %v1127 = vmax.f32 %v1065, 0.0
        %v1128 = vmax.f32 %v1085, 0.0
        %v1129 = vmax.f32 %v1105, 0.0
        %v1130 = vmax.f32 %v1125, 0.0
        %v1131 = vld [vmem:[#allocation7] sm:$0xff]
        %v1132 = vld [vmem:[#allocation7 + $0x8] sm:$0xff]
        %v1133 = vld [vmem:[#allocation7 + $0x10] sm:$0xff]
        %v1134 = vld [vmem:[#allocation7 + $0x18] sm:$0xff]
        %v1135 = vld [vmem:[#allocation7 + $0x20] sm:$0xff]
        %v1136 = vld [vmem:[#allocation7 + $0x28] sm:$0xff]
        %v1137 = vld [vmem:[#allocation7 + $0x30] sm:$0xff]
        %v1138 = vld [vmem:[#allocation7 + $0x38] sm:$0xff]
        %v1139 = vld [vmem:[#allocation7 + $0x40] sm:$0xff]
        %v1140 = vld [vmem:[#allocation7 + $0x48] sm:$0xff]
        %v1141 = vld [vmem:[#allocation7 + $0x50] sm:$0xff]
        %v1142 = vld [vmem:[#allocation7 + $0x58] sm:$0xff]
        %v1143 = vld [vmem:[#allocation7 + $0x60] sm:$0xff]
        %v1144 = vld [vmem:[#allocation7 + $0x68] sm:$0xff]
        %v1145 = vld [vmem:[#allocation7 + $0x70] sm:$0xff]
        %v1146 = vld [vmem:[#allocation7 + $0x78] sm:$0xff]
        %v1147 = vld [vmem:[#allocation7 + $0x80] sm:$0xff]
        %v1148 = vld [vmem:[#allocation7 + $0x88] sm:$0xff]
        %v1149 = vld [vmem:[#allocation7 + $0x90] sm:$0xff]
        %v1150 = vld [vmem:[#allocation7 + $0x98] sm:$0xff]
        %v1151 = vld [vmem:[#allocation7 + $0xa0] sm:$0xff]
        %v1152 = vld [vmem:[#allocation7 + $0xa8] sm:$0xff]
        %v1153 = vld [vmem:[#allocation7 + $0xb0] sm:$0xff]
        %v1154 = vld [vmem:[#allocation7 + $0xb8] sm:$0xff]
        %v1155 = vld [vmem:[#allocation7 + $0xc0] sm:$0xff]
        %v1156 = vld [vmem:[#allocation7 + $0xc8] sm:$0xff]
        %v1157 = vld [vmem:[#allocation7 + $0xd0] sm:$0xff]
        %v1158 = vld [vmem:[#allocation7 + $0xd8] sm:$0xff]
        %v1159 = vld [vmem:[#allocation7 + $0xe0] sm:$0xff]
        %v1160 = vld [vmem:[#allocation7 + $0xe8] sm:$0xff]
        %v1161 = vld [vmem:[#allocation7 + $0xf0] sm:$0xff]
        %v1162 = vld [vmem:[#allocation7 + $0xf8] sm:$0xff]
        %v1163 = vld [vmem:[#allocation7 + $0x100] sm:$0xff]
        %v1164 = vld [vmem:[#allocation7 + $0x108] sm:$0xff]
        %v1165 = vld [vmem:[#allocation7 + $0x110] sm:$0xff]
        %v1166 = vld [vmem:[#allocation7 + $0x118] sm:$0xff]
        %v1167 = vld [vmem:[#allocation7 + $0x120] sm:$0xff]
        %v1168 = vld [vmem:[#allocation7 + $0x128] sm:$0xff]
        %v1169 = vld [vmem:[#allocation7 + $0x130] sm:$0xff]
        %v1170 = vld [vmem:[#allocation7 + $0x138] sm:$0xff]
        %v1171 = vld [vmem:[#allocation7 + $0x140] sm:$0xff]
        %v1172 = vld [vmem:[#allocation7 + $0x148] sm:$0xff]
        %v1173 = vld [vmem:[#allocation7 + $0x150] sm:$0xff]
        %v1174 = vld [vmem:[#allocation7 + $0x158] sm:$0xff]
        %v1175 = vld [vmem:[#allocation7 + $0x160] sm:$0xff]
        %v1176 = vld [vmem:[#allocation7 + $0x168] sm:$0xff]
        %v1177 = vld [vmem:[#allocation7 + $0x170] sm:$0xff]
        %v1178 = vld [vmem:[#allocation7 + $0x178] sm:$0xff]
        %v1179 = vld [vmem:[#allocation7 + $0x180] sm:$0xff]
        %v1180 = vld [vmem:[#allocation7 + $0x188] sm:$0xff]
        %v1181 = vld [vmem:[#allocation7 + $0x190] sm:$0xff]
        %v1182 = vld [vmem:[#allocation7 + $0x198] sm:$0xff]
        %v1183 = vld [vmem:[#allocation7 + $0x1a0] sm:$0xff]
        %v1184 = vld [vmem:[#allocation7 + $0x1a8] sm:$0xff]
        %v1185 = vld [vmem:[#allocation7 + $0x1b0] sm:$0xff]
        %v1186 = vld [vmem:[#allocation7 + $0x1b8] sm:$0xff]
        %v1187 = vld [vmem:[#allocation7 + $0x1c0] sm:$0xff]
        %v1188 = vld [vmem:[#allocation7 + $0x1c8] sm:$0xff]
        %v1189 = vld [vmem:[#allocation7 + $0x1d0] sm:$0xff]
        %v1190 = vld [vmem:[#allocation7 + $0x1d8] sm:$0xff]
        %v1191 = vld [vmem:[#allocation7 + $0x1e0] sm:$0xff]
        %v1192 = vld [vmem:[#allocation7 + $0x1e8] sm:$0xff]
        %v1193 = vld [vmem:[#allocation7 + $0x1f0] sm:$0xff]
        %v1194 = vld [vmem:[#allocation7 + $0x1f8] sm:$0xff]
        %v1195 = vld [vmem:[%s10] sm:$0x1]
        %v1197 = vperm.slane %v1195, 0
        %1199 = vmatpush.msra.mxu0 %v1146
        %1200 = vmatpush.msra.mxu0 %v1145
        %1201 = vmatpush.msra.mxu0 %v1144
        %1202 = vmatpush.msra.mxu0 %v1143
        %1203 = vmatpush.msra.mxu0 %v1142
        %1204 = vmatpush.msra.mxu0 %v1141
        %1205 = vmatpush.msra.mxu0 %v1140
        %1206 = vmatpush.msra.mxu0 %v1139
        %1207 = vmatpush.msra.mxu0 %v1138
        %1208 = vmatpush.msra.mxu0 %v1137
        %1209 = vmatpush.msra.mxu0 %v1136
        %1210 = vmatpush.msra.mxu0 %v1135
        %1211 = vmatpush.msra.mxu0 %v1134
        %1212 = vmatpush.msra.mxu0 %v1133
        %1213 = vmatpush.msra.mxu0 %v1132
        %1214 = vmatpush.msra.mxu0 %v1131
        %1215 = vmatmul.f32.gmra.mxu0 %v1127
        %v1216 = vpop.f32.mrf.mxu0
        %v1217 = vadd.f32 %v1197, %v1216
        %1218 = vdwg.mxu0
        %1219 = vmatpush.msra.mxu0 %v1162
        %1220 = vmatpush.msra.mxu0 %v1161
        %1221 = vmatpush.msra.mxu0 %v1160
        %1222 = vmatpush.msra.mxu0 %v1159
        %1223 = vmatpush.msra.mxu0 %v1158
        %1224 = vmatpush.msra.mxu0 %v1157
        %1225 = vmatpush.msra.mxu0 %v1156
        %1226 = vmatpush.msra.mxu0 %v1155
        %1227 = vmatpush.msra.mxu0 %v1154
        %1228 = vmatpush.msra.mxu0 %v1153
        %1229 = vmatpush.msra.mxu0 %v1152
        %1230 = vmatpush.msra.mxu0 %v1151
        %1231 = vmatpush.msra.mxu0 %v1150
        %1232 = vmatpush.msra.mxu0 %v1149
        %1233 = vmatpush.msra.mxu0 %v1148
        %1234 = vmatpush.msra.mxu0 %v1147
        %1235 = vmatmul.f32.gmra.mxu0 %v1128
        %v1236 = vpop.f32.mrf.mxu0
        %v1237 = vadd.f32 %v1217, %v1236
        %1238 = vdwg.mxu0
        %1239 = vmatpush.msra.mxu0 %v1178
        %1240 = vmatpush.msra.mxu0 %v1177
        %1241 = vmatpush.msra.mxu0 %v1176
        %1242 = vmatpush.msra.mxu0 %v1175
        %1243 = vmatpush.msra.mxu0 %v1174
        %1244 = vmatpush.msra.mxu0 %v1173
        %1245 = vmatpush.msra.mxu0 %v1172
        %1246 = vmatpush.msra.mxu0 %v1171
        %1247 = vmatpush.msra.mxu0 %v1170
        %1248 = vmatpush.msra.mxu0 %v1169
        %1249 = vmatpush.msra.mxu0 %v1168
        %1250 = vmatpush.msra.mxu0 %v1167
        %1251 = vmatpush.msra.mxu0 %v1166
        %1252 = vmatpush.msra.mxu0 %v1165
        %1253 = vmatpush.msra.mxu0 %v1164
        %1254 = vmatpush.msra.mxu0 %v1163
        %1255 = vmatmul.f32.gmra.mxu0 %v1129
        %v1256 = vpop.f32.mrf.mxu0
        %v1257 = vadd.f32 %v1237, %v1256
        %1258 = vdwg.mxu0
        %1259 = vmatpush.msra.mxu0 %v1194
        %1260 = vmatpush.msra.mxu0 %v1193
        %1261 = vmatpush.msra.mxu0 %v1192
        %1262 = vmatpush.msra.mxu0 %v1191
        %1263 = vmatpush.msra.mxu0 %v1190
        %1264 = vmatpush.msra.mxu0 %v1189
        %1265 = vmatpush.msra.mxu0 %v1188
        %1266 = vmatpush.msra.mxu0 %v1187
        %1267 = vmatpush.msra.mxu0 %v1186
        %1268 = vmatpush.msra.mxu0 %v1185
        %1269 = vmatpush.msra.mxu0 %v1184
        %1270 = vmatpush.msra.mxu0 %v1183
        %1271 = vmatpush.msra.mxu0 %v1182
        %1272 = vmatpush.msra.mxu0 %v1181
        %1273 = vmatpush.msra.mxu0 %v1180
        %1274 = vmatpush.msra.mxu0 %v1179
        %1275 = vmatmul.f32.gmra.mxu0 %v1130
        %v1276 = vpop.f32.mrf.mxu0
        %v1277 = vadd.f32 %v1257, %v1276
        %1278 = vdwg.mxu0
        %v1279 = vadd.f32 %v972, %v1277
        %v1280 = vld [vmem:[%s11] sm:$0x1]
        %v1281 = vld [vmem:[%s12] sm:$0x1]
        %1282 = vadd.xlane.f32.xlu0 %v1279
        %v1283 = vpop.xlane.xlu0 %1282
        %v1284 = vmul.f32 %v1283, %v946
        %v1285 = vsub.f32 %v1279, %v1284
        %v1286 = vmul.f32 %v1285, %v1285
        %1287 = vadd.xlane.f32.xlu0 %v1286
        %v1288 = vpop.xlane.xlu0 %1287
        %v1289 = vmul.f32 %v1288, %v946
        %v1290 = vadd.f32 %v1289, 1e-05
        %v1291 = vrsqrt.pop %v1290
        %v1292 = vmul.f32 %v1291, %v1290
        %v1293 = vmul.f32 %v1292, %v1291
        %v1294 = vmul.f32 0.5, %v1293
        %v1295 = vsub.f32 1.5, %v1294
        %v1296 = vmul.f32 %v1291, %v1295
        %vm1297 = vweird.f32 %v1290
        %vm1298 = vweird.f32 %v1291
        %vm1299 = vmor %vm1297, %vm1298
        %v1300 = vsel %vm1299, %v1291, %v1296
        %v1301 = vmul.f32 %v1285, %v1300
        %v1303 = vperm.slane %v1280, 0
        %v1305 = vmul.f32 %v1301, %v1303
        %v1307 = vperm.slane %v1281, 0
        %v1309 = vadd.f32 %v1305, %v1307
        %1310 = vst [vmem:[%s502] sm:$0xff] %v1309
        %p1311 = scmp.lt.s32.totalorder %s27, 1
        %s1312 = scalar_select %p1311, %s27, 1
        %s1313 = smul.addr %s1312, 8
        %s1314 = scalar_lea.vmem %s13, %s1313
        // Predicated region
        $region89: #{tiny_transformer_forward.6} parent=71 // pred_check
          %p1315 = pneg %p323
        $region90: #{tiny_transformer_forward.6} parent=71 // pred_check_branch
          %1317 = sbr.rel (%p1315) target = $region92
        $region91: #{tiny_transformer_forward.6} parent=71 // pred_region
          _
        $region92: #{tiny_transformer_forward.6} parent=71 // pred_fallthru
          _
      $region72: #{tiny_transformer_forward.6} parent=5 // pred_fallthru
        _
      %p1318 = scmp.le.s32.totalorder 2, %s22
      // Predicated region
      $region93: #{tiny_transformer_forward.6} parent=5 // pred_check
        %p1319 = pneg %p1318
      $region94: #{tiny_transformer_forward.6} parent=5 // pred_check_branch
        %1321 = sbr.rel (%p1319) target = $region96
      $region95: #{tiny_transformer_forward.6} parent=5 // pred_region
        %s1322 = ssub.s32 %s22, 2
        // Predicated region
        $region97: #{tiny_transformer_forward.6} parent=95 // pred_check
          %p1323 = pneg %p329
        $region98: #{tiny_transformer_forward.6} parent=95 // pred_check_branch
          %1325 = sbr.rel (%p1323) target = $region100
        $region99: #{tiny_transformer_forward.6} parent=95 // pred_region
          %p1326 = scmp.lt.s32.totalorder %s28, 1
          %s1327 = scalar_select %p1326, %s28, 1
          %s1328 = smul.addr %s1327, 8
          %s1329 = scalar_lea.vmem %s13, %s1328
        $region100: #{tiny_transformer_forward.6} parent=95 // pred_fallthru
          _
      $region96: #{tiny_transformer_forward.6} parent=5 // pred_fallthru
        _
    $region6: #{tiny_transformer_forward.6} parent=1 // loop_footer
      %s26 = sadd.s32 1, %s22
    $region7: #{tiny_transformer_forward.6} parent=1 // loop_footer_branch
      %21 = sbr.rel target = $region3
    $region8: #{tiny_transformer_forward.6} parent=1 // loop_exit
      _
    %1330 = vsyncpa [#allocation3], 1
    %s1331 = scalar_lea.sflag [#allocation3], 1
    %1332 = vsyncpa %s1331, 1
    %1333 = vsyncpa [#allocation5], 1
    %1334 = vsyncpa [#allocation8], 1

// kernel: tiny_transformer_forward.11
$region0: #{tiny_transformer_forward.11}
  #allocation0 [shape = 'u32[]', space=smem, size = 0x4, offset = 0x4, fixed_abs, tag = 'smem constant byte address 0x4 - core index']
  #allocation1 [shape = 'u32[72,128]{1,0:T(1,128)}', space=vmem, size = 0x9000, scoped, tag = 'internal scratch']
  %s0 = inlined_call_operand.vmem [shape: f32[16,128], index: 0, kind: input, shape index: {}]
  %s1 = inlined_call_operand.vmem [shape: f32[1,128], index: 1, kind: input, shape index: {}]
  %s2 = inlined_call_operand.hbm [shape: f32[1,128], index: 2, kind: input, shape index: {}]
  %s3 = inlined_call_operand.hbm [shape: f32[128,128], index: 3, kind: input, shape index: {}]
  %s4 = inlined_call_operand.hbm [shape: f32[1,128], index: 4, kind: input, shape index: {}]
  %s5 = inlined_call_operand.vmem [shape: f32[16,128], index: 5, kind: output, shape index: {}]
  %s6 = sld [smem:[#allocation0]]
  $region42: #{tiny_transformer_forward.11} parent=0
    _
  %s8 = ssub.s32 1, %s6
  %s9 = scalar_select 0, %s8, %s6
  $region1: #{tiny_transformer_forward.11} parent=0
    #allocation2 [shape = 'u8[512]{0}', space=vmem, size = 0x400, scoped, tag = 'input window, operand 2, single buffered']
    #allocation3 [shape = 's32[1]{0}', space=sflag, size = 0x4, scoped, tag = 'scoped memory for tiny_transformer_forward.11']
    #allocation4 [shape = 'u8[65536]{0}', space=vmem, size = 0x10000, scoped, tag = 'input window, operand 3, single buffered']
    #allocation5 [shape = 's32[1]{0}', space=sflag, size = 0x4, scoped, tag = 'scoped memory for tiny_transformer_forward.11']
    #allocation6 [shape = 'u8[512]{0}', space=vmem, size = 0x400, scoped, tag = 'input window, operand 4, single buffered']
    %10 = vsyncpa [#allocation3], 0
    %11 = vsyncpa [#allocation5], 0
    // Predicated region
    $region2: #{tiny_transformer_forward.11} parent=1 // pred_check
      _
    $region3: #{tiny_transformer_forward.11} parent=1 // pred_check_branch
      %13 = sbr.rel (0) target = $region5
    $region4: #{tiny_transformer_forward.11} parent=1 // pred_region
      _
    $region5: #{tiny_transformer_forward.11} parent=1 // pred_fallthru
      _
    // Predicated region
    $region6: #{tiny_transformer_forward.11} parent=1 // pred_check
      _
    $region7: #{tiny_transformer_forward.11} parent=1 // pred_check_branch
      %15 = sbr.rel (0) target = $region9
    $region8: #{tiny_transformer_forward.11} parent=1 // pred_region
      _
    $region9: #{tiny_transformer_forward.11} parent=1 // pred_fallthru
      _
    // Predicated region
    $region10: #{tiny_transformer_forward.11} parent=1 // pred_check
      _
    $region11: #{tiny_transformer_forward.11} parent=1 // pred_check_branch
      %17 = sbr.rel (0) target = $region13
    $region12: #{tiny_transformer_forward.11} parent=1 // pred_region
      %19 = vsyncadd [#allocation3], 0
      %s21 = sshll.u32 %s2, 4
      %s22 = int_to_ptr.hbm [resolvable:$true] %s21
      %s23 = sshll.u32 [#allocation2], 4
      %s24 = int_to_ptr.vmem [resolvable:$true] %s23
      %26 = dma.hbm_to_vmem [thread:$0]  %s22, 16, %s24, [#allocation3]
    $region13: #{tiny_transformer_forward.11} parent=1 // pred_fallthru
      _
    // Predicated region
    $region14: #{tiny_transformer_forward.11} parent=1 // pred_check
      _
    $region15: #{tiny_transformer_forward.11} parent=1 // pred_check_branch
      %28 = sbr.rel (0) target = $region17
    $region16: #{tiny_transformer_forward.11} parent=1 // pred_region
      %30 = vsyncadd [#allocation5], 0
      %s31 = sshll.u32 %s3, 4
      %s32 = int_to_ptr.hbm [resolvable:$true] %s31
      %s33 = sshll.u32 [#allocation4], 4
      %s34 = int_to_ptr.vmem [resolvable:$true] %s33
      %39 = dma.hbm_to_vmem [thread:$0]  %s32, 2048, %s34, [#allocation5], 128, 128, 8
    $region17: #{tiny_transformer_forward.11} parent=1 // pred_fallthru
      _
    // Predicated region
    $region18: #{tiny_transformer_forward.11} parent=1 // pred_check
      _
    $region19: #{tiny_transformer_forward.11} parent=1 // pred_check_branch
      %41 = sbr.rel (0) target = $region21
    $region20: #{tiny_transformer_forward.11} parent=1 // pred_region
      %43 = vsyncadd [#allocation5], 0
      %s45 = sshll.u32 %s4, 4
      %s46 = int_to_ptr.hbm [resolvable:$true] %s45
      %s47 = sshll.u32 [#allocation6], 4
      %s48 = int_to_ptr.vmem [resolvable:$true] %s47
      %50 = dma.hbm_to_vmem [thread:$0]  %s46, 16, %s48, [#allocation5]
    $region21: #{tiny_transformer_forward.11} parent=1 // pred_fallthru
      _
    // Predicated region
    $region22: #{tiny_transformer_forward.11} parent=1 // pred_check
      _
    $region23: #{tiny_transformer_forward.11} parent=1 // pred_check_branch
      %52 = sbr.rel (0) target = $region25
    $region24: #{tiny_transformer_forward.11} parent=1 // pred_region
      %54 = dma.done [#allocation3], 16
    $region25: #{tiny_transformer_forward.11} parent=1 // pred_fallthru
      _
    // Predicated region
    $region26: #{tiny_transformer_forward.11} parent=1 // pred_check
      _
    $region27: #{tiny_transformer_forward.11} parent=1 // pred_check_branch
      %56 = sbr.rel (0) target = $region29
    $region28: #{tiny_transformer_forward.11} parent=1 // pred_region
      %58 = dma.done [#allocation5], 2048
    $region29: #{tiny_transformer_forward.11} parent=1 // pred_fallthru
      _
    // Predicated region
    $region30: #{tiny_transformer_forward.11} parent=1 // pred_check
      _
    $region31: #{tiny_transformer_forward.11} parent=1 // pred_check_branch
      %60 = sbr.rel (0) target = $region33
    $region32: #{tiny_transformer_forward.11} parent=1 // pred_region
      %62 = dma.done [#allocation5], 16
    $region33: #{tiny_transformer_forward.11} parent=1 // pred_fallthru
      _
    %v63 = vld [vmem:[%s0] sm:$0xff]
    %v64 = vld [vmem:[%s0 + $0x8] sm:$0xff]
    %v65 = vld [vmem:[%s1] sm:$0x1]
    %v66 = vld [vmem:[#allocation2] sm:$0x1]
    %67 = vadd.xlane.f32.xlu0 %v63
    %v68 = vpop.xlane.xlu0 %67
    %69 = vadd.xlane.f32.xlu0 %v64
    %v70 = vpop.xlane.xlu0 %69
    %v71 = vrcp.pop 128.0
    %v72 = vmul.f32 128.0, %v71
    %v73 = vsub.f32 1.0, %v72
    %v74 = vmul.f32 %v71, %v73
    %v75 = vadd.f32 %v71, %v74
    %vm76 = vweird.f32 %v71
    %v77 = vsel %vm76, %v71, %v75
    %v78 = vmul.f32 %v68, %v77
    %v79 = vmul.f32 %v70, %v77
    %v80 = vsub.f32 %v63, %v78
    %v81 = vsub.f32 %v64, %v79
    %v82 = vmul.f32 %v80, %v80
    %v83 = vmul.f32 %v81, %v81
    %84 = vadd.xlane.f32.xlu0 %v82
    %v85 = vpop.xlane.xlu0 %84
    %86 = vadd.xlane.f32.xlu0 %v83
    %v87 = vpop.xlane.xlu0 %86
    %v88 = vmul.f32 %v85, %v77
    %v89 = vmul.f32 %v87, %v77
    %v90 = vadd.f32 %v88, 1e-05
    %v91 = vadd.f32 %v89, 1e-05
    %v92 = vrsqrt.pop %v90
    %v93 = vmul.f32 %v92, %v90
    %v94 = vmul.f32 %v93, %v92
    %v95 = vmul.f32 0.5, %v94
    %v96 = vsub.f32 1.5, %v95
    %v97 = vmul.f32 %v92, %v96
    %vm98 = vweird.f32 %v90
    %vm99 = vweird.f32 %v92
    %vm100 = vmor %vm98, %vm99
    %v101 = vsel %vm100, %v92, %v97
    %v102 = vrsqrt.pop %v91
    %v103 = vmul.f32 %v102, %v91
    %v104 = vmul.f32 %v103, %v102
    %v105 = vmul.f32 0.5, %v104
    %v106 = vsub.f32 1.5, %v105
    %v107 = vmul.f32 %v102, %v106
    %vm108 = vweird.f32 %v91
    %vm109 = vweird.f32 %v102
    %vm110 = vmor %vm108, %vm109
    %v111 = vsel %vm110, %v102, %v107
    %v112 = vmul.f32 %v80, %v101
    %v113 = vmul.f32 %v81, %v111
    %v115 = vperm.slane %v65, 0
    %v117 = vmul.f32 %v112, %v115
    %v118 = vmul.f32 %v113, %v115
    %v120 = vperm.slane %v66, 0
    %v122 = vadd.f32 %v117, %v120
    %v123 = vadd.f32 %v118, %v120
    %v124 = vld [vmem:[#allocation4] sm:$0xff]
    %v125 = vld [vmem:[#allocation4 + $0x8] sm:$0xff]
    %v126 = vld [vmem:[#allocation4 + $0x10] sm:$0xff]
    %v127 = vld [vmem:[#allocation4 + $0x18] sm:$0xff]
    %v128 = vld [vmem:[#allocation4 + $0x20] sm:$0xff]
    %v129 = vld [vmem:[#allocation4 + $0x28] sm:$0xff]
    %v130 = vld [vmem:[#allocation4 + $0x30] sm:$0xff]
    %v131 = vld [vmem:[#allocation4 + $0x38] sm:$0xff]
    %v132 = vld [vmem:[#allocation4 + $0x40] sm:$0xff]
    %v133 = vld [vmem:[#allocation4 + $0x48] sm:$0xff]
    %v134 = vld [vmem:[#allocation4 + $0x50] sm:$0xff]
    %v135 = vld [vmem:[#allocation4 + $0x58] sm:$0xff]
    %v136 = vld [vmem:[#allocation4 + $0x60] sm:$0xff]
    %v137 = vld [vmem:[#allocation4 + $0x68] sm:$0xff]
    %v138 = vld [vmem:[#allocation4 + $0x70] sm:$0xff]
    %v139 = vld [vmem:[#allocation4 + $0x78] sm:$0xff]
    %v140 = vld [vmem:[#allocation6] sm:$0x1]
    %v142 = vperm.slane %v140, 0
    %144 = vmatpush.msra.mxu0 %v139
    %145 = vmatpush.msra.mxu0 %v138
    %146 = vmatpush.msra.mxu0 %v137
    %147 = vmatpush.msra.mxu0 %v136
    %148 = vmatpush.msra.mxu0 %v135
    %149 = vmatpush.msra.mxu0 %v134
    %150 = vmatpush.msra.mxu0 %v133
    %151 = vmatpush.msra.mxu0 %v132
    %152 = vmatpush.msra.mxu0 %v131
    %153 = vmatpush.msra.mxu0 %v130
    %154 = vmatpush.msra.mxu0 %v129
    %155 = vmatpush.msra.mxu0 %v128
    %156 = vmatpush.msra.mxu0 %v127
    %157 = vmatpush.msra.mxu0 %v126
    %158 = vmatpush.msra.mxu0 %v125
    %159 = vmatpush.msra.mxu0 %v124
    %160 = vmatmul.f32.gmra.mxu0 %v122
    %v161 = vpop.f32.mrf.mxu0
    %v162 = vadd.f32 %v142, %v161
    %163 = vmatmul.f32.gmra.mxu0 %v123
    %v164 = vpop.f32.mrf.mxu0
    %v165 = vadd.f32 %v142, %v164
    %166 = vdwg.mxu0
    %167 = vst [vmem:[%s5] sm:$0xff] %v162
    %168 = vst [vmem:[%s5 + $0x8] sm:$0xff] %v165
    // Predicated region
    $region34: #{tiny_transformer_forward.11} parent=1 // pred_check
      _
    $region35: #{tiny_transformer_forward.11} parent=1 // pred_check_branch
      %170 = sbr.rel (0) target = $region37
    $region36: #{tiny_transformer_forward.11} parent=1 // pred_region
      _
    $region37: #{tiny_transformer_forward.11} parent=1 // pred_fallthru
      _
    // Predicated region
    $region38: #{tiny_transformer_forward.11} parent=1 // pred_check
      _
    $region39: #{tiny_transformer_forward.11} parent=1 // pred_check_branch
      %172 = sbr.rel (0) target = $region41
    $region40: #{tiny_transformer_forward.11} parent=1 // pred_region
      _
    $region41: #{tiny_transformer_forward.11} parent=1 // pred_fallthru
      _
    %173 = vsyncpa [#allocation3], 1
    %174 = vsyncpa [#allocation5], 1

// kernel: tiny_transformer_forward.10
$region0: #{tiny_transformer_forward.10}
  #allocation0 [shape = 'u32[]', space=smem, size = 0x4, offset = 0x4, fixed_abs, tag = 'smem constant byte address 0x4 - core index']
  #allocation1 [shape = 'u32[72,128]{1,0:T(1,128)}', space=vmem, size = 0x9000, scoped, tag = 'internal scratch']
  %s0 = inlined_call_operand.vmem [shape: f32[16,128], index: 0, kind: input, shape index: {}]
  %s1 = inlined_call_operand.vmem [shape: f32[16,128], index: 1, kind: input, shape index: {}]
  %s2 = inlined_call_operand.hbm [shape: f32[128,384], index: 2, kind: input, shape index: {}]
  %s3 = inlined_call_operand.vmem [shape: f32[1,384], index: 3, kind: input, shape index: {}]
  %s4 = inlined_call_operand.hbm [shape: f32[128,128], index: 4, kind: input, shape index: {}]
  %s5 = inlined_call_operand.vmem [shape: f32[1,128], index: 5, kind: input, shape index: {}]
  %s6 = inlined_call_operand.vmem [shape: f32[1,128], index: 6, kind: input, shape index: {}]
  %s7 = inlined_call_operand.vmem [shape: f32[1,128], index: 7, kind: input, shape index: {}]
  %s8 = inlined_call_operand.hbm [shape: f32[128,128], index: 8, kind: input, shape index: {}]
  %s9 = inlined_call_operand.vmem [shape: f32[1,128], index: 9, kind: input, shape index: {}]
  %s10 = inlined_call_operand.hbm [shape: f32[128,256], index: 10, kind: input, shape index: {}]
  %s11 = inlined_call_operand.vmem [shape: f32[1,256], index: 11, kind: input, shape index: {}]
  %s12 = inlined_call_operand.hbm [shape: f32[128,128], index: 12, kind: input, shape index: {}]
  %s13 = inlined_call_operand.hbm [shape: f32[1,128], index: 13, kind: input, shape index: {}]
  %s14 = inlined_call_operand.hbm [shape: f32[1,128], index: 14, kind: input, shape index: {}]
  %s15 = inlined_call_operand.hbm [shape: f32[1,128], index: 15, kind: input, shape index: {}]
  %s16 = inlined_call_operand.hbm [shape: f32[128,512], index: 16, kind: input, shape index: {}]
  %s17 = inlined_call_operand.vmem [shape: f32[1,512], index: 17, kind: input, shape index: {}]
  %s18 = inlined_call_operand.hbm [shape: f32[512,128], index: 18, kind: input, shape index: {}]
  %s19 = inlined_call_operand.hbm [shape: f32[1,128], index: 19, kind: input, shape index: {}]
  %s20 = inlined_call_operand.hbm [shape: f32[1,128], index: 20, kind: input, shape index: {}]
  %s21 = inlined_call_operand.hbm [shape: f32[1,128], index: 21, kind: input, shape index: {}]
  %s22 = inlined_call_operand.vmem [shape: f32[16,128], index: 22, kind: output, shape index: {}]
  %s23 = sld [smem:[#allocation0]]
  $region173: #{tiny_transformer_forward.10} parent=0
    _
  %s25 = ssub.s32 1, %s23
  %s26 = scalar_select 0, %s25, %s23
  $region1: #{tiny_transformer_forward.10} parent=0
    #allocation2 [shape = 'u8[196608]{0}', space=vmem, size = 0x30000, scoped, tag = 'input window, operand 2, single buffered']
    #allocation3 [shape = 's32[2]{0}', space=sflag, size = 0x8, scoped, tag = 'scoped memory for tiny_transformer_forward.10']
    #allocation4 [shape = 'u8[65536]{0}', space=vmem, size = 0x10000, scoped, tag = 'input window, operand 4, single buffered']
    #allocation5 [shape = 's32[1]{0}', space=sflag, size = 0x4, scoped, tag = 'scoped memory for tiny_transformer_forward.10']
    #allocation6 [shape = 'u8[65536]{0}', space=vmem, size = 0x10000, scoped, tag = 'input window, operand 8, single buffered']
    #allocation7 [shape = 'u8[131072]{0}', space=vmem, size = 0x20000, scoped, tag = 'input window, operand 10, single buffered']
    #allocation8 [shape = 's32[1]{0}', space=sflag, size = 0x4, scoped, tag = 'scoped memory for tiny_transformer_forward.10']
    #allocation9 [shape = 'u8[65536]{0}', space=vmem, size = 0x10000, scoped, tag = 'input window, operand 12, single buffered']
    #allocation10 [shape = 'u8[512]{0}', space=vmem, size = 0x400, scoped, tag = 'input window, operand 13, single buffered']
    #allocation11 [shape = 's32[1]{0}', space=sflag, size = 0x4, scoped, tag = 'scoped memory for tiny_transformer_forward.10']
    #allocation12 [shape = 'u8[512]{0}', space=vmem, size = 0x400, scoped, tag = 'input window, operand 14, single buffered']
    #allocation13 [shape = 'u8[512]{0}', space=vmem, size = 0x400, scoped, tag = 'input window, operand 15, single buffered']
    #allocation14 [shape = 's32[1]{0}', space=sflag, size = 0x4, scoped, tag = 'scoped memory for tiny_transformer_forward.10']
    #allocation15 [shape = 'u8[262144]{0}', space=vmem, size = 0x40000, scoped, tag = 'input window, operand 16, single buffered']
    #allocation16 [shape = 'u8[262144]{0}', space=vmem, size = 0x40000, scoped, tag = 'input window, operand 18, single buffered']
    #allocation17 [shape = 's32[1]{0}', space=sflag, size = 0x4, scoped, tag = 'scoped memory for tiny_transformer_forward.10']
    #allocation18 [shape = 'u8[512]{0}', space=vmem, size = 0x400, scoped, tag = 'input window, operand 19, single buffered']
    #allocation19 [shape = 'u8[512]{0}', space=vmem, size = 0x400, scoped, tag = 'input window, operand 20, single buffered']
    #allocation20 [shape = 's32[1]{0}', space=sflag, size = 0x4, scoped, tag = 'scoped memory for tiny_transformer_forward.10']
    #allocation21 [shape = 'u8[512]{0}', space=vmem, size = 0x400, scoped, tag = 'input window, operand 21, single buffered']
    %27 = vsyncpa [#allocation3], 0
    %28 = vsyncpa [#allocation5], 0
    %29 = vsyncpa [#allocation8], 0
    %30 = vsyncpa [#allocation11], 0
    %31 = vsyncpa [#allocation14], 0
    %32 = vsyncpa [#allocation17], 0
    %33 = vsyncpa [#allocation20], 0
    loop: start=0, step=1, limit=4
    $region2: #{tiny_transformer_forward.10} parent=1 // loop_pre_header
      _
    $region3: #{tiny_transformer_forward.10} parent=1 // loop_header
      %s35 = sphi 0, %s39
      %p36 = scmp.ge.s32.totalorder %s35, 4
      %s45 = sphi 0, %s47
      %s48 = sphi 0, %s45
      %s49 = sphi 0, %s48
      %s65 = sphi 0, %s49
      %s71 = sphi 0, %s73
      %s74 = sphi 0, %s71
      %s75 = sphi 0, %s74
      %s91 = sphi 0, %s75
      %s95 = sphi 0, %s95
      %s97 = sphi 0, %s95
      %s98 = sphi 0, %s97
      %s112 = sphi 0, %s98
      %s116 = sphi 0, %s116
      %s118 = sphi 0, %s116
      %s119 = sphi 0, %s118
      %s133 = sphi 0, %s119
      %s137 = sphi 0, %s137
      %s139 = sphi 0, %s137
      %s140 = sphi 0, %s139
      %s154 = sphi 0, %s140
      %s158 = sphi 0, %s158
      %s160 = sphi 0, %s158
      %s161 = sphi 0, %s160
      %s175 = sphi 0, %s161
      %s179 = sphi 0, %s179
      %s181 = sphi 0, %s179
      %s182 = sphi 0, %s181
      %s196 = sphi 0, %s182
      %s200 = sphi 0, %s200
      %s202 = sphi 0, %s200
      %s203 = sphi 0, %s202
      %s217 = sphi 0, %s203
      %s221 = sphi 0, %s221
      %s223 = sphi 0, %s221
      %s224 = sphi 0, %s223
      %s238 = sphi 0, %s224
      %s242 = sphi 0, %s242
      %s244 = sphi 0, %s242
      %s245 = sphi 0, %s244
      %s259 = sphi 0, %s245
      %s263 = sphi 0, %s263
      %s265 = sphi 0, %s263
      %s266 = sphi 0, %s265
      %s280 = sphi 0, %s266
      %s284 = sphi 0, %s284
      %s286 = sphi 0, %s284
      %s287 = sphi 0, %s286
      %s301 = sphi 0, %s287
      %s305 = sphi 0, %s305
      %s307 = sphi 0, %s305
      %s308 = sphi 0, %s307
      %s322 = sphi 0, %s308
      %s326 = sphi 0, %s326
      %s328 = sphi 0, %s326
      %s329 = sphi 0, %s328
      %s343 = sphi 0, %s329
      %s347 = sphi 0, %s347
      %s349 = sphi 0, %s347
      %s350 = sphi 0, %s349
      %s364 = sphi 0, %s350
      %s368 = sphi 0, %s368
      %s370 = sphi 0, %s368
      %s371 = sphi 0, %s370
      %s385 = sphi 0, %s371
      %s389 = sphi 0, %s389
      %s391 = sphi 0, %s389
      %s392 = sphi 0, %s391
      %s406 = sphi 0, %s392
      %s410 = sphi 0, %s410
      %s412 = sphi 0, %s410
      %s413 = sphi 0, %s412
      %s427 = sphi 0, %s413
      %s431 = sphi 0, %s431
      %s433 = sphi 0, %s431
      %s434 = sphi 0, %s433
      %s448 = sphi 0, %s434
      %s452 = sphi 0, %s452
      %s454 = sphi 0, %s452
      %s455 = sphi 0, %s454
      %s469 = sphi 0, %s455
      %s473 = sphi 0, %s473
      %s475 = sphi 0, %s473
      %s476 = sphi 0, %s475
      %s490 = sphi 0, %s476
      %s494 = sphi 0, %s494
      %s496 = sphi 0, %s494
      %s497 = sphi 0, %s496
      %s511 = sphi 0, %s497
      %s517 = sphi 0, %s519
      %s520 = sphi 0, %s517
      %s521 = sphi 0, %s520
      %s537 = sphi 0, %s521
    $region4: #{tiny_transformer_forward.10} parent=1 // loop_header_branch
      %38 = sbr.rel (%p36) target = $region8
    $region5: #{tiny_transformer_forward.10} parent=1 // loop_body
      %s40 = ssub.s32 %s35, 1
      %s41 = ssub.s32 %s35, 2
      %s42 = sadd.s32 %s35, 1
      %s43 = ssub.s32 %s35, %s42
      %p44 = scmp.eq.s32.totalorder %s43, 0
      %s46 = sadd.s32 %s45, 1
      %s47 = scalar_select %p44, %s45, %s46
      %p50 = pneg %p44
      %p51 = scmp.eq.s32.totalorder %s35, 1
      %p52 = por %p50, %p51
      %p53 = scmp.ne.s32.totalorder %s45, %s48
      %p54 = scmp.eq.s32.totalorder %s35, 0
      %p55 = por %p53, %p54
      %p56 = scmp.ne.s32.totalorder %s45, %s48
      %p57 = scmp.eq.s32.totalorder %s40, 1
      %p58 = por %p56, %p57
      %p59 = scmp.ne.s32.totalorder %s48, %s49
      %p60 = scmp.eq.s32.totalorder %s40, 0
      %p61 = por %p59, %p60
      %p62 = scmp.ne.s32.totalorder %s48, %s49
      %p63 = scmp.eq.s32.totalorder %s41, 1
      %p64 = por %p62, %p63
      %p66 = scmp.ne.s32.totalorder %s49, %s65
      %p67 = scmp.eq.s32.totalorder %s41, 0
      %p68 = por %p66, %p67
      %s69 = ssub.s32 %s35, %s42
      %p70 = scmp.eq.s32.totalorder %s69, 0
      %s72 = sadd.s32 %s71, 1
      %s73 = scalar_select %p70, %s71, %s72
      %p76 = pneg %p70
      %p77 = scmp.eq.s32.totalorder %s35, 1
      %p78 = por %p76, %p77
      %p79 = scmp.ne.s32.totalorder %s71, %s74
      %p80 = scmp.eq.s32.totalorder %s35, 0
      %p81 = por %p79, %p80
      %p82 = scmp.ne.s32.totalorder %s71, %s74
      %p83 = scmp.eq.s32.totalorder %s40, 1
      %p84 = por %p82, %p83
      %p85 = scmp.ne.s32.totalorder %s74, %s75
      %p86 = scmp.eq.s32.totalorder %s40, 0
      %p87 = por %p85, %p86
      %p88 = scmp.ne.s32.totalorder %s74, %s75
      %p89 = scmp.eq.s32.totalorder %s41, 1
      %p90 = por %p88, %p89
      %p92 = scmp.ne.s32.totalorder %s75, %s91
      %p93 = scmp.eq.s32.totalorder %s41, 0
      %p94 = por %p92, %p93
      %s96 = sadd.s32 %s95, 1
      %p99 = scmp.eq.s32.totalorder %s35, 1
      %p100 = scmp.ne.s32.totalorder %s95, %s97
      %p101 = scmp.eq.s32.totalorder %s35, 0
      %p102 = por %p100, %p101
      %p103 = scmp.ne.s32.totalorder %s95, %s97
      %p104 = scmp.eq.s32.totalorder %s40, 1
      %p105 = por %p103, %p104
      %p106 = scmp.ne.s32.totalorder %s97, %s98
      %p107 = scmp.eq.s32.totalorder %s40, 0
      %p108 = por %p106, %p107
      %p109 = scmp.ne.s32.totalorder %s97, %s98
      %p110 = scmp.eq.s32.totalorder %s41, 1
      %p111 = por %p109, %p110
      %p113 = scmp.ne.s32.totalorder %s98, %s112
      %p114 = scmp.eq.s32.totalorder %s41, 0
      %p115 = por %p113, %p114
      %s117 = sadd.s32 %s116, 1
      %p120 = scmp.eq.s32.totalorder %s35, 1
      %p121 = scmp.ne.s32.totalorder %s116, %s118
      %p122 = scmp.eq.s32.totalorder %s35, 0
      %p123 = por %p121, %p122
      %p124 = scmp.ne.s32.totalorder %s116, %s118
      %p125 = scmp.eq.s32.totalorder %s40, 1
      %p126 = por %p124, %p125
      %p127 = scmp.ne.s32.totalorder %s118, %s119
      %p128 = scmp.eq.s32.totalorder %s40, 0
      %p129 = por %p127, %p128
      %p130 = scmp.ne.s32.totalorder %s118, %s119
      %p131 = scmp.eq.s32.totalorder %s41, 1
      %p132 = por %p130, %p131
      %p134 = scmp.ne.s32.totalorder %s119, %s133
      %p135 = scmp.eq.s32.totalorder %s41, 0
      %p136 = por %p134, %p135
      %s138 = sadd.s32 %s137, 1
      %p141 = scmp.eq.s32.totalorder %s35, 1
      %p142 = scmp.ne.s32.totalorder %s137, %s139
      %p143 = scmp.eq.s32.totalorder %s35, 0
      %p144 = por %p142, %p143
      %p145 = scmp.ne.s32.totalorder %s137, %s139
      %p146 = scmp.eq.s32.totalorder %s40, 1
      %p147 = por %p145, %p146
      %p148 = scmp.ne.s32.totalorder %s139, %s140
      %p149 = scmp.eq.s32.totalorder %s40, 0
      %p150 = por %p148, %p149
      %p151 = scmp.ne.s32.totalorder %s139, %s140
      %p152 = scmp.eq.s32.totalorder %s41, 1
      %p153 = por %p151, %p152
      %p155 = scmp.ne.s32.totalorder %s140, %s154
      %p156 = scmp.eq.s32.totalorder %s41, 0
      %p157 = por %p155, %p156
      %s159 = sadd.s32 %s158, 1
      %p162 = scmp.eq.s32.totalorder %s35, 1
      %p163 = scmp.ne.s32.totalorder %s158, %s160
      %p164 = scmp.eq.s32.totalorder %s35, 0
      %p165 = por %p163, %p164
      %p166 = scmp.ne.s32.totalorder %s158, %s160
      %p167 = scmp.eq.s32.totalorder %s40, 1
      %p168 = por %p166, %p167
      %p169 = scmp.ne.s32.totalorder %s160, %s161
      %p170 = scmp.eq.s32.totalorder %s40, 0
      %p171 = por %p169, %p170
      %p172 = scmp.ne.s32.totalorder %s160, %s161
      %p173 = scmp.eq.s32.totalorder %s41, 1
      %p174 = por %p172, %p173
      %p176 = scmp.ne.s32.totalorder %s161, %s175
      %p177 = scmp.eq.s32.totalorder %s41, 0
      %p178 = por %p176, %p177
      %s180 = sadd.s32 %s179, 1
      %p183 = scmp.eq.s32.totalorder %s35, 1
      %p184 = scmp.ne.s32.totalorder %s179, %s181
      %p185 = scmp.eq.s32.totalorder %s35, 0
      %p186 = por %p184, %p185
      %p187 = scmp.ne.s32.totalorder %s179, %s181
      %p188 = scmp.eq.s32.totalorder %s40, 1
      %p189 = por %p187, %p188
      %p190 = scmp.ne.s32.totalorder %s181, %s182
      %p191 = scmp.eq.s32.totalorder %s40, 0
      %p192 = por %p190, %p191
      %p193 = scmp.ne.s32.totalorder %s181, %s182
      %p194 = scmp.eq.s32.totalorder %s41, 1
      %p195 = por %p193, %p194
      %p197 = scmp.ne.s32.totalorder %s182, %s196
      %p198 = scmp.eq.s32.totalorder %s41, 0
      %p199 = por %p197, %p198
      %s201 = sadd.s32 %s200, 1
      %p204 = scmp.eq.s32.totalorder %s35, 1
      %p205 = scmp.ne.s32.totalorder %s200, %s202
      %p206 = scmp.eq.s32.totalorder %s35, 0
      %p207 = por %p205, %p206
      %p208 = scmp.ne.s32.totalorder %s200, %s202
      %p209 = scmp.eq.s32.totalorder %s40, 1
      %p210 = por %p208, %p209
      %p211 = scmp.ne.s32.totalorder %s202, %s203
      %p212 = scmp.eq.s32.totalorder %s40, 0
      %p213 = por %p211, %p212
      %p214 = scmp.ne.s32.totalorder %s202, %s203
      %p215 = scmp.eq.s32.totalorder %s41, 1
      %p216 = por %p214, %p215
      %p218 = scmp.ne.s32.totalorder %s203, %s217
      %p219 = scmp.eq.s32.totalorder %s41, 0
      %p220 = por %p218, %p219
      %s222 = sadd.s32 %s221, 1
      %p225 = scmp.eq.s32.totalorder %s35, 1
      %p226 = scmp.ne.s32.totalorder %s221, %s223
      %p227 = scmp.eq.s32.totalorder %s35, 0
      %p228 = por %p226, %p227
      %p229 = scmp.ne.s32.totalorder %s221, %s223
      %p230 = scmp.eq.s32.totalorder %s40, 1
      %p231 = por %p229, %p230
      %p232 = scmp.ne.s32.totalorder %s223, %s224
      %p233 = scmp.eq.s32.totalorder %s40, 0
      %p234 = por %p232, %p233
      %p235 = scmp.ne.s32.totalorder %s223, %s224
      %p236 = scmp.eq.s32.totalorder %s41, 1
      %p237 = por %p235, %p236
      %p239 = scmp.ne.s32.totalorder %s224, %s238
      %p240 = scmp.eq.s32.totalorder %s41, 0
      %p241 = por %p239, %p240
      %s243 = sadd.s32 %s242, 1
      %p246 = scmp.eq.s32.totalorder %s35, 1
      %p247 = scmp.ne.s32.totalorder %s242, %s244
      %p248 = scmp.eq.s32.totalorder %s35, 0
      %p249 = por %p247, %p248
      %p250 = scmp.ne.s32.totalorder %s242, %s244
      %p251 = scmp.eq.s32.totalorder %s40, 1
      %p252 = por %p250, %p251
      %p253 = scmp.ne.s32.totalorder %s244, %s245
      %p254 = scmp.eq.s32.totalorder %s40, 0
      %p255 = por %p253, %p254
      %p256 = scmp.ne.s32.totalorder %s244, %s245
      %p257 = scmp.eq.s32.totalorder %s41, 1
      %p258 = por %p256, %p257
      %p260 = scmp.ne.s32.totalorder %s245, %s259
      %p261 = scmp.eq.s32.totalorder %s41, 0
      %p262 = por %p260, %p261
      %s264 = sadd.s32 %s263, 1
      %p267 = scmp.eq.s32.totalorder %s35, 1
      %p268 = scmp.ne.s32.totalorder %s263, %s265
      %p269 = scmp.eq.s32.totalorder %s35, 0
      %p270 = por %p268, %p269
      %p271 = scmp.ne.s32.totalorder %s263, %s265
      %p272 = scmp.eq.s32.totalorder %s40, 1
      %p273 = por %p271, %p272
      %p274 = scmp.ne.s32.totalorder %s265, %s266
      %p275 = scmp.eq.s32.totalorder %s40, 0
      %p276 = por %p274, %p275
      %p277 = scmp.ne.s32.totalorder %s265, %s266
      %p278 = scmp.eq.s32.totalorder %s41, 1
      %p279 = por %p277, %p278
      %p281 = scmp.ne.s32.totalorder %s266, %s280
      %p282 = scmp.eq.s32.totalorder %s41, 0
      %p283 = por %p281, %p282
      %s285 = sadd.s32 %s284, 1
      %p288 = scmp.eq.s32.totalorder %s35, 1
      %p289 = scmp.ne.s32.totalorder %s284, %s286
      %p290 = scmp.eq.s32.totalorder %s35, 0
      %p291 = por %p289, %p290
      %p292 = scmp.ne.s32.totalorder %s284, %s286
      %p293 = scmp.eq.s32.totalorder %s40, 1
      %p294 = por %p292, %p293
      %p295 = scmp.ne.s32.totalorder %s286, %s287
      %p296 = scmp.eq.s32.totalorder %s40, 0
      %p297 = por %p295, %p296
      %p298 = scmp.ne.s32.totalorder %s286, %s287
      %p299 = scmp.eq.s32.totalorder %s41, 1
      %p300 = por %p298, %p299
      %p302 = scmp.ne.s32.totalorder %s287, %s301
      %p303 = scmp.eq.s32.totalorder %s41, 0
      %p304 = por %p302, %p303
      %s306 = sadd.s32 %s305, 1
      %p309 = scmp.eq.s32.totalorder %s35, 1
      %p310 = scmp.ne.s32.totalorder %s305, %s307
      %p311 = scmp.eq.s32.totalorder %s35, 0
      %p312 = por %p310, %p311
      %p313 = scmp.ne.s32.totalorder %s305, %s307
      %p314 = scmp.eq.s32.totalorder %s40, 1
      %p315 = por %p313, %p314
      %p316 = scmp.ne.s32.totalorder %s307, %s308
      %p317 = scmp.eq.s32.totalorder %s40, 0
      %p318 = por %p316, %p317
      %p319 = scmp.ne.s32.totalorder %s307, %s308
      %p320 = scmp.eq.s32.totalorder %s41, 1
      %p321 = por %p319, %p320
      %p323 = scmp.ne.s32.totalorder %s308, %s322
      %p324 = scmp.eq.s32.totalorder %s41, 0
      %p325 = por %p323, %p324
      %s327 = sadd.s32 %s326, 1
      %p330 = scmp.eq.s32.totalorder %s35, 1
      %p331 = scmp.ne.s32.totalorder %s326, %s328
      %p332 = scmp.eq.s32.totalorder %s35, 0
      %p333 = por %p331, %p332
      %p334 = scmp.ne.s32.totalorder %s326, %s328
      %p335 = scmp.eq.s32.totalorder %s40, 1
      %p336 = por %p334, %p335
      %p337 = scmp.ne.s32.totalorder %s328, %s329
      %p338 = scmp.eq.s32.totalorder %s40, 0
      %p339 = por %p337, %p338
      %p340 = scmp.ne.s32.totalorder %s328, %s329
      %p341 = scmp.eq.s32.totalorder %s41, 1
      %p342 = por %p340, %p341
      %p344 = scmp.ne.s32.totalorder %s329, %s343
      %p345 = scmp.eq.s32.totalorder %s41, 0
      %p346 = por %p344, %p345
      %s348 = sadd.s32 %s347, 1
      %p351 = scmp.eq.s32.totalorder %s35, 1
      %p352 = scmp.ne.s32.totalorder %s347, %s349
      %p353 = scmp.eq.s32.totalorder %s35, 0
      %p354 = por %p352, %p353
      %p355 = scmp.ne.s32.totalorder %s347, %s349
      %p356 = scmp.eq.s32.totalorder %s40, 1
      %p357 = por %p355, %p356
      %p358 = scmp.ne.s32.totalorder %s349, %s350
      %p359 = scmp.eq.s32.totalorder %s40, 0
      %p360 = por %p358, %p359
      %p361 = scmp.ne.s32.totalorder %s349, %s350
      %p362 = scmp.eq.s32.totalorder %s41, 1
      %p363 = por %p361, %p362
      %p365 = scmp.ne.s32.totalorder %s350, %s364
      %p366 = scmp.eq.s32.totalorder %s41, 0
      %p367 = por %p365, %p366
      %s369 = sadd.s32 %s368, 1
      %p372 = scmp.eq.s32.totalorder %s35, 1
      %p373 = scmp.ne.s32.totalorder %s368, %s370
      %p374 = scmp.eq.s32.totalorder %s35, 0
      %p375 = por %p373, %p374
      %p376 = scmp.ne.s32.totalorder %s368, %s370
      %p377 = scmp.eq.s32.totalorder %s40, 1
      %p378 = por %p376, %p377
      %p379 = scmp.ne.s32.totalorder %s370, %s371
      %p380 = scmp.eq.s32.totalorder %s40, 0
      %p381 = por %p379, %p380
      %p382 = scmp.ne.s32.totalorder %s370, %s371
      %p383 = scmp.eq.s32.totalorder %s41, 1
      %p384 = por %p382, %p383
      %p386 = scmp.ne.s32.totalorder %s371, %s385
      %p387 = scmp.eq.s32.totalorder %s41, 0
      %p388 = por %p386, %p387
      %s390 = sadd.s32 %s389, 1
      %p393 = scmp.eq.s32.totalorder %s35, 1
      %p394 = scmp.ne.s32.totalorder %s389, %s391
      %p395 = scmp.eq.s32.totalorder %s35, 0
      %p396 = por %p394, %p395
      %p397 = scmp.ne.s32.totalorder %s389, %s391
      %p398 = scmp.eq.s32.totalorder %s40, 1
      %p399 = por %p397, %p398
      %p400 = scmp.ne.s32.totalorder %s391, %s392
      %p401 = scmp.eq.s32.totalorder %s40, 0
      %p402 = por %p400, %p401
      %p403 = scmp.ne.s32.totalorder %s391, %s392
      %p404 = scmp.eq.s32.totalorder %s41, 1
      %p405 = por %p403, %p404
      %p407 = scmp.ne.s32.totalorder %s392, %s406
      %p408 = scmp.eq.s32.totalorder %s41, 0
      %p409 = por %p407, %p408
      %s411 = sadd.s32 %s410, 1
      %p414 = scmp.eq.s32.totalorder %s35, 1
      %p415 = scmp.ne.s32.totalorder %s410, %s412
      %p416 = scmp.eq.s32.totalorder %s35, 0
      %p417 = por %p415, %p416
      %p418 = scmp.ne.s32.totalorder %s410, %s412
      %p419 = scmp.eq.s32.totalorder %s40, 1
      %p420 = por %p418, %p419
      %p421 = scmp.ne.s32.totalorder %s412, %s413
      %p422 = scmp.eq.s32.totalorder %s40, 0
      %p423 = por %p421, %p422
      %p424 = scmp.ne.s32.totalorder %s412, %s413
      %p425 = scmp.eq.s32.totalorder %s41, 1
      %p426 = por %p424, %p425
      %p428 = scmp.ne.s32.totalorder %s413, %s427
      %p429 = scmp.eq.s32.totalorder %s41, 0
      %p430 = por %p428, %p429
      %s432 = sadd.s32 %s431, 1
      %p435 = scmp.eq.s32.totalorder %s35, 1
      %p436 = scmp.ne.s32.totalorder %s431, %s433
      %p437 = scmp.eq.s32.totalorder %s35, 0
      %p438 = por %p436, %p437
      %p439 = scmp.ne.s32.totalorder %s431, %s433
      %p440 = scmp.eq.s32.totalorder %s40, 1
      %p441 = por %p439, %p440
      %p442 = scmp.ne.s32.totalorder %s433, %s434
      %p443 = scmp.eq.s32.totalorder %s40, 0
      %p444 = por %p442, %p443
      %p445 = scmp.ne.s32.totalorder %s433, %s434
      %p446 = scmp.eq.s32.totalorder %s41, 1
      %p447 = por %p445, %p446
      %p449 = scmp.ne.s32.totalorder %s434, %s448
      %p450 = scmp.eq.s32.totalorder %s41, 0
      %p451 = por %p449, %p450
      %s453 = sadd.s32 %s452, 1
      %p456 = scmp.eq.s32.totalorder %s35, 1
      %p457 = scmp.ne.s32.totalorder %s452, %s454
      %p458 = scmp.eq.s32.totalorder %s35, 0
      %p459 = por %p457, %p458
      %p460 = scmp.ne.s32.totalorder %s452, %s454
      %p461 = scmp.eq.s32.totalorder %s40, 1
      %p462 = por %p460, %p461
      %p463 = scmp.ne.s32.totalorder %s454, %s455
      %p464 = scmp.eq.s32.totalorder %s40, 0
      %p465 = por %p463, %p464
      %p466 = scmp.ne.s32.totalorder %s454, %s455
      %p467 = scmp.eq.s32.totalorder %s41, 1
      %p468 = por %p466, %p467
      %p470 = scmp.ne.s32.totalorder %s455, %s469
      %p471 = scmp.eq.s32.totalorder %s41, 0
      %p472 = por %p470, %p471
      %s474 = sadd.s32 %s473, 1
      %p477 = scmp.eq.s32.totalorder %s35, 1
      %p478 = scmp.ne.s32.totalorder %s473, %s475
      %p479 = scmp.eq.s32.totalorder %s35, 0
      %p480 = por %p478, %p479
      %p481 = scmp.ne.s32.totalorder %s473, %s475
      %p482 = scmp.eq.s32.totalorder %s40, 1
      %p483 = por %p481, %p482
      %p484 = scmp.ne.s32.totalorder %s475, %s476
      %p485 = scmp.eq.s32.totalorder %s40, 0
      %p486 = por %p484, %p485
      %p487 = scmp.ne.s32.totalorder %s475, %s476
      %p488 = scmp.eq.s32.totalorder %s41, 1
      %p489 = por %p487, %p488
      %p491 = scmp.ne.s32.totalorder %s476, %s490
      %p492 = scmp.eq.s32.totalorder %s41, 0
      %p493 = por %p491, %p492
      %s495 = sadd.s32 %s494, 1
      %p498 = scmp.eq.s32.totalorder %s35, 1
      %p499 = scmp.ne.s32.totalorder %s494, %s496
      %p500 = scmp.eq.s32.totalorder %s35, 0
      %p501 = por %p499, %p500
      %p502 = scmp.ne.s32.totalorder %s494, %s496
      %p503 = scmp.eq.s32.totalorder %s40, 1
      %p504 = por %p502, %p503
      %p505 = scmp.ne.s32.totalorder %s496, %s497
      %p506 = scmp.eq.s32.totalorder %s40, 0
      %p507 = por %p505, %p506
      %p508 = scmp.ne.s32.totalorder %s496, %s497
      %p509 = scmp.eq.s32.totalorder %s41, 1
      %p510 = por %p508, %p509
      %p512 = scmp.ne.s32.totalorder %s497, %s511
      %p513 = scmp.eq.s32.totalorder %s41, 0
      %p514 = por %p512, %p513
      %s515 = ssub.s32 %s35, %s42
      %p516 = scmp.eq.s32.totalorder %s515, 0
      %s518 = sadd.s32 %s517, 1
      %s519 = scalar_select %p516, %s517, %s518
      %p522 = pneg %p516
      %p523 = scmp.eq.s32.totalorder %s35, 1
      %p524 = por %p522, %p523
      %p525 = scmp.ne.s32.totalorder %s517, %s520
      %p526 = scmp.eq.s32.totalorder %s35, 0
      %p527 = por %p525, %p526
      %p528 = scmp.ne.s32.totalorder %s517, %s520
      %p529 = scmp.eq.s32.totalorder %s40, 1
      %p530 = por %p528, %p529
      %p531 = scmp.ne.s32.totalorder %s520, %s521
      %p532 = scmp.eq.s32.totalorder %s40, 0
      %p533 = por %p531, %p532
      %p534 = scmp.ne.s32.totalorder %s520, %s521
      %p535 = scmp.eq.s32.totalorder %s41, 1
      %p536 = por %p534, %p535
      %p538 = scmp.ne.s32.totalorder %s521, %s537
      %p539 = scmp.eq.s32.totalorder %s41, 0
      %p540 = por %p538, %p539
      %p541 = scmp.le.s32.totalorder 1, %s35
      %p542 = scmp.lt.s32.totalorder %s35, 3
      %p543 = pnand %p541, %p542
      %p544 = pneg %p543
      // Predicated region
      $region9: #{tiny_transformer_forward.10} parent=5 // pred_check
        _
      $region10: #{tiny_transformer_forward.10} parent=5 // pred_check_branch
        %546 = sbr.rel (%p543) target = $region12
      $region11: #{tiny_transformer_forward.10} parent=5 // pred_region
        %s547 = ssub.s32 %s35, 1
        // Predicated region
        $region13: #{tiny_transformer_forward.10} parent=11 // pred_check
          %p548 = pneg %p108
        $region14: #{tiny_transformer_forward.10} parent=11 // pred_check_branch
          %550 = sbr.rel (%p548) target = $region16
        $region15: #{tiny_transformer_forward.10} parent=11 // pred_region
          %552 = vsyncadd [#allocation3], 0
          %s553 = sshll.u32 %s2, 4
          %s554 = int_to_ptr.hbm [resolvable:$true] %s553
          %s555 = sshll.u32 [#allocation2], 4
          %s556 = int_to_ptr.vmem [resolvable:$true] %s555
          %561 = dma.hbm_to_vmem [thread:$0]  %s554, 6144, %s556, [#allocation3], 384, 384, 24
        $region16: #{tiny_transformer_forward.10} parent=11 // pred_fallthru
          _
        // Predicated region
        $region17: #{tiny_transformer_forward.10} parent=11 // pred_check
          %p562 = pneg %p129
        $region18: #{tiny_transformer_forward.10} parent=11 // pred_check_branch
          %564 = sbr.rel (%p562) target = $region20
        $region19: #{tiny_transformer_forward.10} parent=11 // pred_region
          _
        $region20: #{tiny_transformer_forward.10} parent=11 // pred_fallthru
          _
        // Predicated region
        $region21: #{tiny_transformer_forward.10} parent=11 // pred_check
          %p565 = pneg %p150
        $region22: #{tiny_transformer_forward.10} parent=11 // pred_check_branch
          %567 = sbr.rel (%p565) target = $region24
        $region23: #{tiny_transformer_forward.10} parent=11 // pred_region
          %569 = vsyncadd [#allocation5], 0
          %s570 = sshll.u32 %s4, 4
          %s571 = int_to_ptr.hbm [resolvable:$true] %s570
          %s572 = sshll.u32 [#allocation4], 4
          %s573 = int_to_ptr.vmem [resolvable:$true] %s572
          %578 = dma.hbm_to_vmem [thread:$0]  %s571, 2048, %s573, [#allocation5], 128, 128, 8
        $region24: #{tiny_transformer_forward.10} parent=11 // pred_fallthru
          _
        // Predicated region
        $region25: #{tiny_transformer_forward.10} parent=11 // pred_check
          %p579 = pneg %p171
        $region26: #{tiny_transformer_forward.10} parent=11 // pred_check_branch
          %581 = sbr.rel (%p579) target = $region28
        $region27: #{tiny_transformer_forward.10} parent=11 // pred_region
          _
        $region28: #{tiny_transformer_forward.10} parent=11 // pred_fallthru
          _
        // Predicated region
        $region29: #{tiny_transformer_forward.10} parent=11 // pred_check
          %p582 = pneg %p192
        $region30: #{tiny_transformer_forward.10} parent=11 // pred_check_branch
          %584 = sbr.rel (%p582) target = $region32
        $region31: #{tiny_transformer_forward.10} parent=11 // pred_region
          _
        $region32: #{tiny_transformer_forward.10} parent=11 // pred_fallthru
          _
        // Predicated region
        $region33: #{tiny_transformer_forward.10} parent=11 // pred_check
          %p585 = pneg %p213
        $region34: #{tiny_transformer_forward.10} parent=11 // pred_check_branch
          %587 = sbr.rel (%p585) target = $region36
        $region35: #{tiny_transformer_forward.10} parent=11 // pred_region
          _
        $region36: #{tiny_transformer_forward.10} parent=11 // pred_fallthru
          _
        // Predicated region
        $region37: #{tiny_transformer_forward.10} parent=11 // pred_check
          %p588 = pneg %p234
        $region38: #{tiny_transformer_forward.10} parent=11 // pred_check_branch
          %590 = sbr.rel (%p588) target = $region40
        $region39: #{tiny_transformer_forward.10} parent=11 // pred_region
          %592 = vsyncadd [#allocation5], 0
          %s593 = sshll.u32 %s8, 4
          %s594 = int_to_ptr.hbm [resolvable:$true] %s593
          %s595 = sshll.u32 [#allocation6], 4
          %s596 = int_to_ptr.vmem [resolvable:$true] %s595
          %601 = dma.hbm_to_vmem [thread:$0]  %s594, 2048, %s596, [#allocation5], 128, 128, 8
        $region40: #{tiny_transformer_forward.10} parent=11 // pred_fallthru
          _
        // Predicated region
        $region41: #{tiny_transformer_forward.10} parent=11 // pred_check
          %p602 = pneg %p255
        $region42: #{tiny_transformer_forward.10} parent=11 // pred_check_branch
          %604 = sbr.rel (%p602) target = $region44
        $region43: #{tiny_transformer_forward.10} parent=11 // pred_region
          _
        $region44: #{tiny_transformer_forward.10} parent=11 // pred_fallthru
          _
        // Predicated region
        $region45: #{tiny_transformer_forward.10} parent=11 // pred_check
          %p605 = pneg %p276
        $region46: #{tiny_transformer_forward.10} parent=11 // pred_check_branch
          %607 = sbr.rel (%p605) target = $region48
        $region47: #{tiny_transformer_forward.10} parent=11 // pred_region
          %609 = vsyncadd [#allocation8], 0
          %s610 = sshll.u32 %s10, 4
          %s611 = int_to_ptr.hbm [resolvable:$true] %s610
          %s612 = sshll.u32 [#allocation7], 4
          %s613 = int_to_ptr.vmem [resolvable:$true] %s612
          %618 = dma.hbm_to_vmem [thread:$0]  %s611, 4096, %s613, [#allocation8], 256, 256, 16
        $region48: #{tiny_transformer_forward.10} parent=11 // pred_fallthru
          _
        // Predicated region
        $region49: #{tiny_transformer_forward.10} parent=11 // pred_check
          %p619 = pneg %p297
        $region50: #{tiny_transformer_forward.10} parent=11 // pred_check_branch
          %621 = sbr.rel (%p619) target = $region52
        $region51: #{tiny_transformer_forward.10} parent=11 // pred_region
          _
        $region52: #{tiny_transformer_forward.10} parent=11 // pred_fallthru
          _
        // Predicated region
        $region53: #{tiny_transformer_forward.10} parent=11 // pred_check
          %p622 = pneg %p318
        $region54: #{tiny_transformer_forward.10} parent=11 // pred_check_branch
          %624 = sbr.rel (%p622) target = $region56
        $region55: #{tiny_transformer_forward.10} parent=11 // pred_region
          %626 = vsyncadd [#allocation8], 0
          %s627 = sshll.u32 %s12, 4
          %s628 = int_to_ptr.hbm [resolvable:$true] %s627
          %s629 = sshll.u32 [#allocation9], 4
          %s630 = int_to_ptr.vmem [resolvable:$true] %s629
          %635 = dma.hbm_to_vmem [thread:$0]  %s628, 2048, %s630, [#allocation8], 128, 128, 8
        $region56: #{tiny_transformer_forward.10} parent=11 // pred_fallthru
          _
        // Predicated region
        $region57: #{tiny_transformer_forward.10} parent=11 // pred_check
          %p636 = pneg %p339
        $region58: #{tiny_transformer_forward.10} parent=11 // pred_check_branch
          %638 = sbr.rel (%p636) target = $region60
        $region59: #{tiny_transformer_forward.10} parent=11 // pred_region
          %640 = vsyncadd [#allocation11], 0
          %s642 = sshll.u32 %s13, 4
          %s643 = int_to_ptr.hbm [resolvable:$true] %s642
          %s644 = sshll.u32 [#allocation10], 4
          %s645 = int_to_ptr.vmem [resolvable:$true] %s644
          %647 = dma.hbm_to_vmem [thread:$0]  %s643, 16, %s645, [#allocation11]
        $region60: #{tiny_transformer_forward.10} parent=11 // pred_fallthru
          _
        // Predicated region
        $region61: #{tiny_transformer_forward.10} parent=11 // pred_check
          %p648 = pneg %p360
        $region62: #{tiny_transformer_forward.10} parent=11 // pred_check_branch
          %650 = sbr.rel (%p648) target = $region64
        $region63: #{tiny_transformer_forward.10} parent=11 // pred_region
          %652 = vsyncadd [#allocation11], 0
          %s654 = sshll.u32 %s14, 4
          %s655 = int_to_ptr.hbm [resolvable:$true] %s654
          %s656 = sshll.u32 [#allocation12], 4
          %s657 = int_to_ptr.vmem [resolvable:$true] %s656
          %659 = dma.hbm_to_vmem [thread:$0]  %s655, 16, %s657, [#allocation11]
        $region64: #{tiny_transformer_forward.10} parent=11 // pred_fallthru
          _
        // Predicated region
        $region65: #{tiny_transformer_forward.10} parent=11 // pred_check
          %p660 = pneg %p381
        $region66: #{tiny_transformer_forward.10} parent=11 // pred_check_branch
          %662 = sbr.rel (%p660) target = $region68
        $region67: #{tiny_transformer_forward.10} parent=11 // pred_region
          %664 = vsyncadd [#allocation14], 0
          %s666 = sshll.u32 %s15, 4
          %s667 = int_to_ptr.hbm [resolvable:$true] %s666
          %s668 = sshll.u32 [#allocation13], 4
          %s669 = int_to_ptr.vmem [resolvable:$true] %s668
          %671 = dma.hbm_to_vmem [thread:$0]  %s667, 16, %s669, [#allocation14]
        $region68: #{tiny_transformer_forward.10} parent=11 // pred_fallthru
          _
        // Predicated region
        $region69: #{tiny_transformer_forward.10} parent=11 // pred_check
          %p672 = pneg %p402
        $region70: #{tiny_transformer_forward.10} parent=11 // pred_check_branch
          %674 = sbr.rel (%p672) target = $region72
        $region71: #{tiny_transformer_forward.10} parent=11 // pred_region
          %676 = vsyncadd [#allocation14], 0
          %s677 = sshll.u32 %s16, 4
          %s678 = int_to_ptr.hbm [resolvable:$true] %s677
          %s679 = sshll.u32 [#allocation15], 4
          %s680 = int_to_ptr.vmem [resolvable:$true] %s679
          %685 = dma.hbm_to_vmem [thread:$0]  %s678, 8192, %s680, [#allocation14], 512, 512, 32
        $region72: #{tiny_transformer_forward.10} parent=11 // pred_fallthru
          _
        // Predicated region
        $region73: #{tiny_transformer_forward.10} parent=11 // pred_check
          %p686 = pneg %p423
        $region74: #{tiny_transformer_forward.10} parent=11 // pred_check_branch
          %688 = sbr.rel (%p686) target = $region76
        $region75: #{tiny_transformer_forward.10} parent=11 // pred_region
          _
        $region76: #{tiny_transformer_forward.10} parent=11 // pred_fallthru
          _
        // Predicated region
        $region77: #{tiny_transformer_forward.10} parent=11 // pred_check
          %p689 = pneg %p444
        $region78: #{tiny_transformer_forward.10} parent=11 // pred_check_branch
          %691 = sbr.rel (%p689) target = $region80
        $region79: #{tiny_transformer_forward.10} parent=11 // pred_region
          %693 = vsyncadd [#allocation17], 0
          %s694 = sshll.u32 %s18, 4
          %s695 = int_to_ptr.hbm [resolvable:$true] %s694
          %s696 = sshll.u32 [#allocation16], 4
          %s697 = int_to_ptr.vmem [resolvable:$true] %s696
          %702 = dma.hbm_to_vmem [thread:$0]  %s695, 8192, %s697, [#allocation17], 128, 128, 8
        $region80: #{tiny_transformer_forward.10} parent=11 // pred_fallthru
          _
        // Predicated region
        $region81: #{tiny_transformer_forward.10} parent=11 // pred_check
          %p703 = pneg %p465
        $region82: #{tiny_transformer_forward.10} parent=11 // pred_check_branch
          %705 = sbr.rel (%p703) target = $region84
        $region83: #{tiny_transformer_forward.10} parent=11 // pred_region
          %707 = vsyncadd [#allocation17], 0
          %s709 = sshll.u32 %s19, 4
          %s710 = int_to_ptr.hbm [resolvable:$true] %s709
          %s711 = sshll.u32 [#allocation18], 4
          %s712 = int_to_ptr.vmem [resolvable:$true] %s711
          %714 = dma.hbm_to_vmem [thread:$0]  %s710, 16, %s712, [#allocation17]
        $region84: #{tiny_transformer_forward.10} parent=11 // pred_fallthru
          _
        // Predicated region
        $region85: #{tiny_transformer_forward.10} parent=11 // pred_check
          %p715 = pneg %p486
        $region86: #{tiny_transformer_forward.10} parent=11 // pred_check_branch
          %717 = sbr.rel (%p715) target = $region88
        $region87: #{tiny_transformer_forward.10} parent=11 // pred_region
          %719 = vsyncadd [#allocation20], 0
          %s721 = sshll.u32 %s20, 4
          %s722 = int_to_ptr.hbm [resolvable:$true] %s721
          %s723 = sshll.u32 [#allocation19], 4
          %s724 = int_to_ptr.vmem [resolvable:$true] %s723
          %726 = dma.hbm_to_vmem [thread:$0]  %s722, 16, %s724, [#allocation20]
        $region88: #{tiny_transformer_forward.10} parent=11 // pred_fallthru
          _
        // Predicated region
        $region89: #{tiny_transformer_forward.10} parent=11 // pred_check
          %p727 = pneg %p507
        $region90: #{tiny_transformer_forward.10} parent=11 // pred_check_branch
          %729 = sbr.rel (%p727) target = $region92
        $region91: #{tiny_transformer_forward.10} parent=11 // pred_region
          %731 = vsyncadd [#allocation20], 0
          %s733 = sshll.u32 %s21, 4
          %s734 = int_to_ptr.hbm [resolvable:$true] %s733
          %s735 = sshll.u32 [#allocation21], 4
          %s736 = int_to_ptr.vmem [resolvable:$true] %s735
          %738 = dma.hbm_to_vmem [thread:$0]  %s734, 16, %s736, [#allocation20]
        $region92: #{tiny_transformer_forward.10} parent=11 // pred_fallthru
          _
      $region12: #{tiny_transformer_forward.10} parent=5 // pred_fallthru
        _
      %p739 = scmp.lt.s32.totalorder %s35, 2
      // Predicated region
      $region93: #{tiny_transformer_forward.10} parent=5 // pred_check
        %p740 = pneg %p739
      $region94: #{tiny_transformer_forward.10} parent=5 // pred_check_branch
        %742 = sbr.rel (%p740) target = $region96
      $region95: #{tiny_transformer_forward.10} parent=5 // pred_region
        // Predicated region
        $region97: #{tiny_transformer_forward.10} parent=95 // pred_check
          %p743 = pneg %p55
        $region98: #{tiny_transformer_forward.10} parent=95 // pred_check_branch
          %745 = sbr.rel (%p743) target = $region100
        $region99: #{tiny_transformer_forward.10} parent=95 // pred_region
          %p746 = scmp.lt.s32.totalorder %s35, 1
          %s747 = scalar_select %p746, %s35, 1
          %s748 = smul.addr %s747, 8
          %s749 = scalar_lea.vmem %s0, %s748
        $region100: #{tiny_transformer_forward.10} parent=95 // pred_fallthru
          _
        // Predicated region
        $region101: #{tiny_transformer_forward.10} parent=95 // pred_check
          %p750 = pneg %p81
        $region102: #{tiny_transformer_forward.10} parent=95 // pred_check_branch
          %752 = sbr.rel (%p750) target = $region104
        $region103: #{tiny_transformer_forward.10} parent=95 // pred_region
          %p753 = scmp.lt.s32.totalorder %s35, 1
          %s754 = scalar_select %p753, %s35, 1
          %s755 = smul.addr %s754, 8
          %s756 = scalar_lea.vmem %s1, %s755
        $region104: #{tiny_transformer_forward.10} parent=95 // pred_fallthru
          _
      $region96: #{tiny_transformer_forward.10} parent=5 // pred_fallthru
        _
      %p757 = scmp.le.s32.totalorder 1, %s35
      %p758 = scmp.lt.s32.totalorder %s35, 3
      %p759 = pnand %p757, %p758
      %p760 = pneg %p759
      // Predicated region
      $region105: #{tiny_transformer_forward.10} parent=5 // pred_check
        _
      $region106: #{tiny_transformer_forward.10} parent=5 // pred_check_branch
        %762 = sbr.rel (%p759) target = $region108
      $region107: #{tiny_transformer_forward.10} parent=5 // pred_region
        %s763 = ssub.s32 %s35, 1
        // Predicated region
        $region109: #{tiny_transformer_forward.10} parent=107 // pred_check
          %p764 = pneg %p108
        $region110: #{tiny_transformer_forward.10} parent=107 // pred_check_branch
          %766 = sbr.rel (%p764) target = $region112
        $region111: #{tiny_transformer_forward.10} parent=107 // pred_region
          %768 = dma.done [#allocation3], 6144
        $region112: #{tiny_transformer_forward.10} parent=107 // pred_fallthru
          _
        // Predicated region
        $region113: #{tiny_transformer_forward.10} parent=107 // pred_check
          %p769 = pneg %p150
        $region114: #{tiny_transformer_forward.10} parent=107 // pred_check_branch
          %771 = sbr.rel (%p769) target = $region116
        $region115: #{tiny_transformer_forward.10} parent=107 // pred_region
          %773 = dma.done [#allocation5], 2048
        $region116: #{tiny_transformer_forward.10} parent=107 // pred_fallthru
          _
        // Predicated region
        $region117: #{tiny_transformer_forward.10} parent=107 // pred_check
          %p774 = pneg %p234
        $region118: #{tiny_transformer_forward.10} parent=107 // pred_check_branch
          %776 = sbr.rel (%p774) target = $region120
        $region119: #{tiny_transformer_forward.10} parent=107 // pred_region
          %778 = dma.done [#allocation5], 2048
        $region120: #{tiny_transformer_forward.10} parent=107 // pred_fallthru
          _
        // Predicated region
        $region121: #{tiny_transformer_forward.10} parent=107 // pred_check
          %p779 = pneg %p276
        $region122: #{tiny_transformer_forward.10} parent=107 // pred_check_branch
          %781 = sbr.rel (%p779) target = $region124
        $region123: #{tiny_transformer_forward.10} parent=107 // pred_region
          %783 = dma.done [#allocation8], 4096
        $region124: #{tiny_transformer_forward.10} parent=107 // pred_fallthru
          _
        // Predicated region
        $region125: #{tiny_transformer_forward.10} parent=107 // pred_check
          %p784 = pneg %p318
        $region126: #{tiny_transformer_forward.10} parent=107 // pred_check_branch
          %786 = sbr.rel (%p784) target = $region128
        $region127: #{tiny_transformer_forward.10} parent=107 // pred_region
          %788 = dma.done [#allocation8], 2048
        $region128: #{tiny_transformer_forward.10} parent=107 // pred_fallthru
          _
        // Predicated region
        $region129: #{tiny_transformer_forward.10} parent=107 // pred_check
          %p789 = pneg %p339
        $region130: #{tiny_transformer_forward.10} parent=107 // pred_check_branch
          %791 = sbr.rel (%p789) target = $region132
        $region131: #{tiny_transformer_forward.10} parent=107 // pred_region
          %793 = dma.done [#allocation11], 16
        $region132: #{tiny_transformer_forward.10} parent=107 // pred_fallthru
          _
        // Predicated region
        $region133: #{tiny_transformer_forward.10} parent=107 // pred_check
          %p794 = pneg %p360
        $region134: #{tiny_transformer_forward.10} parent=107 // pred_check_branch
          %796 = sbr.rel (%p794) target = $region136
        $region135: #{tiny_transformer_forward.10} parent=107 // pred_region
          %798 = dma.done [#allocation11], 16
        $region136: #{tiny_transformer_forward.10} parent=107 // pred_fallthru
          _
        // Predicated region
        $region137: #{tiny_transformer_forward.10} parent=107 // pred_check
          %p799 = pneg %p381
        $region138: #{tiny_transformer_forward.10} parent=107 // pred_check_branch
          %801 = sbr.rel (%p799) target = $region140
        $region139: #{tiny_transformer_forward.10} parent=107 // pred_region
          %803 = dma.done [#allocation14], 16
        $region140: #{tiny_transformer_forward.10} parent=107 // pred_fallthru
          _
        // Predicated region
        $region141: #{tiny_transformer_forward.10} parent=107 // pred_check
          %p804 = pneg %p402
        $region142: #{tiny_transformer_forward.10} parent=107 // pred_check_branch
          %806 = sbr.rel (%p804) target = $region144
        $region143: #{tiny_transformer_forward.10} parent=107 // pred_region
          %808 = dma.done [#allocation14], 8192
        $region144: #{tiny_transformer_forward.10} parent=107 // pred_fallthru
          _
        // Predicated region
        $region145: #{tiny_transformer_forward.10} parent=107 // pred_check
          %p809 = pneg %p444
        $region146: #{tiny_transformer_forward.10} parent=107 // pred_check_branch
          %811 = sbr.rel (%p809) target = $region148
        $region147: #{tiny_transformer_forward.10} parent=107 // pred_region
          %813 = dma.done [#allocation17], 8192
        $region148: #{tiny_transformer_forward.10} parent=107 // pred_fallthru
          _
        // Predicated region
        $region149: #{tiny_transformer_forward.10} parent=107 // pred_check
          %p814 = pneg %p465
        $region150: #{tiny_transformer_forward.10} parent=107 // pred_check_branch
          %816 = sbr.rel (%p814) target = $region152
        $region151: #{tiny_transformer_forward.10} parent=107 // pred_region
          %818 = dma.done [#allocation17], 16
        $region152: #{tiny_transformer_forward.10} parent=107 // pred_fallthru
          _
        // Predicated region
        $region153: #{tiny_transformer_forward.10} parent=107 // pred_check
          %p819 = pneg %p486
        $region154: #{tiny_transformer_forward.10} parent=107 // pred_check_branch
          %821 = sbr.rel (%p819) target = $region156
        $region155: #{tiny_transformer_forward.10} parent=107 // pred_region
          %823 = dma.done [#allocation20], 16
        $region156: #{tiny_transformer_forward.10} parent=107 // pred_fallthru
          _
        // Predicated region
        $region157: #{tiny_transformer_forward.10} parent=107 // pred_check
          %p824 = pneg %p507
        $region158: #{tiny_transformer_forward.10} parent=107 // pred_check_branch
          %826 = sbr.rel (%p824) target = $region160
        $region159: #{tiny_transformer_forward.10} parent=107 // pred_region
          %828 = dma.done [#allocation20], 16
        $region160: #{tiny_transformer_forward.10} parent=107 // pred_fallthru
          _
        %p829 = scmp.lt.s32.totalorder %s40, 1
        %s830 = scalar_select %p829, %s40, 1
        %s831 = smul.addr %s830, 8
        %s832 = scalar_lea.vmem %s0, %s831
        %p833 = pneg %p61
        %p834 = pneg %p58
        %p835 = scmp.lt.s32.totalorder %s40, 1
        %s836 = scalar_select %p835, %s40, 1
        %s837 = smul.addr %s836, 8
        %s838 = scalar_lea.vmem %s1, %s837
        %p839 = pneg %p87
        %p840 = pneg %p84
        %p841 = pneg %p108
        %p842 = pneg %p105
        %p843 = pneg %p129
        %p844 = pneg %p126
        %p845 = pneg %p150
        %p846 = pneg %p147
        %p847 = pneg %p171
        %p848 = pneg %p168
        %p849 = pneg %p192
        %p850 = pneg %p189
        %p851 = pneg %p213
        %p852 = pneg %p210
        %p853 = pneg %p234
        %p854 = pneg %p231
        %p855 = pneg %p255
        %p856 = pneg %p252
        %p857 = pneg %p276
        %p858 = pneg %p273
        %p859 = pneg %p297
        %p860 = pneg %p294
        %p861 = pneg %p318
        %p862 = pneg %p315
        %p863 = pneg %p339
        %p864 = pneg %p336
        %p865 = pneg %p360
        %p866 = pneg %p357
        %p867 = pneg %p381
        %p868 = pneg %p378
        %p869 = pneg %p402
        %p870 = pneg %p399
        %p871 = pneg %p423
        %p872 = pneg %p420
        %p873 = pneg %p444
        %p874 = pneg %p441
        %p875 = pneg %p465
        %p876 = pneg %p462
        %p877 = pneg %p486
        %p878 = pneg %p483
        %p879 = pneg %p507
        %p880 = pneg %p504
        %p881 = pneg %p533
        %p882 = pneg %p530
        %p883 = scmp.lt.s32.totalorder %s40, 1
        %s884 = scalar_select %p883, %s40, 1
        %s885 = smul.addr %s884, 8
        %s886 = scalar_lea.vmem %s22, %s885
        %p887 = scmp.lt.s32.totalorder %s40, 1
        %s888 = scalar_select %p887, %s40, 1
        %s889 = smul.addr %s888, 8
        %s890 = scalar_lea.vmem %s0, %s889
        %p891 = scmp.lt.s32.totalorder %s40, 1
        %s892 = scalar_select %p891, %s40, 1
        %s893 = smul.addr %s892, 8
        %s894 = scalar_lea.vmem %s1, %s893
        %p895 = scmp.lt.s32.totalorder %s40, 1
        %s896 = scalar_select %p895, %s40, 1
        %s897 = smul.addr %s896, 8
        %s898 = scalar_lea.vmem %s22, %s897
        %v899 = vld [vmem:[%s890] sm:$0xff]
        %v900 = vld [vmem:[%s894] sm:$0xff]
        %v901 = vld [vmem:[#allocation2] sm:$0xff]
        %v902 = vld [vmem:[#allocation2 + $0x8] sm:$0xff]
        %v903 = vld [vmem:[#allocation2 + $0x10] sm:$0xff]
        %v904 = vld [vmem:[#allocation2 + $0x18] sm:$0xff]
        %v905 = vld [vmem:[#allocation2 + $0x20] sm:$0xff]
        %v906 = vld [vmem:[#allocation2 + $0x28] sm:$0xff]
        %v907 = vld [vmem:[#allocation2 + $0x30] sm:$0xff]
        %v908 = vld [vmem:[#allocation2 + $0x38] sm:$0xff]
        %v909 = vld [vmem:[#allocation2 + $0x40] sm:$0xff]
        %v910 = vld [vmem:[#allocation2 + $0x48] sm:$0xff]
        %v911 = vld [vmem:[#allocation2 + $0x50] sm:$0xff]
        %v912 = vld [vmem:[#allocation2 + $0x58] sm:$0xff]
        %v913 = vld [vmem:[#allocation2 + $0x60] sm:$0xff]
        %v914 = vld [vmem:[#allocation2 + $0x68] sm:$0xff]
        %v915 = vld [vmem:[#allocation2 + $0x70] sm:$0xff]
        %v916 = vld [vmem:[#allocation2 + $0x78] sm:$0xff]
        %v917 = vld [vmem:[#allocation2 + $0x80] sm:$0xff]
        %v918 = vld [vmem:[#allocation2 + $0x88] sm:$0xff]
        %v919 = vld [vmem:[#allocation2 + $0x90] sm:$0xff]
        %v920 = vld [vmem:[#allocation2 + $0x98] sm:$0xff]
        %v921 = vld [vmem:[#allocation2 + $0xa0] sm:$0xff]
        %v922 = vld [vmem:[#allocation2 + $0xa8] sm:$0xff]
        %v923 = vld [vmem:[#allocation2 + $0xb0] sm:$0xff]
        %v924 = vld [vmem:[#allocation2 + $0xb8] sm:$0xff]
        %v925 = vld [vmem:[#allocation2 + $0xc0] sm:$0xff]
        %v926 = vld [vmem:[#allocation2 + $0xc8] sm:$0xff]
        %v927 = vld [vmem:[#allocation2 + $0xd0] sm:$0xff]
        %v928 = vld [vmem:[#allocation2 + $0xd8] sm:$0xff]
        %v929 = vld [vmem:[#allocation2 + $0xe0] sm:$0xff]
        %v930 = vld [vmem:[#allocation2 + $0xe8] sm:$0xff]
        %v931 = vld [vmem:[#allocation2 + $0xf0] sm:$0xff]
        %v932 = vld [vmem:[#allocation2 + $0xf8] sm:$0xff]
        %v933 = vld [vmem:[#allocation2 + $0x100] sm:$0xff]
        %v934 = vld [vmem:[#allocation2 + $0x108] sm:$0xff]
        %v935 = vld [vmem:[#allocation2 + $0x110] sm:$0xff]
        %v936 = vld [vmem:[#allocation2 + $0x118] sm:$0xff]
        %v937 = vld [vmem:[#allocation2 + $0x120] sm:$0xff]
        %v938 = vld [vmem:[#allocation2 + $0x128] sm:$0xff]
        %v939 = vld [vmem:[#allocation2 + $0x130] sm:$0xff]
        %v940 = vld [vmem:[#allocation2 + $0x138] sm:$0xff]
        %v941 = vld [vmem:[#allocation2 + $0x140] sm:$0xff]
        %v942 = vld [vmem:[#allocation2 + $0x148] sm:$0xff]
        %v943 = vld [vmem:[#allocation2 + $0x150] sm:$0xff]
        %v944 = vld [vmem:[#allocation2 + $0x158] sm:$0xff]
        %v945 = vld [vmem:[#allocation2 + $0x160] sm:$0xff]
        %v946 = vld [vmem:[#allocation2 + $0x168] sm:$0xff]
        %v947 = vld [vmem:[#allocation2 + $0x170] sm:$0xff]
        %v948 = vld [vmem:[#allocation2 + $0x178] sm:$0xff]
        %v949 = vld [vmem:[%s3] sm:$0x7]
        %v951 = vperm.slane %v949, 0
        %v952 = vperm.slane %v949, 1
        %v953 = vperm.slane %v949, 2
        %957 = vmatpush.msra.mxu0 %v946
        %958 = vmatpush.msra.mxu0 %v943
        %959 = vmatpush.msra.mxu0 %v940
        %960 = vmatpush.msra.mxu0 %v937
        %961 = vmatpush.msra.mxu0 %v934
        %962 = vmatpush.msra.mxu0 %v931
        %963 = vmatpush.msra.mxu0 %v928
        %964 = vmatpush.msra.mxu0 %v925
        %965 = vmatpush.msra.mxu0 %v922
        %966 = vmatpush.msra.mxu0 %v919
        %967 = vmatpush.msra.mxu0 %v916
        %968 = vmatpush.msra.mxu0 %v913
        %969 = vmatpush.msra.mxu0 %v910
        %970 = vmatpush.msra.mxu0 %v907
        %971 = vmatpush.msra.mxu0 %v904
        %972 = vmatpush.msra.mxu0 %v901
        %973 = vmatmul.f32.gmra.mxu0 %v899
        %v974 = vpop.f32.mrf.mxu0
        %v975 = vadd.f32 %v951, %v974
        %976 = vdwg.mxu0
        %977 = vmatpush.msra.mxu0 %v947
        %978 = vmatpush.msra.mxu0 %v944
        %979 = vmatpush.msra.mxu0 %v941
        %980 = vmatpush.msra.mxu0 %v938
        %981 = vmatpush.msra.mxu0 %v935
        %982 = vmatpush.msra.mxu0 %v932
        %983 = vmatpush.msra.mxu0 %v929
        %984 = vmatpush.msra.mxu0 %v926
        %985 = vmatpush.msra.mxu0 %v923
        %986 = vmatpush.msra.mxu0 %v920
        %987 = vmatpush.msra.mxu0 %v917
        %988 = vmatpush.msra.mxu0 %v914
        %989 = vmatpush.msra.mxu0 %v911
        %990 = vmatpush.msra.mxu0 %v908
        %991 = vmatpush.msra.mxu0 %v905
        %992 = vmatpush.msra.mxu0 %v902
        %993 = vmatmul.f32.gmra.mxu0 %v899
        %v994 = vpop.f32.mrf.mxu0
        %v995 = vadd.f32 %v952, %v994
        %996 = vdwg.mxu0
        %997 = vmatpush.msra.mxu0 %v948
        %998 = vmatpush.msra.mxu0 %v945
        %999 = vmatpush.msra.mxu0 %v942
        %1000 = vmatpush.msra.mxu0 %v939
        %1001 = vmatpush.msra.mxu0 %v936
        %1002 = vmatpush.msra.mxu0 %v933
        %1003 = vmatpush.msra.mxu0 %v930
        %1004 = vmatpush.msra.mxu0 %v927
        %1005 = vmatpush.msra.mxu0 %v924
        %1006 = vmatpush.msra.mxu0 %v921
        %1007 = vmatpush.msra.mxu0 %v918
        %1008 = vmatpush.msra.mxu0 %v915
        %1009 = vmatpush.msra.mxu0 %v912
        %1010 = vmatpush.msra.mxu0 %v909
        %1011 = vmatpush.msra.mxu0 %v906
        %1012 = vmatpush.msra.mxu0 %v903
        %1013 = vmatmul.f32.gmra.mxu0 %v899
        %v1014 = vpop.f32.mrf.mxu0
        %v1015 = vadd.f32 %v953, %v1014
        %1016 = vdwg.mxu0
        %v1017 = vlaneseq
        %v1018 = vshrl.u32 %v1017, 7
        %v1019 = vlaneseq
        %v1020 = vand.u32 %v1019, 127
        %vm1021 = vcmp.gt.s32.totalorder %v1020, %v1018
        %v1022 = vsel %vm1021, -1e+09, 0.0
        %vm1023 = vcmask 261120
        %v1025 = vsel %vm1023, %v975, 0
        %v1028 = vsel %vm1023, %v995, 0
        %1030 = vmatpush.xpose.msra.mxu0 0.0
        %1031 = vmatpush.xpose.msra.mxu0 0.0
        %1032 = vmatpush.xpose.msra.mxu0 0.0
        %1033 = vmatpush.xpose.msra.mxu0 0.0
        %1034 = vmatpush.xpose.msra.mxu0 0.0
        %1035 = vmatpush.xpose.msra.mxu0 0.0
        %1036 = vmatpush.xpose.msra.mxu0 0.0
        %1037 = vmatpush.xpose.msra.mxu0 0.0
        %1038 = vmatpush.xpose.msra.mxu0 0.0
        %1039 = vmatpush.xpose.msra.mxu0 0.0
        %1040 = vmatpush.xpose.msra.mxu0 0.0
        %1041 = vmatpush.xpose.msra.mxu0 0.0
        %1042 = vmatpush.xpose.msra.mxu0 0.0
        %1043 = vmatpush.xpose.msra.mxu0 0.0
        %1044 = vmatpush.xpose.msra.mxu0 0.0
        %1045 = vmatpush.xpose.msra.mxu0 %v1028
        %1046 = vmatmul.f32.gmra.mxu0 %v1025
        %v1047 = vpop.f32.mrf.mxu0
        %v1048 = vadd.f32 %v1022, %v1047
        %1049 = vdwg.mxu0
        %vm1050 = vcmask 64512
        %v1051 = vsel %vm1050, %v1048, -inf
        %1052 = vmax.xlane.f32.xlu0 %v1051
        %v1053 = vpop.xlane.xlu0 %1052
        %v1054 = vsub.f32 %v1048, %v1053
        %v1055 = vmul.f32 %v1054, 1.442695
        %v1056 = vpow.pop %v1055
        %v1057 = vsel %vm1050, %v1056, 0.0
        %1058 = vadd.xlane.f32.xlu0 %v1057
        %v1059 = vpop.xlane.xlu0 %1058
        %v1060 = vrcp.pop %v1059
        %v1061 = vmul.f32 %v1056, %v1060
        %v1063 = vsel %vm1050, %v1061, 0
        %1065 = vmatpush.msra.mxu0 0.0
        %1066 = vmatpush.msra.mxu0 0.0
        %1067 = vmatpush.msra.mxu0 0.0
        %1068 = vmatpush.msra.mxu0 0.0
        %1069 = vmatpush.msra.mxu0 0.0
        %1070 = vmatpush.msra.mxu0 0.0
        %1071 = vmatpush.msra.mxu0 0.0
        %1072 = vmatpush.msra.mxu0 0.0
        %1073 = vmatpush.msra.mxu0 0.0
        %1074 = vmatpush.msra.mxu0 0.0
        %1075 = vmatpush.msra.mxu0 0.0
        %1076 = vmatpush.msra.mxu0 0.0
        %1077 = vmatpush.msra.mxu0 0.0
        %1078 = vmatpush.msra.mxu0 0.0
        %1079 = vmatpush.msra.mxu0 0.0
        %1080 = vmatpush.msra.mxu0 %v1015
        %1081 = vmatmul.f32.gmra.mxu0 %v1063
        %v1082 = vpop.f32.mrf.mxu0
        %v1083 = vadd.f32 0.0, %v1082
        %1084 = vdwg.mxu0
        %1085 = vrot.lane.b32.xlu0 %v975, 96
        %v1086 = vpop.permute.xlu0 %1085
        %1087 = vrot.lane.b32.xlu0 %v995, 96
        %v1088 = vpop.permute.xlu0 %1087
        %v1089 = vsel %vm1023, %v1086, 0
        %v1091 = vsel %vm1023, %v1088, 0
        %1093 = vmatpush.xpose.msra.mxu0 0.0
        %1094 = vmatpush.xpose.msra.mxu0 0.0
        %1095 = vmatpush.xpose.msra.mxu0 0.0
        %1096 = vmatpush.xpose.msra.mxu0 0.0
        %1097 = vmatpush.xpose.msra.mxu0 0.0
        %1098 = vmatpush.xpose.msra.mxu0 0.0
        %1099 = vmatpush.xpose.msra.mxu0 0.0
        %1100 = vmatpush.xpose.msra.mxu0 0.0
        %1101 = vmatpush.xpose.msra.mxu0 0.0
        %1102 = vmatpush.xpose.msra.mxu0 0.0
        %1103 = vmatpush.xpose.msra.mxu0 0.0
        %1104 = vmatpush.xpose.msra.mxu0 0.0
        %1105 = vmatpush.xpose.msra.mxu0 0.0
        %1106 = vmatpush.xpose.msra.mxu0 0.0
        %1107 = vmatpush.xpose.msra.mxu0 0.0
        %1108 = vmatpush.xpose.msra.mxu0 %v1091
        %1109 = vmatmul.f32.gmra.mxu0 %v1089
        %v1110 = vpop.f32.mrf.mxu0
        %v1111 = vadd.f32 %v1022, %v1110
        %1112 = vdwg.mxu0
        %v1113 = vsel %vm1050, %v1111, -inf
        %1114 = vmax.xlane.f32.xlu0 %v1113
        %v1115 = vpop.xlane.xlu0 %1114
        %v1116 = vsub.f32 %v1111, %v1115
        %v1117 = vmul.f32 %v1116, 1.442695
        %v1118 = vpow.pop %v1117
        %v1119 = vsel %vm1050, %v1118, 0.0
        %1120 = vadd.xlane.f32.xlu0 %v1119
        %v1121 = vpop.xlane.xlu0 %1120
        %v1122 = vrcp.pop %v1121
        %v1123 = vmul.f32 %v1118, %v1122
        %1125 = vrot.lane.b32.xlu0 %v1015, 96
        %v1126 = vpop.permute.xlu0 %1125
        %v1129 = vsel %vm1050, %v1123, 0
        %1131 = vmatpush.msra.mxu0 0.0
        %1132 = vmatpush.msra.mxu0 0.0
        %1133 = vmatpush.msra.mxu0 0.0
        %1134 = vmatpush.msra.mxu0 0.0
        %1135 = vmatpush.msra.mxu0 0.0
        %1136 = vmatpush.msra.mxu0 0.0
        %1137 = vmatpush.msra.mxu0 0.0
        %1138 = vmatpush.msra.mxu0 0.0
        %1139 = vmatpush.msra.mxu0 0.0
        %1140 = vmatpush.msra.mxu0 0.0
        %1141 = vmatpush.msra.mxu0 0.0
        %1142 = vmatpush.msra.mxu0 0.0
        %1143 = vmatpush.msra.mxu0 0.0
        %1144 = vmatpush.msra.mxu0 0.0
        %1145 = vmatpush.msra.mxu0 0.0
        %1146 = vmatpush.msra.mxu0 %v1126
        %1147 = vmatmul.f32.gmra.mxu0 %v1129
        %v1148 = vpop.f32.mrf.mxu0
        %v1149 = vadd.f32 0.0, %v1148
        %1150 = vdwg.mxu0
        %1151 = vrot.lane.b32.xlu0 %v975, 64
        %v1152 = vpop.permute.xlu0 %1151
        %1153 = vrot.lane.b32.xlu0 %v995, 64
        %v1154 = vpop.permute.xlu0 %1153
        %v1155 = vsel %vm1023, %v1152, 0
        %v1157 = vsel %vm1023, %v1154, 0
        %1159 = vmatpush.xpose.msra.mxu0 0.0
        %1160 = vmatpush.xpose.msra.mxu0 0.0
        %1161 = vmatpush.xpose.msra.mxu0 0.0
        %1162 = vmatpush.xpose.msra.mxu0 0.0
        %1163 = vmatpush.xpose.msra.mxu0 0.0
        %1164 = vmatpush.xpose.msra.mxu0 0.0
        %1165 = vmatpush.xpose.msra.mxu0 0.0
        %1166 = vmatpush.xpose.msra.mxu0 0.0
        %1167 = vmatpush.xpose.msra.mxu0 0.0
        %1168 = vmatpush.xpose.msra.mxu0 0.0
        %1169 = vmatpush.xpose.msra.mxu0 0.0
        %1170 = vmatpush.xpose.msra.mxu0 0.0
        %1171 = vmatpush.xpose.msra.mxu0 0.0
        %1172 = vmatpush.xpose.msra.mxu0 0.0
        %1173 = vmatpush.xpose.msra.mxu0 0.0
        %1174 = vmatpush.xpose.msra.mxu0 %v1157
        %1175 = vmatmul.f32.gmra.mxu0 %v1155
        %v1176 = vpop.f32.mrf.mxu0
        %v1177 = vadd.f32 %v1022, %v1176
        %1178 = vdwg.mxu0
        %v1179 = vsel %vm1050, %v1177, -inf
        %1180 = vmax.xlane.f32.xlu0 %v1179
        %v1181 = vpop.xlane.xlu0 %1180
        %v1182 = vsub.f32 %v1177, %v1181
        %v1183 = vmul.f32 %v1182, 1.442695
        %v1184 = vpow.pop %v1183
        %v1185 = vsel %vm1050, %v1184, 0.0
        %1186 = vadd.xlane.f32.xlu0 %v1185
        %v1187 = vpop.xlane.xlu0 %1186
        %v1188 = vrcp.pop %v1187
        %v1189 = vmul.f32 %v1184, %v1188
        %1190 = vrot.lane.b32.xlu0 %v1015, 64
        %v1191 = vpop.permute.xlu0 %1190
        %v1194 = vsel %vm1050, %v1189, 0
        %1196 = vmatpush.msra.mxu0 0.0
        %1197 = vmatpush.msra.mxu0 0.0
        %1198 = vmatpush.msra.mxu0 0.0
        %1199 = vmatpush.msra.mxu0 0.0
        %1200 = vmatpush.msra.mxu0 0.0
        %1201 = vmatpush.msra.mxu0 0.0
        %1202 = vmatpush.msra.mxu0 0.0
        %1203 = vmatpush.msra.mxu0 0.0
        %1204 = vmatpush.msra.mxu0 0.0
        %1205 = vmatpush.msra.mxu0 0.0
        %1206 = vmatpush.msra.mxu0 0.0
        %1207 = vmatpush.msra.mxu0 0.0
        %1208 = vmatpush.msra.mxu0 0.0
        %1209 = vmatpush.msra.mxu0 0.0
        %1210 = vmatpush.msra.mxu0 0.0
        %1211 = vmatpush.msra.mxu0 %v1191
        %1212 = vmatmul.f32.gmra.mxu0 %v1194
        %v1213 = vpop.f32.mrf.mxu0
        %v1214 = vadd.f32 0.0, %v1213
        %1215 = vdwg.mxu0
        %1216 = vrot.lane.b32.xlu0 %v975, 32
        %v1217 = vpop.permute.xlu0 %1216
        %1218 = vrot.lane.b32.xlu0 %v995, 32
        %v1219 = vpop.permute.xlu0 %1218
        %v1220 = vsel %vm1023, %v1217, 0
        %v1222 = vsel %vm1023, %v1219, 0
        %1224 = vmatpush.xpose.msra.mxu0 0.0
        %1225 = vmatpush.xpose.msra.mxu0 0.0
        %1226 = vmatpush.xpose.msra.mxu0 0.0
        %1227 = vmatpush.xpose.msra.mxu0 0.0
        %1228 = vmatpush.xpose.msra.mxu0 0.0
        %1229 = vmatpush.xpose.msra.mxu0 0.0
        %1230 = vmatpush.xpose.msra.mxu0 0.0
        %1231 = vmatpush.xpose.msra.mxu0 0.0
        %1232 = vmatpush.xpose.msra.mxu0 0.0
        %1233 = vmatpush.xpose.msra.mxu0 0.0
        %1234 = vmatpush.xpose.msra.mxu0 0.0
        %1235 = vmatpush.xpose.msra.mxu0 0.0
        %1236 = vmatpush.xpose.msra.mxu0 0.0
        %1237 = vmatpush.xpose.msra.mxu0 0.0
        %1238 = vmatpush.xpose.msra.mxu0 0.0
        %1239 = vmatpush.xpose.msra.mxu0 %v1222
        %1240 = vmatmul.f32.gmra.mxu0 %v1220
        %v1241 = vpop.f32.mrf.mxu0
        %v1242 = vadd.f32 %v1022, %v1241
        %1243 = vdwg.mxu0
        %v1244 = vsel %vm1050, %v1242, -inf
        %1245 = vmax.xlane.f32.xlu0 %v1244
        %v1246 = vpop.xlane.xlu0 %1245
        %v1247 = vsub.f32 %v1242, %v1246
        %v1248 = vmul.f32 %v1247, 1.442695
        %v1249 = vpow.pop %v1248
        %v1250 = vsel %vm1050, %v1249, 0.0
        %1251 = vadd.xlane.f32.xlu0 %v1250
        %v1252 = vpop.xlane.xlu0 %1251
        %v1253 = vrcp.pop %v1252
        %v1254 = vmul.f32 %v1249, %v1253
        %1255 = vrot.lane.b32.xlu0 %v1015, 32
        %v1256 = vpop.permute.xlu0 %1255
        %v1259 = vsel %vm1050, %v1254, 0
        %1261 = vmatpush.msra.mxu0 0.0
        %1262 = vmatpush.msra.mxu0 0.0
        %1263 = vmatpush.msra.mxu0 0.0
        %1264 = vmatpush.msra.mxu0 0.0
        %1265 = vmatpush.msra.mxu0 0.0
        %1266 = vmatpush.msra.mxu0 0.0
        %1267 = vmatpush.msra.mxu0 0.0
        %1268 = vmatpush.msra.mxu0 0.0
        %1269 = vmatpush.msra.mxu0 0.0
        %1270 = vmatpush.msra.mxu0 0.0
        %1271 = vmatpush.msra.mxu0 0.0
        %1272 = vmatpush.msra.mxu0 0.0
        %1273 = vmatpush.msra.mxu0 0.0
        %1274 = vmatpush.msra.mxu0 0.0
        %1275 = vmatpush.msra.mxu0 0.0
        %1276 = vmatpush.msra.mxu0 %v1256
        %1277 = vmatmul.f32.gmra.mxu0 %v1259
        %v1278 = vpop.f32.mrf.mxu0
        %v1279 = vadd.f32 0.0, %v1278
        %1280 = vdwg.mxu0
        %1282 = vrot.lane.b32.xlu0 %v1149, 32
        %v1283 = vpop.permute.xlu0 %1282
        %1286 = vrot.lane.b32.xlu0 %v1214, 64
        %v1287 = vpop.permute.xlu0 %1286
        %1290 = vrot.lane.b32.xlu0 %v1279, 96
        %v1291 = vpop.permute.xlu0 %1290
        %v1293 = vsel %vm1023, %v1083, %v1283
        %vm1294 = vcmask 523264
        %v1295 = vsel %vm1294, %v1293, %v1287
        %vm1296 = vcmask 785408
        %v1297 = vsel %vm1296, %v1295, %v1291
        %v1298 = vld [vmem:[#allocation4] sm:$0xff]
        %v1299 = vld [vmem:[#allocation4 + $0x8] sm:$0xff]
        %v1300 = vld [vmem:[#allocation4 + $0x10] sm:$0xff]
        %v1301 = vld [vmem:[#allocation4 + $0x18] sm:$0xff]
        %v1302 = vld [vmem:[#allocation4 + $0x20] sm:$0xff]
        %v1303 = vld [vmem:[#allocation4 + $0x28] sm:$0xff]
        %v1304 = vld [vmem:[#allocation4 + $0x30] sm:$0xff]
        %v1305 = vld [vmem:[#allocation4 + $0x38] sm:$0xff]
        %v1306 = vld [vmem:[#allocation4 + $0x40] sm:$0xff]
        %v1307 = vld [vmem:[#allocation4 + $0x48] sm:$0xff]
        %v1308 = vld [vmem:[#allocation4 + $0x50] sm:$0xff]
        %v1309 = vld [vmem:[#allocation4 + $0x58] sm:$0xff]
        %v1310 = vld [vmem:[#allocation4 + $0x60] sm:$0xff]
        %v1311 = vld [vmem:[#allocation4 + $0x68] sm:$0xff]
        %v1312 = vld [vmem:[#allocation4 + $0x70] sm:$0xff]
        %v1313 = vld [vmem:[#allocation4 + $0x78] sm:$0xff]
        %v1314 = vld [vmem:[%s5] sm:$0x1]
        %v1316 = vperm.slane %v1314, 0
        %1318 = vmatpush.msra.mxu0 %v1313
        %1319 = vmatpush.msra.mxu0 %v1312
        %1320 = vmatpush.msra.mxu0 %v1311
        %1321 = vmatpush.msra.mxu0 %v1310
        %1322 = vmatpush.msra.mxu0 %v1309
        %1323 = vmatpush.msra.mxu0 %v1308
        %1324 = vmatpush.msra.mxu0 %v1307
        %1325 = vmatpush.msra.mxu0 %v1306
        %1326 = vmatpush.msra.mxu0 %v1305
        %1327 = vmatpush.msra.mxu0 %v1304
        %1328 = vmatpush.msra.mxu0 %v1303
        %1329 = vmatpush.msra.mxu0 %v1302
        %1330 = vmatpush.msra.mxu0 %v1301
        %1331 = vmatpush.msra.mxu0 %v1300
        %1332 = vmatpush.msra.mxu0 %v1299
        %1333 = vmatpush.msra.mxu0 %v1298
        %1334 = vmatmul.f32.gmra.mxu0 %v1297
        %v1335 = vpop.f32.mrf.mxu0
        %v1336 = vadd.f32 %v1316, %v1335
        %1337 = vdwg.mxu0
        %v1338 = vadd.f32 %v899, %v1336
        %v1339 = vld [vmem:[%s6] sm:$0x1]
        %v1340 = vld [vmem:[%s7] sm:$0x1]
        %1341 = vadd.xlane.f32.xlu0 %v1338
        %v1342 = vpop.xlane.xlu0 %1341
        %v1343 = vrcp.pop 128.0
        %v1344 = vmul.f32 128.0, %v1343
        %v1345 = vsub.f32 1.0, %v1344
        %v1346 = vmul.f32 %v1343, %v1345
        %v1347 = vadd.f32 %v1343, %v1346
        %vm1348 = vweird.f32 %v1343
        %v1349 = vsel %vm1348, %v1343, %v1347
        %v1350 = vmul.f32 %v1342, %v1349
        %v1351 = vsub.f32 %v1338, %v1350
        %v1352 = vmul.f32 %v1351, %v1351
        %1353 = vadd.xlane.f32.xlu0 %v1352
        %v1354 = vpop.xlane.xlu0 %1353
        %v1355 = vmul.f32 %v1354, %v1349
        %v1356 = vadd.f32 %v1355, 1e-05
        %v1357 = vrsqrt.pop %v1356
        %v1358 = vmul.f32 %v1357, %v1356
        %v1359 = vmul.f32 %v1358, %v1357
        %v1360 = vmul.f32 0.5, %v1359
        %v1361 = vsub.f32 1.5, %v1360
        %v1362 = vmul.f32 %v1357, %v1361
        %vm1363 = vweird.f32 %v1356
        %vm1364 = vweird.f32 %v1357
        %vm1365 = vmor %vm1363, %vm1364
        %v1366 = vsel %vm1365, %v1357, %v1362
        %v1367 = vmul.f32 %v1351, %v1366
        %v1369 = vperm.slane %v1339, 0
        %v1371 = vmul.f32 %v1367, %v1369
        %v1373 = vperm.slane %v1340, 0
        %v1375 = vadd.f32 %v1371, %v1373
        %v1376 = vld [vmem:[#allocation6] sm:$0xff]
        %v1377 = vld [vmem:[#allocation6 + $0x8] sm:$0xff]
        %v1378 = vld [vmem:[#allocation6 + $0x10] sm:$0xff]
        %v1379 = vld [vmem:[#allocation6 + $0x18] sm:$0xff]
        %v1380 = vld [vmem:[#allocation6 + $0x20] sm:$0xff]
        %v1381 = vld [vmem:[#allocation6 + $0x28] sm:$0xff]
        %v1382 = vld [vmem:[#allocation6 + $0x30] sm:$0xff]
        %v1383 = vld [vmem:[#allocation6 + $0x38] sm:$0xff]
        %v1384 = vld [vmem:[#allocation6 + $0x40] sm:$0xff]
        %v1385 = vld [vmem:[#allocation6 + $0x48] sm:$0xff]
        %v1386 = vld [vmem:[#allocation6 + $0x50] sm:$0xff]
        %v1387 = vld [vmem:[#allocation6 + $0x58] sm:$0xff]
        %v1388 = vld [vmem:[#allocation6 + $0x60] sm:$0xff]
        %v1389 = vld [vmem:[#allocation6 + $0x68] sm:$0xff]
        %v1390 = vld [vmem:[#allocation6 + $0x70] sm:$0xff]
        %v1391 = vld [vmem:[#allocation6 + $0x78] sm:$0xff]
        %v1392 = vld [vmem:[%s9] sm:$0x1]
        %v1394 = vperm.slane %v1392, 0
        %1396 = vmatpush.msra.mxu0 %v1391
        %1397 = vmatpush.msra.mxu0 %v1390
        %1398 = vmatpush.msra.mxu0 %v1389
        %1399 = vmatpush.msra.mxu0 %v1388
        %1400 = vmatpush.msra.mxu0 %v1387
        %1401 = vmatpush.msra.mxu0 %v1386
        %1402 = vmatpush.msra.mxu0 %v1385
        %1403 = vmatpush.msra.mxu0 %v1384
        %1404 = vmatpush.msra.mxu0 %v1383
        %1405 = vmatpush.msra.mxu0 %v1382
        %1406 = vmatpush.msra.mxu0 %v1381
        %1407 = vmatpush.msra.mxu0 %v1380
        %1408 = vmatpush.msra.mxu0 %v1379
        %1409 = vmatpush.msra.mxu0 %v1378
        %1410 = vmatpush.msra.mxu0 %v1377
        %1411 = vmatpush.msra.mxu0 %v1376
        %1412 = vmatmul.f32.gmra.mxu0 %v1375
        %v1413 = vpop.f32.mrf.mxu0
        %v1414 = vadd.f32 %v1394, %v1413
        %1415 = vdwg.mxu0
        %v1416 = vld [vmem:[#allocation7] sm:$0xff]
        %v1417 = vld [vmem:[#allocation7 + $0x8] sm:$0xff]
        %v1418 = vld [vmem:[#allocation7 + $0x10] sm:$0xff]
        %v1419 = vld [vmem:[#allocation7 + $0x18] sm:$0xff]
        %v1420 = vld [vmem:[#allocation7 + $0x20] sm:$0xff]
        %v1421 = vld [vmem:[#allocation7 + $0x28] sm:$0xff]
        %v1422 = vld [vmem:[#allocation7 + $0x30] sm:$0xff]
        %v1423 = vld [vmem:[#allocation7 + $0x38] sm:$0xff]
        %v1424 = vld [vmem:[#allocation7 + $0x40] sm:$0xff]
        %v1425 = vld [vmem:[#allocation7 + $0x48] sm:$0xff]
        %v1426 = vld [vmem:[#allocation7 + $0x50] sm:$0xff]
        %v1427 = vld [vmem:[#allocation7 + $0x58] sm:$0xff]
        %v1428 = vld [vmem:[#allocation7 + $0x60] sm:$0xff]
        %v1429 = vld [vmem:[#allocation7 + $0x68] sm:$0xff]
        %v1430 = vld [vmem:[#allocation7 + $0x70] sm:$0xff]
        %v1431 = vld [vmem:[#allocation7 + $0x78] sm:$0xff]
        %v1432 = vld [vmem:[#allocation7 + $0x80] sm:$0xff]
        %v1433 = vld [vmem:[#allocation7 + $0x88] sm:$0xff]
        %v1434 = vld [vmem:[#allocation7 + $0x90] sm:$0xff]
        %v1435 = vld [vmem:[#allocation7 + $0x98] sm:$0xff]
        %v1436 = vld [vmem:[#allocation7 + $0xa0] sm:$0xff]
        %v1437 = vld [vmem:[#allocation7 + $0xa8] sm:$0xff]
        %v1438 = vld [vmem:[#allocation7 + $0xb0] sm:$0xff]
        %v1439 = vld [vmem:[#allocation7 + $0xb8] sm:$0xff]
        %v1440 = vld [vmem:[#allocation7 + $0xc0] sm:$0xff]
        %v1441 = vld [vmem:[#allocation7 + $0xc8] sm:$0xff]
        %v1442 = vld [vmem:[#allocation7 + $0xd0] sm:$0xff]
        %v1443 = vld [vmem:[#allocation7 + $0xd8] sm:$0xff]
        %v1444 = vld [vmem:[#allocation7 + $0xe0] sm:$0xff]
        %v1445 = vld [vmem:[#allocation7 + $0xe8] sm:$0xff]
        %v1446 = vld [vmem:[#allocation7 + $0xf0] sm:$0xff]
        %v1447 = vld [vmem:[#allocation7 + $0xf8] sm:$0xff]
        %v1448 = vld [vmem:[%s11] sm:$0x3]
        %v1450 = vperm.slane %v1448, 0
        %v1451 = vperm.slane %v1448, 1
        %1454 = vmatpush.msra.mxu0 %v1446
        %1455 = vmatpush.msra.mxu0 %v1444
        %1456 = vmatpush.msra.mxu0 %v1442
        %1457 = vmatpush.msra.mxu0 %v1440
        %1458 = vmatpush.msra.mxu0 %v1438
        %1459 = vmatpush.msra.mxu0 %v1436
        %1460 = vmatpush.msra.mxu0 %v1434
        %1461 = vmatpush.msra.mxu0 %v1432
        %1462 = vmatpush.msra.mxu0 %v1430
        %1463 = vmatpush.msra.mxu0 %v1428
        %1464 = vmatpush.msra.mxu0 %v1426
        %1465 = vmatpush.msra.mxu0 %v1424
        %1466 = vmatpush.msra.mxu0 %v1422
        %1467 = vmatpush.msra.mxu0 %v1420
        %1468 = vmatpush.msra.mxu0 %v1418
        %1469 = vmatpush.msra.mxu0 %v1416
        %1470 = vmatmul.f32.gmra.mxu0 %v900
        %v1471 = vpop.f32.mrf.mxu0
        %v1472 = vadd.f32 %v1450, %v1471
        %1473 = vdwg.mxu0
        %1474 = vmatpush.msra.mxu0 %v1447
        %1475 = vmatpush.msra.mxu0 %v1445
        %1476 = vmatpush.msra.mxu0 %v1443
        %1477 = vmatpush.msra.mxu0 %v1441
        %1478 = vmatpush.msra.mxu0 %v1439
        %1479 = vmatpush.msra.mxu0 %v1437
        %1480 = vmatpush.msra.mxu0 %v1435
        %1481 = vmatpush.msra.mxu0 %v1433
        %1482 = vmatpush.msra.mxu0 %v1431
        %1483 = vmatpush.msra.mxu0 %v1429
        %1484 = vmatpush.msra.mxu0 %v1427
        %1485 = vmatpush.msra.mxu0 %v1425
        %1486 = vmatpush.msra.mxu0 %v1423
        %1487 = vmatpush.msra.mxu0 %v1421
        %1488 = vmatpush.msra.mxu0 %v1419
        %1489 = vmatpush.msra.mxu0 %v1417
        %1490 = vmatmul.f32.gmra.mxu0 %v900
        %v1491 = vpop.f32.mrf.mxu0
        %v1492 = vadd.f32 %v1451, %v1491
        %1493 = vdwg.mxu0
        %v1495 = vsel %vm1023, %v1414, 0
        %v1498 = vsel %vm1023, %v1472, 0
        %1500 = vmatpush.xpose.msra.mxu0 0.0
        %1501 = vmatpush.xpose.msra.mxu0 0.0
        %1502 = vmatpush.xpose.msra.mxu0 0.0
        %1503 = vmatpush.xpose.msra.mxu0 0.0
        %1504 = vmatpush.xpose.msra.mxu0 0.0
        %1505 = vmatpush.xpose.msra.mxu0 0.0
        %1506 = vmatpush.xpose.msra.mxu0 0.0
        %1507 = vmatpush.xpose.msra.mxu0 0.0
        %1508 = vmatpush.xpose.msra.mxu0 0.0
        %1509 = vmatpush.xpose.msra.mxu0 0.0
        %1510 = vmatpush.xpose.msra.mxu0 0.0
        %1511 = vmatpush.xpose.msra.mxu0 0.0
        %1512 = vmatpush.xpose.msra.mxu0 0.0
        %1513 = vmatpush.xpose.msra.mxu0 0.0
        %1514 = vmatpush.xpose.msra.mxu0 0.0
        %1515 = vmatpush.xpose.msra.mxu0 %v1498
        %1516 = vmatmul.f32.gmra.mxu0 %v1495
        %v1517 = vpop.f32.mrf.mxu0
        %v1518 = vadd.f32 0.0, %v1517
        %1519 = vdwg.mxu0
        %v1520 = vsel %vm1050, %v1518, -inf
        %1521 = vmax.xlane.f32.xlu0 %v1520
        %v1522 = vpop.xlane.xlu0 %1521
        %v1523 = vsub.f32 %v1518, %v1522
        %v1524 = vmul.f32 %v1523, 1.442695
        %v1525 = vpow.pop %v1524
        %v1526 = vsel %vm1050, %v1525, 0.0
        %1527 = vadd.xlane.f32.xlu0 %v1526
        %v1528 = vpop.xlane.xlu0 %1527
        %v1529 = vrcp.pop %v1528
        %v1530 = vmul.f32 %v1525, %v1529
        %v1532 = vsel %vm1050, %v1530, 0
        %1534 = vmatpush.msra.mxu0 0.0
        %1535 = vmatpush.msra.mxu0 0.0
        %1536 = vmatpush.msra.mxu0 0.0
        %1537 = vmatpush.msra.mxu0 0.0
        %1538 = vmatpush.msra.mxu0 0.0
        %1539 = vmatpush.msra.mxu0 0.0
        %1540 = vmatpush.msra.mxu0 0.0
        %1541 = vmatpush.msra.mxu0 0.0
        %1542 = vmatpush.msra.mxu0 0.0
        %1543 = vmatpush.msra.mxu0 0.0
        %1544 = vmatpush.msra.mxu0 0.0
        %1545 = vmatpush.msra.mxu0 0.0
        %1546 = vmatpush.msra.mxu0 0.0
        %1547 = vmatpush.msra.mxu0 0.0
        %1548 = vmatpush.msra.mxu0 0.0
        %1549 = vmatpush.msra.mxu0 %v1492
        %1550 = vmatmul.f32.gmra.mxu0 %v1532
        %v1551 = vpop.f32.mrf.mxu0
        %v1552 = vadd.f32 0.0, %v1551
        %1553 = vdwg.mxu0
        %1554 = vrot.lane.b32.xlu0 %v1414, 96
        %v1555 = vpop.permute.xlu0 %1554
        %1556 = vrot.lane.b32.xlu0 %v1472, 96
        %v1557 = vpop.permute.xlu0 %1556
        %v1558 = vsel %vm1023, %v1555, 0
        %v1560 = vsel %vm1023, %v1557, 0
        %1562 = vmatpush.xpose.msra.mxu0 0.0
        %1563 = vmatpush.xpose.msra.mxu0 0.0
        %1564 = vmatpush.xpose.msra.mxu0 0.0
        %1565 = vmatpush.xpose.msra.mxu0 0.0
        %1566 = vmatpush.xpose.msra.mxu0 0.0
        %1567 = vmatpush.xpose.msra.mxu0 0.0
        %1568 = vmatpush.xpose.msra.mxu0 0.0
        %1569 = vmatpush.xpose.msra.mxu0 0.0
        %1570 = vmatpush.xpose.msra.mxu0 0.0
        %1571 = vmatpush.xpose.msra.mxu0 0.0
        %1572 = vmatpush.xpose.msra.mxu0 0.0
        %1573 = vmatpush.xpose.msra.mxu0 0.0
        %1574 = vmatpush.xpose.msra.mxu0 0.0
        %1575 = vmatpush.xpose.msra.mxu0 0.0
        %1576 = vmatpush.xpose.msra.mxu0 0.0
        %1577 = vmatpush.xpose.msra.mxu0 %v1560
        %1578 = vmatmul.f32.gmra.mxu0 %v1558
        %v1579 = vpop.f32.mrf.mxu0
        %v1580 = vadd.f32 0.0, %v1579
        %1581 = vdwg.mxu0
        %v1582 = vsel %vm1050, %v1580, -inf
        %1583 = vmax.xlane.f32.xlu0 %v1582
        %v1584 = vpop.xlane.xlu0 %1583
        %v1585 = vsub.f32 %v1580, %v1584
        %v1586 = vmul.f32 %v1585, 1.442695
        %v1587 = vpow.pop %v1586
        %v1588 = vsel %vm1050, %v1587, 0.0
        %1589 = vadd.xlane.f32.xlu0 %v1588
        %v1590 = vpop.xlane.xlu0 %1589
        %v1591 = vrcp.pop %v1590
        %v1592 = vmul.f32 %v1587, %v1591
        %1594 = vrot.lane.b32.xlu0 %v1492, 96
        %v1595 = vpop.permute.xlu0 %1594
        %v1598 = vsel %vm1050, %v1592, 0
        %1600 = vmatpush.msra.mxu0 0.0
        %1601 = vmatpush.msra.mxu0 0.0
        %1602 = vmatpush.msra.mxu0 0.0
        %1603 = vmatpush.msra.mxu0 0.0
        %1604 = vmatpush.msra.mxu0 0.0
        %1605 = vmatpush.msra.mxu0 0.0
        %1606 = vmatpush.msra.mxu0 0.0
        %1607 = vmatpush.msra.mxu0 0.0
        %1608 = vmatpush.msra.mxu0 0.0
        %1609 = vmatpush.msra.mxu0 0.0
        %1610 = vmatpush.msra.mxu0 0.0
        %1611 = vmatpush.msra.mxu0 0.0
        %1612 = vmatpush.msra.mxu0 0.0
        %1613 = vmatpush.msra.mxu0 0.0
        %1614 = vmatpush.msra.mxu0 0.0
        %1615 = vmatpush.msra.mxu0 %v1595
        %1616 = vmatmul.f32.gmra.mxu0 %v1598
        %v1617 = vpop.f32.mrf.mxu0
        %v1618 = vadd.f32 0.0, %v1617
        %1619 = vdwg.mxu0
        %1620 = vrot.lane.b32.xlu0 %v1414, 64
        %v1621 = vpop.permute.xlu0 %1620
        %1622 = vrot.lane.b32.xlu0 %v1472, 64
        %v1623 = vpop.permute.xlu0 %1622
        %v1624 = vsel %vm1023, %v1621, 0
        %v1626 = vsel %vm1023, %v1623, 0
        %1628 = vmatpush.xpose.msra.mxu0 0.0
        %1629 = vmatpush.xpose.msra.mxu0 0.0
        %1630 = vmatpush.xpose.msra.mxu0 0.0
        %1631 = vmatpush.xpose.msra.mxu0 0.0
        %1632 = vmatpush.xpose.msra.mxu0 0.0
        %1633 = vmatpush.xpose.msra.mxu0 0.0
        %1634 = vmatpush.xpose.msra.mxu0 0.0
        %1635 = vmatpush.xpose.msra.mxu0 0.0
        %1636 = vmatpush.xpose.msra.mxu0 0.0
        %1637 = vmatpush.xpose.msra.mxu0 0.0
        %1638 = vmatpush.xpose.msra.mxu0 0.0
        %1639 = vmatpush.xpose.msra.mxu0 0.0
        %1640 = vmatpush.xpose.msra.mxu0 0.0
        %1641 = vmatpush.xpose.msra.mxu0 0.0
        %1642 = vmatpush.xpose.msra.mxu0 0.0
        %1643 = vmatpush.xpose.msra.mxu0 %v1626
        %1644 = vmatmul.f32.gmra.mxu0 %v1624
        %v1645 = vpop.f32.mrf.mxu0
        %v1646 = vadd.f32 0.0, %v1645
        %1647 = vdwg.mxu0
        %v1648 = vsel %vm1050, %v1646, -inf
        %1649 = vmax.xlane.f32.xlu0 %v1648
        %v1650 = vpop.xlane.xlu0 %1649
        %v1651 = vsub.f32 %v1646, %v1650
        %v1652 = vmul.f32 %v1651, 1.442695
        %v1653 = vpow.pop %v1652
        %v1654 = vsel %vm1050, %v1653, 0.0
        %1655 = vadd.xlane.f32.xlu0 %v1654
        %v1656 = vpop.xlane.xlu0 %1655
        %v1657 = vrcp.pop %v1656
        %v1658 = vmul.f32 %v1653, %v1657
        %1659 = vrot.lane.b32.xlu0 %v1492, 64
        %v1660 = vpop.permute.xlu0 %1659
        %v1663 = vsel %vm1050, %v1658, 0
        %1665 = vmatpush.msra.mxu0 0.0
        %1666 = vmatpush.msra.mxu0 0.0
        %1667 = vmatpush.msra.mxu0 0.0
        %1668 = vmatpush.msra.mxu0 0.0
        %1669 = vmatpush.msra.mxu0 0.0
        %1670 = vmatpush.msra.mxu0 0.0
        %1671 = vmatpush.msra.mxu0 0.0
        %1672 = vmatpush.msra.mxu0 0.0
        %1673 = vmatpush.msra.mxu0 0.0
        %1674 = vmatpush.msra.mxu0 0.0
        %1675 = vmatpush.msra.mxu0 0.0
        %1676 = vmatpush.msra.mxu0 0.0
        %1677 = vmatpush.msra.mxu0 0.0
        %1678 = vmatpush.msra.mxu0 0.0
        %1679 = vmatpush.msra.mxu0 0.0
        %1680 = vmatpush.msra.mxu0 %v1660
        %1681 = vmatmul.f32.gmra.mxu0 %v1663
        %v1682 = vpop.f32.mrf.mxu0
        %v1683 = vadd.f32 0.0, %v1682
        %1684 = vdwg.mxu0
        %1685 = vrot.lane.b32.xlu0 %v1414, 32
        %v1686 = vpop.permute.xlu0 %1685
        %1687 = vrot.lane.b32.xlu0 %v1472, 32
        %v1688 = vpop.permute.xlu0 %1687
        %v1689 = vsel %vm1023, %v1686, 0
        %v1691 = vsel %vm1023, %v1688, 0
        %1693 = vmatpush.xpose.msra.mxu0 0.0
        %1694 = vmatpush.xpose.msra.mxu0 0.0
        %1695 = vmatpush.xpose.msra.mxu0 0.0
        %1696 = vmatpush.xpose.msra.mxu0 0.0
        %1697 = vmatpush.xpose.msra.mxu0 0.0
        %1698 = vmatpush.xpose.msra.mxu0 0.0
        %1699 = vmatpush.xpose.msra.mxu0 0.0
        %1700 = vmatpush.xpose.msra.mxu0 0.0
        %1701 = vmatpush.xpose.msra.mxu0 0.0
        %1702 = vmatpush.xpose.msra.mxu0 0.0
        %1703 = vmatpush.xpose.msra.mxu0 0.0
        %1704 = vmatpush.xpose.msra.mxu0 0.0
        %1705 = vmatpush.xpose.msra.mxu0 0.0
        %1706 = vmatpush.xpose.msra.mxu0 0.0
        %1707 = vmatpush.xpose.msra.mxu0 0.0
        %1708 = vmatpush.xpose.msra.mxu0 %v1691
        %1709 = vmatmul.f32.gmra.mxu0 %v1689
        %v1710 = vpop.f32.mrf.mxu0
        %v1711 = vadd.f32 0.0, %v1710
        %1712 = vdwg.mxu0
        %v1713 = vsel %vm1050, %v1711, -inf
        %1714 = vmax.xlane.f32.xlu0 %v1713
        %v1715 = vpop.xlane.xlu0 %1714
        %v1716 = vsub.f32 %v1711, %v1715
        %v1717 = vmul.f32 %v1716, 1.442695
        %v1718 = vpow.pop %v1717
        %v1719 = vsel %vm1050, %v1718, 0.0
        %1720 = vadd.xlane.f32.xlu0 %v1719
        %v1721 = vpop.xlane.xlu0 %1720
        %v1722 = vrcp.pop %v1721
        %v1723 = vmul.f32 %v1718, %v1722
        %1724 = vrot.lane.b32.xlu0 %v1492, 32
        %v1725 = vpop.permute.xlu0 %1724
        %v1728 = vsel %vm1050, %v1723, 0
        %1730 = vmatpush.msra.mxu0 0.0
        %1731 = vmatpush.msra.mxu0 0.0
        %1732 = vmatpush.msra.mxu0 0.0
        %1733 = vmatpush.msra.mxu0 0.0
        %1734 = vmatpush.msra.mxu0 0.0
        %1735 = vmatpush.msra.mxu0 0.0
        %1736 = vmatpush.msra.mxu0 0.0
        %1737 = vmatpush.msra.mxu0 0.0
        %1738 = vmatpush.msra.mxu0 0.0
        %1739 = vmatpush.msra.mxu0 0.0
        %1740 = vmatpush.msra.mxu0 0.0
        %1741 = vmatpush.msra.mxu0 0.0
        %1742 = vmatpush.msra.mxu0 0.0
        %1743 = vmatpush.msra.mxu0 0.0
        %1744 = vmatpush.msra.mxu0 0.0
        %1745 = vmatpush.msra.mxu0 %v1725
        %1746 = vmatmul.f32.gmra.mxu0 %v1728
        %v1747 = vpop.f32.mrf.mxu0
        %v1748 = vadd.f32 0.0, %v1747
        %1749 = vdwg.mxu0
        %1751 = vrot.lane.b32.xlu0 %v1618, 32
        %v1752 = vpop.permute.xlu0 %1751
        %1755 = vrot.lane.b32.xlu0 %v1683, 64
        %v1756 = vpop.permute.xlu0 %1755
        %1759 = vrot.lane.b32.xlu0 %v1748, 96
        %v1760 = vpop.permute.xlu0 %1759
        %v1762 = vsel %vm1023, %v1552, %v1752
        %v1763 = vsel %vm1294, %v1762, %v1756
        %v1764 = vsel %vm1296, %v1763, %v1760
        %v1765 = vld [vmem:[#allocation9] sm:$0xff]
        %v1766 = vld [vmem:[#allocation9 + $0x8] sm:$0xff]
        %v1767 = vld [vmem:[#allocation9 + $0x10] sm:$0xff]
        %v1768 = vld [vmem:[#allocation9 + $0x18] sm:$0xff]
        %v1769 = vld [vmem:[#allocation9 + $0x20] sm:$0xff]
        %v1770 = vld [vmem:[#allocation9 + $0x28] sm:$0xff]
        %v1771 = vld [vmem:[#allocation9 + $0x30] sm:$0xff]
        %v1772 = vld [vmem:[#allocation9 + $0x38] sm:$0xff]
        %v1773 = vld [vmem:[#allocation9 + $0x40] sm:$0xff]
        %v1774 = vld [vmem:[#allocation9 + $0x48] sm:$0xff]
        %v1775 = vld [vmem:[#allocation9 + $0x50] sm:$0xff]
        %v1776 = vld [vmem:[#allocation9 + $0x58] sm:$0xff]
        %v1777 = vld [vmem:[#allocation9 + $0x60] sm:$0xff]
        %v1778 = vld [vmem:[#allocation9 + $0x68] sm:$0xff]
        %v1779 = vld [vmem:[#allocation9 + $0x70] sm:$0xff]
        %v1780 = vld [vmem:[#allocation9 + $0x78] sm:$0xff]
        %v1781 = vld [vmem:[#allocation10] sm:$0x1]
        %v1783 = vperm.slane %v1781, 0
        %1785 = vmatpush.msra.mxu0 %v1780
        %1786 = vmatpush.msra.mxu0 %v1779
        %1787 = vmatpush.msra.mxu0 %v1778
        %1788 = vmatpush.msra.mxu0 %v1777
        %1789 = vmatpush.msra.mxu0 %v1776
        %1790 = vmatpush.msra.mxu0 %v1775
        %1791 = vmatpush.msra.mxu0 %v1774
        %1792 = vmatpush.msra.mxu0 %v1773
        %1793 = vmatpush.msra.mxu0 %v1772
        %1794 = vmatpush.msra.mxu0 %v1771
        %1795 = vmatpush.msra.mxu0 %v1770
        %1796 = vmatpush.msra.mxu0 %v1769
        %1797 = vmatpush.msra.mxu0 %v1768
        %1798 = vmatpush.msra.mxu0 %v1767
        %1799 = vmatpush.msra.mxu0 %v1766
        %1800 = vmatpush.msra.mxu0 %v1765
        %1801 = vmatmul.f32.gmra.mxu0 %v1764
        %v1802 = vpop.f32.mrf.mxu0
        %v1803 = vadd.f32 %v1783, %v1802
        %1804 = vdwg.mxu0
        %v1805 = vadd.f32 %v1375, %v1803
        %v1806 = vld [vmem:[#allocation12] sm:$0x1]
        %v1807 = vld [vmem:[#allocation13] sm:$0x1]
        %1808 = vadd.xlane.f32.xlu0 %v1805
        %v1809 = vpop.xlane.xlu0 %1808
        %v1810 = vmul.f32 %v1809, %v1349
        %v1811 = vsub.f32 %v1805, %v1810
        %v1812 = vmul.f32 %v1811, %v1811
        %1813 = vadd.xlane.f32.xlu0 %v1812
        %v1814 = vpop.xlane.xlu0 %1813
        %v1815 = vmul.f32 %v1814, %v1349
        %v1816 = vadd.f32 %v1815, 1e-05
        %v1817 = vrsqrt.pop %v1816
        %v1818 = vmul.f32 %v1817, %v1816
        %v1819 = vmul.f32 %v1818, %v1817
        %v1820 = vmul.f32 0.5, %v1819
        %v1821 = vsub.f32 1.5, %v1820
        %v1822 = vmul.f32 %v1817, %v1821
        %vm1823 = vweird.f32 %v1816
        %vm1824 = vweird.f32 %v1817
        %vm1825 = vmor %vm1823, %vm1824
        %v1826 = vsel %vm1825, %v1817, %v1822
        %v1827 = vmul.f32 %v1811, %v1826
        %v1829 = vperm.slane %v1806, 0
        %v1831 = vmul.f32 %v1827, %v1829
        %v1833 = vperm.slane %v1807, 0
        %v1835 = vadd.f32 %v1831, %v1833
        %v1836 = vld [vmem:[#allocation15] sm:$0xff]
        %v1837 = vld [vmem:[#allocation15 + $0x8] sm:$0xff]
        %v1838 = vld [vmem:[#allocation15 + $0x10] sm:$0xff]
        %v1839 = vld [vmem:[#allocation15 + $0x18] sm:$0xff]
        %v1840 = vld [vmem:[#allocation15 + $0x20] sm:$0xff]
        %v1841 = vld [vmem:[#allocation15 + $0x28] sm:$0xff]
        %v1842 = vld [vmem:[#allocation15 + $0x30] sm:$0xff]
        %v1843 = vld [vmem:[#allocation15 + $0x38] sm:$0xff]
        %v1844 = vld [vmem:[#allocation15 + $0x40] sm:$0xff]
        %v1845 = vld [vmem:[#allocation15 + $0x48] sm:$0xff]
        %v1846 = vld [vmem:[#allocation15 + $0x50] sm:$0xff]
        %v1847 = vld [vmem:[#allocation15 + $0x58] sm:$0xff]
        %v1848 = vld [vmem:[#allocation15 + $0x60] sm:$0xff]
        %v1849 = vld [vmem:[#allocation15 + $0x68] sm:$0xff]
        %v1850 = vld [vmem:[#allocation15 + $0x70] sm:$0xff]
        %v1851 = vld [vmem:[#allocation15 + $0x78] sm:$0xff]
        %v1852 = vld [vmem:[#allocation15 + $0x80] sm:$0xff]
        %v1853 = vld [vmem:[#allocation15 + $0x88] sm:$0xff]
        %v1854 = vld [vmem:[#allocation15 + $0x90] sm:$0xff]
        %v1855 = vld [vmem:[#allocation15 + $0x98] sm:$0xff]
        %v1856 = vld [vmem:[#allocation15 + $0xa0] sm:$0xff]
        %v1857 = vld [vmem:[#allocation15 + $0xa8] sm:$0xff]
        %v1858 = vld [vmem:[#allocation15 + $0xb0] sm:$0xff]
        %v1859 = vld [vmem:[#allocation15 + $0xb8] sm:$0xff]
        %v1860 = vld [vmem:[#allocation15 + $0xc0] sm:$0xff]
        %v1861 = vld [vmem:[#allocation15 + $0xc8] sm:$0xff]
        %v1862 = vld [vmem:[#allocation15 + $0xd0] sm:$0xff]
        %v1863 = vld [vmem:[#allocation15 + $0xd8] sm:$0xff]
        %v1864 = vld [vmem:[#allocation15 + $0xe0] sm:$0xff]
        %v1865 = vld [vmem:[#allocation15 + $0xe8] sm:$0xff]
        %v1866 = vld [vmem:[#allocation15 + $0xf0] sm:$0xff]
        %v1867 = vld [vmem:[#allocation15 + $0xf8] sm:$0xff]
        %v1868 = vld [vmem:[#allocation15 + $0x100] sm:$0xff]
        %v1869 = vld [vmem:[#allocation15 + $0x108] sm:$0xff]
        %v1870 = vld [vmem:[#allocation15 + $0x110] sm:$0xff]
        %v1871 = vld [vmem:[#allocation15 + $0x118] sm:$0xff]
        %v1872 = vld [vmem:[#allocation15 + $0x120] sm:$0xff]
        %v1873 = vld [vmem:[#allocation15 + $0x128] sm:$0xff]
        %v1874 = vld [vmem:[#allocation15 + $0x130] sm:$0xff]
        %v1875 = vld [vmem:[#allocation15 + $0x138] sm:$0xff]
        %v1876 = vld [vmem:[#allocation15 + $0x140] sm:$0xff]
        %v1877 = vld [vmem:[#allocation15 + $0x148] sm:$0xff]
        %v1878 = vld [vmem:[#allocation15 + $0x150] sm:$0xff]
        %v1879 = vld [vmem:[#allocation15 + $0x158] sm:$0xff]
        %v1880 = vld [vmem:[#allocation15 + $0x160] sm:$0xff]
        %v1881 = vld [vmem:[#allocation15 + $0x168] sm:$0xff]
        %v1882 = vld [vmem:[#allocation15 + $0x170] sm:$0xff]
        %v1883 = vld [vmem:[#allocation15 + $0x178] sm:$0xff]
        %v1884 = vld [vmem:[#allocation15 + $0x180] sm:$0xff]
        %v1885 = vld [vmem:[#allocation15 + $0x188] sm:$0xff]
        %v1886 = vld [vmem:[#allocation15 + $0x190] sm:$0xff]
        %v1887 = vld [vmem:[#allocation15 + $0x198] sm:$0xff]
        %v1888 = vld [vmem:[#allocation15 + $0x1a0] sm:$0xff]
        %v1889 = vld [vmem:[#allocation15 + $0x1a8] sm:$0xff]
        %v1890 = vld [vmem:[#allocation15 + $0x1b0] sm:$0xff]
        %v1891 = vld [vmem:[#allocation15 + $0x1b8] sm:$0xff]
        %v1892 = vld [vmem:[#allocation15 + $0x1c0] sm:$0xff]
        %v1893 = vld [vmem:[#allocation15 + $0x1c8] sm:$0xff]
        %v1894 = vld [vmem:[#allocation15 + $0x1d0] sm:$0xff]
        %v1895 = vld [vmem:[#allocation15 + $0x1d8] sm:$0xff]
        %v1896 = vld [vmem:[#allocation15 + $0x1e0] sm:$0xff]
        %v1897 = vld [vmem:[#allocation15 + $0x1e8] sm:$0xff]
        %v1898 = vld [vmem:[#allocation15 + $0x1f0] sm:$0xff]
        %v1899 = vld [vmem:[#allocation15 + $0x1f8] sm:$0xff]
        %v1900 = vld [vmem:[%s17] sm:$0xf]
        %v1902 = vperm.slane %v1900, 0
        %v1903 = vperm.slane %v1900, 1
        %v1904 = vperm.slane %v1900, 2
        %v1905 = vperm.slane %v1900, 3
        %1910 = vmatpush.msra.mxu0 %v1896
        %1911 = vmatpush.msra.mxu0 %v1892
        %1912 = vmatpush.msra.mxu0 %v1888
        %1913 = vmatpush.msra.mxu0 %v1884
        %1914 = vmatpush.msra.mxu0 %v1880
        %1915 = vmatpush.msra.mxu0 %v1876
        %1916 = vmatpush.msra.mxu0 %v1872
        %1917 = vmatpush.msra.mxu0 %v1868
        %1918 = vmatpush.msra.mxu0 %v1864
        %1919 = vmatpush.msra.mxu0 %v1860
        %1920 = vmatpush.msra.mxu0 %v1856
        %1921 = vmatpush.msra.mxu0 %v1852
        %1922 = vmatpush.msra.mxu0 %v1848
        %1923 = vmatpush.msra.mxu0 %v1844
        %1924 = vmatpush.msra.mxu0 %v1840
        %1925 = vmatpush.msra.mxu0 %v1836
        %1926 = vmatmul.f32.gmra.mxu0 %v1835
        %v1927 = vpop.f32.mrf.mxu0
        %v1928 = vadd.f32 %v1902, %v1927
        %1929 = vdwg.mxu0
        %1930 = vmatpush.msra.mxu0 %v1897
        %1931 = vmatpush.msra.mxu0 %v1893
        %1932 = vmatpush.msra.mxu0 %v1889
        %1933 = vmatpush.msra.mxu0 %v1885
        %1934 = vmatpush.msra.mxu0 %v1881
        %1935 = vmatpush.msra.mxu0 %v1877
        %1936 = vmatpush.msra.mxu0 %v1873
        %1937 = vmatpush.msra.mxu0 %v1869
        %1938 = vmatpush.msra.mxu0 %v1865
        %1939 = vmatpush.msra.mxu0 %v1861
        %1940 = vmatpush.msra.mxu0 %v1857
        %1941 = vmatpush.msra.mxu0 %v1853
        %1942 = vmatpush.msra.mxu0 %v1849
        %1943 = vmatpush.msra.mxu0 %v1845
        %1944 = vmatpush.msra.mxu0 %v1841
        %1945 = vmatpush.msra.mxu0 %v1837
        %1946 = vmatmul.f32.gmra.mxu0 %v1835
        %v1947 = vpop.f32.mrf.mxu0
        %v1948 = vadd.f32 %v1903, %v1947
        %1949 = vdwg.mxu0
        %1950 = vmatpush.msra.mxu0 %v1898
        %1951 = vmatpush.msra.mxu0 %v1894
        %1952 = vmatpush.msra.mxu0 %v1890
        %1953 = vmatpush.msra.mxu0 %v1886
        %1954 = vmatpush.msra.mxu0 %v1882
        %1955 = vmatpush.msra.mxu0 %v1878
        %1956 = vmatpush.msra.mxu0 %v1874
        %1957 = vmatpush.msra.mxu0 %v1870
        %1958 = vmatpush.msra.mxu0 %v1866
        %1959 = vmatpush.msra.mxu0 %v1862
        %1960 = vmatpush.msra.mxu0 %v1858
        %1961 = vmatpush.msra.mxu0 %v1854
        %1962 = vmatpush.msra.mxu0 %v1850
        %1963 = vmatpush.msra.mxu0 %v1846
        %1964 = vmatpush.msra.mxu0 %v1842
        %1965 = vmatpush.msra.mxu0 %v1838
        %1966 = vmatmul.f32.gmra.mxu0 %v1835
        %v1967 = vpop.f32.mrf.mxu0
        %v1968 = vadd.f32 %v1904, %v1967
        %1969 = vdwg.mxu0
        %1970 = vmatpush.msra.mxu0 %v1899
        %1971 = vmatpush.msra.mxu0 %v1895
        %1972 = vmatpush.msra.mxu0 %v1891
        %1973 = vmatpush.msra.mxu0 %v1887
        %1974 = vmatpush.msra.mxu0 %v1883
        %1975 = vmatpush.msra.mxu0 %v1879
        %1976 = vmatpush.msra.mxu0 %v1875
        %1977 = vmatpush.msra.mxu0 %v1871
        %1978 = vmatpush.msra.mxu0 %v1867
        %1979 = vmatpush.msra.mxu0 %v1863
        %1980 = vmatpush.msra.mxu0 %v1859
        %1981 = vmatpush.msra.mxu0 %v1855
        %1982 = vmatpush.msra.mxu0 %v1851
        %1983 = vmatpush.msra.mxu0 %v1847
        %1984 = vmatpush.msra.mxu0 %v1843
        %1985 = vmatpush.msra.mxu0 %v1839
        %1986 = vmatmul.f32.gmra.mxu0 %v1835
        %v1987 = vpop.f32.mrf.mxu0
        %v1988 = vadd.f32 %v1905, %v1987
        %1989 = vdwg.mxu0
        %v1990 = vmax.f32 %v1928, 0.0
        %v1991 = vmax.f32 %v1948, 0.0
        %v1992 = vmax.f32 %v1968, 0.0
        %v1993 = vmax.f32 %v1988, 0.0
        %v1994 = vld [vmem:[#allocation16] sm:$0xff]
        %v1995 = vld [vmem:[#allocation16 + $0x8] sm:$0xff]
        %v1996 = vld [vmem:[#allocation16 + $0x10] sm:$0xff]
        %v1997 = vld [vmem:[#allocation16 + $0x18] sm:$0xff]
        %v1998 = vld [vmem:[#allocation16 + $0x20] sm:$0xff]
        %v1999 = vld [vmem:[#allocation16 + $0x28] sm:$0xff]
        %v2000 = vld [vmem:[#allocation16 + $0x30] sm:$0xff]
        %v2001 = vld [vmem:[#allocation16 + $0x38] sm:$0xff]
        %v2002 = vld [vmem:[#allocation16 + $0x40] sm:$0xff]
        %v2003 = vld [vmem:[#allocation16 + $0x48] sm:$0xff]
        %v2004 = vld [vmem:[#allocation16 + $0x50] sm:$0xff]
        %v2005 = vld [vmem:[#allocation16 + $0x58] sm:$0xff]
        %v2006 = vld [vmem:[#allocation16 + $0x60] sm:$0xff]
        %v2007 = vld [vmem:[#allocation16 + $0x68] sm:$0xff]
        %v2008 = vld [vmem:[#allocation16 + $0x70] sm:$0xff]
        %v2009 = vld [vmem:[#allocation16 + $0x78] sm:$0xff]
        %v2010 = vld [vmem:[#allocation16 + $0x80] sm:$0xff]
        %v2011 = vld [vmem:[#allocation16 + $0x88] sm:$0xff]
        %v2012 = vld [vmem:[#allocation16 + $0x90] sm:$0xff]
        %v2013 = vld [vmem:[#allocation16 + $0x98] sm:$0xff]
        %v2014 = vld [vmem:[#allocation16 + $0xa0] sm:$0xff]
        %v2015 = vld [vmem:[#allocation16 + $0xa8] sm:$0xff]
        %v2016 = vld [vmem:[#allocation16 + $0xb0] sm:$0xff]
        %v2017 = vld [vmem:[#allocation16 + $0xb8] sm:$0xff]
        %v2018 = vld [vmem:[#allocation16 + $0xc0] sm:$0xff]
        %v2019 = vld [vmem:[#allocation16 + $0xc8] sm:$0xff]
        %v2020 = vld [vmem:[#allocation16 + $0xd0] sm:$0xff]
        %v2021 = vld [vmem:[#allocation16 + $0xd8] sm:$0xff]
        %v2022 = vld [vmem:[#allocation16 + $0xe0] sm:$0xff]
        %v2023 = vld [vmem:[#allocation16 + $0xe8] sm:$0xff]
        %v2024 = vld [vmem:[#allocation16 + $0xf0] sm:$0xff]
        %v2025 = vld [vmem:[#allocation16 + $0xf8] sm:$0xff]
        %v2026 = vld [vmem:[#allocation16 + $0x100] sm:$0xff]
        %v2027 = vld [vmem:[#allocation16 + $0x108] sm:$0xff]
        %v2028 = vld [vmem:[#allocation16 + $0x110] sm:$0xff]
        %v2029 = vld [vmem:[#allocation16 + $0x118] sm:$0xff]
        %v2030 = vld [vmem:[#allocation16 + $0x120] sm:$0xff]
        %v2031 = vld [vmem:[#allocation16 + $0x128] sm:$0xff]
        %v2032 = vld [vmem:[#allocation16 + $0x130] sm:$0xff]
        %v2033 = vld [vmem:[#allocation16 + $0x138] sm:$0xff]
        %v2034 = vld [vmem:[#allocation16 + $0x140] sm:$0xff]
        %v2035 = vld [vmem:[#allocation16 + $0x148] sm:$0xff]
        %v2036 = vld [vmem:[#allocation16 + $0x150] sm:$0xff]
        %v2037 = vld [vmem:[#allocation16 + $0x158] sm:$0xff]
        %v2038 = vld [vmem:[#allocation16 + $0x160] sm:$0xff]
        %v2039 = vld [vmem:[#allocation16 + $0x168] sm:$0xff]
        %v2040 = vld [vmem:[#allocation16 + $0x170] sm:$0xff]
        %v2041 = vld [vmem:[#allocation16 + $0x178] sm:$0xff]
        %v2042 = vld [vmem:[#allocation16 + $0x180] sm:$0xff]
        %v2043 = vld [vmem:[#allocation16 + $0x188] sm:$0xff]
        %v2044 = vld [vmem:[#allocation16 + $0x190] sm:$0xff]
        %v2045 = vld [vmem:[#allocation16 + $0x198] sm:$0xff]
        %v2046 = vld [vmem:[#allocation16 + $0x1a0] sm:$0xff]
        %v2047 = vld [vmem:[#allocation16 + $0x1a8] sm:$0xff]
        %v2048 = vld [vmem:[#allocation16 + $0x1b0] sm:$0xff]
        %v2049 = vld [vmem:[#allocation16 + $0x1b8] sm:$0xff]
        %v2050 = vld [vmem:[#allocation16 + $0x1c0] sm:$0xff]
        %v2051 = vld [vmem:[#allocation16 + $0x1c8] sm:$0xff]
        %v2052 = vld [vmem:[#allocation16 + $0x1d0] sm:$0xff]
        %v2053 = vld [vmem:[#allocation16 + $0x1d8] sm:$0xff]
        %v2054 = vld [vmem:[#allocation16 + $0x1e0] sm:$0xff]
        %v2055 = vld [vmem:[#allocation16 + $0x1e8] sm:$0xff]
        %v2056 = vld [vmem:[#allocation16 + $0x1f0] sm:$0xff]
        %v2057 = vld [vmem:[#allocation16 + $0x1f8] sm:$0xff]
        %v2058 = vld [vmem:[#allocation18] sm:$0x1]
        %v2060 = vperm.slane %v2058, 0
        %2062 = vmatpush.msra.mxu0 %v2009
        %2063 = vmatpush.msra.mxu0 %v2008
        %2064 = vmatpush.msra.mxu0 %v2007
        %2065 = vmatpush.msra.mxu0 %v2006
        %2066 = vmatpush.msra.mxu0 %v2005
        %2067 = vmatpush.msra.mxu0 %v2004
        %2068 = vmatpush.msra.mxu0 %v2003
        %2069 = vmatpush.msra.mxu0 %v2002
        %2070 = vmatpush.msra.mxu0 %v2001
        %2071 = vmatpush.msra.mxu0 %v2000
        %2072 = vmatpush.msra.mxu0 %v1999
        %2073 = vmatpush.msra.mxu0 %v1998
        %2074 = vmatpush.msra.mxu0 %v1997
        %2075 = vmatpush.msra.mxu0 %v1996
        %2076 = vmatpush.msra.mxu0 %v1995
        %2077 = vmatpush.msra.mxu0 %v1994
        %2078 = vmatmul.f32.gmra.mxu0 %v1990
        %v2079 = vpop.f32.mrf.mxu0
        %v2080 = vadd.f32 %v2060, %v2079
        %2081 = vdwg.mxu0
        %2082 = vmatpush.msra.mxu0 %v2025
        %2083 = vmatpush.msra.mxu0 %v2024
        %2084 = vmatpush.msra.mxu0 %v2023
        %2085 = vmatpush.msra.mxu0 %v2022
        %2086 = vmatpush.msra.mxu0 %v2021
        %2087 = vmatpush.msra.mxu0 %v2020
        %2088 = vmatpush.msra.mxu0 %v2019
        %2089 = vmatpush.msra.mxu0 %v2018
        %2090 = vmatpush.msra.mxu0 %v2017
        %2091 = vmatpush.msra.mxu0 %v2016
        %2092 = vmatpush.msra.mxu0 %v2015
        %2093 = vmatpush.msra.mxu0 %v2014
        %2094 = vmatpush.msra.mxu0 %v2013
        %2095 = vmatpush.msra.mxu0 %v2012
        %2096 = vmatpush.msra.mxu0 %v2011
        %2097 = vmatpush.msra.mxu0 %v2010
        %2098 = vmatmul.f32.gmra.mxu0 %v1991
        %v2099 = vpop.f32.mrf.mxu0
        %v2100 = vadd.f32 %v2080, %v2099
        %2101 = vdwg.mxu0
        %2102 = vmatpush.msra.mxu0 %v2041
        %2103 = vmatpush.msra.mxu0 %v2040
        %2104 = vmatpush.msra.mxu0 %v2039
        %2105 = vmatpush.msra.mxu0 %v2038
        %2106 = vmatpush.msra.mxu0 %v2037
        %2107 = vmatpush.msra.mxu0 %v2036
        %2108 = vmatpush.msra.mxu0 %v2035
        %2109 = vmatpush.msra.mxu0 %v2034
        %2110 = vmatpush.msra.mxu0 %v2033
        %2111 = vmatpush.msra.mxu0 %v2032
        %2112 = vmatpush.msra.mxu0 %v2031
        %2113 = vmatpush.msra.mxu0 %v2030
        %2114 = vmatpush.msra.mxu0 %v2029
        %2115 = vmatpush.msra.mxu0 %v2028
        %2116 = vmatpush.msra.mxu0 %v2027
        %2117 = vmatpush.msra.mxu0 %v2026
        %2118 = vmatmul.f32.gmra.mxu0 %v1992
        %v2119 = vpop.f32.mrf.mxu0
        %v2120 = vadd.f32 %v2100, %v2119
        %2121 = vdwg.mxu0
        %2122 = vmatpush.msra.mxu0 %v2057
        %2123 = vmatpush.msra.mxu0 %v2056
        %2124 = vmatpush.msra.mxu0 %v2055
        %2125 = vmatpush.msra.mxu0 %v2054
        %2126 = vmatpush.msra.mxu0 %v2053
        %2127 = vmatpush.msra.mxu0 %v2052
        %2128 = vmatpush.msra.mxu0 %v2051
        %2129 = vmatpush.msra.mxu0 %v2050
        %2130 = vmatpush.msra.mxu0 %v2049
        %2131 = vmatpush.msra.mxu0 %v2048
        %2132 = vmatpush.msra.mxu0 %v2047
        %2133 = vmatpush.msra.mxu0 %v2046
        %2134 = vmatpush.msra.mxu0 %v2045
        %2135 = vmatpush.msra.mxu0 %v2044
        %2136 = vmatpush.msra.mxu0 %v2043
        %2137 = vmatpush.msra.mxu0 %v2042
        %2138 = vmatmul.f32.gmra.mxu0 %v1993
        %v2139 = vpop.f32.mrf.mxu0
        %v2140 = vadd.f32 %v2120, %v2139
        %2141 = vdwg.mxu0
        %v2142 = vadd.f32 %v1835, %v2140
        %v2143 = vld [vmem:[#allocation19] sm:$0x1]
        %v2144 = vld [vmem:[#allocation21] sm:$0x1]
        %2145 = vadd.xlane.f32.xlu0 %v2142
        %v2146 = vpop.xlane.xlu0 %2145
        %v2147 = vmul.f32 %v2146, %v1349
        %v2148 = vsub.f32 %v2142, %v2147
        %v2149 = vmul.f32 %v2148, %v2148
        %2150 = vadd.xlane.f32.xlu0 %v2149
        %v2151 = vpop.xlane.xlu0 %2150
        %v2152 = vmul.f32 %v2151, %v1349
        %v2153 = vadd.f32 %v2152, 1e-05
        %v2154 = vrsqrt.pop %v2153
        %v2155 = vmul.f32 %v2154, %v2153
        %v2156 = vmul.f32 %v2155, %v2154
        %v2157 = vmul.f32 0.5, %v2156
        %v2158 = vsub.f32 1.5, %v2157
        %v2159 = vmul.f32 %v2154, %v2158
        %vm2160 = vweird.f32 %v2153
        %vm2161 = vweird.f32 %v2154
        %vm2162 = vmor %vm2160, %vm2161
        %v2163 = vsel %vm2162, %v2154, %v2159
        %v2164 = vmul.f32 %v2148, %v2163
        %v2166 = vperm.slane %v2143, 0
        %v2168 = vmul.f32 %v2164, %v2166
        %v2170 = vperm.slane %v2144, 0
        %v2172 = vadd.f32 %v2168, %v2170
        %2173 = vst [vmem:[%s898] sm:$0xff] %v2172
        %p2174 = scmp.lt.s32.totalorder %s40, 1
        %s2175 = scalar_select %p2174, %s40, 1
        %s2176 = smul.addr %s2175, 8
        %s2177 = scalar_lea.vmem %s22, %s2176
        // Predicated region
        $region161: #{tiny_transformer_forward.10} parent=107 // pred_check
          %p2178 = pneg %p530
        $region162: #{tiny_transformer_forward.10} parent=107 // pred_check_branch
          %2180 = sbr.rel (%p2178) target = $region164
        $region163: #{tiny_transformer_forward.10} parent=107 // pred_region
          _
        $region164: #{tiny_transformer_forward.10} parent=107 // pred_fallthru
          _
      $region108: #{tiny_transformer_forward.10} parent=5 // pred_fallthru
        _
      %p2181 = scmp.le.s32.totalorder 2, %s35
      // Predicated region
      $region165: #{tiny_transformer_forward.10} parent=5 // pred_check
        %p2182 = pneg %p2181
      $region166: #{tiny_transformer_forward.10} parent=5 // pred_check_branch
        %2184 = sbr.rel (%p2182) target = $region168
      $region167: #{tiny_transformer_forward.10} parent=5 // pred_region
        %s2185 = ssub.s32 %s35, 2
        // Predicated region
        $region169: #{tiny_transformer_forward.10} parent=167 // pred_check
          %p2186 = pneg %p536
        $region170: #{tiny_transformer_forward.10} parent=167 // pred_check_branch
          %2188 = sbr.rel (%p2186) target = $region172
        $region171: #{tiny_transformer_forward.10} parent=167 // pred_region
          %p2189 = scmp.lt.s32.totalorder %s41, 1
          %s2190 = scalar_select %p2189, %s41, 1
          %s2191 = smul.addr %s2190, 8
          %s2192 = scalar_lea.vmem %s22, %s2191
        $region172: #{tiny_transformer_forward.10} parent=167 // pred_fallthru
          _
      $region168: #{tiny_transformer_forward.10} parent=5 // pred_fallthru
        _
    $region6: #{tiny_transformer_forward.10} parent=1 // loop_footer
      %s39 = sadd.s32 1, %s35
    $region7: #{tiny_transformer_forward.10} parent=1 // loop_footer_branch
      %34 = sbr.rel target = $region3
    $region8: #{tiny_transformer_forward.10} parent=1 // loop_exit
      _
    %2193 = vsyncpa [#allocation3], 1
    %s2194 = scalar_lea.sflag [#allocation3], 1
    %2195 = vsyncpa %s2194, 1
    %2196 = vsyncpa [#allocation5], 1
    %2197 = vsyncpa [#allocation8], 1
    %2198 = vsyncpa [#allocation11], 1
    %2199 = vsyncpa [#allocation14], 1
    %2200 = vsyncpa [#allocation17], 1
    %2201 = vsyncpa [#allocation20], 1

// kernel: tiny_transformer_forward.9
$region0: #{tiny_transformer_forward.9}
  #allocation0 [shape = 'u32[]', space=smem, size = 0x4, offset = 0x4, fixed_abs, tag = 'smem constant byte address 0x4 - core index']
  #allocation1 [shape = 'u32[72,128]{1,0:T(1,128)}', space=vmem, size = 0x9000, scoped, tag = 'internal scratch']
  %s0 = inlined_call_operand.vmem [shape: f32[16,128], index: 0, kind: input, shape index: {}]
  %s1 = inlined_call_operand.vmem [shape: f32[16,128], index: 1, kind: input, shape index: {}]
  %s2 = inlined_call_operand.hbm [shape: f32[128,384], index: 2, kind: input, shape index: {}]
  %s3 = inlined_call_operand.vmem [shape: f32[1,384], index: 3, kind: input, shape index: {}]
  %s4 = inlined_call_operand.hbm [shape: f32[128,128], index: 4, kind: input, shape index: {}]
  %s5 = inlined_call_operand.vmem [shape: f32[1,128], index: 5, kind: input, shape index: {}]
  %s6 = inlined_call_operand.vmem [shape: f32[1,128], index: 6, kind: input, shape index: {}]
  %s7 = inlined_call_operand.vmem [shape: f32[1,128], index: 7, kind: input, shape index: {}]
  %s8 = inlined_call_operand.hbm [shape: f32[128,128], index: 8, kind: input, shape index: {}]
  %s9 = inlined_call_operand.vmem [shape: f32[1,128], index: 9, kind: input, shape index: {}]
  %s10 = inlined_call_operand.vmem [shape: f32[128,256], index: 10, kind: input, shape index: {}]
  %s11 = inlined_call_operand.vmem [shape: f32[1,256], index: 11, kind: input, shape index: {}]
  %s12 = inlined_call_operand.hbm [shape: f32[128,128], index: 12, kind: input, shape index: {}]
  %s13 = inlined_call_operand.vmem [shape: f32[1,128], index: 13, kind: input, shape index: {}]
  %s14 = inlined_call_operand.vmem [shape: f32[1,128], index: 14, kind: input, shape index: {}]
  %s15 = inlined_call_operand.vmem [shape: f32[1,128], index: 15, kind: input, shape index: {}]
  %s16 = inlined_call_operand.hbm [shape: f32[128,512], index: 16, kind: input, shape index: {}]
  %s17 = inlined_call_operand.vmem [shape: f32[1,512], index: 17, kind: input, shape index: {}]
  %s18 = inlined_call_operand.hbm [shape: f32[512,128], index: 18, kind: input, shape index: {}]
  %s19 = inlined_call_operand.vmem [shape: f32[1,128], index: 19, kind: input, shape index: {}]
  %s20 = inlined_call_operand.vmem [shape: f32[1,128], index: 20, kind: input, shape index: {}]
  %s21 = inlined_call_operand.vmem [shape: f32[1,128], index: 21, kind: input, shape index: {}]
  %s22 = inlined_call_operand.vmem [shape: f32[16,128], index: 22, kind: output, shape index: {}]
  %s23 = sld [smem:[#allocation0]]
  $region145: #{tiny_transformer_forward.9} parent=0
    _
  %s25 = ssub.s32 1, %s23
  %s26 = scalar_select 0, %s25, %s23
  $region1: #{tiny_transformer_forward.9} parent=0
    #allocation2 [shape = 'u8[196608]{0}', space=vmem, size = 0x30000, scoped, tag = 'input window, operand 2, single buffered']
    #allocation3 [shape = 's32[2]{0}', space=sflag, size = 0x8, scoped, tag = 'scoped memory for tiny_transformer_forward.9']
    #allocation4 [shape = 'u8[65536]{0}', space=vmem, size = 0x10000, scoped, tag = 'input window, operand 4, single buffered']
    #allocation5 [shape = 's32[1]{0}', space=sflag, size = 0x4, scoped, tag = 'scoped memory for tiny_transformer_forward.9']
    #allocation6 [shape = 'u8[65536]{0}', space=vmem, size = 0x10000, scoped, tag = 'input window, operand 8, single buffered']
    #allocation7 [shape = 'u8[65536]{0}', space=vmem, size = 0x10000, scoped, tag = 'input window, operand 12, single buffered']
    #allocation8 [shape = 's32[1]{0}', space=sflag, size = 0x4, scoped, tag = 'scoped memory for tiny_transformer_forward.9']
    #allocation9 [shape = 'u8[262144]{0}', space=vmem, size = 0x40000, scoped, tag = 'input window, operand 16, single buffered']
    #allocation10 [shape = 'u8[262144]{0}', space=vmem, size = 0x40000, scoped, tag = 'input window, operand 18, single buffered']
    #allocation11 [shape = 's32[1]{0}', space=sflag, size = 0x4, scoped, tag = 'scoped memory for tiny_transformer_forward.9']
    %27 = vsyncpa [#allocation3], 0
    %28 = vsyncpa [#allocation5], 0
    %29 = vsyncpa [#allocation8], 0
    %30 = vsyncpa [#allocation11], 0
    loop: start=0, step=1, limit=4
    $region2: #{tiny_transformer_forward.9} parent=1 // loop_pre_header
      _
    $region3: #{tiny_transformer_forward.9} parent=1 // loop_header
      %s32 = sphi 0, %s36
      %p33 = scmp.ge.s32.totalorder %s32, 4
      %s42 = sphi 0, %s44
      %s45 = sphi 0, %s42
      %s46 = sphi 0, %s45
      %s62 = sphi 0, %s46
      %s68 = sphi 0, %s70
      %s71 = sphi 0, %s68
      %s72 = sphi 0, %s71
      %s88 = sphi 0, %s72
      %s92 = sphi 0, %s92
      %s94 = sphi 0, %s92
      %s95 = sphi 0, %s94
      %s109 = sphi 0, %s95
      %s113 = sphi 0, %s113
      %s115 = sphi 0, %s113
      %s116 = sphi 0, %s115
      %s130 = sphi 0, %s116
      %s134 = sphi 0, %s134
      %s136 = sphi 0, %s134
      %s137 = sphi 0, %s136
      %s151 = sphi 0, %s137
      %s155 = sphi 0, %s155
      %s157 = sphi 0, %s155
      %s158 = sphi 0, %s157
      %s172 = sphi 0, %s158
      %s176 = sphi 0, %s176
      %s178 = sphi 0, %s176
      %s179 = sphi 0, %s178
      %s193 = sphi 0, %s179
      %s197 = sphi 0, %s197
      %s199 = sphi 0, %s197
      %s200 = sphi 0, %s199
      %s214 = sphi 0, %s200
      %s218 = sphi 0, %s218
      %s220 = sphi 0, %s218
      %s221 = sphi 0, %s220
      %s235 = sphi 0, %s221
      %s239 = sphi 0, %s239
      %s241 = sphi 0, %s239
      %s242 = sphi 0, %s241
      %s256 = sphi 0, %s242
      %s260 = sphi 0, %s260
      %s262 = sphi 0, %s260
      %s263 = sphi 0, %s262
      %s277 = sphi 0, %s263
      %s281 = sphi 0, %s281
      %s283 = sphi 0, %s281
      %s284 = sphi 0, %s283
      %s298 = sphi 0, %s284
      %s302 = sphi 0, %s302
      %s304 = sphi 0, %s302
      %s305 = sphi 0, %s304
      %s319 = sphi 0, %s305
      %s323 = sphi 0, %s323
      %s325 = sphi 0, %s323
      %s326 = sphi 0, %s325
      %s340 = sphi 0, %s326
      %s344 = sphi 0, %s344
      %s346 = sphi 0, %s344
      %s347 = sphi 0, %s346
      %s361 = sphi 0, %s347
      %s365 = sphi 0, %s365
      %s367 = sphi 0, %s365
      %s368 = sphi 0, %s367
      %s382 = sphi 0, %s368
      %s386 = sphi 0, %s386
      %s388 = sphi 0, %s386
      %s389 = sphi 0, %s388
      %s403 = sphi 0, %s389
      %s407 = sphi 0, %s407
      %s409 = sphi 0, %s407
      %s410 = sphi 0, %s409
      %s424 = sphi 0, %s410
      %s428 = sphi 0, %s428
      %s430 = sphi 0, %s428
      %s431 = sphi 0, %s430
      %s445 = sphi 0, %s431
      %s449 = sphi 0, %s449
      %s451 = sphi 0, %s449
      %s452 = sphi 0, %s451
      %s466 = sphi 0, %s452
      %s470 = sphi 0, %s470
      %s472 = sphi 0, %s470
      %s473 = sphi 0, %s472
      %s487 = sphi 0, %s473
      %s491 = sphi 0, %s491
      %s493 = sphi 0, %s491
      %s494 = sphi 0, %s493
      %s508 = sphi 0, %s494
      %s514 = sphi 0, %s516
      %s517 = sphi 0, %s514
      %s518 = sphi 0, %s517
      %s534 = sphi 0, %s518
    $region4: #{tiny_transformer_forward.9} parent=1 // loop_header_branch
      %35 = sbr.rel (%p33) target = $region8
    $region5: #{tiny_transformer_forward.9} parent=1 // loop_body
      %s37 = ssub.s32 %s32, 1
      %s38 = ssub.s32 %s32, 2
      %s39 = sadd.s32 %s32, 1
      %s40 = ssub.s32 %s32, %s39
      %p41 = scmp.eq.s32.totalorder %s40, 0
      %s43 = sadd.s32 %s42, 1
      %s44 = scalar_select %p41, %s42, %s43
      %p47 = pneg %p41
      %p48 = scmp.eq.s32.totalorder %s32, 1
      %p49 = por %p47, %p48
      %p50 = scmp.ne.s32.totalorder %s42, %s45
      %p51 = scmp.eq.s32.totalorder %s32, 0
      %p52 = por %p50, %p51
      %p53 = scmp.ne.s32.totalorder %s42, %s45
      %p54 = scmp.eq.s32.totalorder %s37, 1
      %p55 = por %p53, %p54
      %p56 = scmp.ne.s32.totalorder %s45, %s46
      %p57 = scmp.eq.s32.totalorder %s37, 0
      %p58 = por %p56, %p57
      %p59 = scmp.ne.s32.totalorder %s45, %s46
      %p60 = scmp.eq.s32.totalorder %s38, 1
      %p61 = por %p59, %p60
      %p63 = scmp.ne.s32.totalorder %s46, %s62
      %p64 = scmp.eq.s32.totalorder %s38, 0
      %p65 = por %p63, %p64
      %s66 = ssub.s32 %s32, %s39
      %p67 = scmp.eq.s32.totalorder %s66, 0
      %s69 = sadd.s32 %s68, 1
      %s70 = scalar_select %p67, %s68, %s69
      %p73 = pneg %p67
      %p74 = scmp.eq.s32.totalorder %s32, 1
      %p75 = por %p73, %p74
      %p76 = scmp.ne.s32.totalorder %s68, %s71
      %p77 = scmp.eq.s32.totalorder %s32, 0
      %p78 = por %p76, %p77
      %p79 = scmp.ne.s32.totalorder %s68, %s71
      %p80 = scmp.eq.s32.totalorder %s37, 1
      %p81 = por %p79, %p80
      %p82 = scmp.ne.s32.totalorder %s71, %s72
      %p83 = scmp.eq.s32.totalorder %s37, 0
      %p84 = por %p82, %p83
      %p85 = scmp.ne.s32.totalorder %s71, %s72
      %p86 = scmp.eq.s32.totalorder %s38, 1
      %p87 = por %p85, %p86
      %p89 = scmp.ne.s32.totalorder %s72, %s88
      %p90 = scmp.eq.s32.totalorder %s38, 0
      %p91 = por %p89, %p90
      %s93 = sadd.s32 %s92, 1
      %p96 = scmp.eq.s32.totalorder %s32, 1
      %p97 = scmp.ne.s32.totalorder %s92, %s94
      %p98 = scmp.eq.s32.totalorder %s32, 0
      %p99 = por %p97, %p98
      %p100 = scmp.ne.s32.totalorder %s92, %s94
      %p101 = scmp.eq.s32.totalorder %s37, 1
      %p102 = por %p100, %p101
      %p103 = scmp.ne.s32.totalorder %s94, %s95
      %p104 = scmp.eq.s32.totalorder %s37, 0
      %p105 = por %p103, %p104
      %p106 = scmp.ne.s32.totalorder %s94, %s95
      %p107 = scmp.eq.s32.totalorder %s38, 1
      %p108 = por %p106, %p107
      %p110 = scmp.ne.s32.totalorder %s95, %s109
      %p111 = scmp.eq.s32.totalorder %s38, 0
      %p112 = por %p110, %p111
      %s114 = sadd.s32 %s113, 1
      %p117 = scmp.eq.s32.totalorder %s32, 1
      %p118 = scmp.ne.s32.totalorder %s113, %s115
      %p119 = scmp.eq.s32.totalorder %s32, 0
      %p120 = por %p118, %p119
      %p121 = scmp.ne.s32.totalorder %s113, %s115
      %p122 = scmp.eq.s32.totalorder %s37, 1
      %p123 = por %p121, %p122
      %p124 = scmp.ne.s32.totalorder %s115, %s116
      %p125 = scmp.eq.s32.totalorder %s37, 0
      %p126 = por %p124, %p125
      %p127 = scmp.ne.s32.totalorder %s115, %s116
      %p128 = scmp.eq.s32.totalorder %s38, 1
      %p129 = por %p127, %p128
      %p131 = scmp.ne.s32.totalorder %s116, %s130
      %p132 = scmp.eq.s32.totalorder %s38, 0
      %p133 = por %p131, %p132
      %s135 = sadd.s32 %s134, 1
      %p138 = scmp.eq.s32.totalorder %s32, 1
      %p139 = scmp.ne.s32.totalorder %s134, %s136
      %p140 = scmp.eq.s32.totalorder %s32, 0
      %p141 = por %p139, %p140
      %p142 = scmp.ne.s32.totalorder %s134, %s136
      %p143 = scmp.eq.s32.totalorder %s37, 1
      %p144 = por %p142, %p143
      %p145 = scmp.ne.s32.totalorder %s136, %s137
      %p146 = scmp.eq.s32.totalorder %s37, 0
      %p147 = por %p145, %p146
      %p148 = scmp.ne.s32.totalorder %s136, %s137
      %p149 = scmp.eq.s32.totalorder %s38, 1
      %p150 = por %p148, %p149
      %p152 = scmp.ne.s32.totalorder %s137, %s151
      %p153 = scmp.eq.s32.totalorder %s38, 0
      %p154 = por %p152, %p153
      %s156 = sadd.s32 %s155, 1
      %p159 = scmp.eq.s32.totalorder %s32, 1
      %p160 = scmp.ne.s32.totalorder %s155, %s157
      %p161 = scmp.eq.s32.totalorder %s32, 0
      %p162 = por %p160, %p161
      %p163 = scmp.ne.s32.totalorder %s155, %s157
      %p164 = scmp.eq.s32.totalorder %s37, 1
      %p165 = por %p163, %p164
      %p166 = scmp.ne.s32.totalorder %s157, %s158
      %p167 = scmp.eq.s32.totalorder %s37, 0
      %p168 = por %p166, %p167
      %p169 = scmp.ne.s32.totalorder %s157, %s158
      %p170 = scmp.eq.s32.totalorder %s38, 1
      %p171 = por %p169, %p170
      %p173 = scmp.ne.s32.totalorder %s158, %s172
      %p174 = scmp.eq.s32.totalorder %s38, 0
      %p175 = por %p173, %p174
      %s177 = sadd.s32 %s176, 1
      %p180 = scmp.eq.s32.totalorder %s32, 1
      %p181 = scmp.ne.s32.totalorder %s176, %s178
      %p182 = scmp.eq.s32.totalorder %s32, 0
      %p183 = por %p181, %p182
      %p184 = scmp.ne.s32.totalorder %s176, %s178
      %p185 = scmp.eq.s32.totalorder %s37, 1
      %p186 = por %p184, %p185
      %p187 = scmp.ne.s32.totalorder %s178, %s179
      %p188 = scmp.eq.s32.totalorder %s37, 0
      %p189 = por %p187, %p188
      %p190 = scmp.ne.s32.totalorder %s178, %s179
      %p191 = scmp.eq.s32.totalorder %s38, 1
      %p192 = por %p190, %p191
      %p194 = scmp.ne.s32.totalorder %s179, %s193
      %p195 = scmp.eq.s32.totalorder %s38, 0
      %p196 = por %p194, %p195
      %s198 = sadd.s32 %s197, 1
      %p201 = scmp.eq.s32.totalorder %s32, 1
      %p202 = scmp.ne.s32.totalorder %s197, %s199
      %p203 = scmp.eq.s32.totalorder %s32, 0
      %p204 = por %p202, %p203
      %p205 = scmp.ne.s32.totalorder %s197, %s199
      %p206 = scmp.eq.s32.totalorder %s37, 1
      %p207 = por %p205, %p206
      %p208 = scmp.ne.s32.totalorder %s199, %s200
      %p209 = scmp.eq.s32.totalorder %s37, 0
      %p210 = por %p208, %p209
      %p211 = scmp.ne.s32.totalorder %s199, %s200
      %p212 = scmp.eq.s32.totalorder %s38, 1
      %p213 = por %p211, %p212
      %p215 = scmp.ne.s32.totalorder %s200, %s214
      %p216 = scmp.eq.s32.totalorder %s38, 0
      %p217 = por %p215, %p216
      %s219 = sadd.s32 %s218, 1
      %p222 = scmp.eq.s32.totalorder %s32, 1
      %p223 = scmp.ne.s32.totalorder %s218, %s220
      %p224 = scmp.eq.s32.totalorder %s32, 0
      %p225 = por %p223, %p224
      %p226 = scmp.ne.s32.totalorder %s218, %s220
      %p227 = scmp.eq.s32.totalorder %s37, 1
      %p228 = por %p226, %p227
      %p229 = scmp.ne.s32.totalorder %s220, %s221
      %p230 = scmp.eq.s32.totalorder %s37, 0
      %p231 = por %p229, %p230
      %p232 = scmp.ne.s32.totalorder %s220, %s221
      %p233 = scmp.eq.s32.totalorder %s38, 1
      %p234 = por %p232, %p233
      %p236 = scmp.ne.s32.totalorder %s221, %s235
      %p237 = scmp.eq.s32.totalorder %s38, 0
      %p238 = por %p236, %p237
      %s240 = sadd.s32 %s239, 1
      %p243 = scmp.eq.s32.totalorder %s32, 1
      %p244 = scmp.ne.s32.totalorder %s239, %s241
      %p245 = scmp.eq.s32.totalorder %s32, 0
      %p246 = por %p244, %p245
      %p247 = scmp.ne.s32.totalorder %s239, %s241
      %p248 = scmp.eq.s32.totalorder %s37, 1
      %p249 = por %p247, %p248
      %p250 = scmp.ne.s32.totalorder %s241, %s242
      %p251 = scmp.eq.s32.totalorder %s37, 0
      %p252 = por %p250, %p251
      %p253 = scmp.ne.s32.totalorder %s241, %s242
      %p254 = scmp.eq.s32.totalorder %s38, 1
      %p255 = por %p253, %p254
      %p257 = scmp.ne.s32.totalorder %s242, %s256
      %p258 = scmp.eq.s32.totalorder %s38, 0
      %p259 = por %p257, %p258
      %s261 = sadd.s32 %s260, 1
      %p264 = scmp.eq.s32.totalorder %s32, 1
      %p265 = scmp.ne.s32.totalorder %s260, %s262
      %p266 = scmp.eq.s32.totalorder %s32, 0
      %p267 = por %p265, %p266
      %p268 = scmp.ne.s32.totalorder %s260, %s262
      %p269 = scmp.eq.s32.totalorder %s37, 1
      %p270 = por %p268, %p269
      %p271 = scmp.ne.s32.totalorder %s262, %s263
      %p272 = scmp.eq.s32.totalorder %s37, 0
      %p273 = por %p271, %p272
      %p274 = scmp.ne.s32.totalorder %s262, %s263
      %p275 = scmp.eq.s32.totalorder %s38, 1
      %p276 = por %p274, %p275
      %p278 = scmp.ne.s32.totalorder %s263, %s277
      %p279 = scmp.eq.s32.totalorder %s38, 0
      %p280 = por %p278, %p279
      %s282 = sadd.s32 %s281, 1
      %p285 = scmp.eq.s32.totalorder %s32, 1
      %p286 = scmp.ne.s32.totalorder %s281, %s283
      %p287 = scmp.eq.s32.totalorder %s32, 0
      %p288 = por %p286, %p287
      %p289 = scmp.ne.s32.totalorder %s281, %s283
      %p290 = scmp.eq.s32.totalorder %s37, 1
      %p291 = por %p289, %p290
      %p292 = scmp.ne.s32.totalorder %s283, %s284
      %p293 = scmp.eq.s32.totalorder %s37, 0
      %p294 = por %p292, %p293
      %p295 = scmp.ne.s32.totalorder %s283, %s284
      %p296 = scmp.eq.s32.totalorder %s38, 1
      %p297 = por %p295, %p296
      %p299 = scmp.ne.s32.totalorder %s284, %s298
      %p300 = scmp.eq.s32.totalorder %s38, 0
      %p301 = por %p299, %p300
      %s303 = sadd.s32 %s302, 1
      %p306 = scmp.eq.s32.totalorder %s32, 1
      %p307 = scmp.ne.s32.totalorder %s302, %s304
      %p308 = scmp.eq.s32.totalorder %s32, 0
      %p309 = por %p307, %p308
      %p310 = scmp.ne.s32.totalorder %s302, %s304
      %p311 = scmp.eq.s32.totalorder %s37, 1
      %p312 = por %p310, %p311
      %p313 = scmp.ne.s32.totalorder %s304, %s305
      %p314 = scmp.eq.s32.totalorder %s37, 0
      %p315 = por %p313, %p314
      %p316 = scmp.ne.s32.totalorder %s304, %s305
      %p317 = scmp.eq.s32.totalorder %s38, 1
      %p318 = por %p316, %p317
      %p320 = scmp.ne.s32.totalorder %s305, %s319
      %p321 = scmp.eq.s32.totalorder %s38, 0
      %p322 = por %p320, %p321
      %s324 = sadd.s32 %s323, 1
      %p327 = scmp.eq.s32.totalorder %s32, 1
      %p328 = scmp.ne.s32.totalorder %s323, %s325
      %p329 = scmp.eq.s32.totalorder %s32, 0
      %p330 = por %p328, %p329
      %p331 = scmp.ne.s32.totalorder %s323, %s325
      %p332 = scmp.eq.s32.totalorder %s37, 1
      %p333 = por %p331, %p332
      %p334 = scmp.ne.s32.totalorder %s325, %s326
      %p335 = scmp.eq.s32.totalorder %s37, 0
      %p336 = por %p334, %p335
      %p337 = scmp.ne.s32.totalorder %s325, %s326
      %p338 = scmp.eq.s32.totalorder %s38, 1
      %p339 = por %p337, %p338
      %p341 = scmp.ne.s32.totalorder %s326, %s340
      %p342 = scmp.eq.s32.totalorder %s38, 0
      %p343 = por %p341, %p342
      %s345 = sadd.s32 %s344, 1
      %p348 = scmp.eq.s32.totalorder %s32, 1
      %p349 = scmp.ne.s32.totalorder %s344, %s346
      %p350 = scmp.eq.s32.totalorder %s32, 0
      %p351 = por %p349, %p350
      %p352 = scmp.ne.s32.totalorder %s344, %s346
      %p353 = scmp.eq.s32.totalorder %s37, 1
      %p354 = por %p352, %p353
      %p355 = scmp.ne.s32.totalorder %s346, %s347
      %p356 = scmp.eq.s32.totalorder %s37, 0
      %p357 = por %p355, %p356
      %p358 = scmp.ne.s32.totalorder %s346, %s347
      %p359 = scmp.eq.s32.totalorder %s38, 1
      %p360 = por %p358, %p359
      %p362 = scmp.ne.s32.totalorder %s347, %s361
      %p363 = scmp.eq.s32.totalorder %s38, 0
      %p364 = por %p362, %p363
      %s366 = sadd.s32 %s365, 1
      %p369 = scmp.eq.s32.totalorder %s32, 1
      %p370 = scmp.ne.s32.totalorder %s365, %s367
      %p371 = scmp.eq.s32.totalorder %s32, 0
      %p372 = por %p370, %p371
      %p373 = scmp.ne.s32.totalorder %s365, %s367
      %p374 = scmp.eq.s32.totalorder %s37, 1
      %p375 = por %p373, %p374
      %p376 = scmp.ne.s32.totalorder %s367, %s368
      %p377 = scmp.eq.s32.totalorder %s37, 0
      %p378 = por %p376, %p377
      %p379 = scmp.ne.s32.totalorder %s367, %s368
      %p380 = scmp.eq.s32.totalorder %s38, 1
      %p381 = por %p379, %p380
      %p383 = scmp.ne.s32.totalorder %s368, %s382
      %p384 = scmp.eq.s32.totalorder %s38, 0
      %p385 = por %p383, %p384
      %s387 = sadd.s32 %s386, 1
      %p390 = scmp.eq.s32.totalorder %s32, 1
      %p391 = scmp.ne.s32.totalorder %s386, %s388
      %p392 = scmp.eq.s32.totalorder %s32, 0
      %p393 = por %p391, %p392
      %p394 = scmp.ne.s32.totalorder %s386, %s388
      %p395 = scmp.eq.s32.totalorder %s37, 1
      %p396 = por %p394, %p395
      %p397 = scmp.ne.s32.totalorder %s388, %s389
      %p398 = scmp.eq.s32.totalorder %s37, 0
      %p399 = por %p397, %p398
      %p400 = scmp.ne.s32.totalorder %s388, %s389
      %p401 = scmp.eq.s32.totalorder %s38, 1
      %p402 = por %p400, %p401
      %p404 = scmp.ne.s32.totalorder %s389, %s403
      %p405 = scmp.eq.s32.totalorder %s38, 0
      %p406 = por %p404, %p405
      %s408 = sadd.s32 %s407, 1
      %p411 = scmp.eq.s32.totalorder %s32, 1
      %p412 = scmp.ne.s32.totalorder %s407, %s409
      %p413 = scmp.eq.s32.totalorder %s32, 0
      %p414 = por %p412, %p413
      %p415 = scmp.ne.s32.totalorder %s407, %s409
      %p416 = scmp.eq.s32.totalorder %s37, 1
      %p417 = por %p415, %p416
      %p418 = scmp.ne.s32.totalorder %s409, %s410
      %p419 = scmp.eq.s32.totalorder %s37, 0
      %p420 = por %p418, %p419
      %p421 = scmp.ne.s32.totalorder %s409, %s410
      %p422 = scmp.eq.s32.totalorder %s38, 1
      %p423 = por %p421, %p422
      %p425 = scmp.ne.s32.totalorder %s410, %s424
      %p426 = scmp.eq.s32.totalorder %s38, 0
      %p427 = por %p425, %p426
      %s429 = sadd.s32 %s428, 1
      %p432 = scmp.eq.s32.totalorder %s32, 1
      %p433 = scmp.ne.s32.totalorder %s428, %s430
      %p434 = scmp.eq.s32.totalorder %s32, 0
      %p435 = por %p433, %p434
      %p436 = scmp.ne.s32.totalorder %s428, %s430
      %p437 = scmp.eq.s32.totalorder %s37, 1
      %p438 = por %p436, %p437
      %p439 = scmp.ne.s32.totalorder %s430, %s431
      %p440 = scmp.eq.s32.totalorder %s37, 0
      %p441 = por %p439, %p440
      %p442 = scmp.ne.s32.totalorder %s430, %s431
      %p443 = scmp.eq.s32.totalorder %s38, 1
      %p444 = por %p442, %p443
      %p446 = scmp.ne.s32.totalorder %s431, %s445
      %p447 = scmp.eq.s32.totalorder %s38, 0
      %p448 = por %p446, %p447
      %s450 = sadd.s32 %s449, 1
      %p453 = scmp.eq.s32.totalorder %s32, 1
      %p454 = scmp.ne.s32.totalorder %s449, %s451
      %p455 = scmp.eq.s32.totalorder %s32, 0
      %p456 = por %p454, %p455
      %p457 = scmp.ne.s32.totalorder %s449, %s451
      %p458 = scmp.eq.s32.totalorder %s37, 1
      %p459 = por %p457, %p458
      %p460 = scmp.ne.s32.totalorder %s451, %s452
      %p461 = scmp.eq.s32.totalorder %s37, 0
      %p462 = por %p460, %p461
      %p463 = scmp.ne.s32.totalorder %s451, %s452
      %p464 = scmp.eq.s32.totalorder %s38, 1
      %p465 = por %p463, %p464
      %p467 = scmp.ne.s32.totalorder %s452, %s466
      %p468 = scmp.eq.s32.totalorder %s38, 0
      %p469 = por %p467, %p468
      %s471 = sadd.s32 %s470, 1
      %p474 = scmp.eq.s32.totalorder %s32, 1
      %p475 = scmp.ne.s32.totalorder %s470, %s472
      %p476 = scmp.eq.s32.totalorder %s32, 0
      %p477 = por %p475, %p476
      %p478 = scmp.ne.s32.totalorder %s470, %s472
      %p479 = scmp.eq.s32.totalorder %s37, 1
      %p480 = por %p478, %p479
      %p481 = scmp.ne.s32.totalorder %s472, %s473
      %p482 = scmp.eq.s32.totalorder %s37, 0
      %p483 = por %p481, %p482
      %p484 = scmp.ne.s32.totalorder %s472, %s473
      %p485 = scmp.eq.s32.totalorder %s38, 1
      %p486 = por %p484, %p485
      %p488 = scmp.ne.s32.totalorder %s473, %s487
      %p489 = scmp.eq.s32.totalorder %s38, 0
      %p490 = por %p488, %p489
      %s492 = sadd.s32 %s491, 1
      %p495 = scmp.eq.s32.totalorder %s32, 1
      %p496 = scmp.ne.s32.totalorder %s491, %s493
      %p497 = scmp.eq.s32.totalorder %s32, 0
      %p498 = por %p496, %p497
      %p499 = scmp.ne.s32.totalorder %s491, %s493
      %p500 = scmp.eq.s32.totalorder %s37, 1
      %p501 = por %p499, %p500
      %p502 = scmp.ne.s32.totalorder %s493, %s494
      %p503 = scmp.eq.s32.totalorder %s37, 0
      %p504 = por %p502, %p503
      %p505 = scmp.ne.s32.totalorder %s493, %s494
      %p506 = scmp.eq.s32.totalorder %s38, 1
      %p507 = por %p505, %p506
      %p509 = scmp.ne.s32.totalorder %s494, %s508
      %p510 = scmp.eq.s32.totalorder %s38, 0
      %p511 = por %p509, %p510
      %s512 = ssub.s32 %s32, %s39
      %p513 = scmp.eq.s32.totalorder %s512, 0
      %s515 = sadd.s32 %s514, 1
      %s516 = scalar_select %p513, %s514, %s515
      %p519 = pneg %p513
      %p520 = scmp.eq.s32.totalorder %s32, 1
      %p521 = por %p519, %p520
      %p522 = scmp.ne.s32.totalorder %s514, %s517
      %p523 = scmp.eq.s32.totalorder %s32, 0
      %p524 = por %p522, %p523
      %p525 = scmp.ne.s32.totalorder %s514, %s517
      %p526 = scmp.eq.s32.totalorder %s37, 1
      %p527 = por %p525, %p526
      %p528 = scmp.ne.s32.totalorder %s517, %s518
      %p529 = scmp.eq.s32.totalorder %s37, 0
      %p530 = por %p528, %p529
      %p531 = scmp.ne.s32.totalorder %s517, %s518
      %p532 = scmp.eq.s32.totalorder %s38, 1
      %p533 = por %p531, %p532
      %p535 = scmp.ne.s32.totalorder %s518, %s534
      %p536 = scmp.eq.s32.totalorder %s38, 0
      %p537 = por %p535, %p536
      %p538 = scmp.le.s32.totalorder 1, %s32
      %p539 = scmp.lt.s32.totalorder %s32, 3
      %p540 = pnand %p538, %p539
      %p541 = pneg %p540
      // Predicated region
      $region9: #{tiny_transformer_forward.9} parent=5 // pred_check
        _
      $region10: #{tiny_transformer_forward.9} parent=5 // pred_check_branch
        %543 = sbr.rel (%p540) target = $region12
      $region11: #{tiny_transformer_forward.9} parent=5 // pred_region
        %s544 = ssub.s32 %s32, 1
        // Predicated region
        $region13: #{tiny_transformer_forward.9} parent=11 // pred_check
          %p545 = pneg %p105
        $region14: #{tiny_transformer_forward.9} parent=11 // pred_check_branch
          %547 = sbr.rel (%p545) target = $region16
        $region15: #{tiny_transformer_forward.9} parent=11 // pred_region
          %549 = vsyncadd [#allocation3], 0
          %s550 = sshll.u32 %s2, 4
          %s551 = int_to_ptr.hbm [resolvable:$true] %s550
          %s552 = sshll.u32 [#allocation2], 4
          %s553 = int_to_ptr.vmem [resolvable:$true] %s552
          %558 = dma.hbm_to_vmem [thread:$0]  %s551, 6144, %s553, [#allocation3], 384, 384, 24
        $region16: #{tiny_transformer_forward.9} parent=11 // pred_fallthru
          _
        // Predicated region
        $region17: #{tiny_transformer_forward.9} parent=11 // pred_check
          %p559 = pneg %p126
        $region18: #{tiny_transformer_forward.9} parent=11 // pred_check_branch
          %561 = sbr.rel (%p559) target = $region20
        $region19: #{tiny_transformer_forward.9} parent=11 // pred_region
          _
        $region20: #{tiny_transformer_forward.9} parent=11 // pred_fallthru
          _
        // Predicated region
        $region21: #{tiny_transformer_forward.9} parent=11 // pred_check
          %p562 = pneg %p147
        $region22: #{tiny_transformer_forward.9} parent=11 // pred_check_branch
          %564 = sbr.rel (%p562) target = $region24
        $region23: #{tiny_transformer_forward.9} parent=11 // pred_region
          %566 = vsyncadd [#allocation5], 0
          %s567 = sshll.u32 %s4, 4
          %s568 = int_to_ptr.hbm [resolvable:$true] %s567
          %s569 = sshll.u32 [#allocation4], 4
          %s570 = int_to_ptr.vmem [resolvable:$true] %s569
          %575 = dma.hbm_to_vmem [thread:$0]  %s568, 2048, %s570, [#allocation5], 128, 128, 8
        $region24: #{tiny_transformer_forward.9} parent=11 // pred_fallthru
          _
        // Predicated region
        $region25: #{tiny_transformer_forward.9} parent=11 // pred_check
          %p576 = pneg %p168
        $region26: #{tiny_transformer_forward.9} parent=11 // pred_check_branch
          %578 = sbr.rel (%p576) target = $region28
        $region27: #{tiny_transformer_forward.9} parent=11 // pred_region
          _
        $region28: #{tiny_transformer_forward.9} parent=11 // pred_fallthru
          _
        // Predicated region
        $region29: #{tiny_transformer_forward.9} parent=11 // pred_check
          %p579 = pneg %p189
        $region30: #{tiny_transformer_forward.9} parent=11 // pred_check_branch
          %581 = sbr.rel (%p579) target = $region32
        $region31: #{tiny_transformer_forward.9} parent=11 // pred_region
          _
        $region32: #{tiny_transformer_forward.9} parent=11 // pred_fallthru
          _
        // Predicated region
        $region33: #{tiny_transformer_forward.9} parent=11 // pred_check
          %p582 = pneg %p210
        $region34: #{tiny_transformer_forward.9} parent=11 // pred_check_branch
          %584 = sbr.rel (%p582) target = $region36
        $region35: #{tiny_transformer_forward.9} parent=11 // pred_region
          _
        $region36: #{tiny_transformer_forward.9} parent=11 // pred_fallthru
          _
        // Predicated region
        $region37: #{tiny_transformer_forward.9} parent=11 // pred_check
          %p585 = pneg %p231
        $region38: #{tiny_transformer_forward.9} parent=11 // pred_check_branch
          %587 = sbr.rel (%p585) target = $region40
        $region39: #{tiny_transformer_forward.9} parent=11 // pred_region
          %589 = vsyncadd [#allocation5], 0
          %s590 = sshll.u32 %s8, 4
          %s591 = int_to_ptr.hbm [resolvable:$true] %s590
          %s592 = sshll.u32 [#allocation6], 4
          %s593 = int_to_ptr.vmem [resolvable:$true] %s592
          %598 = dma.hbm_to_vmem [thread:$0]  %s591, 2048, %s593, [#allocation5], 128, 128, 8
        $region40: #{tiny_transformer_forward.9} parent=11 // pred_fallthru
          _
        // Predicated region
        $region41: #{tiny_transformer_forward.9} parent=11 // pred_check
          %p599 = pneg %p252
        $region42: #{tiny_transformer_forward.9} parent=11 // pred_check_branch
          %601 = sbr.rel (%p599) target = $region44
        $region43: #{tiny_transformer_forward.9} parent=11 // pred_region
          _
        $region44: #{tiny_transformer_forward.9} parent=11 // pred_fallthru
          _
        // Predicated region
        $region45: #{tiny_transformer_forward.9} parent=11 // pred_check
          %p602 = pneg %p273
        $region46: #{tiny_transformer_forward.9} parent=11 // pred_check_branch
          %604 = sbr.rel (%p602) target = $region48
        $region47: #{tiny_transformer_forward.9} parent=11 // pred_region
          _
        $region48: #{tiny_transformer_forward.9} parent=11 // pred_fallthru
          _
        // Predicated region
        $region49: #{tiny_transformer_forward.9} parent=11 // pred_check
          %p605 = pneg %p294
        $region50: #{tiny_transformer_forward.9} parent=11 // pred_check_branch
          %607 = sbr.rel (%p605) target = $region52
        $region51: #{tiny_transformer_forward.9} parent=11 // pred_region
          _
        $region52: #{tiny_transformer_forward.9} parent=11 // pred_fallthru
          _
        // Predicated region
        $region53: #{tiny_transformer_forward.9} parent=11 // pred_check
          %p608 = pneg %p315
        $region54: #{tiny_transformer_forward.9} parent=11 // pred_check_branch
          %610 = sbr.rel (%p608) target = $region56
        $region55: #{tiny_transformer_forward.9} parent=11 // pred_region
          %612 = vsyncadd [#allocation8], 0
          %s613 = sshll.u32 %s12, 4
          %s614 = int_to_ptr.hbm [resolvable:$true] %s613
          %s615 = sshll.u32 [#allocation7], 4
          %s616 = int_to_ptr.vmem [resolvable:$true] %s615
          %621 = dma.hbm_to_vmem [thread:$0]  %s614, 2048, %s616, [#allocation8], 128, 128, 8
        $region56: #{tiny_transformer_forward.9} parent=11 // pred_fallthru
          _
        // Predicated region
        $region57: #{tiny_transformer_forward.9} parent=11 // pred_check
          %p622 = pneg %p336
        $region58: #{tiny_transformer_forward.9} parent=11 // pred_check_branch
          %624 = sbr.rel (%p622) target = $region60
        $region59: #{tiny_transformer_forward.9} parent=11 // pred_region
          _
        $region60: #{tiny_transformer_forward.9} parent=11 // pred_fallthru
          _
        // Predicated region
        $region61: #{tiny_transformer_forward.9} parent=11 // pred_check
          %p625 = pneg %p357
        $region62: #{tiny_transformer_forward.9} parent=11 // pred_check_branch
          %627 = sbr.rel (%p625) target = $region64
        $region63: #{tiny_transformer_forward.9} parent=11 // pred_region
          _
        $region64: #{tiny_transformer_forward.9} parent=11 // pred_fallthru
          _
        // Predicated region
        $region65: #{tiny_transformer_forward.9} parent=11 // pred_check
          %p628 = pneg %p378
        $region66: #{tiny_transformer_forward.9} parent=11 // pred_check_branch
          %630 = sbr.rel (%p628) target = $region68
        $region67: #{tiny_transformer_forward.9} parent=11 // pred_region
          _
        $region68: #{tiny_transformer_forward.9} parent=11 // pred_fallthru
          _
        // Predicated region
        $region69: #{tiny_transformer_forward.9} parent=11 // pred_check
          %p631 = pneg %p399
        $region70: #{tiny_transformer_forward.9} parent=11 // pred_check_branch
          %633 = sbr.rel (%p631) target = $region72
        $region71: #{tiny_transformer_forward.9} parent=11 // pred_region
          %635 = vsyncadd [#allocation8], 0
          %s636 = sshll.u32 %s16, 4
          %s637 = int_to_ptr.hbm [resolvable:$true] %s636
          %s638 = sshll.u32 [#allocation9], 4
          %s639 = int_to_ptr.vmem [resolvable:$true] %s638
          %644 = dma.hbm_to_vmem [thread:$0]  %s637, 8192, %s639, [#allocation8], 512, 512, 32
        $region72: #{tiny_transformer_forward.9} parent=11 // pred_fallthru
          _
        // Predicated region
        $region73: #{tiny_transformer_forward.9} parent=11 // pred_check
          %p645 = pneg %p420
        $region74: #{tiny_transformer_forward.9} parent=11 // pred_check_branch
          %647 = sbr.rel (%p645) target = $region76
        $region75: #{tiny_transformer_forward.9} parent=11 // pred_region
          _
        $region76: #{tiny_transformer_forward.9} parent=11 // pred_fallthru
          _
        // Predicated region
        $region77: #{tiny_transformer_forward.9} parent=11 // pred_check
          %p648 = pneg %p441
        $region78: #{tiny_transformer_forward.9} parent=11 // pred_check_branch
          %650 = sbr.rel (%p648) target = $region80
        $region79: #{tiny_transformer_forward.9} parent=11 // pred_region
          %652 = vsyncadd [#allocation11], 0
          %s653 = sshll.u32 %s18, 4
          %s654 = int_to_ptr.hbm [resolvable:$true] %s653
          %s655 = sshll.u32 [#allocation10], 4
          %s656 = int_to_ptr.vmem [resolvable:$true] %s655
          %661 = dma.hbm_to_vmem [thread:$0]  %s654, 8192, %s656, [#allocation11], 128, 128, 8
        $region80: #{tiny_transformer_forward.9} parent=11 // pred_fallthru
          _
        // Predicated region
        $region81: #{tiny_transformer_forward.9} parent=11 // pred_check
          %p662 = pneg %p462
        $region82: #{tiny_transformer_forward.9} parent=11 // pred_check_branch
          %664 = sbr.rel (%p662) target = $region84
        $region83: #{tiny_transformer_forward.9} parent=11 // pred_region
          _
        $region84: #{tiny_transformer_forward.9} parent=11 // pred_fallthru
          _
        // Predicated region
        $region85: #{tiny_transformer_forward.9} parent=11 // pred_check
          %p665 = pneg %p483
        $region86: #{tiny_transformer_forward.9} parent=11 // pred_check_branch
          %667 = sbr.rel (%p665) target = $region88
        $region87: #{tiny_transformer_forward.9} parent=11 // pred_region
          _
        $region88: #{tiny_transformer_forward.9} parent=11 // pred_fallthru
          _
        // Predicated region
        $region89: #{tiny_transformer_forward.9} parent=11 // pred_check
          %p668 = pneg %p504
        $region90: #{tiny_transformer_forward.9} parent=11 // pred_check_branch
          %670 = sbr.rel (%p668) target = $region92
        $region91: #{tiny_transformer_forward.9} parent=11 // pred_region
          _
        $region92: #{tiny_transformer_forward.9} parent=11 // pred_fallthru
          _
      $region12: #{tiny_transformer_forward.9} parent=5 // pred_fallthru
        _
      %p671 = scmp.lt.s32.totalorder %s32, 2
      // Predicated region
      $region93: #{tiny_transformer_forward.9} parent=5 // pred_check
        %p672 = pneg %p671
      $region94: #{tiny_transformer_forward.9} parent=5 // pred_check_branch
        %674 = sbr.rel (%p672) target = $region96
      $region95: #{tiny_transformer_forward.9} parent=5 // pred_region
        // Predicated region
        $region97: #{tiny_transformer_forward.9} parent=95 // pred_check
          %p675 = pneg %p52
        $region98: #{tiny_transformer_forward.9} parent=95 // pred_check_branch
          %677 = sbr.rel (%p675) target = $region100
        $region99: #{tiny_transformer_forward.9} parent=95 // pred_region
          %p678 = scmp.lt.s32.totalorder %s32, 1
          %s679 = scalar_select %p678, %s32, 1
          %s680 = smul.addr %s679, 8
          %s681 = scalar_lea.vmem %s0, %s680
        $region100: #{tiny_transformer_forward.9} parent=95 // pred_fallthru
          _
        // Predicated region
        $region101: #{tiny_transformer_forward.9} parent=95 // pred_check
          %p682 = pneg %p78
        $region102: #{tiny_transformer_forward.9} parent=95 // pred_check_branch
          %684 = sbr.rel (%p682) target = $region104
        $region103: #{tiny_transformer_forward.9} parent=95 // pred_region
          %p685 = scmp.lt.s32.totalorder %s32, 1
          %s686 = scalar_select %p685, %s32, 1
          %s687 = smul.addr %s686, 8
          %s688 = scalar_lea.vmem %s1, %s687
        $region104: #{tiny_transformer_forward.9} parent=95 // pred_fallthru
          _
      $region96: #{tiny_transformer_forward.9} parent=5 // pred_fallthru
        _
      %p689 = scmp.le.s32.totalorder 1, %s32
      %p690 = scmp.lt.s32.totalorder %s32, 3
      %p691 = pnand %p689, %p690
      %p692 = pneg %p691
      // Predicated region
      $region105: #{tiny_transformer_forward.9} parent=5 // pred_check
        _
      $region106: #{tiny_transformer_forward.9} parent=5 // pred_check_branch
        %694 = sbr.rel (%p691) target = $region108
      $region107: #{tiny_transformer_forward.9} parent=5 // pred_region
        %s695 = ssub.s32 %s32, 1
        // Predicated region
        $region109: #{tiny_transformer_forward.9} parent=107 // pred_check
          %p696 = pneg %p105
        $region110: #{tiny_transformer_forward.9} parent=107 // pred_check_branch
          %698 = sbr.rel (%p696) target = $region112
        $region111: #{tiny_transformer_forward.9} parent=107 // pred_region
          %700 = dma.done [#allocation3], 6144
        $region112: #{tiny_transformer_forward.9} parent=107 // pred_fallthru
          _
        // Predicated region
        $region113: #{tiny_transformer_forward.9} parent=107 // pred_check
          %p701 = pneg %p147
        $region114: #{tiny_transformer_forward.9} parent=107 // pred_check_branch
          %703 = sbr.rel (%p701) target = $region116
        $region115: #{tiny_transformer_forward.9} parent=107 // pred_region
          %705 = dma.done [#allocation5], 2048
        $region116: #{tiny_transformer_forward.9} parent=107 // pred_fallthru
          _
        // Predicated region
        $region117: #{tiny_transformer_forward.9} parent=107 // pred_check
          %p706 = pneg %p231
        $region118: #{tiny_transformer_forward.9} parent=107 // pred_check_branch
          %708 = sbr.rel (%p706) target = $region120
        $region119: #{tiny_transformer_forward.9} parent=107 // pred_region
          %710 = dma.done [#allocation5], 2048
        $region120: #{tiny_transformer_forward.9} parent=107 // pred_fallthru
          _
        // Predicated region
        $region121: #{tiny_transformer_forward.9} parent=107 // pred_check
          %p711 = pneg %p315
        $region122: #{tiny_transformer_forward.9} parent=107 // pred_check_branch
          %713 = sbr.rel (%p711) target = $region124
        $region123: #{tiny_transformer_forward.9} parent=107 // pred_region
          %715 = dma.done [#allocation8], 2048
        $region124: #{tiny_transformer_forward.9} parent=107 // pred_fallthru
          _
        // Predicated region
        $region125: #{tiny_transformer_forward.9} parent=107 // pred_check
          %p716 = pneg %p399
        $region126: #{tiny_transformer_forward.9} parent=107 // pred_check_branch
          %718 = sbr.rel (%p716) target = $region128
        $region127: #{tiny_transformer_forward.9} parent=107 // pred_region
          %720 = dma.done [#allocation8], 8192
        $region128: #{tiny_transformer_forward.9} parent=107 // pred_fallthru
          _
        // Predicated region
        $region129: #{tiny_transformer_forward.9} parent=107 // pred_check
          %p721 = pneg %p441
        $region130: #{tiny_transformer_forward.9} parent=107 // pred_check_branch
          %723 = sbr.rel (%p721) target = $region132
        $region131: #{tiny_transformer_forward.9} parent=107 // pred_region
          %725 = dma.done [#allocation11], 8192
        $region132: #{tiny_transformer_forward.9} parent=107 // pred_fallthru
          _
        %p726 = scmp.lt.s32.totalorder %s37, 1
        %s727 = scalar_select %p726, %s37, 1
        %s728 = smul.addr %s727, 8
        %s729 = scalar_lea.vmem %s0, %s728
        %p730 = pneg %p58
        %p731 = pneg %p55
        %p732 = scmp.lt.s32.totalorder %s37, 1
        %s733 = scalar_select %p732, %s37, 1
        %s734 = smul.addr %s733, 8
        %s735 = scalar_lea.vmem %s1, %s734
        %p736 = pneg %p84
        %p737 = pneg %p81
        %p738 = pneg %p105
        %p739 = pneg %p102
        %p740 = pneg %p126
        %p741 = pneg %p123
        %p742 = pneg %p147
        %p743 = pneg %p144
        %p744 = pneg %p168
        %p745 = pneg %p165
        %p746 = pneg %p189
        %p747 = pneg %p186
        %p748 = pneg %p210
        %p749 = pneg %p207
        %p750 = pneg %p231
        %p751 = pneg %p228
        %p752 = pneg %p252
        %p753 = pneg %p249
        %p754 = pneg %p273
        %p755 = pneg %p270
        %p756 = pneg %p294
        %p757 = pneg %p291
        %p758 = pneg %p315
        %p759 = pneg %p312
        %p760 = pneg %p336
        %p761 = pneg %p333
        %p762 = pneg %p357
        %p763 = pneg %p354
        %p764 = pneg %p378
        %p765 = pneg %p375
        %p766 = pneg %p399
        %p767 = pneg %p396
        %p768 = pneg %p420
        %p769 = pneg %p417
        %p770 = pneg %p441
        %p771 = pneg %p438
        %p772 = pneg %p462
        %p773 = pneg %p459
        %p774 = pneg %p483
        %p775 = pneg %p480
        %p776 = pneg %p504
        %p777 = pneg %p501
        %p778 = pneg %p530
        %p779 = pneg %p527
        %p780 = scmp.lt.s32.totalorder %s37, 1
        %s781 = scalar_select %p780, %s37, 1
        %s782 = smul.addr %s781, 8
        %s783 = scalar_lea.vmem %s22, %s782
        %p784 = scmp.lt.s32.totalorder %s37, 1
        %s785 = scalar_select %p784, %s37, 1
        %s786 = smul.addr %s785, 8
        %s787 = scalar_lea.vmem %s0, %s786
        %p788 = scmp.lt.s32.totalorder %s37, 1
        %s789 = scalar_select %p788, %s37, 1
        %s790 = smul.addr %s789, 8
        %s791 = scalar_lea.vmem %s1, %s790
        %p792 = scmp.lt.s32.totalorder %s37, 1
        %s793 = scalar_select %p792, %s37, 1
        %s794 = smul.addr %s793, 8
        %s795 = scalar_lea.vmem %s22, %s794
        %v796 = vld [vmem:[%s787] sm:$0xff]
        %v797 = vld [vmem:[%s791] sm:$0xff]
        %v798 = vld [vmem:[#allocation2] sm:$0xff]
        %v799 = vld [vmem:[#allocation2 + $0x8] sm:$0xff]
        %v800 = vld [vmem:[#allocation2 + $0x10] sm:$0xff]
        %v801 = vld [vmem:[#allocation2 + $0x18] sm:$0xff]
        %v802 = vld [vmem:[#allocation2 + $0x20] sm:$0xff]
        %v803 = vld [vmem:[#allocation2 + $0x28] sm:$0xff]
        %v804 = vld [vmem:[#allocation2 + $0x30] sm:$0xff]
        %v805 = vld [vmem:[#allocation2 + $0x38] sm:$0xff]
        %v806 = vld [vmem:[#allocation2 + $0x40] sm:$0xff]
        %v807 = vld [vmem:[#allocation2 + $0x48] sm:$0xff]
        %v808 = vld [vmem:[#allocation2 + $0x50] sm:$0xff]
        %v809 = vld [vmem:[#allocation2 + $0x58] sm:$0xff]
        %v810 = vld [vmem:[#allocation2 + $0x60] sm:$0xff]
        %v811 = vld [vmem:[#allocation2 + $0x68] sm:$0xff]
        %v812 = vld [vmem:[#allocation2 + $0x70] sm:$0xff]
        %v813 = vld [vmem:[#allocation2 + $0x78] sm:$0xff]
        %v814 = vld [vmem:[#allocation2 + $0x80] sm:$0xff]
        %v815 = vld [vmem:[#allocation2 + $0x88] sm:$0xff]
        %v816 = vld [vmem:[#allocation2 + $0x90] sm:$0xff]
        %v817 = vld [vmem:[#allocation2 + $0x98] sm:$0xff]
        %v818 = vld [vmem:[#allocation2 + $0xa0] sm:$0xff]
        %v819 = vld [vmem:[#allocation2 + $0xa8] sm:$0xff]
        %v820 = vld [vmem:[#allocation2 + $0xb0] sm:$0xff]
        %v821 = vld [vmem:[#allocation2 + $0xb8] sm:$0xff]
        %v822 = vld [vmem:[#allocation2 + $0xc0] sm:$0xff]
        %v823 = vld [vmem:[#allocation2 + $0xc8] sm:$0xff]
        %v824 = vld [vmem:[#allocation2 + $0xd0] sm:$0xff]
        %v825 = vld [vmem:[#allocation2 + $0xd8] sm:$0xff]
        %v826 = vld [vmem:[#allocation2 + $0xe0] sm:$0xff]
        %v827 = vld [vmem:[#allocation2 + $0xe8] sm:$0xff]
        %v828 = vld [vmem:[#allocation2 + $0xf0] sm:$0xff]
        %v829 = vld [vmem:[#allocation2 + $0xf8] sm:$0xff]
        %v830 = vld [vmem:[#allocation2 + $0x100] sm:$0xff]
        %v831 = vld [vmem:[#allocation2 + $0x108] sm:$0xff]
        %v832 = vld [vmem:[#allocation2 + $0x110] sm:$0xff]
        %v833 = vld [vmem:[#allocation2 + $0x118] sm:$0xff]
        %v834 = vld [vmem:[#allocation2 + $0x120] sm:$0xff]
        %v835 = vld [vmem:[#allocation2 + $0x128] sm:$0xff]
        %v836 = vld [vmem:[#allocation2 + $0x130] sm:$0xff]
        %v837 = vld [vmem:[#allocation2 + $0x138] sm:$0xff]
        %v838 = vld [vmem:[#allocation2 + $0x140] sm:$0xff]
        %v839 = vld [vmem:[#allocation2 + $0x148] sm:$0xff]
        %v840 = vld [vmem:[#allocation2 + $0x150] sm:$0xff]
        %v841 = vld [vmem:[#allocation2 + $0x158] sm:$0xff]
        %v842 = vld [vmem:[#allocation2 + $0x160] sm:$0xff]
        %v843 = vld [vmem:[#allocation2 + $0x168] sm:$0xff]
        %v844 = vld [vmem:[#allocation2 + $0x170] sm:$0xff]
        %v845 = vld [vmem:[#allocation2 + $0x178] sm:$0xff]
        %v846 = vld [vmem:[%s3] sm:$0x7]
        %v848 = vperm.slane %v846, 0
        %v849 = vperm.slane %v846, 1
        %v850 = vperm.slane %v846, 2
        %854 = vmatpush.msra.mxu0 %v843
        %855 = vmatpush.msra.mxu0 %v840
        %856 = vmatpush.msra.mxu0 %v837
        %857 = vmatpush.msra.mxu0 %v834
        %858 = vmatpush.msra.mxu0 %v831
        %859 = vmatpush.msra.mxu0 %v828
        %860 = vmatpush.msra.mxu0 %v825
        %861 = vmatpush.msra.mxu0 %v822
        %862 = vmatpush.msra.mxu0 %v819
        %863 = vmatpush.msra.mxu0 %v816
        %864 = vmatpush.msra.mxu0 %v813
        %865 = vmatpush.msra.mxu0 %v810
        %866 = vmatpush.msra.mxu0 %v807
        %867 = vmatpush.msra.mxu0 %v804
        %868 = vmatpush.msra.mxu0 %v801
        %869 = vmatpush.msra.mxu0 %v798
        %870 = vmatmul.f32.gmra.mxu0 %v796
        %v871 = vpop.f32.mrf.mxu0
        %v872 = vadd.f32 %v848, %v871
        %873 = vdwg.mxu0
        %874 = vmatpush.msra.mxu0 %v844
        %875 = vmatpush.msra.mxu0 %v841
        %876 = vmatpush.msra.mxu0 %v838
        %877 = vmatpush.msra.mxu0 %v835
        %878 = vmatpush.msra.mxu0 %v832
        %879 = vmatpush.msra.mxu0 %v829
        %880 = vmatpush.msra.mxu0 %v826
        %881 = vmatpush.msra.mxu0 %v823
        %882 = vmatpush.msra.mxu0 %v820
        %883 = vmatpush.msra.mxu0 %v817
        %884 = vmatpush.msra.mxu0 %v814
        %885 = vmatpush.msra.mxu0 %v811
        %886 = vmatpush.msra.mxu0 %v808
        %887 = vmatpush.msra.mxu0 %v805
        %888 = vmatpush.msra.mxu0 %v802
        %889 = vmatpush.msra.mxu0 %v799
        %890 = vmatmul.f32.gmra.mxu0 %v796
        %v891 = vpop.f32.mrf.mxu0
        %v892 = vadd.f32 %v849, %v891
        %893 = vdwg.mxu0
        %894 = vmatpush.msra.mxu0 %v845
        %895 = vmatpush.msra.mxu0 %v842
        %896 = vmatpush.msra.mxu0 %v839
        %897 = vmatpush.msra.mxu0 %v836
        %898 = vmatpush.msra.mxu0 %v833
        %899 = vmatpush.msra.mxu0 %v830
        %900 = vmatpush.msra.mxu0 %v827
        %901 = vmatpush.msra.mxu0 %v824
        %902 = vmatpush.msra.mxu0 %v821
        %903 = vmatpush.msra.mxu0 %v818
        %904 = vmatpush.msra.mxu0 %v815
        %905 = vmatpush.msra.mxu0 %v812
        %906 = vmatpush.msra.mxu0 %v809
        %907 = vmatpush.msra.mxu0 %v806
        %908 = vmatpush.msra.mxu0 %v803
        %909 = vmatpush.msra.mxu0 %v800
        %910 = vmatmul.f32.gmra.mxu0 %v796
        %v911 = vpop.f32.mrf.mxu0
        %v912 = vadd.f32 %v850, %v911
        %913 = vdwg.mxu0
        %v914 = vlaneseq
        %v915 = vshrl.u32 %v914, 7
        %v916 = vlaneseq
        %v917 = vand.u32 %v916, 127
        %vm918 = vcmp.gt.s32.totalorder %v917, %v915
        %v919 = vsel %vm918, -1e+09, 0.0
        %vm920 = vcmask 261120
        %v922 = vsel %vm920, %v872, 0
        %v925 = vsel %vm920, %v892, 0
        %927 = vmatpush.xpose.msra.mxu0 0.0
        %928 = vmatpush.xpose.msra.mxu0 0.0
        %929 = vmatpush.xpose.msra.mxu0 0.0
        %930 = vmatpush.xpose.msra.mxu0 0.0
        %931 = vmatpush.xpose.msra.mxu0 0.0
        %932 = vmatpush.xpose.msra.mxu0 0.0
        %933 = vmatpush.xpose.msra.mxu0 0.0
        %934 = vmatpush.xpose.msra.mxu0 0.0
        %935 = vmatpush.xpose.msra.mxu0 0.0
        %936 = vmatpush.xpose.msra.mxu0 0.0
        %937 = vmatpush.xpose.msra.mxu0 0.0
        %938 = vmatpush.xpose.msra.mxu0 0.0
        %939 = vmatpush.xpose.msra.mxu0 0.0
        %940 = vmatpush.xpose.msra.mxu0 0.0
        %941 = vmatpush.xpose.msra.mxu0 0.0
        %942 = vmatpush.xpose.msra.mxu0 %v925
        %943 = vmatmul.f32.gmra.mxu0 %v922
        %v944 = vpop.f32.mrf.mxu0
        %v945 = vadd.f32 %v919, %v944
        %946 = vdwg.mxu0
        %vm947 = vcmask 64512
        %v948 = vsel %vm947, %v945, -inf
        %949 = vmax.xlane.f32.xlu0 %v948
        %v950 = vpop.xlane.xlu0 %949
        %v951 = vsub.f32 %v945, %v950
        %v952 = vmul.f32 %v951, 1.442695
        %v953 = vpow.pop %v952
        %v954 = vsel %vm947, %v953, 0.0
        %955 = vadd.xlane.f32.xlu0 %v954
        %v956 = vpop.xlane.xlu0 %955
        %v957 = vrcp.pop %v956
        %v958 = vmul.f32 %v953, %v957
        %v960 = vsel %vm947, %v958, 0
        %962 = vmatpush.msra.mxu0 0.0
        %963 = vmatpush.msra.mxu0 0.0
        %964 = vmatpush.msra.mxu0 0.0
        %965 = vmatpush.msra.mxu0 0.0
        %966 = vmatpush.msra.mxu0 0.0
        %967 = vmatpush.msra.mxu0 0.0
        %968 = vmatpush.msra.mxu0 0.0
        %969 = vmatpush.msra.mxu0 0.0
        %970 = vmatpush.msra.mxu0 0.0
        %971 = vmatpush.msra.mxu0 0.0
        %972 = vmatpush.msra.mxu0 0.0
        %973 = vmatpush.msra.mxu0 0.0
        %974 = vmatpush.msra.mxu0 0.0
        %975 = vmatpush.msra.mxu0 0.0
        %976 = vmatpush.msra.mxu0 0.0
        %977 = vmatpush.msra.mxu0 %v912
        %978 = vmatmul.f32.gmra.mxu0 %v960
        %v979 = vpop.f32.mrf.mxu0
        %v980 = vadd.f32 0.0, %v979
        %981 = vdwg.mxu0
        %982 = vrot.lane.b32.xlu0 %v872, 96
        %v983 = vpop.permute.xlu0 %982
        %984 = vrot.lane.b32.xlu0 %v892, 96
        %v985 = vpop.permute.xlu0 %984
        %v986 = vsel %vm920, %v983, 0
        %v988 = vsel %vm920, %v985, 0
        %990 = vmatpush.xpose.msra.mxu0 0.0
        %991 = vmatpush.xpose.msra.mxu0 0.0
        %992 = vmatpush.xpose.msra.mxu0 0.0
        %993 = vmatpush.xpose.msra.mxu0 0.0
        %994 = vmatpush.xpose.msra.mxu0 0.0
        %995 = vmatpush.xpose.msra.mxu0 0.0
        %996 = vmatpush.xpose.msra.mxu0 0.0
        %997 = vmatpush.xpose.msra.mxu0 0.0
        %998 = vmatpush.xpose.msra.mxu0 0.0
        %999 = vmatpush.xpose.msra.mxu0 0.0
        %1000 = vmatpush.xpose.msra.mxu0 0.0
        %1001 = vmatpush.xpose.msra.mxu0 0.0
        %1002 = vmatpush.xpose.msra.mxu0 0.0
        %1003 = vmatpush.xpose.msra.mxu0 0.0
        %1004 = vmatpush.xpose.msra.mxu0 0.0
        %1005 = vmatpush.xpose.msra.mxu0 %v988
        %1006 = vmatmul.f32.gmra.mxu0 %v986
        %v1007 = vpop.f32.mrf.mxu0
        %v1008 = vadd.f32 %v919, %v1007
        %1009 = vdwg.mxu0
        %v1010 = vsel %vm947, %v1008, -inf
        %1011 = vmax.xlane.f32.xlu0 %v1010
        %v1012 = vpop.xlane.xlu0 %1011
        %v1013 = vsub.f32 %v1008, %v1012
        %v1014 = vmul.f32 %v1013, 1.442695
        %v1015 = vpow.pop %v1014
        %v1016 = vsel %vm947, %v1015, 0.0
        %1017 = vadd.xlane.f32.xlu0 %v1016
        %v1018 = vpop.xlane.xlu0 %1017
        %v1019 = vrcp.pop %v1018
        %v1020 = vmul.f32 %v1015, %v1019
        %1022 = vrot.lane.b32.xlu0 %v912, 96
        %v1023 = vpop.permute.xlu0 %1022
        %v1026 = vsel %vm947, %v1020, 0
        %1028 = vmatpush.msra.mxu0 0.0
        %1029 = vmatpush.msra.mxu0 0.0
        %1030 = vmatpush.msra.mxu0 0.0
        %1031 = vmatpush.msra.mxu0 0.0
        %1032 = vmatpush.msra.mxu0 0.0
        %1033 = vmatpush.msra.mxu0 0.0
        %1034 = vmatpush.msra.mxu0 0.0
        %1035 = vmatpush.msra.mxu0 0.0
        %1036 = vmatpush.msra.mxu0 0.0
        %1037 = vmatpush.msra.mxu0 0.0
        %1038 = vmatpush.msra.mxu0 0.0
        %1039 = vmatpush.msra.mxu0 0.0
        %1040 = vmatpush.msra.mxu0 0.0
        %1041 = vmatpush.msra.mxu0 0.0
        %1042 = vmatpush.msra.mxu0 0.0
        %1043 = vmatpush.msra.mxu0 %v1023
        %1044 = vmatmul.f32.gmra.mxu0 %v1026
        %v1045 = vpop.f32.mrf.mxu0
        %v1046 = vadd.f32 0.0, %v1045
        %1047 = vdwg.mxu0
        %1048 = vrot.lane.b32.xlu0 %v872, 64
        %v1049 = vpop.permute.xlu0 %1048
        %1050 = vrot.lane.b32.xlu0 %v892, 64
        %v1051 = vpop.permute.xlu0 %1050
        %v1052 = vsel %vm920, %v1049, 0
        %v1054 = vsel %vm920, %v1051, 0
        %1056 = vmatpush.xpose.msra.mxu0 0.0
        %1057 = vmatpush.xpose.msra.mxu0 0.0
        %1058 = vmatpush.xpose.msra.mxu0 0.0
        %1059 = vmatpush.xpose.msra.mxu0 0.0
        %1060 = vmatpush.xpose.msra.mxu0 0.0
        %1061 = vmatpush.xpose.msra.mxu0 0.0
        %1062 = vmatpush.xpose.msra.mxu0 0.0
        %1063 = vmatpush.xpose.msra.mxu0 0.0
        %1064 = vmatpush.xpose.msra.mxu0 0.0
        %1065 = vmatpush.xpose.msra.mxu0 0.0
        %1066 = vmatpush.xpose.msra.mxu0 0.0
        %1067 = vmatpush.xpose.msra.mxu0 0.0
        %1068 = vmatpush.xpose.msra.mxu0 0.0
        %1069 = vmatpush.xpose.msra.mxu0 0.0
        %1070 = vmatpush.xpose.msra.mxu0 0.0
        %1071 = vmatpush.xpose.msra.mxu0 %v1054
        %1072 = vmatmul.f32.gmra.mxu0 %v1052
        %v1073 = vpop.f32.mrf.mxu0
        %v1074 = vadd.f32 %v919, %v1073
        %1075 = vdwg.mxu0
        %v1076 = vsel %vm947, %v1074, -inf
        %1077 = vmax.xlane.f32.xlu0 %v1076
        %v1078 = vpop.xlane.xlu0 %1077
        %v1079 = vsub.f32 %v1074, %v1078
        %v1080 = vmul.f32 %v1079, 1.442695
        %v1081 = vpow.pop %v1080
        %v1082 = vsel %vm947, %v1081, 0.0
        %1083 = vadd.xlane.f32.xlu0 %v1082
        %v1084 = vpop.xlane.xlu0 %1083
        %v1085 = vrcp.pop %v1084
        %v1086 = vmul.f32 %v1081, %v1085
        %1087 = vrot.lane.b32.xlu0 %v912, 64
        %v1088 = vpop.permute.xlu0 %1087
        %v1091 = vsel %vm947, %v1086, 0
        %1093 = vmatpush.msra.mxu0 0.0
        %1094 = vmatpush.msra.mxu0 0.0
        %1095 = vmatpush.msra.mxu0 0.0
        %1096 = vmatpush.msra.mxu0 0.0
        %1097 = vmatpush.msra.mxu0 0.0
        %1098 = vmatpush.msra.mxu0 0.0
        %1099 = vmatpush.msra.mxu0 0.0
        %1100 = vmatpush.msra.mxu0 0.0
        %1101 = vmatpush.msra.mxu0 0.0
        %1102 = vmatpush.msra.mxu0 0.0
        %1103 = vmatpush.msra.mxu0 0.0
        %1104 = vmatpush.msra.mxu0 0.0
        %1105 = vmatpush.msra.mxu0 0.0
        %1106 = vmatpush.msra.mxu0 0.0
        %1107 = vmatpush.msra.mxu0 0.0
        %1108 = vmatpush.msra.mxu0 %v1088
        %1109 = vmatmul.f32.gmra.mxu0 %v1091
        %v1110 = vpop.f32.mrf.mxu0
        %v1111 = vadd.f32 0.0, %v1110
        %1112 = vdwg.mxu0
        %1113 = vrot.lane.b32.xlu0 %v872, 32
        %v1114 = vpop.permute.xlu0 %1113
        %1115 = vrot.lane.b32.xlu0 %v892, 32
        %v1116 = vpop.permute.xlu0 %1115
        %v1117 = vsel %vm920, %v1114, 0
        %v1119 = vsel %vm920, %v1116, 0
        %1121 = vmatpush.xpose.msra.mxu0 0.0
        %1122 = vmatpush.xpose.msra.mxu0 0.0
        %1123 = vmatpush.xpose.msra.mxu0 0.0
        %1124 = vmatpush.xpose.msra.mxu0 0.0
        %1125 = vmatpush.xpose.msra.mxu0 0.0
        %1126 = vmatpush.xpose.msra.mxu0 0.0
        %1127 = vmatpush.xpose.msra.mxu0 0.0
        %1128 = vmatpush.xpose.msra.mxu0 0.0
        %1129 = vmatpush.xpose.msra.mxu0 0.0
        %1130 = vmatpush.xpose.msra.mxu0 0.0
        %1131 = vmatpush.xpose.msra.mxu0 0.0
        %1132 = vmatpush.xpose.msra.mxu0 0.0
        %1133 = vmatpush.xpose.msra.mxu0 0.0
        %1134 = vmatpush.xpose.msra.mxu0 0.0
        %1135 = vmatpush.xpose.msra.mxu0 0.0
        %1136 = vmatpush.xpose.msra.mxu0 %v1119
        %1137 = vmatmul.f32.gmra.mxu0 %v1117
        %v1138 = vpop.f32.mrf.mxu0
        %v1139 = vadd.f32 %v919, %v1138
        %1140 = vdwg.mxu0
        %v1141 = vsel %vm947, %v1139, -inf
        %1142 = vmax.xlane.f32.xlu0 %v1141
        %v1143 = vpop.xlane.xlu0 %1142
        %v1144 = vsub.f32 %v1139, %v1143
        %v1145 = vmul.f32 %v1144, 1.442695
        %v1146 = vpow.pop %v1145
        %v1147 = vsel %vm947, %v1146, 0.0
        %1148 = vadd.xlane.f32.xlu0 %v1147
        %v1149 = vpop.xlane.xlu0 %1148
        %v1150 = vrcp.pop %v1149
        %v1151 = vmul.f32 %v1146, %v1150
        %1152 = vrot.lane.b32.xlu0 %v912, 32
        %v1153 = vpop.permute.xlu0 %1152
        %v1156 = vsel %vm947, %v1151, 0
        %1158 = vmatpush.msra.mxu0 0.0
        %1159 = vmatpush.msra.mxu0 0.0
        %1160 = vmatpush.msra.mxu0 0.0
        %1161 = vmatpush.msra.mxu0 0.0
        %1162 = vmatpush.msra.mxu0 0.0
        %1163 = vmatpush.msra.mxu0 0.0
        %1164 = vmatpush.msra.mxu0 0.0
        %1165 = vmatpush.msra.mxu0 0.0
        %1166 = vmatpush.msra.mxu0 0.0
        %1167 = vmatpush.msra.mxu0 0.0
        %1168 = vmatpush.msra.mxu0 0.0
        %1169 = vmatpush.msra.mxu0 0.0
        %1170 = vmatpush.msra.mxu0 0.0
        %1171 = vmatpush.msra.mxu0 0.0
        %1172 = vmatpush.msra.mxu0 0.0
        %1173 = vmatpush.msra.mxu0 %v1153
        %1174 = vmatmul.f32.gmra.mxu0 %v1156
        %v1175 = vpop.f32.mrf.mxu0
        %v1176 = vadd.f32 0.0, %v1175
        %1177 = vdwg.mxu0
        %1179 = vrot.lane.b32.xlu0 %v1046, 32
        %v1180 = vpop.permute.xlu0 %1179
        %1183 = vrot.lane.b32.xlu0 %v1111, 64
        %v1184 = vpop.permute.xlu0 %1183
        %1187 = vrot.lane.b32.xlu0 %v1176, 96
        %v1188 = vpop.permute.xlu0 %1187
        %v1190 = vsel %vm920, %v980, %v1180
        %vm1191 = vcmask 523264
        %v1192 = vsel %vm1191, %v1190, %v1184
        %vm1193 = vcmask 785408
        %v1194 = vsel %vm1193, %v1192, %v1188
        %v1195 = vld [vmem:[#allocation4] sm:$0xff]
        %v1196 = vld [vmem:[#allocation4 + $0x8] sm:$0xff]
        %v1197 = vld [vmem:[#allocation4 + $0x10] sm:$0xff]
        %v1198 = vld [vmem:[#allocation4 + $0x18] sm:$0xff]
        %v1199 = vld [vmem:[#allocation4 + $0x20] sm:$0xff]
        %v1200 = vld [vmem:[#allocation4 + $0x28] sm:$0xff]
        %v1201 = vld [vmem:[#allocation4 + $0x30] sm:$0xff]
        %v1202 = vld [vmem:[#allocation4 + $0x38] sm:$0xff]
        %v1203 = vld [vmem:[#allocation4 + $0x40] sm:$0xff]
        %v1204 = vld [vmem:[#allocation4 + $0x48] sm:$0xff]
        %v1205 = vld [vmem:[#allocation4 + $0x50] sm:$0xff]
        %v1206 = vld [vmem:[#allocation4 + $0x58] sm:$0xff]
        %v1207 = vld [vmem:[#allocation4 + $0x60] sm:$0xff]
        %v1208 = vld [vmem:[#allocation4 + $0x68] sm:$0xff]
        %v1209 = vld [vmem:[#allocation4 + $0x70] sm:$0xff]
        %v1210 = vld [vmem:[#allocation4 + $0x78] sm:$0xff]
        %v1211 = vld [vmem:[%s5] sm:$0x1]
        %v1213 = vperm.slane %v1211, 0
        %1215 = vmatpush.msra.mxu0 %v1210
        %1216 = vmatpush.msra.mxu0 %v1209
        %1217 = vmatpush.msra.mxu0 %v1208
        %1218 = vmatpush.msra.mxu0 %v1207
        %1219 = vmatpush.msra.mxu0 %v1206
        %1220 = vmatpush.msra.mxu0 %v1205
        %1221 = vmatpush.msra.mxu0 %v1204
        %1222 = vmatpush.msra.mxu0 %v1203
        %1223 = vmatpush.msra.mxu0 %v1202
        %1224 = vmatpush.msra.mxu0 %v1201
        %1225 = vmatpush.msra.mxu0 %v1200
        %1226 = vmatpush.msra.mxu0 %v1199
        %1227 = vmatpush.msra.mxu0 %v1198
        %1228 = vmatpush.msra.mxu0 %v1197
        %1229 = vmatpush.msra.mxu0 %v1196
        %1230 = vmatpush.msra.mxu0 %v1195
        %1231 = vmatmul.f32.gmra.mxu0 %v1194
        %v1232 = vpop.f32.mrf.mxu0
        %v1233 = vadd.f32 %v1213, %v1232
        %1234 = vdwg.mxu0
        %v1235 = vadd.f32 %v796, %v1233
        %v1236 = vld [vmem:[%s6] sm:$0x1]
        %v1237 = vld [vmem:[%s7] sm:$0x1]
        %1238 = vadd.xlane.f32.xlu0 %v1235
        %v1239 = vpop.xlane.xlu0 %1238
        %v1240 = vrcp.pop 128.0
        %v1241 = vmul.f32 128.0, %v1240
        %v1242 = vsub.f32 1.0, %v1241
        %v1243 = vmul.f32 %v1240, %v1242
        %v1244 = vadd.f32 %v1240, %v1243
        %vm1245 = vweird.f32 %v1240
        %v1246 = vsel %vm1245, %v1240, %v1244
        %v1247 = vmul.f32 %v1239, %v1246
        %v1248 = vsub.f32 %v1235, %v1247
        %v1249 = vmul.f32 %v1248, %v1248
        %1250 = vadd.xlane.f32.xlu0 %v1249
        %v1251 = vpop.xlane.xlu0 %1250
        %v1252 = vmul.f32 %v1251, %v1246
        %v1253 = vadd.f32 %v1252, 1e-05
        %v1254 = vrsqrt.pop %v1253
        %v1255 = vmul.f32 %v1254, %v1253
        %v1256 = vmul.f32 %v1255, %v1254
        %v1257 = vmul.f32 0.5, %v1256
        %v1258 = vsub.f32 1.5, %v1257
        %v1259 = vmul.f32 %v1254, %v1258
        %vm1260 = vweird.f32 %v1253
        %vm1261 = vweird.f32 %v1254
        %vm1262 = vmor %vm1260, %vm1261
        %v1263 = vsel %vm1262, %v1254, %v1259
        %v1264 = vmul.f32 %v1248, %v1263
        %v1266 = vperm.slane %v1236, 0
        %v1268 = vmul.f32 %v1264, %v1266
        %v1270 = vperm.slane %v1237, 0
        %v1272 = vadd.f32 %v1268, %v1270
        %v1273 = vld [vmem:[#allocation6] sm:$0xff]
        %v1274 = vld [vmem:[#allocation6 + $0x8] sm:$0xff]
        %v1275 = vld [vmem:[#allocation6 + $0x10] sm:$0xff]
        %v1276 = vld [vmem:[#allocation6 + $0x18] sm:$0xff]
        %v1277 = vld [vmem:[#allocation6 + $0x20] sm:$0xff]
        %v1278 = vld [vmem:[#allocation6 + $0x28] sm:$0xff]
        %v1279 = vld [vmem:[#allocation6 + $0x30] sm:$0xff]
        %v1280 = vld [vmem:[#allocation6 + $0x38] sm:$0xff]
        %v1281 = vld [vmem:[#allocation6 + $0x40] sm:$0xff]
        %v1282 = vld [vmem:[#allocation6 + $0x48] sm:$0xff]
        %v1283 = vld [vmem:[#allocation6 + $0x50] sm:$0xff]
        %v1284 = vld [vmem:[#allocation6 + $0x58] sm:$0xff]
        %v1285 = vld [vmem:[#allocation6 + $0x60] sm:$0xff]
        %v1286 = vld [vmem:[#allocation6 + $0x68] sm:$0xff]
        %v1287 = vld [vmem:[#allocation6 + $0x70] sm:$0xff]
        %v1288 = vld [vmem:[#allocation6 + $0x78] sm:$0xff]
        %v1289 = vld [vmem:[%s9] sm:$0x1]
        %v1291 = vperm.slane %v1289, 0
        %1293 = vmatpush.msra.mxu0 %v1288
        %1294 = vmatpush.msra.mxu0 %v1287
        %1295 = vmatpush.msra.mxu0 %v1286
        %1296 = vmatpush.msra.mxu0 %v1285
        %1297 = vmatpush.msra.mxu0 %v1284
        %1298 = vmatpush.msra.mxu0 %v1283
        %1299 = vmatpush.msra.mxu0 %v1282
        %1300 = vmatpush.msra.mxu0 %v1281
        %1301 = vmatpush.msra.mxu0 %v1280
        %1302 = vmatpush.msra.mxu0 %v1279
        %1303 = vmatpush.msra.mxu0 %v1278
        %1304 = vmatpush.msra.mxu0 %v1277
        %1305 = vmatpush.msra.mxu0 %v1276
        %1306 = vmatpush.msra.mxu0 %v1275
        %1307 = vmatpush.msra.mxu0 %v1274
        %1308 = vmatpush.msra.mxu0 %v1273
        %1309 = vmatmul.f32.gmra.mxu0 %v1272
        %v1310 = vpop.f32.mrf.mxu0
        %v1311 = vadd.f32 %v1291, %v1310
        %1312 = vdwg.mxu0
        %v1313 = vld [vmem:[%s10] sm:$0xff]
        %v1314 = vld [vmem:[%s10 + $0x8] sm:$0xff]
        %v1315 = vld [vmem:[%s10 + $0x10] sm:$0xff]
        %v1316 = vld [vmem:[%s10 + $0x18] sm:$0xff]
        %v1317 = vld [vmem:[%s10 + $0x20] sm:$0xff]
        %v1318 = vld [vmem:[%s10 + $0x28] sm:$0xff]
        %v1319 = vld [vmem:[%s10 + $0x30] sm:$0xff]
        %v1320 = vld [vmem:[%s10 + $0x38] sm:$0xff]
        %v1321 = vld [vmem:[%s10 + $0x40] sm:$0xff]
        %v1322 = vld [vmem:[%s10 + $0x48] sm:$0xff]
        %v1323 = vld [vmem:[%s10 + $0x50] sm:$0xff]
        %v1324 = vld [vmem:[%s10 + $0x58] sm:$0xff]
        %v1325 = vld [vmem:[%s10 + $0x60] sm:$0xff]
        %v1326 = vld [vmem:[%s10 + $0x68] sm:$0xff]
        %v1327 = vld [vmem:[%s10 + $0x70] sm:$0xff]
        %v1328 = vld [vmem:[%s10 + $0x78] sm:$0xff]
        %v1329 = vld [vmem:[%s10 + $0x80] sm:$0xff]
        %v1330 = vld [vmem:[%s10 + $0x88] sm:$0xff]
        %v1331 = vld [vmem:[%s10 + $0x90] sm:$0xff]
        %v1332 = vld [vmem:[%s10 + $0x98] sm:$0xff]
        %v1333 = vld [vmem:[%s10 + $0xa0] sm:$0xff]
        %v1334 = vld [vmem:[%s10 + $0xa8] sm:$0xff]
        %v1335 = vld [vmem:[%s10 + $0xb0] sm:$0xff]
        %v1336 = vld [vmem:[%s10 + $0xb8] sm:$0xff]
        %v1337 = vld [vmem:[%s10 + $0xc0] sm:$0xff]
        %v1338 = vld [vmem:[%s10 + $0xc8] sm:$0xff]
        %v1339 = vld [vmem:[%s10 + $0xd0] sm:$0xff]
        %v1340 = vld [vmem:[%s10 + $0xd8] sm:$0xff]
        %v1341 = vld [vmem:[%s10 + $0xe0] sm:$0xff]
        %v1342 = vld [vmem:[%s10 + $0xe8] sm:$0xff]
        %v1343 = vld [vmem:[%s10 + $0xf0] sm:$0xff]
        %v1344 = vld [vmem:[%s10 + $0xf8] sm:$0xff]
        %v1345 = vld [vmem:[%s11] sm:$0x3]
        %v1347 = vperm.slane %v1345, 0
        %v1348 = vperm.slane %v1345, 1
        %1351 = vmatpush.msra.mxu0 %v1343
        %1352 = vmatpush.msra.mxu0 %v1341
        %1353 = vmatpush.msra.mxu0 %v1339
        %1354 = vmatpush.msra.mxu0 %v1337
        %1355 = vmatpush.msra.mxu0 %v1335
        %1356 = vmatpush.msra.mxu0 %v1333
        %1357 = vmatpush.msra.mxu0 %v1331
        %1358 = vmatpush.msra.mxu0 %v1329
        %1359 = vmatpush.msra.mxu0 %v1327
        %1360 = vmatpush.msra.mxu0 %v1325
        %1361 = vmatpush.msra.mxu0 %v1323
        %1362 = vmatpush.msra.mxu0 %v1321
        %1363 = vmatpush.msra.mxu0 %v1319
        %1364 = vmatpush.msra.mxu0 %v1317
        %1365 = vmatpush.msra.mxu0 %v1315
        %1366 = vmatpush.msra.mxu0 %v1313
        %1367 = vmatmul.f32.gmra.mxu0 %v797
        %v1368 = vpop.f32.mrf.mxu0
        %v1369 = vadd.f32 %v1347, %v1368
        %1370 = vdwg.mxu0
        %1371 = vmatpush.msra.mxu0 %v1344
        %1372 = vmatpush.msra.mxu0 %v1342
        %1373 = vmatpush.msra.mxu0 %v1340
        %1374 = vmatpush.msra.mxu0 %v1338
        %1375 = vmatpush.msra.mxu0 %v1336
        %1376 = vmatpush.msra.mxu0 %v1334
        %1377 = vmatpush.msra.mxu0 %v1332
        %1378 = vmatpush.msra.mxu0 %v1330
        %1379 = vmatpush.msra.mxu0 %v1328
        %1380 = vmatpush.msra.mxu0 %v1326
        %1381 = vmatpush.msra.mxu0 %v1324
        %1382 = vmatpush.msra.mxu0 %v1322
        %1383 = vmatpush.msra.mxu0 %v1320
        %1384 = vmatpush.msra.mxu0 %v1318
        %1385 = vmatpush.msra.mxu0 %v1316
        %1386 = vmatpush.msra.mxu0 %v1314
        %1387 = vmatmul.f32.gmra.mxu0 %v797
        %v1388 = vpop.f32.mrf.mxu0
        %v1389 = vadd.f32 %v1348, %v1388
        %1390 = vdwg.mxu0
        %v1392 = vsel %vm920, %v1311, 0
        %v1395 = vsel %vm920, %v1369, 0
        %1397 = vmatpush.xpose.msra.mxu0 0.0
        %1398 = vmatpush.xpose.msra.mxu0 0.0
        %1399 = vmatpush.xpose.msra.mxu0 0.0
        %1400 = vmatpush.xpose.msra.mxu0 0.0
        %1401 = vmatpush.xpose.msra.mxu0 0.0
        %1402 = vmatpush.xpose.msra.mxu0 0.0
        %1403 = vmatpush.xpose.msra.mxu0 0.0
        %1404 = vmatpush.xpose.msra.mxu0 0.0
        %1405 = vmatpush.xpose.msra.mxu0 0.0
        %1406 = vmatpush.xpose.msra.mxu0 0.0
        %1407 = vmatpush.xpose.msra.mxu0 0.0
        %1408 = vmatpush.xpose.msra.mxu0 0.0
        %1409 = vmatpush.xpose.msra.mxu0 0.0
        %1410 = vmatpush.xpose.msra.mxu0 0.0
        %1411 = vmatpush.xpose.msra.mxu0 0.0
        %1412 = vmatpush.xpose.msra.mxu0 %v1395
        %1413 = vmatmul.f32.gmra.mxu0 %v1392
        %v1414 = vpop.f32.mrf.mxu0
        %v1415 = vadd.f32 0.0, %v1414
        %1416 = vdwg.mxu0
        %v1417 = vsel %vm947, %v1415, -inf
        %1418 = vmax.xlane.f32.xlu0 %v1417
        %v1419 = vpop.xlane.xlu0 %1418
        %v1420 = vsub.f32 %v1415, %v1419
        %v1421 = vmul.f32 %v1420, 1.442695
        %v1422 = vpow.pop %v1421
        %v1423 = vsel %vm947, %v1422, 0.0
        %1424 = vadd.xlane.f32.xlu0 %v1423
        %v1425 = vpop.xlane.xlu0 %1424
        %v1426 = vrcp.pop %v1425
        %v1427 = vmul.f32 %v1422, %v1426
        %v1429 = vsel %vm947, %v1427, 0
        %1431 = vmatpush.msra.mxu0 0.0
        %1432 = vmatpush.msra.mxu0 0.0
        %1433 = vmatpush.msra.mxu0 0.0
        %1434 = vmatpush.msra.mxu0 0.0
        %1435 = vmatpush.msra.mxu0 0.0
        %1436 = vmatpush.msra.mxu0 0.0
        %1437 = vmatpush.msra.mxu0 0.0
        %1438 = vmatpush.msra.mxu0 0.0
        %1439 = vmatpush.msra.mxu0 0.0
        %1440 = vmatpush.msra.mxu0 0.0
        %1441 = vmatpush.msra.mxu0 0.0
        %1442 = vmatpush.msra.mxu0 0.0
        %1443 = vmatpush.msra.mxu0 0.0
        %1444 = vmatpush.msra.mxu0 0.0
        %1445 = vmatpush.msra.mxu0 0.0
        %1446 = vmatpush.msra.mxu0 %v1389
        %1447 = vmatmul.f32.gmra.mxu0 %v1429
        %v1448 = vpop.f32.mrf.mxu0
        %v1449 = vadd.f32 0.0, %v1448
        %1450 = vdwg.mxu0
        %1451 = vrot.lane.b32.xlu0 %v1311, 96
        %v1452 = vpop.permute.xlu0 %1451
        %1453 = vrot.lane.b32.xlu0 %v1369, 96
        %v1454 = vpop.permute.xlu0 %1453
        %v1455 = vsel %vm920, %v1452, 0
        %v1457 = vsel %vm920, %v1454, 0
        %1459 = vmatpush.xpose.msra.mxu0 0.0
        %1460 = vmatpush.xpose.msra.mxu0 0.0
        %1461 = vmatpush.xpose.msra.mxu0 0.0
        %1462 = vmatpush.xpose.msra.mxu0 0.0
        %1463 = vmatpush.xpose.msra.mxu0 0.0
        %1464 = vmatpush.xpose.msra.mxu0 0.0
        %1465 = vmatpush.xpose.msra.mxu0 0.0
        %1466 = vmatpush.xpose.msra.mxu0 0.0
        %1467 = vmatpush.xpose.msra.mxu0 0.0
        %1468 = vmatpush.xpose.msra.mxu0 0.0
        %1469 = vmatpush.xpose.msra.mxu0 0.0
        %1470 = vmatpush.xpose.msra.mxu0 0.0
        %1471 = vmatpush.xpose.msra.mxu0 0.0
        %1472 = vmatpush.xpose.msra.mxu0 0.0
        %1473 = vmatpush.xpose.msra.mxu0 0.0
        %1474 = vmatpush.xpose.msra.mxu0 %v1457
        %1475 = vmatmul.f32.gmra.mxu0 %v1455
        %v1476 = vpop.f32.mrf.mxu0
        %v1477 = vadd.f32 0.0, %v1476
        %1478 = vdwg.mxu0
        %v1479 = vsel %vm947, %v1477, -inf
        %1480 = vmax.xlane.f32.xlu0 %v1479
        %v1481 = vpop.xlane.xlu0 %1480
        %v1482 = vsub.f32 %v1477, %v1481
        %v1483 = vmul.f32 %v1482, 1.442695
        %v1484 = vpow.pop %v1483
        %v1485 = vsel %vm947, %v1484, 0.0
        %1486 = vadd.xlane.f32.xlu0 %v1485
        %v1487 = vpop.xlane.xlu0 %1486
        %v1488 = vrcp.pop %v1487
        %v1489 = vmul.f32 %v1484, %v1488
        %1491 = vrot.lane.b32.xlu0 %v1389, 96
        %v1492 = vpop.permute.xlu0 %1491
        %v1495 = vsel %vm947, %v1489, 0
        %1497 = vmatpush.msra.mxu0 0.0
        %1498 = vmatpush.msra.mxu0 0.0
        %1499 = vmatpush.msra.mxu0 0.0
        %1500 = vmatpush.msra.mxu0 0.0
        %1501 = vmatpush.msra.mxu0 0.0
        %1502 = vmatpush.msra.mxu0 0.0
        %1503 = vmatpush.msra.mxu0 0.0
        %1504 = vmatpush.msra.mxu0 0.0
        %1505 = vmatpush.msra.mxu0 0.0
        %1506 = vmatpush.msra.mxu0 0.0
        %1507 = vmatpush.msra.mxu0 0.0
        %1508 = vmatpush.msra.mxu0 0.0
        %1509 = vmatpush.msra.mxu0 0.0
        %1510 = vmatpush.msra.mxu0 0.0
        %1511 = vmatpush.msra.mxu0 0.0
        %1512 = vmatpush.msra.mxu0 %v1492
        %1513 = vmatmul.f32.gmra.mxu0 %v1495
        %v1514 = vpop.f32.mrf.mxu0
        %v1515 = vadd.f32 0.0, %v1514
        %1516 = vdwg.mxu0
        %1517 = vrot.lane.b32.xlu0 %v1311, 64
        %v1518 = vpop.permute.xlu0 %1517
        %1519 = vrot.lane.b32.xlu0 %v1369, 64
        %v1520 = vpop.permute.xlu0 %1519
        %v1521 = vsel %vm920, %v1518, 0
        %v1523 = vsel %vm920, %v1520, 0
        %1525 = vmatpush.xpose.msra.mxu0 0.0
        %1526 = vmatpush.xpose.msra.mxu0 0.0
        %1527 = vmatpush.xpose.msra.mxu0 0.0
        %1528 = vmatpush.xpose.msra.mxu0 0.0
        %1529 = vmatpush.xpose.msra.mxu0 0.0
        %1530 = vmatpush.xpose.msra.mxu0 0.0
        %1531 = vmatpush.xpose.msra.mxu0 0.0
        %1532 = vmatpush.xpose.msra.mxu0 0.0
        %1533 = vmatpush.xpose.msra.mxu0 0.0
        %1534 = vmatpush.xpose.msra.mxu0 0.0
        %1535 = vmatpush.xpose.msra.mxu0 0.0
        %1536 = vmatpush.xpose.msra.mxu0 0.0
        %1537 = vmatpush.xpose.msra.mxu0 0.0
        %1538 = vmatpush.xpose.msra.mxu0 0.0
        %1539 = vmatpush.xpose.msra.mxu0 0.0
        %1540 = vmatpush.xpose.msra.mxu0 %v1523
        %1541 = vmatmul.f32.gmra.mxu0 %v1521
        %v1542 = vpop.f32.mrf.mxu0
        %v1543 = vadd.f32 0.0, %v1542
        %1544 = vdwg.mxu0
        %v1545 = vsel %vm947, %v1543, -inf
        %1546 = vmax.xlane.f32.xlu0 %v1545
        %v1547 = vpop.xlane.xlu0 %1546
        %v1548 = vsub.f32 %v1543, %v1547
        %v1549 = vmul.f32 %v1548, 1.442695
        %v1550 = vpow.pop %v1549
        %v1551 = vsel %vm947, %v1550, 0.0
        %1552 = vadd.xlane.f32.xlu0 %v1551
        %v1553 = vpop.xlane.xlu0 %1552
        %v1554 = vrcp.pop %v1553
        %v1555 = vmul.f32 %v1550, %v1554
        %1556 = vrot.lane.b32.xlu0 %v1389, 64
        %v1557 = vpop.permute.xlu0 %1556
        %v1560 = vsel %vm947, %v1555, 0
        %1562 = vmatpush.msra.mxu0 0.0
        %1563 = vmatpush.msra.mxu0 0.0
        %1564 = vmatpush.msra.mxu0 0.0
        %1565 = vmatpush.msra.mxu0 0.0
        %1566 = vmatpush.msra.mxu0 0.0
        %1567 = vmatpush.msra.mxu0 0.0
        %1568 = vmatpush.msra.mxu0 0.0
        %1569 = vmatpush.msra.mxu0 0.0
        %1570 = vmatpush.msra.mxu0 0.0
        %1571 = vmatpush.msra.mxu0 0.0
        %1572 = vmatpush.msra.mxu0 0.0
        %1573 = vmatpush.msra.mxu0 0.0
        %1574 = vmatpush.msra.mxu0 0.0
        %1575 = vmatpush.msra.mxu0 0.0
        %1576 = vmatpush.msra.mxu0 0.0
        %1577 = vmatpush.msra.mxu0 %v1557
        %1578 = vmatmul.f32.gmra.mxu0 %v1560
        %v1579 = vpop.f32.mrf.mxu0
        %v1580 = vadd.f32 0.0, %v1579
        %1581 = vdwg.mxu0
        %1582 = vrot.lane.b32.xlu0 %v1311, 32
        %v1583 = vpop.permute.xlu0 %1582
        %1584 = vrot.lane.b32.xlu0 %v1369, 32
        %v1585 = vpop.permute.xlu0 %1584
        %v1586 = vsel %vm920, %v1583, 0
        %v1588 = vsel %vm920, %v1585, 0
        %1590 = vmatpush.xpose.msra.mxu0 0.0
        %1591 = vmatpush.xpose.msra.mxu0 0.0
        %1592 = vmatpush.xpose.msra.mxu0 0.0
        %1593 = vmatpush.xpose.msra.mxu0 0.0
        %1594 = vmatpush.xpose.msra.mxu0 0.0
        %1595 = vmatpush.xpose.msra.mxu0 0.0
        %1596 = vmatpush.xpose.msra.mxu0 0.0
        %1597 = vmatpush.xpose.msra.mxu0 0.0
        %1598 = vmatpush.xpose.msra.mxu0 0.0
        %1599 = vmatpush.xpose.msra.mxu0 0.0
        %1600 = vmatpush.xpose.msra.mxu0 0.0
        %1601 = vmatpush.xpose.msra.mxu0 0.0
        %1602 = vmatpush.xpose.msra.mxu0 0.0
        %1603 = vmatpush.xpose.msra.mxu0 0.0
        %1604 = vmatpush.xpose.msra.mxu0 0.0
        %1605 = vmatpush.xpose.msra.mxu0 %v1588
        %1606 = vmatmul.f32.gmra.mxu0 %v1586
        %v1607 = vpop.f32.mrf.mxu0
        %v1608 = vadd.f32 0.0, %v1607
        %1609 = vdwg.mxu0
        %v1610 = vsel %vm947, %v1608, -inf
        %1611 = vmax.xlane.f32.xlu0 %v1610
        %v1612 = vpop.xlane.xlu0 %1611
        %v1613 = vsub.f32 %v1608, %v1612
        %v1614 = vmul.f32 %v1613, 1.442695
        %v1615 = vpow.pop %v1614
        %v1616 = vsel %vm947, %v1615, 0.0
        %1617 = vadd.xlane.f32.xlu0 %v1616
        %v1618 = vpop.xlane.xlu0 %1617
        %v1619 = vrcp.pop %v1618
        %v1620 = vmul.f32 %v1615, %v1619
        %1621 = vrot.lane.b32.xlu0 %v1389, 32
        %v1622 = vpop.permute.xlu0 %1621
        %v1625 = vsel %vm947, %v1620, 0
        %1627 = vmatpush.msra.mxu0 0.0
        %1628 = vmatpush.msra.mxu0 0.0
        %1629 = vmatpush.msra.mxu0 0.0
        %1630 = vmatpush.msra.mxu0 0.0
        %1631 = vmatpush.msra.mxu0 0.0
        %1632 = vmatpush.msra.mxu0 0.0
        %1633 = vmatpush.msra.mxu0 0.0
        %1634 = vmatpush.msra.mxu0 0.0
        %1635 = vmatpush.msra.mxu0 0.0
        %1636 = vmatpush.msra.mxu0 0.0
        %1637 = vmatpush.msra.mxu0 0.0
        %1638 = vmatpush.msra.mxu0 0.0
        %1639 = vmatpush.msra.mxu0 0.0
        %1640 = vmatpush.msra.mxu0 0.0
        %1641 = vmatpush.msra.mxu0 0.0
        %1642 = vmatpush.msra.mxu0 %v1622
        %1643 = vmatmul.f32.gmra.mxu0 %v1625
        %v1644 = vpop.f32.mrf.mxu0
        %v1645 = vadd.f32 0.0, %v1644
        %1646 = vdwg.mxu0
        %1648 = vrot.lane.b32.xlu0 %v1515, 32
        %v1649 = vpop.permute.xlu0 %1648
        %1652 = vrot.lane.b32.xlu0 %v1580, 64
        %v1653 = vpop.permute.xlu0 %1652
        %1656 = vrot.lane.b32.xlu0 %v1645, 96
        %v1657 = vpop.permute.xlu0 %1656
        %v1659 = vsel %vm920, %v1449, %v1649
        %v1660 = vsel %vm1191, %v1659, %v1653
        %v1661 = vsel %vm1193, %v1660, %v1657
        %v1662 = vld [vmem:[#allocation7] sm:$0xff]
        %v1663 = vld [vmem:[#allocation7 + $0x8] sm:$0xff]
        %v1664 = vld [vmem:[#allocation7 + $0x10] sm:$0xff]
        %v1665 = vld [vmem:[#allocation7 + $0x18] sm:$0xff]
        %v1666 = vld [vmem:[#allocation7 + $0x20] sm:$0xff]
        %v1667 = vld [vmem:[#allocation7 + $0x28] sm:$0xff]
        %v1668 = vld [vmem:[#allocation7 + $0x30] sm:$0xff]
        %v1669 = vld [vmem:[#allocation7 + $0x38] sm:$0xff]
        %v1670 = vld [vmem:[#allocation7 + $0x40] sm:$0xff]
        %v1671 = vld [vmem:[#allocation7 + $0x48] sm:$0xff]
        %v1672 = vld [vmem:[#allocation7 + $0x50] sm:$0xff]
        %v1673 = vld [vmem:[#allocation7 + $0x58] sm:$0xff]
        %v1674 = vld [vmem:[#allocation7 + $0x60] sm:$0xff]
        %v1675 = vld [vmem:[#allocation7 + $0x68] sm:$0xff]
        %v1676 = vld [vmem:[#allocation7 + $0x70] sm:$0xff]
        %v1677 = vld [vmem:[#allocation7 + $0x78] sm:$0xff]
        %v1678 = vld [vmem:[%s13] sm:$0x1]
        %v1680 = vperm.slane %v1678, 0
        %1682 = vmatpush.msra.mxu0 %v1677
        %1683 = vmatpush.msra.mxu0 %v1676
        %1684 = vmatpush.msra.mxu0 %v1675
        %1685 = vmatpush.msra.mxu0 %v1674
        %1686 = vmatpush.msra.mxu0 %v1673
        %1687 = vmatpush.msra.mxu0 %v1672
        %1688 = vmatpush.msra.mxu0 %v1671
        %1689 = vmatpush.msra.mxu0 %v1670
        %1690 = vmatpush.msra.mxu0 %v1669
        %1691 = vmatpush.msra.mxu0 %v1668
        %1692 = vmatpush.msra.mxu0 %v1667
        %1693 = vmatpush.msra.mxu0 %v1666
        %1694 = vmatpush.msra.mxu0 %v1665
        %1695 = vmatpush.msra.mxu0 %v1664
        %1696 = vmatpush.msra.mxu0 %v1663
        %1697 = vmatpush.msra.mxu0 %v1662
        %1698 = vmatmul.f32.gmra.mxu0 %v1661
        %v1699 = vpop.f32.mrf.mxu0
        %v1700 = vadd.f32 %v1680, %v1699
        %1701 = vdwg.mxu0
        %v1702 = vadd.f32 %v1272, %v1700
        %v1703 = vld [vmem:[%s14] sm:$0x1]
        %v1704 = vld [vmem:[%s15] sm:$0x1]
        %1705 = vadd.xlane.f32.xlu0 %v1702
        %v1706 = vpop.xlane.xlu0 %1705
        %v1707 = vmul.f32 %v1706, %v1246
        %v1708 = vsub.f32 %v1702, %v1707
        %v1709 = vmul.f32 %v1708, %v1708
        %1710 = vadd.xlane.f32.xlu0 %v1709
        %v1711 = vpop.xlane.xlu0 %1710
        %v1712 = vmul.f32 %v1711, %v1246
        %v1713 = vadd.f32 %v1712, 1e-05
        %v1714 = vrsqrt.pop %v1713
        %v1715 = vmul.f32 %v1714, %v1713
        %v1716 = vmul.f32 %v1715, %v1714
        %v1717 = vmul.f32 0.5, %v1716
        %v1718 = vsub.f32 1.5, %v1717
        %v1719 = vmul.f32 %v1714, %v1718
        %vm1720 = vweird.f32 %v1713
        %vm1721 = vweird.f32 %v1714
        %vm1722 = vmor %vm1720, %vm1721
        %v1723 = vsel %vm1722, %v1714, %v1719
        %v1724 = vmul.f32 %v1708, %v1723
        %v1726 = vperm.slane %v1703, 0
        %v1728 = vmul.f32 %v1724, %v1726
        %v1730 = vperm.slane %v1704, 0
        %v1732 = vadd.f32 %v1728, %v1730
        %v1733 = vld [vmem:[#allocation9] sm:$0xff]
        %v1734 = vld [vmem:[#allocation9 + $0x8] sm:$0xff]
        %v1735 = vld [vmem:[#allocation9 + $0x10] sm:$0xff]
        %v1736 = vld [vmem:[#allocation9 + $0x18] sm:$0xff]
        %v1737 = vld [vmem:[#allocation9 + $0x20] sm:$0xff]
        %v1738 = vld [vmem:[#allocation9 + $0x28] sm:$0xff]
        %v1739 = vld [vmem:[#allocation9 + $0x30] sm:$0xff]
        %v1740 = vld [vmem:[#allocation9 + $0x38] sm:$0xff]
        %v1741 = vld [vmem:[#allocation9 + $0x40] sm:$0xff]
        %v1742 = vld [vmem:[#allocation9 + $0x48] sm:$0xff]
        %v1743 = vld [vmem:[#allocation9 + $0x50] sm:$0xff]
        %v1744 = vld [vmem:[#allocation9 + $0x58] sm:$0xff]
        %v1745 = vld [vmem:[#allocation9 + $0x60] sm:$0xff]
        %v1746 = vld [vmem:[#allocation9 + $0x68] sm:$0xff]
        %v1747 = vld [vmem:[#allocation9 + $0x70] sm:$0xff]
        %v1748 = vld [vmem:[#allocation9 + $0x78] sm:$0xff]
        %v1749 = vld [vmem:[#allocation9 + $0x80] sm:$0xff]
        %v1750 = vld [vmem:[#allocation9 + $0x88] sm:$0xff]
        %v1751 = vld [vmem:[#allocation9 + $0x90] sm:$0xff]
        %v1752 = vld [vmem:[#allocation9 + $0x98] sm:$0xff]
        %v1753 = vld [vmem:[#allocation9 + $0xa0] sm:$0xff]
        %v1754 = vld [vmem:[#allocation9 + $0xa8] sm:$0xff]
        %v1755 = vld [vmem:[#allocation9 + $0xb0] sm:$0xff]
        %v1756 = vld [vmem:[#allocation9 + $0xb8] sm:$0xff]
        %v1757 = vld [vmem:[#allocation9 + $0xc0] sm:$0xff]
        %v1758 = vld [vmem:[#allocation9 + $0xc8] sm:$0xff]
        %v1759 = vld [vmem:[#allocation9 + $0xd0] sm:$0xff]
        %v1760 = vld [vmem:[#allocation9 + $0xd8] sm:$0xff]
        %v1761 = vld [vmem:[#allocation9 + $0xe0] sm:$0xff]
        %v1762 = vld [vmem:[#allocation9 + $0xe8] sm:$0xff]
        %v1763 = vld [vmem:[#allocation9 + $0xf0] sm:$0xff]
        %v1764 = vld [vmem:[#allocation9 + $0xf8] sm:$0xff]
        %v1765 = vld [vmem:[#allocation9 + $0x100] sm:$0xff]
        %v1766 = vld [vmem:[#allocation9 + $0x108] sm:$0xff]
        %v1767 = vld [vmem:[#allocation9 + $0x110] sm:$0xff]
        %v1768 = vld [vmem:[#allocation9 + $0x118] sm:$0xff]
        %v1769 = vld [vmem:[#allocation9 + $0x120] sm:$0xff]
        %v1770 = vld [vmem:[#allocation9 + $0x128] sm:$0xff]
        %v1771 = vld [vmem:[#allocation9 + $0x130] sm:$0xff]
        %v1772 = vld [vmem:[#allocation9 + $0x138] sm:$0xff]
        %v1773 = vld [vmem:[#allocation9 + $0x140] sm:$0xff]
        %v1774 = vld [vmem:[#allocation9 + $0x148] sm:$0xff]
        %v1775 = vld [vmem:[#allocation9 + $0x150] sm:$0xff]
        %v1776 = vld [vmem:[#allocation9 + $0x158] sm:$0xff]
        %v1777 = vld [vmem:[#allocation9 + $0x160] sm:$0xff]
        %v1778 = vld [vmem:[#allocation9 + $0x168] sm:$0xff]
        %v1779 = vld [vmem:[#allocation9 + $0x170] sm:$0xff]
        %v1780 = vld [vmem:[#allocation9 + $0x178] sm:$0xff]
        %v1781 = vld [vmem:[#allocation9 + $0x180] sm:$0xff]
        %v1782 = vld [vmem:[#allocation9 + $0x188] sm:$0xff]
        %v1783 = vld [vmem:[#allocation9 + $0x190] sm:$0xff]
        %v1784 = vld [vmem:[#allocation9 + $0x198] sm:$0xff]
        %v1785 = vld [vmem:[#allocation9 + $0x1a0] sm:$0xff]
        %v1786 = vld [vmem:[#allocation9 + $0x1a8] sm:$0xff]
        %v1787 = vld [vmem:[#allocation9 + $0x1b0] sm:$0xff]
        %v1788 = vld [vmem:[#allocation9 + $0x1b8] sm:$0xff]
        %v1789 = vld [vmem:[#allocation9 + $0x1c0] sm:$0xff]
        %v1790 = vld [vmem:[#allocation9 + $0x1c8] sm:$0xff]
        %v1791 = vld [vmem:[#allocation9 + $0x1d0] sm:$0xff]
        %v1792 = vld [vmem:[#allocation9 + $0x1d8] sm:$0xff]
        %v1793 = vld [vmem:[#allocation9 + $0x1e0] sm:$0xff]
        %v1794 = vld [vmem:[#allocation9 + $0x1e8] sm:$0xff]
        %v1795 = vld [vmem:[#allocation9 + $0x1f0] sm:$0xff]
        %v1796 = vld [vmem:[#allocation9 + $0x1f8] sm:$0xff]
        %v1797 = vld [vmem:[%s17] sm:$0xf]
        %v1799 = vperm.slane %v1797, 0
        %v1800 = vperm.slane %v1797, 1
        %v1801 = vperm.slane %v1797, 2
        %v1802 = vperm.slane %v1797, 3
        %1807 = vmatpush.msra.mxu0 %v1793
        %1808 = vmatpush.msra.mxu0 %v1789
        %1809 = vmatpush.msra.mxu0 %v1785
        %1810 = vmatpush.msra.mxu0 %v1781
        %1811 = vmatpush.msra.mxu0 %v1777
        %1812 = vmatpush.msra.mxu0 %v1773
        %1813 = vmatpush.msra.mxu0 %v1769
        %1814 = vmatpush.msra.mxu0 %v1765
        %1815 = vmatpush.msra.mxu0 %v1761
        %1816 = vmatpush.msra.mxu0 %v1757
        %1817 = vmatpush.msra.mxu0 %v1753
        %1818 = vmatpush.msra.mxu0 %v1749
        %1819 = vmatpush.msra.mxu0 %v1745
        %1820 = vmatpush.msra.mxu0 %v1741
        %1821 = vmatpush.msra.mxu0 %v1737
        %1822 = vmatpush.msra.mxu0 %v1733
        %1823 = vmatmul.f32.gmra.mxu0 %v1732
        %v1824 = vpop.f32.mrf.mxu0
        %v1825 = vadd.f32 %v1799, %v1824
        %1826 = vdwg.mxu0
        %1827 = vmatpush.msra.mxu0 %v1794
        %1828 = vmatpush.msra.mxu0 %v1790
        %1829 = vmatpush.msra.mxu0 %v1786
        %1830 = vmatpush.msra.mxu0 %v1782
        %1831 = vmatpush.msra.mxu0 %v1778
        %1832 = vmatpush.msra.mxu0 %v1774
        %1833 = vmatpush.msra.mxu0 %v1770
        %1834 = vmatpush.msra.mxu0 %v1766
        %1835 = vmatpush.msra.mxu0 %v1762
        %1836 = vmatpush.msra.mxu0 %v1758
        %1837 = vmatpush.msra.mxu0 %v1754
        %1838 = vmatpush.msra.mxu0 %v1750
        %1839 = vmatpush.msra.mxu0 %v1746
        %1840 = vmatpush.msra.mxu0 %v1742
        %1841 = vmatpush.msra.mxu0 %v1738
        %1842 = vmatpush.msra.mxu0 %v1734
        %1843 = vmatmul.f32.gmra.mxu0 %v1732
        %v1844 = vpop.f32.mrf.mxu0
        %v1845 = vadd.f32 %v1800, %v1844
        %1846 = vdwg.mxu0
        %1847 = vmatpush.msra.mxu0 %v1795
        %1848 = vmatpush.msra.mxu0 %v1791
        %1849 = vmatpush.msra.mxu0 %v1787
        %1850 = vmatpush.msra.mxu0 %v1783
        %1851 = vmatpush.msra.mxu0 %v1779
        %1852 = vmatpush.msra.mxu0 %v1775
        %1853 = vmatpush.msra.mxu0 %v1771
        %1854 = vmatpush.msra.mxu0 %v1767
        %1855 = vmatpush.msra.mxu0 %v1763
        %1856 = vmatpush.msra.mxu0 %v1759
        %1857 = vmatpush.msra.mxu0 %v1755
        %1858 = vmatpush.msra.mxu0 %v1751
        %1859 = vmatpush.msra.mxu0 %v1747
        %1860 = vmatpush.msra.mxu0 %v1743
        %1861 = vmatpush.msra.mxu0 %v1739
        %1862 = vmatpush.msra.mxu0 %v1735
        %1863 = vmatmul.f32.gmra.mxu0 %v1732
        %v1864 = vpop.f32.mrf.mxu0
        %v1865 = vadd.f32 %v1801, %v1864
        %1866 = vdwg.mxu0
        %1867 = vmatpush.msra.mxu0 %v1796
        %1868 = vmatpush.msra.mxu0 %v1792
        %1869 = vmatpush.msra.mxu0 %v1788
        %1870 = vmatpush.msra.mxu0 %v1784
        %1871 = vmatpush.msra.mxu0 %v1780
        %1872 = vmatpush.msra.mxu0 %v1776
        %1873 = vmatpush.msra.mxu0 %v1772
        %1874 = vmatpush.msra.mxu0 %v1768
        %1875 = vmatpush.msra.mxu0 %v1764
        %1876 = vmatpush.msra.mxu0 %v1760
        %1877 = vmatpush.msra.mxu0 %v1756
        %1878 = vmatpush.msra.mxu0 %v1752
        %1879 = vmatpush.msra.mxu0 %v1748
        %1880 = vmatpush.msra.mxu0 %v1744
        %1881 = vmatpush.msra.mxu0 %v1740
        %1882 = vmatpush.msra.mxu0 %v1736
        %1883 = vmatmul.f32.gmra.mxu0 %v1732
        %v1884 = vpop.f32.mrf.mxu0
        %v1885 = vadd.f32 %v1802, %v1884
        %1886 = vdwg.mxu0
        %v1887 = vmax.f32 %v1825, 0.0
        %v1888 = vmax.f32 %v1845, 0.0
        %v1889 = vmax.f32 %v1865, 0.0
        %v1890 = vmax.f32 %v1885, 0.0
        %v1891 = vld [vmem:[#allocation10] sm:$0xff]
        %v1892 = vld [vmem:[#allocation10 + $0x8] sm:$0xff]
        %v1893 = vld [vmem:[#allocation10 + $0x10] sm:$0xff]
        %v1894 = vld [vmem:[#allocation10 + $0x18] sm:$0xff]
        %v1895 = vld [vmem:[#allocation10 + $0x20] sm:$0xff]
        %v1896 = vld [vmem:[#allocation10 + $0x28] sm:$0xff]
        %v1897 = vld [vmem:[#allocation10 + $0x30] sm:$0xff]
        %v1898 = vld [vmem:[#allocation10 + $0x38] sm:$0xff]
        %v1899 = vld [vmem:[#allocation10 + $0x40] sm:$0xff]
        %v1900 = vld [vmem:[#allocation10 + $0x48] sm:$0xff]
        %v1901 = vld [vmem:[#allocation10 + $0x50] sm:$0xff]
        %v1902 = vld [vmem:[#allocation10 + $0x58] sm:$0xff]
        %v1903 = vld [vmem:[#allocation10 + $0x60] sm:$0xff]
        %v1904 = vld [vmem:[#allocation10 + $0x68] sm:$0xff]
        %v1905 = vld [vmem:[#allocation10 + $0x70] sm:$0xff]
        %v1906 = vld [vmem:[#allocation10 + $0x78] sm:$0xff]
        %v1907 = vld [vmem:[#allocation10 + $0x80] sm:$0xff]
        %v1908 = vld [vmem:[#allocation10 + $0x88] sm:$0xff]
        %v1909 = vld [vmem:[#allocation10 + $0x90] sm:$0xff]
        %v1910 = vld [vmem:[#allocation10 + $0x98] sm:$0xff]
        %v1911 = vld [vmem:[#allocation10 + $0xa0] sm:$0xff]
        %v1912 = vld [vmem:[#allocation10 + $0xa8] sm:$0xff]
        %v1913 = vld [vmem:[#allocation10 + $0xb0] sm:$0xff]
        %v1914 = vld [vmem:[#allocation10 + $0xb8] sm:$0xff]
        %v1915 = vld [vmem:[#allocation10 + $0xc0] sm:$0xff]
        %v1916 = vld [vmem:[#allocation10 + $0xc8] sm:$0xff]
        %v1917 = vld [vmem:[#allocation10 + $0xd0] sm:$0xff]
        %v1918 = vld [vmem:[#allocation10 + $0xd8] sm:$0xff]
        %v1919 = vld [vmem:[#allocation10 + $0xe0] sm:$0xff]
        %v1920 = vld [vmem:[#allocation10 + $0xe8] sm:$0xff]
        %v1921 = vld [vmem:[#allocation10 + $0xf0] sm:$0xff]
        %v1922 = vld [vmem:[#allocation10 + $0xf8] sm:$0xff]
        %v1923 = vld [vmem:[#allocation10 + $0x100] sm:$0xff]
        %v1924 = vld [vmem:[#allocation10 + $0x108] sm:$0xff]
        %v1925 = vld [vmem:[#allocation10 + $0x110] sm:$0xff]
        %v1926 = vld [vmem:[#allocation10 + $0x118] sm:$0xff]
        %v1927 = vld [vmem:[#allocation10 + $0x120] sm:$0xff]
        %v1928 = vld [vmem:[#allocation10 + $0x128] sm:$0xff]
        %v1929 = vld [vmem:[#allocation10 + $0x130] sm:$0xff]
        %v1930 = vld [vmem:[#allocation10 + $0x138] sm:$0xff]
        %v1931 = vld [vmem:[#allocation10 + $0x140] sm:$0xff]
        %v1932 = vld [vmem:[#allocation10 + $0x148] sm:$0xff]
        %v1933 = vld [vmem:[#allocation10 + $0x150] sm:$0xff]
        %v1934 = vld [vmem:[#allocation10 + $0x158] sm:$0xff]
        %v1935 = vld [vmem:[#allocation10 + $0x160] sm:$0xff]
        %v1936 = vld [vmem:[#allocation10 + $0x168] sm:$0xff]
        %v1937 = vld [vmem:[#allocation10 + $0x170] sm:$0xff]
        %v1938 = vld [vmem:[#allocation10 + $0x178] sm:$0xff]
        %v1939 = vld [vmem:[#allocation10 + $0x180] sm:$0xff]
        %v1940 = vld [vmem:[#allocation10 + $0x188] sm:$0xff]
        %v1941 = vld [vmem:[#allocation10 + $0x190] sm:$0xff]
        %v1942 = vld [vmem:[#allocation10 + $0x198] sm:$0xff]
        %v1943 = vld [vmem:[#allocation10 + $0x1a0] sm:$0xff]
        %v1944 = vld [vmem:[#allocation10 + $0x1a8] sm:$0xff]
        %v1945 = vld [vmem:[#allocation10 + $0x1b0] sm:$0xff]
        %v1946 = vld [vmem:[#allocation10 + $0x1b8] sm:$0xff]
        %v1947 = vld [vmem:[#allocation10 + $0x1c0] sm:$0xff]
        %v1948 = vld [vmem:[#allocation10 + $0x1c8] sm:$0xff]
        %v1949 = vld [vmem:[#allocation10 + $0x1d0] sm:$0xff]
        %v1950 = vld [vmem:[#allocation10 + $0x1d8] sm:$0xff]
        %v1951 = vld [vmem:[#allocation10 + $0x1e0] sm:$0xff]
        %v1952 = vld [vmem:[#allocation10 + $0x1e8] sm:$0xff]
        %v1953 = vld [vmem:[#allocation10 + $0x1f0] sm:$0xff]
        %v1954 = vld [vmem:[#allocation10 + $0x1f8] sm:$0xff]
        %v1955 = vld [vmem:[%s19] sm:$0x1]
        %v1957 = vperm.slane %v1955, 0
        %1959 = vmatpush.msra.mxu0 %v1906
        %1960 = vmatpush.msra.mxu0 %v1905
        %1961 = vmatpush.msra.mxu0 %v1904
        %1962 = vmatpush.msra.mxu0 %v1903
        %1963 = vmatpush.msra.mxu0 %v1902
        %1964 = vmatpush.msra.mxu0 %v1901
        %1965 = vmatpush.msra.mxu0 %v1900
        %1966 = vmatpush.msra.mxu0 %v1899
        %1967 = vmatpush.msra.mxu0 %v1898
        %1968 = vmatpush.msra.mxu0 %v1897
        %1969 = vmatpush.msra.mxu0 %v1896
        %1970 = vmatpush.msra.mxu0 %v1895
        %1971 = vmatpush.msra.mxu0 %v1894
        %1972 = vmatpush.msra.mxu0 %v1893
        %1973 = vmatpush.msra.mxu0 %v1892
        %1974 = vmatpush.msra.mxu0 %v1891
        %1975 = vmatmul.f32.gmra.mxu0 %v1887
        %v1976 = vpop.f32.mrf.mxu0
        %v1977 = vadd.f32 %v1957, %v1976
        %1978 = vdwg.mxu0
        %1979 = vmatpush.msra.mxu0 %v1922
        %1980 = vmatpush.msra.mxu0 %v1921
        %1981 = vmatpush.msra.mxu0 %v1920
        %1982 = vmatpush.msra.mxu0 %v1919
        %1983 = vmatpush.msra.mxu0 %v1918
        %1984 = vmatpush.msra.mxu0 %v1917
        %1985 = vmatpush.msra.mxu0 %v1916
        %1986 = vmatpush.msra.mxu0 %v1915
        %1987 = vmatpush.msra.mxu0 %v1914
        %1988 = vmatpush.msra.mxu0 %v1913
        %1989 = vmatpush.msra.mxu0 %v1912
        %1990 = vmatpush.msra.mxu0 %v1911
        %1991 = vmatpush.msra.mxu0 %v1910
        %1992 = vmatpush.msra.mxu0 %v1909
        %1993 = vmatpush.msra.mxu0 %v1908
        %1994 = vmatpush.msra.mxu0 %v1907
        %1995 = vmatmul.f32.gmra.mxu0 %v1888
        %v1996 = vpop.f32.mrf.mxu0
        %v1997 = vadd.f32 %v1977, %v1996
        %1998 = vdwg.mxu0
        %1999 = vmatpush.msra.mxu0 %v1938
        %2000 = vmatpush.msra.mxu0 %v1937
        %2001 = vmatpush.msra.mxu0 %v1936
        %2002 = vmatpush.msra.mxu0 %v1935
        %2003 = vmatpush.msra.mxu0 %v1934
        %2004 = vmatpush.msra.mxu0 %v1933
        %2005 = vmatpush.msra.mxu0 %v1932
        %2006 = vmatpush.msra.mxu0 %v1931
        %2007 = vmatpush.msra.mxu0 %v1930
        %2008 = vmatpush.msra.mxu0 %v1929
        %2009 = vmatpush.msra.mxu0 %v1928
        %2010 = vmatpush.msra.mxu0 %v1927
        %2011 = vmatpush.msra.mxu0 %v1926
        %2012 = vmatpush.msra.mxu0 %v1925
        %2013 = vmatpush.msra.mxu0 %v1924
        %2014 = vmatpush.msra.mxu0 %v1923
        %2015 = vmatmul.f32.gmra.mxu0 %v1889
        %v2016 = vpop.f32.mrf.mxu0
        %v2017 = vadd.f32 %v1997, %v2016
        %2018 = vdwg.mxu0
        %2019 = vmatpush.msra.mxu0 %v1954
        %2020 = vmatpush.msra.mxu0 %v1953
        %2021 = vmatpush.msra.mxu0 %v1952
        %2022 = vmatpush.msra.mxu0 %v1951
        %2023 = vmatpush.msra.mxu0 %v1950
        %2024 = vmatpush.msra.mxu0 %v1949
        %2025 = vmatpush.msra.mxu0 %v1948
        %2026 = vmatpush.msra.mxu0 %v1947
        %2027 = vmatpush.msra.mxu0 %v1946
        %2028 = vmatpush.msra.mxu0 %v1945
        %2029 = vmatpush.msra.mxu0 %v1944
        %2030 = vmatpush.msra.mxu0 %v1943
        %2031 = vmatpush.msra.mxu0 %v1942
        %2032 = vmatpush.msra.mxu0 %v1941
        %2033 = vmatpush.msra.mxu0 %v1940
        %2034 = vmatpush.msra.mxu0 %v1939
        %2035 = vmatmul.f32.gmra.mxu0 %v1890
        %v2036 = vpop.f32.mrf.mxu0
        %v2037 = vadd.f32 %v2017, %v2036
        %2038 = vdwg.mxu0
        %v2039 = vadd.f32 %v1732, %v2037
        %v2040 = vld [vmem:[%s20] sm:$0x1]
        %v2041 = vld [vmem:[%s21] sm:$0x1]
        %2042 = vadd.xlane.f32.xlu0 %v2039
        %v2043 = vpop.xlane.xlu0 %2042
        %v2044 = vmul.f32 %v2043, %v1246
        %v2045 = vsub.f32 %v2039, %v2044
        %v2046 = vmul.f32 %v2045, %v2045
        %2047 = vadd.xlane.f32.xlu0 %v2046
        %v2048 = vpop.xlane.xlu0 %2047
        %v2049 = vmul.f32 %v2048, %v1246
        %v2050 = vadd.f32 %v2049, 1e-05
        %v2051 = vrsqrt.pop %v2050
        %v2052 = vmul.f32 %v2051, %v2050
        %v2053 = vmul.f32 %v2052, %v2051
        %v2054 = vmul.f32 0.5, %v2053
        %v2055 = vsub.f32 1.5, %v2054
        %v2056 = vmul.f32 %v2051, %v2055
        %vm2057 = vweird.f32 %v2050
        %vm2058 = vweird.f32 %v2051
        %vm2059 = vmor %vm2057, %vm2058
        %v2060 = vsel %vm2059, %v2051, %v2056
        %v2061 = vmul.f32 %v2045, %v2060
        %v2063 = vperm.slane %v2040, 0
        %v2065 = vmul.f32 %v2061, %v2063
        %v2067 = vperm.slane %v2041, 0
        %v2069 = vadd.f32 %v2065, %v2067
        %2070 = vst [vmem:[%s795] sm:$0xff] %v2069
        %p2071 = scmp.lt.s32.totalorder %s37, 1
        %s2072 = scalar_select %p2071, %s37, 1
        %s2073 = smul.addr %s2072, 8
        %s2074 = scalar_lea.vmem %s22, %s2073
        // Predicated region
        $region133: #{tiny_transformer_forward.9} parent=107 // pred_check
          %p2075 = pneg %p527
        $region134: #{tiny_transformer_forward.9} parent=107 // pred_check_branch
          %2077 = sbr.rel (%p2075) target = $region136
        $region135: #{tiny_transformer_forward.9} parent=107 // pred_region
          _
        $region136: #{tiny_transformer_forward.9} parent=107 // pred_fallthru
          _
      $region108: #{tiny_transformer_forward.9} parent=5 // pred_fallthru
        _
      %p2078 = scmp.le.s32.totalorder 2, %s32
      // Predicated region
      $region137: #{tiny_transformer_forward.9} parent=5 // pred_check
        %p2079 = pneg %p2078
      $region138: #{tiny_transformer_forward.9} parent=5 // pred_check_branch
        %2081 = sbr.rel (%p2079) target = $region140
      $region139: #{tiny_transformer_forward.9} parent=5 // pred_region
        %s2082 = ssub.s32 %s32, 2
        // Predicated region
        $region141: #{tiny_transformer_forward.9} parent=139 // pred_check
          %p2083 = pneg %p533
        $region142: #{tiny_transformer_forward.9} parent=139 // pred_check_branch
          %2085 = sbr.rel (%p2083) target = $region144
        $region143: #{tiny_transformer_forward.9} parent=139 // pred_region
          %p2086 = scmp.lt.s32.totalorder %s38, 1
          %s2087 = scalar_select %p2086, %s38, 1
          %s2088 = smul.addr %s2087, 8
          %s2089 = scalar_lea.vmem %s22, %s2088
        $region144: #{tiny_transformer_forward.9} parent=139 // pred_fallthru
          _
      $region140: #{tiny_transformer_forward.9} parent=5 // pred_fallthru
        _
    $region6: #{tiny_transformer_forward.9} parent=1 // loop_footer
      %s36 = sadd.s32 1, %s32
    $region7: #{tiny_transformer_forward.9} parent=1 // loop_footer_branch
      %31 = sbr.rel target = $region3
    $region8: #{tiny_transformer_forward.9} parent=1 // loop_exit
      _
    %2090 = vsyncpa [#allocation3], 1
    %s2091 = scalar_lea.sflag [#allocation3], 1
    %2092 = vsyncpa %s2091, 1
    %2093 = vsyncpa [#allocation5], 1
    %2094 = vsyncpa [#allocation8], 1
    %2095 = vsyncpa [#allocation11], 1

</llo_original>
